<compile_context>
chip_gen: v7x
topology: tpu7x:2x2x1
jax: 0.10.0
libtpu: 0.0.40
codegen_flags: <defaults>
</compile_context>

<pallas_src>
import jax
import jax.numpy as jnp
import numpy as np
from jax.experimental import pallas as pl
from jax.experimental.pallas import tpu as pltpu

# ---------------------------------------------------------------------------
# Shapes fixed by the PyTorch module:
#   Conv1d(1->32,k=5,s=2) -> ReLU -> MaxPool(2) -> Conv1d(32->64,k=5) -> ReLU
#   -> MaxPool(2) -> flatten -> Linear(22336,512) -> Linear(512,num_classes)
# fc1 in_features = 22336 = 64 * 349  =>  input length L = 2816.
# ---------------------------------------------------------------------------
NUM_CLASSES = 2
L_IN = 2816
L1 = (L_IN - 5) // 2 + 1      # 1406  conv1 output length
L2 = L1 // 2                  # 703   maxpool1 output length
L3 = L2 - 4                   # 699   conv2 output length
L4 = L3 // 2                  # 349   maxpool2 output length
FLAT = 64 * L4                # 22336 fc1 in_features
FLAT_PAD = 176 * 128          # 22528 lane-aligned, zero padded (weights+acts both zero-padded)
NF1 = 512                     # fc1 out_features
TK = 5632                     # fc1 K tile (44*128); 22528/5632 = 4 reduction steps
TN = 256                      # fc1 N tile; 2 tiles -> parallel axis (2 TCs on v7x)
S1 = 351                      # pooled-phase columns needed (pooled1 indices 0..701 suffice,
                              # since maxpool2 discards conv2's last (odd) output)


# ---------------------------------------------------------------------------
# Stage 1: conv1 + relu + maxpool1 + conv2 + relu + maxpool2, one batch element / grid step.
# Channels live on sublanes, time on lanes, so phase extraction and the conv2 tap concatenation
# are sublane-aligned, and the output is already channel-major.
# ---------------------------------------------------------------------------
def feature_kernel(ph_ref, w1_ref, b1_ref, w2_ref, b2_ref, out_ref):
    ph = ph_ref[0]                                               # (20, 351)  rows = 5*phase + tap

    # conv1: single fused matmul with block-diagonal weights -> row 32*p + c is phase p, chan c.
    y = jnp.dot(w1_ref[...], ph, preferred_element_type=jnp.float32)   # (128, 351)
    r = jnp.maximum(y + b1_ref[...], 0.0)                        # relu1

    # maxpool1: pooled1[2u] from phases 0/1, pooled1[2u+1] from phases 2/3 (sublane-aligned).
    e = jnp.maximum(r[0:32, :], r[32:64, :])                     # (32, 351) = pooled1[:, 2u]
    o = jnp.maximum(r[64:96, :], r[96:128, :])                   # (32, 351) = pooled1[:, 2u+1]

    # conv2 (k=5) at even / odd output times, 5 taps fused into one K=160 matmul per parity.
    xe = jnp.concatenate([e[:, 0:L4], o[:, 0:L4], e[:, 1:L4 + 1],
                          o[:, 1:L4 + 1], e[:, 2:L4 + 2]], axis=0)      # (160, 349)
    xo = jnp.concatenate([o[:, 0:L4], e[:, 1:L4 + 1], o[:, 1:L4 + 1],
                          e[:, 2:L4 + 2], o[:, 2:L4 + 2]], axis=0)      # (160, 349)
    he = jnp.dot(w2_ref[...], xe, preferred_element_type=jnp.float32) + b2_ref[...]  # s = 2v
    ho = jnp.dot(w2_ref[...], xo, preferred_element_type=jnp.float32) + b2_ref[...]  # s = 2v+1

    # relu2 + maxpool2, already channel-major (64, 349); cast to bf16 for the fc stage.
    pooled = jnp.maximum(jnp.maximum(he, 0.0), jnp.maximum(ho, 0.0))
    out_ref[0] = pooled.astype(out_ref.dtype)


# ---------------------------------------------------------------------------
# Stage 2: fc1 (22528->512) as a (N-tile, K-tile) matmul, bf16 inputs, f32 accumulation directly
# in the resident output block (bias-initialized at k==0; no scratch, no final copy).
# N axis "parallel" (one tile per TensorCore on v7x), K axis "arbitrary" (reduction, innermost).
# fc2 (512 x num_classes) is done in the wrapper.
# ---------------------------------------------------------------------------
def fc1_kernel(x_ref, w_ref, b_ref, h_ref):
    k = pl.program_id(1)

    @pl.when(k == 0)
    def _():
        h_ref[...] = jnp.broadcast_to(b_ref[...], h_ref.shape)   # fc1 bias; no relu in forward()

    h_ref[...] += jnp.dot(x_ref[...], w_ref[...],
                          preferred_element_type=jnp.float32)


# ---------------------------------------------------------------------------
# One-time weight re-layout, OUTSIDE the jitted forward.
# ---------------------------------------------------------------------------
def prepare_params(params):
    w_c1, b_c1, w_c2, b_c2, w_f1, b_f1, w_f2, b_f2 = params
    w1ck = w_c1[:, 0, :]                                       # (32, 5)  [c, k]
    w1bd = jax.scipy.linalg.block_diag(*([w1ck] * 4))          # (128, 20) block-diag over phases
    b1col = jnp.tile(b_c1, 4).reshape(128, 1)                  # row 32*p + c -> b_c1[c]
    w2cat = jnp.transpose(w_c2, (0, 2, 1)).reshape(64, 5 * 32) # (64, 160) cols = 32*k + ci
    b2col = b_c2.reshape(64, 1)
    # fc1: PyTorch flatten order j = c*349 + t; transpose, zero-pad K to FLAT_PAD, cast bf16.
    w_f1p = jnp.pad(jnp.transpose(w_f1), ((0, FLAT_PAD - FLAT), (0, 0))).astype(jnp.bfloat16)
    b_f1r = b_f1.reshape(1, NF1)
    w_f2t = jnp.transpose(w_f2)                                # (512, num_classes)
    return (w1bd, b1col, w2cat, b2col, w_f1p, b_f1r, w_f2t, b_f2)


@jax.jit
def conv1d_model_forward(x, prep):
    w1bd, b1col, w2cat, b2col, w_f1p, b_f1r, w_f2t, b_f2 = prep
    B = x.shape[0]
    x2d = x[:, 0, :]                                           # (B, L_IN), in_channels = 1

    # im2col for the 4 conv1 stride-phases, built from plain slices (no gather):
    #   ph_t[b, 5p+k, u] = x[b, 8u + 2p + k],  u = 0..350.
    xr = x2d.reshape(B, L_IN // 8, 8)                          # (B, 352, 8)
    x8 = jnp.concatenate([xr[:, :S1, :], xr[:, 1:S1 + 1, :3]], axis=-1)   # (B, 351, 11)
    ph = jnp.concatenate([x8[:, :, 2 * p:2 * p + 5] for p in range(4)], axis=-1)  # (B,351,20)
    ph_t = jnp.transpose(ph, (0, 2, 1))                        # (B, 20, 351)

    feat = pl.pallas_call(
        feature_kernel,
        out_shape=jax.ShapeDtypeStruct((B, 64, L4), jnp.bfloat16),
        grid=(B,),                                             # TODO(synk): block >1 elem/step for large B
        in_specs=[
            pl.BlockSpec((1, 20, S1), lambda b: (b, 0, 0)),
            pl.BlockSpec((128, 20), lambda b: (0, 0)),
            pl.BlockSpec((128, 1), lambda b: (0, 0)),
            pl.BlockSpec((64, 160), lambda b: (0, 0)),
            pl.BlockSpec((64, 1), lambda b: (0, 0)),
        ],
        out_specs=pl.BlockSpec((1, 64, L4), lambda b: (b, 0, 0)),
        compiler_params=pltpu.CompilerParams(
            dimension_semantics=("parallel",)),
    )(ph_t, w1bd, b1col, w2cat, b2col)                         # (B, chan=64, time=349) bf16

    # PyTorch flatten j = c*349 + t is just the row-major flatten of (B, 64, 349).
    x_flat = jnp.pad(feat.reshape(B, FLAT), ((0, 0), (0, FLAT_PAD - FLAT)))   # (B, 22528) bf16

    h = pl.pallas_call(
        fc1_kernel,
        out_shape=jax.ShapeDtypeStruct((B, NF1), jnp.float32),
        grid=(NF1 // TN, FLAT_PAD // TK),                      # (2 parallel N tiles, 4 K steps)
        in_specs=[
            pl.BlockSpec((B, TK), lambda j, k: (0, k)),
            pl.BlockSpec((TK, TN), lambda j, k: (k, j)),
            pl.BlockSpec((1, TN), lambda j, k: (0, j)),
        ],
        out_specs=pl.BlockSpec((B, TN), lambda j, k: (0, j)),
        compiler_params=pltpu.CompilerParams(
            dimension_semantics=("parallel", "arbitrary")),
    )(x_flat, w_f1p, b_f1r)                                    # (B, 512) f32

    # fc2: 512 x num_classes, trivial -> plain XLA dot in f32.
    return jnp.dot(h, w_f2t, precision=jax.lax.Precision.HIGHEST) + b_f2


def reference_forward(x, params):
    """Pure-JAX replica of the PyTorch forward (for correctness checking)."""
    w_c1, b_c1, w_c2, b_c2, w_f1, b_f1, w_f2, b_f2 = params
    hp = jax.lax.Precision.HIGHEST
    dn = ('NCH', 'OIH', 'NCH')
    h = jax.lax.conv_general_dilated(x, w_c1, (2,), 'VALID',
                                     dimension_numbers=dn, precision=hp)
    h = jnp.maximum(h + b_c1[None, :, None], 0.0)
    h = jax.lax.reduce_window(h, -jnp.inf, jax.lax.max, (1, 1, 2), (1, 1, 2), 'VALID')
    h = jax.lax.conv_general_dilated(h, w_c2, (1,), 'VALID',
                                     dimension_numbers=dn, precision=hp)
    h = jnp.maximum(h + b_c2[None, :, None], 0.0)
    h = jax.lax.reduce_window(h, -jnp.inf, jax.lax.max, (1, 1, 2), (1, 1, 2), 'VALID')
    h = h.reshape(h.shape[0], -1)
    h = jnp.dot(h, w_f1.T, precision=hp) + b_f1
    h = jnp.dot(h, w_f2.T, precision=hp) + b_f2
    return h


if __name__ == "__main__":
    key = jax.random.PRNGKey(0)
    ks = jax.random.split(key, 9)

    def uinit(k, shape, fan_in):
        bound = 1.0 / np.sqrt(fan_in)
        return jax.random.uniform(k, shape, jnp.float32, -bound, bound)

    # Deterministic synthetic parameters (PyTorch default-init-like uniform bounds).
    params = (
        uinit(ks[0], (32, 1, 5), 5),             # conv1.weight
        uinit(ks[1], (32,), 5),                  # conv1.bias
        uinit(ks[2], (64, 32, 5), 32 * 5),       # conv2.weight
        uinit(ks[3], (64,), 32 * 5),             # conv2.bias
        uinit(ks[4], (512, FLAT), FLAT),         # fc1.weight
        uinit(ks[5], (512,), FLAT),              # fc1.bias
        uinit(ks[6], (NUM_CLASSES, 512), 512),   # fc2.weight
        uinit(ks[7], (NUM_CLASSES,), 512),       # fc2.bias
    )
    prep = prepare_params(params)                # one-time re-layout, outside the jit

    B = 2
    x = jax.random.normal(ks[8], (B, 1, L_IN), jnp.float32)   # NCW, L implied by fc1=22336

    out = jax.block_until_ready(conv1d_model_forward(x, prep))
    assert out.shape == (B, NUM_CLASSES), out.shape

    ref = reference_forward(x, params)
    # bf16 features / fc1 weights (f32 accumulation) introduce ~1e-3-level error vs f32 reference.
    np.testing.assert_allclose(np.asarray(out), np.asarray(ref), rtol=2e-2, atol=2e-2)
    print("KERNEL_OK")
</pallas_src>

<mosaic_0001>
module attributes {stable_mosaic.version = 11 : i64} {
  func.func @feature_kernel(%arg0: i32, %arg1: memref<1x20x351xf32, #tpu.memory_space<vmem>>, %arg2: memref<128x20xf32, #tpu.memory_space<vmem>>, %arg3: memref<128x1xf32, #tpu.memory_space<vmem>>, %arg4: memref<64x160xf32, #tpu.memory_space<vmem>>, %arg5: memref<64x1xf32, #tpu.memory_space<vmem>>, %arg6: memref<1x64x349xbf16, #tpu.memory_space<vmem>>) attributes {dimension_semantics = [#tpu.dimension_semantics<parallel>], iteration_bounds = array<i64: 2>, scalar_prefetch = 0 : i64, scratch_operands = 0 : i64, tpu.core_type = #tpu.core_type<tc>, window_params = [{transform_indices = @transform_0, window_bounds = array<i64: 1, 20, 351>}, {pipeline_mode = #tpu.pipeline_mode<synchronous>, transform_indices = @transform_1, window_bounds = array<i64: 128, 20>}, {pipeline_mode = #tpu.pipeline_mode<synchronous>, transform_indices = @transform_2, window_bounds = array<i64: 128, 1>}, {pipeline_mode = #tpu.pipeline_mode<synchronous>, transform_indices = @transform_3, window_bounds = array<i64: 64, 160>}, {pipeline_mode = #tpu.pipeline_mode<synchronous>, transform_indices = @transform_4, window_bounds = array<i64: 64, 1>}, {transform_indices = @transform_5, window_bounds = array<i64: 1, 64, 349>}]} {
    %c0 = arith.constant 0 : index
    %c0_0 = arith.constant 0 : index
    %c0_1 = arith.constant 0 : index
    %0 = vector.load %arg1[%c0, %c0_0, %c0_1] : memref<1x20x351xf32, #tpu.memory_space<vmem>>, vector<1x20x351xf32>
    %1 = vector.shape_cast %0 : vector<1x20x351xf32> to vector<20x351xf32>
    %c0_2 = arith.constant 0 : index
    %c0_3 = arith.constant 0 : index
    %2 = vector.load %arg2[%c0_2, %c0_3] : memref<128x20xf32, #tpu.memory_space<vmem>>, vector<128x20xf32>
    %cst = arith.constant dense<0.000000e+00> : vector<128x351xf32>
    %3 = tpu.matmul %2, %1, %cst {dimension_numbers = #tpu.dot_dimension_numbers<[1], [0], [0], [1], [0, 0, 1, 1], [], []>} : vector<128x20xf32>, vector<20x351xf32>, vector<128x351xf32> -> vector<128x351xf32>
    %c0_4 = arith.constant 0 : index
    %c0_5 = arith.constant 0 : index
    %4 = vector.load %arg3[%c0_4, %c0_5] : memref<128x1xf32, #tpu.memory_space<vmem>>, vector<128x1xf32>
    %5 = vector.broadcast %4 : vector<128x1xf32> to vector<128x351xf32>
    %6 = arith.addf %3, %5 : vector<128x351xf32>
    %cst_6 = arith.constant 0.000000e+00 : f32
    %7 = vector.broadcast %cst_6 : f32 to vector<128x351xf32>
    %8 = arith.maximumf %6, %7 : vector<128x351xf32>
    %9 = vector.extract_strided_slice %8 {offsets = [0, 0], sizes = [32, 351], strides = [1, 1]} : vector<128x351xf32> to vector<32x351xf32>
    %10 = vector.extract_strided_slice %8 {offsets = [32, 0], sizes = [32, 351], strides = [1, 1]} : vector<128x351xf32> to vector<32x351xf32>
    %11 = arith.maximumf %9, %10 : vector<32x351xf32>
    %12 = vector.extract_strided_slice %8 {offsets = [64, 0], sizes = [32, 351], strides = [1, 1]} : vector<128x351xf32> to vector<32x351xf32>
    %13 = vector.extract_strided_slice %8 {offsets = [96, 0], sizes = [32, 351], strides = [1, 1]} : vector<128x351xf32> to vector<32x351xf32>
    %14 = arith.maximumf %12, %13 : vector<32x351xf32>
    %15 = vector.extract_strided_slice %11 {offsets = [0, 0], sizes = [32, 349], strides = [1, 1]} : vector<32x351xf32> to vector<32x349xf32>
    %16 = vector.extract_strided_slice %14 {offsets = [0, 0], sizes = [32, 349], strides = [1, 1]} : vector<32x351xf32> to vector<32x349xf32>
    %17 = vector.extract_strided_slice %11 {offsets = [0, 1], sizes = [32, 349], strides = [1, 1]} : vector<32x351xf32> to vector<32x349xf32>
    %18 = vector.extract_strided_slice %14 {offsets = [0, 1], sizes = [32, 349], strides = [1, 1]} : vector<32x351xf32> to vector<32x349xf32>
    %19 = vector.extract_strided_slice %11 {offsets = [0, 2], sizes = [32, 349], strides = [1, 1]} : vector<32x351xf32> to vector<32x349xf32>
    %20 = tpu.concatenate %15, %16, %17, %18, %19 in 0 : vector<32x349xf32>, vector<32x349xf32>, vector<32x349xf32>, vector<32x349xf32>, vector<32x349xf32> -> vector<160x349xf32>
    %21 = vector.extract_strided_slice %14 {offsets = [0, 0], sizes = [32, 349], strides = [1, 1]} : vector<32x351xf32> to vector<32x349xf32>
    %22 = vector.extract_strided_slice %11 {offsets = [0, 1], sizes = [32, 349], strides = [1, 1]} : vector<32x351xf32> to vector<32x349xf32>
    %23 = vector.extract_strided_slice %14 {offsets = [0, 1], sizes = [32, 349], strides = [1, 1]} : vector<32x351xf32> to vector<32x349xf32>
    %24 = vector.extract_strided_slice %11 {offsets = [0, 2], sizes = [32, 349], strides = [1, 1]} : vector<32x351xf32> to vector<32x349xf32>
    %25 = vector.extract_strided_slice %14 {offsets = [0, 2], sizes = [32, 349], strides = [1, 1]} : vector<32x351xf32> to vector<32x349xf32>
    %26 = tpu.concatenate %21, %22, %23, %24, %25 in 0 : vector<32x349xf32>, vector<32x349xf32>, vector<32x349xf32>, vector<32x349xf32>, vector<32x349xf32> -> vector<160x349xf32>
    %c0_7 = arith.constant 0 : index
    %c0_8 = arith.constant 0 : index
    %27 = vector.load %arg4[%c0_7, %c0_8] : memref<64x160xf32, #tpu.memory_space<vmem>>, vector<64x160xf32>
    %cst_9 = arith.constant dense<0.000000e+00> : vector<64x349xf32>
    %28 = tpu.matmul %27, %20, %cst_9 {dimension_numbers = #tpu.dot_dimension_numbers<[1], [0], [0], [1], [0, 0, 1, 1], [], []>} : vector<64x160xf32>, vector<160x349xf32>, vector<64x349xf32> -> vector<64x349xf32>
    %c0_10 = arith.constant 0 : index
    %c0_11 = arith.constant 0 : index
    %29 = vector.load %arg5[%c0_10, %c0_11] : memref<64x1xf32, #tpu.memory_space<vmem>>, vector<64x1xf32>
    %30 = vector.broadcast %29 : vector<64x1xf32> to vector<64x349xf32>
    %31 = arith.addf %28, %30 : vector<64x349xf32>
    %c0_12 = arith.constant 0 : index
    %c0_13 = arith.constant 0 : index
    %32 = vector.load %arg4[%c0_12, %c0_13] : memref<64x160xf32, #tpu.memory_space<vmem>>, vector<64x160xf32>
    %cst_14 = arith.constant dense<0.000000e+00> : vector<64x349xf32>
    %33 = tpu.matmul %32, %26, %cst_14 {dimension_numbers = #tpu.dot_dimension_numbers<[1], [0], [0], [1], [0, 0, 1, 1], [], []>} : vector<64x160xf32>, vector<160x349xf32>, vector<64x349xf32> -> vector<64x349xf32>
    %c0_15 = arith.constant 0 : index
    %c0_16 = arith.constant 0 : index
    %34 = vector.load %arg5[%c0_15, %c0_16] : memref<64x1xf32, #tpu.memory_space<vmem>>, vector<64x1xf32>
    %35 = vector.broadcast %34 : vector<64x1xf32> to vector<64x349xf32>
    %36 = arith.addf %33, %35 : vector<64x349xf32>
    %cst_17 = arith.constant 0.000000e+00 : f32
    %37 = vector.broadcast %cst_17 : f32 to vector<64x349xf32>
    %38 = arith.maximumf %31, %37 : vector<64x349xf32>
    %cst_18 = arith.constant 0.000000e+00 : f32
    %39 = vector.broadcast %cst_18 : f32 to vector<64x349xf32>
    %40 = arith.maximumf %36, %39 : vector<64x349xf32>
    %41 = arith.maximumf %38, %40 : vector<64x349xf32>
    %42 = arith.truncf %41 : vector<64x349xf32> to vector<64x349xbf16>
    %c0_19 = arith.constant 0 : index
    %c0_20 = arith.constant 0 : index
    %c0_21 = arith.constant 0 : index
    %43 = vector.load %arg6[%c0_19, %c0_20, %c0_21] : memref<1x64x349xbf16, #tpu.memory_space<vmem>>, vector<1x64x349xbf16>
    %44 = vector.shape_cast %43 : vector<1x64x349xbf16> to vector<64x349xbf16>
    %45 = vector.shape_cast %42 : vector<64x349xbf16> to vector<1x64x349xbf16>
    tpu.vector_store %arg6[%c0_19, %c0_20, %c0_21], %45 {strides = array<i32>} : memref<1x64x349xbf16, #tpu.memory_space<vmem>>, vector<1x64x349xbf16>,
    return
  }
  func.func @transform_0(%arg0: i32) -> (i32, i32, i32) {
    %c0_i32 = arith.constant 0 : i32
    %c0_i32_0 = arith.constant 0 : i32
    %c0_i32_1 = arith.constant 0 : i32
    return %arg0, %c0_i32, %c0_i32_0 : i32, i32, i32
  }
  func.func @transform_1(%arg0: i32) -> (i32, i32) {
    %c0_i32 = arith.constant 0 : i32
    %c0_i32_0 = arith.constant 0 : i32
    %c0_i32_1 = arith.constant 0 : i32
    return %c0_i32, %c0_i32_0 : i32, i32
  }
  func.func @transform_2(%arg0: i32) -> (i32, i32) {
    %c0_i32 = arith.constant 0 : i32
    %c0_i32_0 = arith.constant 0 : i32
    %c0_i32_1 = arith.constant 0 : i32
    return %c0_i32, %c0_i32_0 : i32, i32
  }
  func.func @transform_3(%arg0: i32) -> (i32, i32) {
    %c0_i32 = arith.constant 0 : i32
    %c0_i32_0 = arith.constant 0 : i32
    %c0_i32_1 = arith.constant 0 : i32
    return %c0_i32, %c0_i32_0 : i32, i32
  }
  func.func @transform_4(%arg0: i32) -> (i32, i32) {
    %c0_i32 = arith.constant 0 : i32
    %c0_i32_0 = arith.constant 0 : i32
    %c0_i32_1 = arith.constant 0 : i32
    return %c0_i32, %c0_i32_0 : i32, i32
  }
  func.func @transform_5(%arg0: i32) -> (i32, i32, i32) {
    %c0_i32 = arith.constant 0 : i32
    %c0_i32_0 = arith.constant 0 : i32
    %c0_i32_1 = arith.constant 0 : i32
    return %arg0, %c0_i32, %c0_i32_0 : i32, i32, i32
  }
}

module attributes {stable_mosaic.version = 11 : i64} {
  func.func @fc1_kernel(%arg0: i32, %arg1: i32, %arg2: memref<2x5632xbf16, #tpu.memory_space<vmem>>, %arg3: memref<5632x256xbf16, #tpu.memory_space<vmem>>, %arg4: memref<1x256xf32, #tpu.memory_space<vmem>>, %arg5: memref<2x256xf32, #tpu.memory_space<vmem>>) attributes {dimension_semantics = [#tpu.dimension_semantics<parallel>, #tpu.dimension_semantics<arbitrary>], iteration_bounds = array<i64: 2, 4>, scalar_prefetch = 0 : i64, scratch_operands = 0 : i64, tpu.core_type = #tpu.core_type<tc>, window_params = [{transform_indices = @transform_0, window_bounds = array<i64: 2, 5632>}, {transform_indices = @transform_1, window_bounds = array<i64: 5632, 256>}, {transform_indices = @transform_2, window_bounds = array<i64: 1, 256>}, {transform_indices = @transform_3, window_bounds = array<i64: 2, 256>}]} {
    %c0_i32 = arith.constant 0 : i32
    %0 = arith.cmpi eq, %arg1, %c0_i32 : i32
    %1 = arith.extui %0 : i1 to i32
    %c0_i32_0 = arith.constant 0 : i32
    %2 = arith.cmpi ne, %1, %c0_i32_0 : i32
    scf.if %2 {
      %c0_8 = arith.constant 0 : index
      %c0_9 = arith.constant 0 : index
      %9 = vector.load %arg4[%c0_8, %c0_9] : memref<1x256xf32, #tpu.memory_space<vmem>>, vector<1x256xf32>
      %10 = vector.shape_cast %9 : vector<1x256xf32> to vector<1x256xf32>
      %11 = vector.broadcast %10 : vector<1x256xf32> to vector<2x256xf32>
      %c0_10 = arith.constant 0 : index
      %c0_11 = arith.constant 0 : index
      %12 = vector.load %arg5[%c0_10, %c0_11] : memref<2x256xf32, #tpu.memory_space<vmem>>, vector<2x256xf32>
      tpu.vector_store %arg5[%c0_10, %c0_11], %11 {strides = array<i32>} : memref<2x256xf32, #tpu.memory_space<vmem>>, vector<2x256xf32>,
    } else {
    }
    %c0 = arith.constant 0 : index
    %c0_1 = arith.constant 0 : index
    %3 = vector.load %arg5[%c0, %c0_1] : memref<2x256xf32, #tpu.memory_space<vmem>>, vector<2x256xf32>
    %c0_2 = arith.constant 0 : index
    %c0_3 = arith.constant 0 : index
    %4 = vector.load %arg2[%c0_2, %c0_3] : memref<2x5632xbf16, #tpu.memory_space<vmem>>, vector<2x5632xbf16>
    %c0_4 = arith.constant 0 : index
    %c0_5 = arith.constant 0 : index
    %5 = vector.load %arg3[%c0_4, %c0_5] : memref<5632x256xbf16, #tpu.memory_space<vmem>>, vector<5632x256xbf16>
    %cst = arith.constant dense<0.000000e+00> : vector<2x256xf32>
    %6 = tpu.matmul %4, %5, %cst {dimension_numbers = #tpu.dot_dimension_numbers<[1], [0], [0], [1], [0, 0, 1, 1], [], []>} : vector<2x5632xbf16>, vector<5632x256xbf16>, vector<2x256xf32> -> vector<2x256xf32>
    %7 = arith.addf %3, %6 : vector<2x256xf32>
    %c0_6 = arith.constant 0 : index
    %c0_7 = arith.constant 0 : index
    %8 = vector.load %arg5[%c0_6, %c0_7] : memref<2x256xf32, #tpu.memory_space<vmem>>, vector<2x256xf32>
    tpu.vector_store %arg5[%c0_6, %c0_7], %7 {strides = array<i32>} : memref<2x256xf32, #tpu.memory_space<vmem>>, vector<2x256xf32>,
    return
  }
  func.func @transform_0(%arg0: i32, %arg1: i32) -> (i32, i32) {
    %c0_i32 = arith.constant 0 : i32
    %c0_i32_0 = arith.constant 0 : i32
    return %c0_i32, %arg1 : i32, i32
  }
  func.func @transform_1(%arg0: i32, %arg1: i32) -> (i32, i32) {
    %c0_i32 = arith.constant 0 : i32
    return %arg1, %arg0 : i32, i32
  }
  func.func @transform_2(%arg0: i32, %arg1: i32) -> (i32, i32) {
    %c0_i32 = arith.constant 0 : i32
    %c0_i32_0 = arith.constant 0 : i32
    return %c0_i32, %arg0 : i32, i32
  }
  func.func @transform_3(%arg0: i32, %arg1: i32) -> (i32, i32) {
    %c0_i32 = arith.constant 0 : i32
    %c0_i32_0 = arith.constant 0 : i32
    return %c0_i32, %arg0 : i32, i32
  }
}

</mosaic_0001>

<llo_original>
// kernel: squeeze.1
$region0: #{squeeze.1}
  %s0 = inlined_call_operand.vmem [shape: f32[2,2816], index: 0, kind: input, shape index: {}]
  %s1 = inlined_call_operand.vmem [shape: f32[2,352,8], index: 1, kind: output, shape index: {}]
  $region1: #{squeeze.1} parent=0
    #allocation0 [shape = 'u8[90112]{0}', space=vmem, size = 0x16000, scoped, tag = 'scoped mem for input reshape']
    %s3 = sshllo.u32 0, 2
    %s4 = smul.addr 2, 21
    %s5 = scalar_lea.vmem %s0, %s4
    %v6 = vld [vmem:[%s5] sm:%s3]
    %s7 = scalar_lea.vmem [#allocation0], 168
    %8 = vst [vmem:[%s7] sm:%s3] %v6
    %s9 = smul.addr 2, 20
    %s10 = scalar_lea.vmem %s0, %s9
    %v11 = vld [vmem:[%s10] sm:%s3]
    %s12 = scalar_lea.vmem [#allocation0], 160
    %13 = vst [vmem:[%s12] sm:%s3] %v11
    %s14 = smul.addr 2, 19
    %s15 = scalar_lea.vmem %s0, %s14
    %v16 = vld [vmem:[%s15] sm:%s3]
    %s17 = scalar_lea.vmem [#allocation0], 152
    %18 = vst [vmem:[%s17] sm:%s3] %v16
    %s19 = smul.addr 2, 18
    %s20 = scalar_lea.vmem %s0, %s19
    %v21 = vld [vmem:[%s20] sm:%s3]
    %s22 = scalar_lea.vmem [#allocation0], 144
    %23 = vst [vmem:[%s22] sm:%s3] %v21
    %s24 = smul.addr 2, 17
    %s25 = scalar_lea.vmem %s0, %s24
    %v26 = vld [vmem:[%s25] sm:%s3]
    %s27 = scalar_lea.vmem [#allocation0], 136
    %28 = vst [vmem:[%s27] sm:%s3] %v26
    %s29 = smul.addr 2, 16
    %s30 = scalar_lea.vmem %s0, %s29
    %v31 = vld [vmem:[%s30] sm:%s3]
    %s32 = scalar_lea.vmem [#allocation0], 128
    %33 = vst [vmem:[%s32] sm:%s3] %v31
    %s34 = smul.addr 2, 15
    %s35 = scalar_lea.vmem %s0, %s34
    %v36 = vld [vmem:[%s35] sm:%s3]
    %s37 = scalar_lea.vmem [#allocation0], 120
    %38 = vst [vmem:[%s37] sm:%s3] %v36
    %s39 = smul.addr 2, 14
    %s40 = scalar_lea.vmem %s0, %s39
    %v41 = vld [vmem:[%s40] sm:%s3]
    %s42 = scalar_lea.vmem [#allocation0], 112
    %43 = vst [vmem:[%s42] sm:%s3] %v41
    %s44 = smul.addr 2, 13
    %s45 = scalar_lea.vmem %s0, %s44
    %v46 = vld [vmem:[%s45] sm:%s3]
    %s47 = scalar_lea.vmem [#allocation0], 104
    %48 = vst [vmem:[%s47] sm:%s3] %v46
    %s49 = smul.addr 2, 12
    %s50 = scalar_lea.vmem %s0, %s49
    %v51 = vld [vmem:[%s50] sm:%s3]
    %s52 = scalar_lea.vmem [#allocation0], 96
    %53 = vst [vmem:[%s52] sm:%s3] %v51
    %s54 = smul.addr 2, 11
    %s55 = scalar_lea.vmem %s0, %s54
    %v56 = vld [vmem:[%s55] sm:%s3]
    %s57 = scalar_lea.vmem [#allocation0], 88
    %58 = vst [vmem:[%s57] sm:%s3] %v56
    %s59 = smul.addr 2, 10
    %s60 = scalar_lea.vmem %s0, %s59
    %v61 = vld [vmem:[%s60] sm:%s3]
    %s62 = scalar_lea.vmem [#allocation0], 80
    %63 = vst [vmem:[%s62] sm:%s3] %v61
    %s64 = smul.addr 2, 9
    %s65 = scalar_lea.vmem %s0, %s64
    %v66 = vld [vmem:[%s65] sm:%s3]
    %s67 = scalar_lea.vmem [#allocation0], 72
    %68 = vst [vmem:[%s67] sm:%s3] %v66
    %s69 = smul.addr 2, 8
    %s70 = scalar_lea.vmem %s0, %s69
    %v71 = vld [vmem:[%s70] sm:%s3]
    %s72 = scalar_lea.vmem [#allocation0], 64
    %73 = vst [vmem:[%s72] sm:%s3] %v71
    %s74 = smul.addr 2, 7
    %s75 = scalar_lea.vmem %s0, %s74
    %v76 = vld [vmem:[%s75] sm:%s3]
    %s77 = scalar_lea.vmem [#allocation0], 56
    %78 = vst [vmem:[%s77] sm:%s3] %v76
    %s79 = smul.addr 2, 6
    %s80 = scalar_lea.vmem %s0, %s79
    %v81 = vld [vmem:[%s80] sm:%s3]
    %s82 = scalar_lea.vmem [#allocation0], 48
    %83 = vst [vmem:[%s82] sm:%s3] %v81
    %s84 = smul.addr 2, 5
    %s85 = scalar_lea.vmem %s0, %s84
    %v86 = vld [vmem:[%s85] sm:%s3]
    %s87 = scalar_lea.vmem [#allocation0], 40
    %88 = vst [vmem:[%s87] sm:%s3] %v86
    %s89 = smul.addr 2, 4
    %s90 = scalar_lea.vmem %s0, %s89
    %v91 = vld [vmem:[%s90] sm:%s3]
    %s92 = scalar_lea.vmem [#allocation0], 32
    %93 = vst [vmem:[%s92] sm:%s3] %v91
    %s94 = smul.addr 2, 3
    %s95 = scalar_lea.vmem %s0, %s94
    %v96 = vld [vmem:[%s95] sm:%s3]
    %s97 = scalar_lea.vmem [#allocation0], 24
    %98 = vst [vmem:[%s97] sm:%s3] %v96
    %s99 = smul.addr 2, 2
    %s100 = scalar_lea.vmem %s0, %s99
    %v101 = vld [vmem:[%s100] sm:%s3]
    %s102 = scalar_lea.vmem [#allocation0], 16
    %103 = vst [vmem:[%s102] sm:%s3] %v101
    %s104 = scalar_lea.vmem %s0, 2
    %v105 = vld [vmem:[%s104] sm:%s3]
    %s106 = scalar_lea.vmem [#allocation0], 8
    %107 = vst [vmem:[%s106] sm:%s3] %v105
    %v108 = vld [vmem:[%s0] sm:%s3]
    %109 = vst [vmem:[#allocation0] sm:%s3] %v108
    %v110 = vld [vmem:[#allocation0] sm:$0x3]
    %vm111 = vcmask 64512
    %112 = vst.msk [vmem:[%s1] sm:$0x1] %vm111, %v110
    %s113 = scalar_lea.vmem %s1, 351
    %114 = vst.msk [vmem:[%s113] sm:$0x2] %vm111, %v110
    %s115 = scalar_lea.vmem [#allocation0], 8
    %v116 = vld [vmem:[%s115] sm:$0x3]
    %vm117 = vcmask 64512
    %s118 = scalar_lea.vmem %s1, 16
    %119 = vst.msk [vmem:[%s118] sm:$0x1] %vm117, %v116
    %s120 = scalar_lea.vmem %s1, 367
    %121 = vst.msk [vmem:[%s120] sm:$0x2] %vm117, %v116
    %s122 = scalar_lea.vmem [#allocation0], 16
    %v123 = vld [vmem:[%s122] sm:$0x3]
    %vm124 = vcmask 64512
    %s125 = scalar_lea.vmem %s1, 32
    %126 = vst.msk [vmem:[%s125] sm:$0x1] %vm124, %v123
    %s127 = scalar_lea.vmem %s1, 383
    %128 = vst.msk [vmem:[%s127] sm:$0x2] %vm124, %v123
    %s129 = scalar_lea.vmem [#allocation0], 24
    %v130 = vld [vmem:[%s129] sm:$0x3]
    %vm131 = vcmask 64512
    %s132 = scalar_lea.vmem %s1, 48
    %133 = vst.msk [vmem:[%s132] sm:$0x1] %vm131, %v130
    %s134 = scalar_lea.vmem %s1, 399
    %135 = vst.msk [vmem:[%s134] sm:$0x2] %vm131, %v130
    %s136 = scalar_lea.vmem [#allocation0], 32
    %v137 = vld [vmem:[%s136] sm:$0x3]
    %vm138 = vcmask 64512
    %s139 = scalar_lea.vmem %s1, 64
    %140 = vst.msk [vmem:[%s139] sm:$0x1] %vm138, %v137
    %s141 = scalar_lea.vmem %s1, 415
    %142 = vst.msk [vmem:[%s141] sm:$0x2] %vm138, %v137
    %s143 = scalar_lea.vmem [#allocation0], 40
    %v144 = vld [vmem:[%s143] sm:$0x3]
    %vm145 = vcmask 64512
    %s146 = scalar_lea.vmem %s1, 80
    %147 = vst.msk [vmem:[%s146] sm:$0x1] %vm145, %v144
    %s148 = scalar_lea.vmem %s1, 431
    %149 = vst.msk [vmem:[%s148] sm:$0x2] %vm145, %v144
    %s150 = scalar_lea.vmem [#allocation0], 48
    %v151 = vld [vmem:[%s150] sm:$0x3]
    %vm152 = vcmask 64512
    %s153 = scalar_lea.vmem %s1, 96
    %154 = vst.msk [vmem:[%s153] sm:$0x1] %vm152, %v151
    %s155 = scalar_lea.vmem %s1, 447
    %156 = vst.msk [vmem:[%s155] sm:$0x2] %vm152, %v151
    %s157 = scalar_lea.vmem [#allocation0], 56
    %v158 = vld [vmem:[%s157] sm:$0x3]
    %vm159 = vcmask 64512
    %s160 = scalar_lea.vmem %s1, 112
    %161 = vst.msk [vmem:[%s160] sm:$0x1] %vm159, %v158
    %s162 = scalar_lea.vmem %s1, 463
    %163 = vst.msk [vmem:[%s162] sm:$0x2] %vm159, %v158
    %s164 = scalar_lea.vmem [#allocation0], 64
    %v165 = vld [vmem:[%s164] sm:$0x3]
    %vm166 = vcmask 64512
    %s167 = scalar_lea.vmem %s1, 128
    %168 = vst.msk [vmem:[%s167] sm:$0x1] %vm166, %v165
    %s169 = scalar_lea.vmem %s1, 479
    %170 = vst.msk [vmem:[%s169] sm:$0x2] %vm166, %v165
    %s171 = scalar_lea.vmem [#allocation0], 72
    %v172 = vld [vmem:[%s171] sm:$0x3]
    %vm173 = vcmask 64512
    %s174 = scalar_lea.vmem %s1, 144
    %175 = vst.msk [vmem:[%s174] sm:$0x1] %vm173, %v172
    %s176 = scalar_lea.vmem %s1, 495
    %177 = vst.msk [vmem:[%s176] sm:$0x2] %vm173, %v172
    %s178 = scalar_lea.vmem [#allocation0], 80
    %v179 = vld [vmem:[%s178] sm:$0x3]
    %vm180 = vcmask 64512
    %s181 = scalar_lea.vmem %s1, 160
    %182 = vst.msk [vmem:[%s181] sm:$0x1] %vm180, %v179
    %s183 = scalar_lea.vmem %s1, 511
    %184 = vst.msk [vmem:[%s183] sm:$0x2] %vm180, %v179
    %s185 = scalar_lea.vmem [#allocation0], 88
    %v186 = vld [vmem:[%s185] sm:$0x3]
    %vm187 = vcmask 64512
    %s188 = scalar_lea.vmem %s1, 176
    %189 = vst.msk [vmem:[%s188] sm:$0x1] %vm187, %v186
    %s190 = scalar_lea.vmem %s1, 527
    %191 = vst.msk [vmem:[%s190] sm:$0x2] %vm187, %v186
    %s192 = scalar_lea.vmem [#allocation0], 96
    %v193 = vld [vmem:[%s192] sm:$0x3]
    %vm194 = vcmask 64512
    %s195 = scalar_lea.vmem %s1, 192
    %196 = vst.msk [vmem:[%s195] sm:$0x1] %vm194, %v193
    %s197 = scalar_lea.vmem %s1, 543
    %198 = vst.msk [vmem:[%s197] sm:$0x2] %vm194, %v193
    %s199 = scalar_lea.vmem [#allocation0], 104
    %v200 = vld [vmem:[%s199] sm:$0x3]
    %vm201 = vcmask 64512
    %s202 = scalar_lea.vmem %s1, 208
    %203 = vst.msk [vmem:[%s202] sm:$0x1] %vm201, %v200
    %s204 = scalar_lea.vmem %s1, 559
    %205 = vst.msk [vmem:[%s204] sm:$0x2] %vm201, %v200
    %s206 = scalar_lea.vmem [#allocation0], 112
    %v207 = vld [vmem:[%s206] sm:$0x3]
    %vm208 = vcmask 64512
    %s209 = scalar_lea.vmem %s1, 224
    %210 = vst.msk [vmem:[%s209] sm:$0x1] %vm208, %v207
    %s211 = scalar_lea.vmem %s1, 575
    %212 = vst.msk [vmem:[%s211] sm:$0x2] %vm208, %v207
    %s213 = scalar_lea.vmem [#allocation0], 120
    %v214 = vld [vmem:[%s213] sm:$0x3]
    %vm215 = vcmask 64512
    %s216 = scalar_lea.vmem %s1, 240
    %217 = vst.msk [vmem:[%s216] sm:$0x1] %vm215, %v214
    %s218 = scalar_lea.vmem %s1, 591
    %219 = vst.msk [vmem:[%s218] sm:$0x2] %vm215, %v214
    %s220 = scalar_lea.vmem [#allocation0], 128
    %v221 = vld [vmem:[%s220] sm:$0x3]
    %vm222 = vcmask 64512
    %s223 = scalar_lea.vmem %s1, 256
    %224 = vst.msk [vmem:[%s223] sm:$0x1] %vm222, %v221
    %s225 = scalar_lea.vmem %s1, 607
    %226 = vst.msk [vmem:[%s225] sm:$0x2] %vm222, %v221
    %s227 = scalar_lea.vmem [#allocation0], 136
    %v228 = vld [vmem:[%s227] sm:$0x3]
    %vm229 = vcmask 64512
    %s230 = scalar_lea.vmem %s1, 272
    %231 = vst.msk [vmem:[%s230] sm:$0x1] %vm229, %v228
    %s232 = scalar_lea.vmem %s1, 623
    %233 = vst.msk [vmem:[%s232] sm:$0x2] %vm229, %v228
    %s234 = scalar_lea.vmem [#allocation0], 144
    %v235 = vld [vmem:[%s234] sm:$0x3]
    %vm236 = vcmask 64512
    %s237 = scalar_lea.vmem %s1, 288
    %238 = vst.msk [vmem:[%s237] sm:$0x1] %vm236, %v235
    %s239 = scalar_lea.vmem %s1, 639
    %240 = vst.msk [vmem:[%s239] sm:$0x2] %vm236, %v235
    %s241 = scalar_lea.vmem [#allocation0], 152
    %v242 = vld [vmem:[%s241] sm:$0x3]
    %vm243 = vcmask 64512
    %s244 = scalar_lea.vmem %s1, 304
    %245 = vst.msk [vmem:[%s244] sm:$0x1] %vm243, %v242
    %s246 = scalar_lea.vmem %s1, 655
    %247 = vst.msk [vmem:[%s246] sm:$0x2] %vm243, %v242
    %s248 = scalar_lea.vmem [#allocation0], 160
    %v249 = vld [vmem:[%s248] sm:$0x3]
    %vm250 = vcmask 64512
    %s251 = scalar_lea.vmem %s1, 320
    %252 = vst.msk [vmem:[%s251] sm:$0x1] %vm250, %v249
    %s253 = scalar_lea.vmem %s1, 671
    %254 = vst.msk [vmem:[%s253] sm:$0x2] %vm250, %v249
    %s255 = scalar_lea.vmem [#allocation0], 168
    %v256 = vld [vmem:[%s255] sm:$0x3]
    %vm257 = vcmask 64512
    %s258 = scalar_lea.vmem %s1, 336
    %259 = vst.msk [vmem:[%s258] sm:$0x1] %vm257, %v256
    %s260 = scalar_lea.vmem %s1, 687
    %261 = vst.msk [vmem:[%s260] sm:$0x2] %vm257, %v256
    %v262 = vld.sshfl [vmem:[#allocation0] sm:$0xff pattern:$0x99999180]
    %s263 = scalar_lea.vmem [#allocation0], 16
    %v264 = vld.sshfl [vmem:[%s263] sm:$0xff pattern:$0x91800000]
    %vm265 = vcmask 1047556
    %v266 = vsel %vm265, %v264, %v262
    %267 = vrot.lane.b32.xlu0 %v266, 120
    %v268 = vpop.permute.xlu0 %267
    %vm269 = vcmask 64512
    %s270 = scalar_lea.vmem %s1, 1
    %271 = vst.msk [vmem:[%s270] ss:$16 sm:$0x3] %vm269, %v268
    %s272 = scalar_lea.vmem %s1, 321
    %273 = vst.msk [vmem:[%s272] ss:$16 sm:$0xc] %vm269, %v268
    %s274 = scalar_lea.vmem %s1, 4294967265
    %275 = vst.msk [vmem:[%s274] ss:$16 sm:$0x30] %vm269, %v268
    %s276 = scalar_lea.vmem %s1, 289
    %277 = vst.msk [vmem:[%s276] ss:$16 sm:$0xc0] %vm269, %v268
    %s278 = scalar_lea.vmem [#allocation0], 32
    %v279 = vld.sshfl [vmem:[%s278] sm:$0xff pattern:$0x99999180]
    %s280 = scalar_lea.vmem [#allocation0], 48
    %v281 = vld.sshfl [vmem:[%s280] sm:$0xff pattern:$0x91800000]
    %vm282 = vcmask 1047556
    %v283 = vsel %vm282, %v281, %v279
    %284 = vrot.lane.b32.xlu0 %v283, 120
    %v285 = vpop.permute.xlu0 %284
    %vm286 = vcmask 64512
    %s287 = scalar_lea.vmem %s1, 65
    %288 = vst.msk [vmem:[%s287] ss:$16 sm:$0x3] %vm286, %v285
    %s289 = scalar_lea.vmem %s1, 385
    %290 = vst.msk [vmem:[%s289] ss:$16 sm:$0xc] %vm286, %v285
    %s291 = scalar_lea.vmem %s1, 33
    %292 = vst.msk [vmem:[%s291] ss:$16 sm:$0x30] %vm286, %v285
    %s293 = scalar_lea.vmem %s1, 353
    %294 = vst.msk [vmem:[%s293] ss:$16 sm:$0xc0] %vm286, %v285
    %s295 = scalar_lea.vmem [#allocation0], 64
    %v296 = vld.sshfl [vmem:[%s295] sm:$0xff pattern:$0x99999180]
    %s297 = scalar_lea.vmem [#allocation0], 80
    %v298 = vld.sshfl [vmem:[%s297] sm:$0xff pattern:$0x91800000]
    %vm299 = vcmask 1047556
    %v300 = vsel %vm299, %v298, %v296
    %301 = vrot.lane.b32.xlu0 %v300, 120
    %v302 = vpop.permute.xlu0 %301
    %vm303 = vcmask 64512
    %s304 = scalar_lea.vmem %s1, 129
    %305 = vst.msk [vmem:[%s304] ss:$16 sm:$0x3] %vm303, %v302
    %s306 = scalar_lea.vmem %s1, 449
    %307 = vst.msk [vmem:[%s306] ss:$16 sm:$0xc] %vm303, %v302
    %s308 = scalar_lea.vmem %s1, 97
    %309 = vst.msk [vmem:[%s308] ss:$16 sm:$0x30] %vm303, %v302
    %s310 = scalar_lea.vmem %s1, 417
    %311 = vst.msk [vmem:[%s310] ss:$16 sm:$0xc0] %vm303, %v302
    %s312 = scalar_lea.vmem [#allocation0], 96
    %v313 = vld.sshfl [vmem:[%s312] sm:$0xff pattern:$0x99999180]
    %s314 = scalar_lea.vmem [#allocation0], 112
    %v315 = vld.sshfl [vmem:[%s314] sm:$0xff pattern:$0x91800000]
    %vm316 = vcmask 1047556
    %v317 = vsel %vm316, %v315, %v313
    %318 = vrot.lane.b32.xlu0 %v317, 120
    %v319 = vpop.permute.xlu0 %318
    %vm320 = vcmask 64512
    %s321 = scalar_lea.vmem %s1, 193
    %322 = vst.msk [vmem:[%s321] ss:$16 sm:$0x3] %vm320, %v319
    %s323 = scalar_lea.vmem %s1, 513
    %324 = vst.msk [vmem:[%s323] ss:$16 sm:$0xc] %vm320, %v319
    %s325 = scalar_lea.vmem %s1, 161
    %326 = vst.msk [vmem:[%s325] ss:$16 sm:$0x30] %vm320, %v319
    %s327 = scalar_lea.vmem %s1, 481
    %328 = vst.msk [vmem:[%s327] ss:$16 sm:$0xc0] %vm320, %v319
    %s329 = scalar_lea.vmem [#allocation0], 128
    %v330 = vld.sshfl [vmem:[%s329] sm:$0xff pattern:$0x99999180]
    %s331 = scalar_lea.vmem [#allocation0], 144
    %v332 = vld.sshfl [vmem:[%s331] sm:$0xff pattern:$0x91800000]
    %vm333 = vcmask 1047556
    %v334 = vsel %vm333, %v332, %v330
    %335 = vrot.lane.b32.xlu0 %v334, 120
    %v336 = vpop.permute.xlu0 %335
    %vm337 = vcmask 64512
    %s338 = scalar_lea.vmem %s1, 257
    %339 = vst.msk [vmem:[%s338] ss:$16 sm:$0x3] %vm337, %v336
    %s340 = scalar_lea.vmem %s1, 577
    %341 = vst.msk [vmem:[%s340] ss:$16 sm:$0xc] %vm337, %v336
    %s342 = scalar_lea.vmem %s1, 225
    %343 = vst.msk [vmem:[%s342] ss:$16 sm:$0x30] %vm337, %v336
    %s344 = scalar_lea.vmem %s1, 545
    %345 = vst.msk [vmem:[%s344] ss:$16 sm:$0xc0] %vm337, %v336
    %s346 = scalar_lea.vmem [#allocation0], 160
    %v347 = vld.sshfl [vmem:[%s346] sm:$0xff pattern:$0x99999180]
    %348 = vrot.lane.b32.xlu0 %v347, 120
    %v349 = vpop.permute.xlu0 %348
    %vm350 = vcmask 64512
    %s351 = scalar_lea.vmem %s1, 321
    %352 = vst.msk [vmem:[%s351] ss:$16 sm:$0x3] %vm350, %v349
    %s353 = scalar_lea.vmem %s1, 641
    %354 = vst.msk [vmem:[%s353] ss:$16 sm:$0xc] %vm350, %v349
    %v355 = vld.sshfl [vmem:[#allocation0] sm:$0xff pattern:$0x99999180]
    %s356 = scalar_lea.vmem [#allocation0], 16
    %v357 = vld.sshfl [vmem:[%s356] sm:$0xff pattern:$0x91800000]
    %vm358 = vcmask 1047556
    %v359 = vsel %vm358, %v357, %v355
    %360 = vrot.lane.b32.xlu0 %v359, 112
    %v361 = vpop.permute.xlu0 %360
    %vm362 = vcmask 64512
    %s363 = scalar_lea.vmem %s1, 2
    %364 = vst.msk [vmem:[%s363] ss:$16 sm:$0x3] %vm362, %v361
    %s365 = scalar_lea.vmem %s1, 322
    %366 = vst.msk [vmem:[%s365] ss:$16 sm:$0xc] %vm362, %v361
    %s367 = scalar_lea.vmem %s1, 4294967266
    %368 = vst.msk [vmem:[%s367] ss:$16 sm:$0x30] %vm362, %v361
    %s369 = scalar_lea.vmem %s1, 290
    %370 = vst.msk [vmem:[%s369] ss:$16 sm:$0xc0] %vm362, %v361
    %s371 = scalar_lea.vmem [#allocation0], 32
    %v372 = vld.sshfl [vmem:[%s371] sm:$0xff pattern:$0x99999180]
    %s373 = scalar_lea.vmem [#allocation0], 48
    %v374 = vld.sshfl [vmem:[%s373] sm:$0xff pattern:$0x91800000]
    %vm375 = vcmask 1047556
    %v376 = vsel %vm375, %v374, %v372
    %377 = vrot.lane.b32.xlu0 %v376, 112
    %v378 = vpop.permute.xlu0 %377
    %vm379 = vcmask 64512
    %s380 = scalar_lea.vmem %s1, 66
    %381 = vst.msk [vmem:[%s380] ss:$16 sm:$0x3] %vm379, %v378
    %s382 = scalar_lea.vmem %s1, 386
    %383 = vst.msk [vmem:[%s382] ss:$16 sm:$0xc] %vm379, %v378
    %s384 = scalar_lea.vmem %s1, 34
    %385 = vst.msk [vmem:[%s384] ss:$16 sm:$0x30] %vm379, %v378
    %s386 = scalar_lea.vmem %s1, 354
    %387 = vst.msk [vmem:[%s386] ss:$16 sm:$0xc0] %vm379, %v378
    %s388 = scalar_lea.vmem [#allocation0], 64
    %v389 = vld.sshfl [vmem:[%s388] sm:$0xff pattern:$0x99999180]
    %s390 = scalar_lea.vmem [#allocation0], 80
    %v391 = vld.sshfl [vmem:[%s390] sm:$0xff pattern:$0x91800000]
    %vm392 = vcmask 1047556
    %v393 = vsel %vm392, %v391, %v389
    %394 = vrot.lane.b32.xlu0 %v393, 112
    %v395 = vpop.permute.xlu0 %394
    %vm396 = vcmask 64512
    %s397 = scalar_lea.vmem %s1, 130
    %398 = vst.msk [vmem:[%s397] ss:$16 sm:$0x3] %vm396, %v395
    %s399 = scalar_lea.vmem %s1, 450
    %400 = vst.msk [vmem:[%s399] ss:$16 sm:$0xc] %vm396, %v395
    %s401 = scalar_lea.vmem %s1, 98
    %402 = vst.msk [vmem:[%s401] ss:$16 sm:$0x30] %vm396, %v395
    %s403 = scalar_lea.vmem %s1, 418
    %404 = vst.msk [vmem:[%s403] ss:$16 sm:$0xc0] %vm396, %v395
    %s405 = scalar_lea.vmem [#allocation0], 96
    %v406 = vld.sshfl [vmem:[%s405] sm:$0xff pattern:$0x99999180]
    %s407 = scalar_lea.vmem [#allocation0], 112
    %v408 = vld.sshfl [vmem:[%s407] sm:$0xff pattern:$0x91800000]
    %vm409 = vcmask 1047556
    %v410 = vsel %vm409, %v408, %v406
    %411 = vrot.lane.b32.xlu0 %v410, 112
    %v412 = vpop.permute.xlu0 %411
    %vm413 = vcmask 64512
    %s414 = scalar_lea.vmem %s1, 194
    %415 = vst.msk [vmem:[%s414] ss:$16 sm:$0x3] %vm413, %v412
    %s416 = scalar_lea.vmem %s1, 514
    %417 = vst.msk [vmem:[%s416] ss:$16 sm:$0xc] %vm413, %v412
    %s418 = scalar_lea.vmem %s1, 162
    %419 = vst.msk [vmem:[%s418] ss:$16 sm:$0x30] %vm413, %v412
    %s420 = scalar_lea.vmem %s1, 482
    %421 = vst.msk [vmem:[%s420] ss:$16 sm:$0xc0] %vm413, %v412
    %s422 = scalar_lea.vmem [#allocation0], 128
    %v423 = vld.sshfl [vmem:[%s422] sm:$0xff pattern:$0x99999180]
    %s424 = scalar_lea.vmem [#allocation0], 144
    %v425 = vld.sshfl [vmem:[%s424] sm:$0xff pattern:$0x91800000]
    %vm426 = vcmask 1047556
    %v427 = vsel %vm426, %v425, %v423
    %428 = vrot.lane.b32.xlu0 %v427, 112
    %v429 = vpop.permute.xlu0 %428
    %vm430 = vcmask 64512
    %s431 = scalar_lea.vmem %s1, 258
    %432 = vst.msk [vmem:[%s431] ss:$16 sm:$0x3] %vm430, %v429
    %s433 = scalar_lea.vmem %s1, 578
    %434 = vst.msk [vmem:[%s433] ss:$16 sm:$0xc] %vm430, %v429
    %s435 = scalar_lea.vmem %s1, 226
    %436 = vst.msk [vmem:[%s435] ss:$16 sm:$0x30] %vm430, %v429
    %s437 = scalar_lea.vmem %s1, 546
    %438 = vst.msk [vmem:[%s437] ss:$16 sm:$0xc0] %vm430, %v429
    %s439 = scalar_lea.vmem [#allocation0], 160
    %v440 = vld.sshfl [vmem:[%s439] sm:$0xff pattern:$0x99999180]
    %441 = vrot.lane.b32.xlu0 %v440, 112
    %v442 = vpop.permute.xlu0 %441
    %vm443 = vcmask 64512
    %s444 = scalar_lea.vmem %s1, 322
    %445 = vst.msk [vmem:[%s444] ss:$16 sm:$0x3] %vm443, %v442
    %s446 = scalar_lea.vmem %s1, 642
    %447 = vst.msk [vmem:[%s446] ss:$16 sm:$0xc] %vm443, %v442
    %v448 = vld.sshfl [vmem:[#allocation0] sm:$0xff pattern:$0x99999180]
    %s449 = scalar_lea.vmem [#allocation0], 16
    %v450 = vld.sshfl [vmem:[%s449] sm:$0xff pattern:$0x91800000]
    %vm451 = vcmask 1047556
    %v452 = vsel %vm451, %v450, %v448
    %453 = vrot.lane.b32.xlu0 %v452, 104
    %v454 = vpop.permute.xlu0 %453
    %vm455 = vcmask 64512
    %s456 = scalar_lea.vmem %s1, 3
    %457 = vst.msk [vmem:[%s456] ss:$16 sm:$0x3] %vm455, %v454
    %s458 = scalar_lea.vmem %s1, 323
    %459 = vst.msk [vmem:[%s458] ss:$16 sm:$0xc] %vm455, %v454
    %s460 = scalar_lea.vmem %s1, 4294967267
    %461 = vst.msk [vmem:[%s460] ss:$16 sm:$0x30] %vm455, %v454
    %s462 = scalar_lea.vmem %s1, 291
    %463 = vst.msk [vmem:[%s462] ss:$16 sm:$0xc0] %vm455, %v454
    %s464 = scalar_lea.vmem [#allocation0], 32
    %v465 = vld.sshfl [vmem:[%s464] sm:$0xff pattern:$0x99999180]
    %s466 = scalar_lea.vmem [#allocation0], 48
    %v467 = vld.sshfl [vmem:[%s466] sm:$0xff pattern:$0x91800000]
    %vm468 = vcmask 1047556
    %v469 = vsel %vm468, %v467, %v465
    %470 = vrot.lane.b32.xlu0 %v469, 104
    %v471 = vpop.permute.xlu0 %470
    %vm472 = vcmask 64512
    %s473 = scalar_lea.vmem %s1, 67
    %474 = vst.msk [vmem:[%s473] ss:$16 sm:$0x3] %vm472, %v471
    %s475 = scalar_lea.vmem %s1, 387
    %476 = vst.msk [vmem:[%s475] ss:$16 sm:$0xc] %vm472, %v471
    %s477 = scalar_lea.vmem %s1, 35
    %478 = vst.msk [vmem:[%s477] ss:$16 sm:$0x30] %vm472, %v471
    %s479 = scalar_lea.vmem %s1, 355
    %480 = vst.msk [vmem:[%s479] ss:$16 sm:$0xc0] %vm472, %v471
    %s481 = scalar_lea.vmem [#allocation0], 64
    %v482 = vld.sshfl [vmem:[%s481] sm:$0xff pattern:$0x99999180]
    %s483 = scalar_lea.vmem [#allocation0], 80
    %v484 = vld.sshfl [vmem:[%s483] sm:$0xff pattern:$0x91800000]
    %vm485 = vcmask 1047556
    %v486 = vsel %vm485, %v484, %v482
    %487 = vrot.lane.b32.xlu0 %v486, 104
    %v488 = vpop.permute.xlu0 %487
    %vm489 = vcmask 64512
    %s490 = scalar_lea.vmem %s1, 131
    %491 = vst.msk [vmem:[%s490] ss:$16 sm:$0x3] %vm489, %v488
    %s492 = scalar_lea.vmem %s1, 451
    %493 = vst.msk [vmem:[%s492] ss:$16 sm:$0xc] %vm489, %v488
    %s494 = scalar_lea.vmem %s1, 99
    %495 = vst.msk [vmem:[%s494] ss:$16 sm:$0x30] %vm489, %v488
    %s496 = scalar_lea.vmem %s1, 419
    %497 = vst.msk [vmem:[%s496] ss:$16 sm:$0xc0] %vm489, %v488
    %s498 = scalar_lea.vmem [#allocation0], 96
    %v499 = vld.sshfl [vmem:[%s498] sm:$0xff pattern:$0x99999180]
    %s500 = scalar_lea.vmem [#allocation0], 112
    %v501 = vld.sshfl [vmem:[%s500] sm:$0xff pattern:$0x91800000]
    %vm502 = vcmask 1047556
    %v503 = vsel %vm502, %v501, %v499
    %504 = vrot.lane.b32.xlu0 %v503, 104
    %v505 = vpop.permute.xlu0 %504
    %vm506 = vcmask 64512
    %s507 = scalar_lea.vmem %s1, 195
    %508 = vst.msk [vmem:[%s507] ss:$16 sm:$0x3] %vm506, %v505
    %s509 = scalar_lea.vmem %s1, 515
    %510 = vst.msk [vmem:[%s509] ss:$16 sm:$0xc] %vm506, %v505
    %s511 = scalar_lea.vmem %s1, 163
    %512 = vst.msk [vmem:[%s511] ss:$16 sm:$0x30] %vm506, %v505
    %s513 = scalar_lea.vmem %s1, 483
    %514 = vst.msk [vmem:[%s513] ss:$16 sm:$0xc0] %vm506, %v505
    %s515 = scalar_lea.vmem [#allocation0], 128
    %v516 = vld.sshfl [vmem:[%s515] sm:$0xff pattern:$0x99999180]
    %s517 = scalar_lea.vmem [#allocation0], 144
    %v518 = vld.sshfl [vmem:[%s517] sm:$0xff pattern:$0x91800000]
    %vm519 = vcmask 1047556
    %v520 = vsel %vm519, %v518, %v516
    %521 = vrot.lane.b32.xlu0 %v520, 104
    %v522 = vpop.permute.xlu0 %521
    %vm523 = vcmask 64512
    %s524 = scalar_lea.vmem %s1, 259
    %525 = vst.msk [vmem:[%s524] ss:$16 sm:$0x3] %vm523, %v522
    %s526 = scalar_lea.vmem %s1, 579
    %527 = vst.msk [vmem:[%s526] ss:$16 sm:$0xc] %vm523, %v522
    %s528 = scalar_lea.vmem %s1, 227
    %529 = vst.msk [vmem:[%s528] ss:$16 sm:$0x30] %vm523, %v522
    %s530 = scalar_lea.vmem %s1, 547
    %531 = vst.msk [vmem:[%s530] ss:$16 sm:$0xc0] %vm523, %v522
    %s532 = scalar_lea.vmem [#allocation0], 160
    %v533 = vld.sshfl [vmem:[%s532] sm:$0xff pattern:$0x99999180]
    %534 = vrot.lane.b32.xlu0 %v533, 104
    %v535 = vpop.permute.xlu0 %534
    %vm536 = vcmask 64512
    %s537 = scalar_lea.vmem %s1, 323
    %538 = vst.msk [vmem:[%s537] ss:$16 sm:$0x3] %vm536, %v535
    %s539 = scalar_lea.vmem %s1, 643
    %540 = vst.msk [vmem:[%s539] ss:$16 sm:$0xc] %vm536, %v535
    %v541 = vld.sshfl [vmem:[#allocation0] sm:$0xff pattern:$0x99999180]
    %s542 = scalar_lea.vmem [#allocation0], 16
    %v543 = vld.sshfl [vmem:[%s542] sm:$0xff pattern:$0x91800000]
    %vm544 = vcmask 1047556
    %v545 = vsel %vm544, %v543, %v541
    %546 = vrot.lane.b32.xlu0 %v545, 96
    %v547 = vpop.permute.xlu0 %546
    %vm548 = vcmask 64512
    %s549 = scalar_lea.vmem %s1, 4
    %550 = vst.msk [vmem:[%s549] ss:$16 sm:$0x3] %vm548, %v547
    %s551 = scalar_lea.vmem %s1, 324
    %552 = vst.msk [vmem:[%s551] ss:$16 sm:$0xc] %vm548, %v547
    %s553 = scalar_lea.vmem %s1, 4294967268
    %554 = vst.msk [vmem:[%s553] ss:$16 sm:$0x30] %vm548, %v547
    %s555 = scalar_lea.vmem %s1, 292
    %556 = vst.msk [vmem:[%s555] ss:$16 sm:$0xc0] %vm548, %v547
    %s557 = scalar_lea.vmem [#allocation0], 32
    %v558 = vld.sshfl [vmem:[%s557] sm:$0xff pattern:$0x99999180]
    %s559 = scalar_lea.vmem [#allocation0], 48
    %v560 = vld.sshfl [vmem:[%s559] sm:$0xff pattern:$0x91800000]
    %vm561 = vcmask 1047556
    %v562 = vsel %vm561, %v560, %v558
    %563 = vrot.lane.b32.xlu0 %v562, 96
    %v564 = vpop.permute.xlu0 %563
    %vm565 = vcmask 64512
    %s566 = scalar_lea.vmem %s1, 68
    %567 = vst.msk [vmem:[%s566] ss:$16 sm:$0x3] %vm565, %v564
    %s568 = scalar_lea.vmem %s1, 388
    %569 = vst.msk [vmem:[%s568] ss:$16 sm:$0xc] %vm565, %v564
    %s570 = scalar_lea.vmem %s1, 36
    %571 = vst.msk [vmem:[%s570] ss:$16 sm:$0x30] %vm565, %v564
    %s572 = scalar_lea.vmem %s1, 356
    %573 = vst.msk [vmem:[%s572] ss:$16 sm:$0xc0] %vm565, %v564
    %s574 = scalar_lea.vmem [#allocation0], 64
    %v575 = vld.sshfl [vmem:[%s574] sm:$0xff pattern:$0x99999180]
    %s576 = scalar_lea.vmem [#allocation0], 80
    %v577 = vld.sshfl [vmem:[%s576] sm:$0xff pattern:$0x91800000]
    %vm578 = vcmask 1047556
    %v579 = vsel %vm578, %v577, %v575
    %580 = vrot.lane.b32.xlu0 %v579, 96
    %v581 = vpop.permute.xlu0 %580
    %vm582 = vcmask 64512
    %s583 = scalar_lea.vmem %s1, 132
    %584 = vst.msk [vmem:[%s583] ss:$16 sm:$0x3] %vm582, %v581
    %s585 = scalar_lea.vmem %s1, 452
    %586 = vst.msk [vmem:[%s585] ss:$16 sm:$0xc] %vm582, %v581
    %s587 = scalar_lea.vmem %s1, 100
    %588 = vst.msk [vmem:[%s587] ss:$16 sm:$0x30] %vm582, %v581
    %s589 = scalar_lea.vmem %s1, 420
    %590 = vst.msk [vmem:[%s589] ss:$16 sm:$0xc0] %vm582, %v581
    %s591 = scalar_lea.vmem [#allocation0], 96
    %v592 = vld.sshfl [vmem:[%s591] sm:$0xff pattern:$0x99999180]
    %s593 = scalar_lea.vmem [#allocation0], 112
    %v594 = vld.sshfl [vmem:[%s593] sm:$0xff pattern:$0x91800000]
    %vm595 = vcmask 1047556
    %v596 = vsel %vm595, %v594, %v592
    %597 = vrot.lane.b32.xlu0 %v596, 96
    %v598 = vpop.permute.xlu0 %597
    %vm599 = vcmask 64512
    %s600 = scalar_lea.vmem %s1, 196
    %601 = vst.msk [vmem:[%s600] ss:$16 sm:$0x3] %vm599, %v598
    %s602 = scalar_lea.vmem %s1, 516
    %603 = vst.msk [vmem:[%s602] ss:$16 sm:$0xc] %vm599, %v598
    %s604 = scalar_lea.vmem %s1, 164
    %605 = vst.msk [vmem:[%s604] ss:$16 sm:$0x30] %vm599, %v598
    %s606 = scalar_lea.vmem %s1, 484
    %607 = vst.msk [vmem:[%s606] ss:$16 sm:$0xc0] %vm599, %v598
    %s608 = scalar_lea.vmem [#allocation0], 128
    %v609 = vld.sshfl [vmem:[%s608] sm:$0xff pattern:$0x99999180]
    %s610 = scalar_lea.vmem [#allocation0], 144
    %v611 = vld.sshfl [vmem:[%s610] sm:$0xff pattern:$0x91800000]
    %vm612 = vcmask 1047556
    %v613 = vsel %vm612, %v611, %v609
    %614 = vrot.lane.b32.xlu0 %v613, 96
    %v615 = vpop.permute.xlu0 %614
    %vm616 = vcmask 64512
    %s617 = scalar_lea.vmem %s1, 260
    %618 = vst.msk [vmem:[%s617] ss:$16 sm:$0x3] %vm616, %v615
    %s619 = scalar_lea.vmem %s1, 580
    %620 = vst.msk [vmem:[%s619] ss:$16 sm:$0xc] %vm616, %v615
    %s621 = scalar_lea.vmem %s1, 228
    %622 = vst.msk [vmem:[%s621] ss:$16 sm:$0x30] %vm616, %v615
    %s623 = scalar_lea.vmem %s1, 548
    %624 = vst.msk [vmem:[%s623] ss:$16 sm:$0xc0] %vm616, %v615
    %s625 = scalar_lea.vmem [#allocation0], 160
    %v626 = vld.sshfl [vmem:[%s625] sm:$0xff pattern:$0x99999180]
    %627 = vrot.lane.b32.xlu0 %v626, 96
    %v628 = vpop.permute.xlu0 %627
    %vm629 = vcmask 64512
    %s630 = scalar_lea.vmem %s1, 324
    %631 = vst.msk [vmem:[%s630] ss:$16 sm:$0x3] %vm629, %v628
    %s632 = scalar_lea.vmem %s1, 644
    %633 = vst.msk [vmem:[%s632] ss:$16 sm:$0xc] %vm629, %v628
    %v634 = vld.sshfl [vmem:[#allocation0] sm:$0xff pattern:$0x99999180]
    %s635 = scalar_lea.vmem [#allocation0], 16
    %v636 = vld.sshfl [vmem:[%s635] sm:$0xff pattern:$0x91800000]
    %vm637 = vcmask 1047556
    %v638 = vsel %vm637, %v636, %v634
    %639 = vrot.lane.b32.xlu0 %v638, 88
    %v640 = vpop.permute.xlu0 %639
    %vm641 = vcmask 64512
    %s642 = scalar_lea.vmem %s1, 5
    %643 = vst.msk [vmem:[%s642] ss:$16 sm:$0x3] %vm641, %v640
    %s644 = scalar_lea.vmem %s1, 325
    %645 = vst.msk [vmem:[%s644] ss:$16 sm:$0xc] %vm641, %v640
    %s646 = scalar_lea.vmem %s1, 4294967269
    %647 = vst.msk [vmem:[%s646] ss:$16 sm:$0x30] %vm641, %v640
    %s648 = scalar_lea.vmem %s1, 293
    %649 = vst.msk [vmem:[%s648] ss:$16 sm:$0xc0] %vm641, %v640
    %s650 = scalar_lea.vmem [#allocation0], 32
    %v651 = vld.sshfl [vmem:[%s650] sm:$0xff pattern:$0x99999180]
    %s652 = scalar_lea.vmem [#allocation0], 48
    %v653 = vld.sshfl [vmem:[%s652] sm:$0xff pattern:$0x91800000]
    %vm654 = vcmask 1047556
    %v655 = vsel %vm654, %v653, %v651
    %656 = vrot.lane.b32.xlu0 %v655, 88
    %v657 = vpop.permute.xlu0 %656
    %vm658 = vcmask 64512
    %s659 = scalar_lea.vmem %s1, 69
    %660 = vst.msk [vmem:[%s659] ss:$16 sm:$0x3] %vm658, %v657
    %s661 = scalar_lea.vmem %s1, 389
    %662 = vst.msk [vmem:[%s661] ss:$16 sm:$0xc] %vm658, %v657
    %s663 = scalar_lea.vmem %s1, 37
    %664 = vst.msk [vmem:[%s663] ss:$16 sm:$0x30] %vm658, %v657
    %s665 = scalar_lea.vmem %s1, 357
    %666 = vst.msk [vmem:[%s665] ss:$16 sm:$0xc0] %vm658, %v657
    %s667 = scalar_lea.vmem [#allocation0], 64
    %v668 = vld.sshfl [vmem:[%s667] sm:$0xff pattern:$0x99999180]
    %s669 = scalar_lea.vmem [#allocation0], 80
    %v670 = vld.sshfl [vmem:[%s669] sm:$0xff pattern:$0x91800000]
    %vm671 = vcmask 1047556
    %v672 = vsel %vm671, %v670, %v668
    %673 = vrot.lane.b32.xlu0 %v672, 88
    %v674 = vpop.permute.xlu0 %673
    %vm675 = vcmask 64512
    %s676 = scalar_lea.vmem %s1, 133
    %677 = vst.msk [vmem:[%s676] ss:$16 sm:$0x3] %vm675, %v674
    %s678 = scalar_lea.vmem %s1, 453
    %679 = vst.msk [vmem:[%s678] ss:$16 sm:$0xc] %vm675, %v674
    %s680 = scalar_lea.vmem %s1, 101
    %681 = vst.msk [vmem:[%s680] ss:$16 sm:$0x30] %vm675, %v674
    %s682 = scalar_lea.vmem %s1, 421
    %683 = vst.msk [vmem:[%s682] ss:$16 sm:$0xc0] %vm675, %v674
    %s684 = scalar_lea.vmem [#allocation0], 96
    %v685 = vld.sshfl [vmem:[%s684] sm:$0xff pattern:$0x99999180]
    %s686 = scalar_lea.vmem [#allocation0], 112
    %v687 = vld.sshfl [vmem:[%s686] sm:$0xff pattern:$0x91800000]
    %vm688 = vcmask 1047556
    %v689 = vsel %vm688, %v687, %v685
    %690 = vrot.lane.b32.xlu0 %v689, 88
    %v691 = vpop.permute.xlu0 %690
    %vm692 = vcmask 64512
    %s693 = scalar_lea.vmem %s1, 197
    %694 = vst.msk [vmem:[%s693] ss:$16 sm:$0x3] %vm692, %v691
    %s695 = scalar_lea.vmem %s1, 517
    %696 = vst.msk [vmem:[%s695] ss:$16 sm:$0xc] %vm692, %v691
    %s697 = scalar_lea.vmem %s1, 165
    %698 = vst.msk [vmem:[%s697] ss:$16 sm:$0x30] %vm692, %v691
    %s699 = scalar_lea.vmem %s1, 485
    %700 = vst.msk [vmem:[%s699] ss:$16 sm:$0xc0] %vm692, %v691
    %s701 = scalar_lea.vmem [#allocation0], 128
    %v702 = vld.sshfl [vmem:[%s701] sm:$0xff pattern:$0x99999180]
    %s703 = scalar_lea.vmem [#allocation0], 144
    %v704 = vld.sshfl [vmem:[%s703] sm:$0xff pattern:$0x91800000]
    %vm705 = vcmask 1047556
    %v706 = vsel %vm705, %v704, %v702
    %707 = vrot.lane.b32.xlu0 %v706, 88
    %v708 = vpop.permute.xlu0 %707
    %vm709 = vcmask 64512
    %s710 = scalar_lea.vmem %s1, 261
    %711 = vst.msk [vmem:[%s710] ss:$16 sm:$0x3] %vm709, %v708
    %s712 = scalar_lea.vmem %s1, 581
    %713 = vst.msk [vmem:[%s712] ss:$16 sm:$0xc] %vm709, %v708
    %s714 = scalar_lea.vmem %s1, 229
    %715 = vst.msk [vmem:[%s714] ss:$16 sm:$0x30] %vm709, %v708
    %s716 = scalar_lea.vmem %s1, 549
    %717 = vst.msk [vmem:[%s716] ss:$16 sm:$0xc0] %vm709, %v708
    %s718 = scalar_lea.vmem [#allocation0], 160
    %v719 = vld.sshfl [vmem:[%s718] sm:$0xff pattern:$0x99999180]
    %720 = vrot.lane.b32.xlu0 %v719, 88
    %v721 = vpop.permute.xlu0 %720
    %vm722 = vcmask 64512
    %s723 = scalar_lea.vmem %s1, 325
    %724 = vst.msk [vmem:[%s723] ss:$16 sm:$0x3] %vm722, %v721
    %s725 = scalar_lea.vmem %s1, 645
    %726 = vst.msk [vmem:[%s725] ss:$16 sm:$0xc] %vm722, %v721
    %v727 = vld.sshfl [vmem:[#allocation0] sm:$0xff pattern:$0x99999180]
    %s728 = scalar_lea.vmem [#allocation0], 16
    %v729 = vld.sshfl [vmem:[%s728] sm:$0xff pattern:$0x91800000]
    %vm730 = vcmask 1047556
    %v731 = vsel %vm730, %v729, %v727
    %732 = vrot.lane.b32.xlu0 %v731, 80
    %v733 = vpop.permute.xlu0 %732
    %vm734 = vcmask 64512
    %s735 = scalar_lea.vmem %s1, 6
    %736 = vst.msk [vmem:[%s735] ss:$16 sm:$0x3] %vm734, %v733
    %s737 = scalar_lea.vmem %s1, 326
    %738 = vst.msk [vmem:[%s737] ss:$16 sm:$0xc] %vm734, %v733
    %s739 = scalar_lea.vmem %s1, 4294967270
    %740 = vst.msk [vmem:[%s739] ss:$16 sm:$0x30] %vm734, %v733
    %s741 = scalar_lea.vmem %s1, 294
    %742 = vst.msk [vmem:[%s741] ss:$16 sm:$0xc0] %vm734, %v733
    %s743 = scalar_lea.vmem [#allocation0], 32
    %v744 = vld.sshfl [vmem:[%s743] sm:$0xff pattern:$0x99999180]
    %s745 = scalar_lea.vmem [#allocation0], 48
    %v746 = vld.sshfl [vmem:[%s745] sm:$0xff pattern:$0x91800000]
    %vm747 = vcmask 1047556
    %v748 = vsel %vm747, %v746, %v744
    %749 = vrot.lane.b32.xlu0 %v748, 80
    %v750 = vpop.permute.xlu0 %749
    %vm751 = vcmask 64512
    %s752 = scalar_lea.vmem %s1, 70
    %753 = vst.msk [vmem:[%s752] ss:$16 sm:$0x3] %vm751, %v750
    %s754 = scalar_lea.vmem %s1, 390
    %755 = vst.msk [vmem:[%s754] ss:$16 sm:$0xc] %vm751, %v750
    %s756 = scalar_lea.vmem %s1, 38
    %757 = vst.msk [vmem:[%s756] ss:$16 sm:$0x30] %vm751, %v750
    %s758 = scalar_lea.vmem %s1, 358
    %759 = vst.msk [vmem:[%s758] ss:$16 sm:$0xc0] %vm751, %v750
    %s760 = scalar_lea.vmem [#allocation0], 64
    %v761 = vld.sshfl [vmem:[%s760] sm:$0xff pattern:$0x99999180]
    %s762 = scalar_lea.vmem [#allocation0], 80
    %v763 = vld.sshfl [vmem:[%s762] sm:$0xff pattern:$0x91800000]
    %vm764 = vcmask 1047556
    %v765 = vsel %vm764, %v763, %v761
    %766 = vrot.lane.b32.xlu0 %v765, 80
    %v767 = vpop.permute.xlu0 %766
    %vm768 = vcmask 64512
    %s769 = scalar_lea.vmem %s1, 134
    %770 = vst.msk [vmem:[%s769] ss:$16 sm:$0x3] %vm768, %v767
    %s771 = scalar_lea.vmem %s1, 454
    %772 = vst.msk [vmem:[%s771] ss:$16 sm:$0xc] %vm768, %v767
    %s773 = scalar_lea.vmem %s1, 102
    %774 = vst.msk [vmem:[%s773] ss:$16 sm:$0x30] %vm768, %v767
    %s775 = scalar_lea.vmem %s1, 422
    %776 = vst.msk [vmem:[%s775] ss:$16 sm:$0xc0] %vm768, %v767
    %s777 = scalar_lea.vmem [#allocation0], 96
    %v778 = vld.sshfl [vmem:[%s777] sm:$0xff pattern:$0x99999180]
    %s779 = scalar_lea.vmem [#allocation0], 112
    %v780 = vld.sshfl [vmem:[%s779] sm:$0xff pattern:$0x91800000]
    %vm781 = vcmask 1047556
    %v782 = vsel %vm781, %v780, %v778
    %783 = vrot.lane.b32.xlu0 %v782, 80
    %v784 = vpop.permute.xlu0 %783
    %vm785 = vcmask 64512
    %s786 = scalar_lea.vmem %s1, 198
    %787 = vst.msk [vmem:[%s786] ss:$16 sm:$0x3] %vm785, %v784
    %s788 = scalar_lea.vmem %s1, 518
    %789 = vst.msk [vmem:[%s788] ss:$16 sm:$0xc] %vm785, %v784
    %s790 = scalar_lea.vmem %s1, 166
    %791 = vst.msk [vmem:[%s790] ss:$16 sm:$0x30] %vm785, %v784
    %s792 = scalar_lea.vmem %s1, 486
    %793 = vst.msk [vmem:[%s792] ss:$16 sm:$0xc0] %vm785, %v784
    %s794 = scalar_lea.vmem [#allocation0], 128
    %v795 = vld.sshfl [vmem:[%s794] sm:$0xff pattern:$0x99999180]
    %s796 = scalar_lea.vmem [#allocation0], 144
    %v797 = vld.sshfl [vmem:[%s796] sm:$0xff pattern:$0x91800000]
    %vm798 = vcmask 1047556
    %v799 = vsel %vm798, %v797, %v795
    %800 = vrot.lane.b32.xlu0 %v799, 80
    %v801 = vpop.permute.xlu0 %800
    %vm802 = vcmask 64512
    %s803 = scalar_lea.vmem %s1, 262
    %804 = vst.msk [vmem:[%s803] ss:$16 sm:$0x3] %vm802, %v801
    %s805 = scalar_lea.vmem %s1, 582
    %806 = vst.msk [vmem:[%s805] ss:$16 sm:$0xc] %vm802, %v801
    %s807 = scalar_lea.vmem %s1, 230
    %808 = vst.msk [vmem:[%s807] ss:$16 sm:$0x30] %vm802, %v801
    %s809 = scalar_lea.vmem %s1, 550
    %810 = vst.msk [vmem:[%s809] ss:$16 sm:$0xc0] %vm802, %v801
    %s811 = scalar_lea.vmem [#allocation0], 160
    %v812 = vld.sshfl [vmem:[%s811] sm:$0xff pattern:$0x99999180]
    %813 = vrot.lane.b32.xlu0 %v812, 80
    %v814 = vpop.permute.xlu0 %813
    %vm815 = vcmask 64512
    %s816 = scalar_lea.vmem %s1, 326
    %817 = vst.msk [vmem:[%s816] ss:$16 sm:$0x3] %vm815, %v814
    %s818 = scalar_lea.vmem %s1, 646
    %819 = vst.msk [vmem:[%s818] ss:$16 sm:$0xc] %vm815, %v814
    %v820 = vld.sshfl [vmem:[#allocation0] sm:$0xff pattern:$0x99999180]
    %s821 = scalar_lea.vmem [#allocation0], 16
    %v822 = vld.sshfl [vmem:[%s821] sm:$0xff pattern:$0x91800000]
    %vm823 = vcmask 1047556
    %v824 = vsel %vm823, %v822, %v820
    %825 = vrot.lane.b32.xlu0 %v824, 72
    %v826 = vpop.permute.xlu0 %825
    %vm827 = vcmask 64512
    %s828 = scalar_lea.vmem %s1, 7
    %829 = vst.msk [vmem:[%s828] ss:$16 sm:$0x3] %vm827, %v826
    %s830 = scalar_lea.vmem %s1, 327
    %831 = vst.msk [vmem:[%s830] ss:$16 sm:$0xc] %vm827, %v826
    %s832 = scalar_lea.vmem %s1, 4294967271
    %833 = vst.msk [vmem:[%s832] ss:$16 sm:$0x30] %vm827, %v826
    %s834 = scalar_lea.vmem %s1, 295
    %835 = vst.msk [vmem:[%s834] ss:$16 sm:$0xc0] %vm827, %v826
    %s836 = scalar_lea.vmem [#allocation0], 32
    %v837 = vld.sshfl [vmem:[%s836] sm:$0xff pattern:$0x99999180]
    %s838 = scalar_lea.vmem [#allocation0], 48
    %v839 = vld.sshfl [vmem:[%s838] sm:$0xff pattern:$0x91800000]
    %vm840 = vcmask 1047556
    %v841 = vsel %vm840, %v839, %v837
    %842 = vrot.lane.b32.xlu0 %v841, 72
    %v843 = vpop.permute.xlu0 %842
    %vm844 = vcmask 64512
    %s845 = scalar_lea.vmem %s1, 71
    %846 = vst.msk [vmem:[%s845] ss:$16 sm:$0x3] %vm844, %v843
    %s847 = scalar_lea.vmem %s1, 391
    %848 = vst.msk [vmem:[%s847] ss:$16 sm:$0xc] %vm844, %v843
    %s849 = scalar_lea.vmem %s1, 39
    %850 = vst.msk [vmem:[%s849] ss:$16 sm:$0x30] %vm844, %v843
    %s851 = scalar_lea.vmem %s1, 359
    %852 = vst.msk [vmem:[%s851] ss:$16 sm:$0xc0] %vm844, %v843
    %s853 = scalar_lea.vmem [#allocation0], 64
    %v854 = vld.sshfl [vmem:[%s853] sm:$0xff pattern:$0x99999180]
    %s855 = scalar_lea.vmem [#allocation0], 80
    %v856 = vld.sshfl [vmem:[%s855] sm:$0xff pattern:$0x91800000]
    %vm857 = vcmask 1047556
    %v858 = vsel %vm857, %v856, %v854
    %859 = vrot.lane.b32.xlu0 %v858, 72
    %v860 = vpop.permute.xlu0 %859
    %vm861 = vcmask 64512
    %s862 = scalar_lea.vmem %s1, 135
    %863 = vst.msk [vmem:[%s862] ss:$16 sm:$0x3] %vm861, %v860
    %s864 = scalar_lea.vmem %s1, 455
    %865 = vst.msk [vmem:[%s864] ss:$16 sm:$0xc] %vm861, %v860
    %s866 = scalar_lea.vmem %s1, 103
    %867 = vst.msk [vmem:[%s866] ss:$16 sm:$0x30] %vm861, %v860
    %s868 = scalar_lea.vmem %s1, 423
    %869 = vst.msk [vmem:[%s868] ss:$16 sm:$0xc0] %vm861, %v860
    %s870 = scalar_lea.vmem [#allocation0], 96
    %v871 = vld.sshfl [vmem:[%s870] sm:$0xff pattern:$0x99999180]
    %s872 = scalar_lea.vmem [#allocation0], 112
    %v873 = vld.sshfl [vmem:[%s872] sm:$0xff pattern:$0x91800000]
    %vm874 = vcmask 1047556
    %v875 = vsel %vm874, %v873, %v871
    %876 = vrot.lane.b32.xlu0 %v875, 72
    %v877 = vpop.permute.xlu0 %876
    %vm878 = vcmask 64512
    %s879 = scalar_lea.vmem %s1, 199
    %880 = vst.msk [vmem:[%s879] ss:$16 sm:$0x3] %vm878, %v877
    %s881 = scalar_lea.vmem %s1, 519
    %882 = vst.msk [vmem:[%s881] ss:$16 sm:$0xc] %vm878, %v877
    %s883 = scalar_lea.vmem %s1, 167
    %884 = vst.msk [vmem:[%s883] ss:$16 sm:$0x30] %vm878, %v877
    %s885 = scalar_lea.vmem %s1, 487
    %886 = vst.msk [vmem:[%s885] ss:$16 sm:$0xc0] %vm878, %v877
    %s887 = scalar_lea.vmem [#allocation0], 128
    %v888 = vld.sshfl [vmem:[%s887] sm:$0xff pattern:$0x99999180]
    %s889 = scalar_lea.vmem [#allocation0], 144
    %v890 = vld.sshfl [vmem:[%s889] sm:$0xff pattern:$0x91800000]
    %vm891 = vcmask 1047556
    %v892 = vsel %vm891, %v890, %v888
    %893 = vrot.lane.b32.xlu0 %v892, 72
    %v894 = vpop.permute.xlu0 %893
    %vm895 = vcmask 64512
    %s896 = scalar_lea.vmem %s1, 263
    %897 = vst.msk [vmem:[%s896] ss:$16 sm:$0x3] %vm895, %v894
    %s898 = scalar_lea.vmem %s1, 583
    %899 = vst.msk [vmem:[%s898] ss:$16 sm:$0xc] %vm895, %v894
    %s900 = scalar_lea.vmem %s1, 231
    %901 = vst.msk [vmem:[%s900] ss:$16 sm:$0x30] %vm895, %v894
    %s902 = scalar_lea.vmem %s1, 551
    %903 = vst.msk [vmem:[%s902] ss:$16 sm:$0xc0] %vm895, %v894
    %s904 = scalar_lea.vmem [#allocation0], 160
    %v905 = vld.sshfl [vmem:[%s904] sm:$0xff pattern:$0x99999180]
    %906 = vrot.lane.b32.xlu0 %v905, 72
    %v907 = vpop.permute.xlu0 %906
    %vm908 = vcmask 64512
    %s909 = scalar_lea.vmem %s1, 327
    %910 = vst.msk [vmem:[%s909] ss:$16 sm:$0x3] %vm908, %v907
    %s911 = scalar_lea.vmem %s1, 647
    %912 = vst.msk [vmem:[%s911] ss:$16 sm:$0xc] %vm908, %v907
    %v913 = vld.sshfl [vmem:[#allocation0] sm:$0xff pattern:$0x99999180]
    %s914 = scalar_lea.vmem [#allocation0], 16
    %v915 = vld.sshfl [vmem:[%s914] sm:$0xff pattern:$0x91800000]
    %vm916 = vcmask 1047556
    %v917 = vsel %vm916, %v915, %v913
    %918 = vrot.lane.b32.xlu0 %v917, 64
    %v919 = vpop.permute.xlu0 %918
    %vm920 = vcmask 64512
    %s921 = scalar_lea.vmem %s1, 8
    %922 = vst.msk [vmem:[%s921] ss:$16 sm:$0x3] %vm920, %v919
    %s923 = scalar_lea.vmem %s1, 328
    %924 = vst.msk [vmem:[%s923] ss:$16 sm:$0xc] %vm920, %v919
    %s925 = scalar_lea.vmem %s1, 4294967272
    %926 = vst.msk [vmem:[%s925] ss:$16 sm:$0x30] %vm920, %v919
    %s927 = scalar_lea.vmem %s1, 296
    %928 = vst.msk [vmem:[%s927] ss:$16 sm:$0xc0] %vm920, %v919
    %s929 = scalar_lea.vmem [#allocation0], 32
    %v930 = vld.sshfl [vmem:[%s929] sm:$0xff pattern:$0x99999180]
    %s931 = scalar_lea.vmem [#allocation0], 48
    %v932 = vld.sshfl [vmem:[%s931] sm:$0xff pattern:$0x91800000]
    %vm933 = vcmask 1047556
    %v934 = vsel %vm933, %v932, %v930
    %935 = vrot.lane.b32.xlu0 %v934, 64
    %v936 = vpop.permute.xlu0 %935
    %vm937 = vcmask 64512
    %s938 = scalar_lea.vmem %s1, 72
    %939 = vst.msk [vmem:[%s938] ss:$16 sm:$0x3] %vm937, %v936
    %s940 = scalar_lea.vmem %s1, 392
    %941 = vst.msk [vmem:[%s940] ss:$16 sm:$0xc] %vm937, %v936
    %s942 = scalar_lea.vmem %s1, 40
    %943 = vst.msk [vmem:[%s942] ss:$16 sm:$0x30] %vm937, %v936
    %s944 = scalar_lea.vmem %s1, 360
    %945 = vst.msk [vmem:[%s944] ss:$16 sm:$0xc0] %vm937, %v936
    %s946 = scalar_lea.vmem [#allocation0], 64
    %v947 = vld.sshfl [vmem:[%s946] sm:$0xff pattern:$0x99999180]
    %s948 = scalar_lea.vmem [#allocation0], 80
    %v949 = vld.sshfl [vmem:[%s948] sm:$0xff pattern:$0x91800000]
    %vm950 = vcmask 1047556
    %v951 = vsel %vm950, %v949, %v947
    %952 = vrot.lane.b32.xlu0 %v951, 64
    %v953 = vpop.permute.xlu0 %952
    %vm954 = vcmask 64512
    %s955 = scalar_lea.vmem %s1, 136
    %956 = vst.msk [vmem:[%s955] ss:$16 sm:$0x3] %vm954, %v953
    %s957 = scalar_lea.vmem %s1, 456
    %958 = vst.msk [vmem:[%s957] ss:$16 sm:$0xc] %vm954, %v953
    %s959 = scalar_lea.vmem %s1, 104
    %960 = vst.msk [vmem:[%s959] ss:$16 sm:$0x30] %vm954, %v953
    %s961 = scalar_lea.vmem %s1, 424
    %962 = vst.msk [vmem:[%s961] ss:$16 sm:$0xc0] %vm954, %v953
    %s963 = scalar_lea.vmem [#allocation0], 96
    %v964 = vld.sshfl [vmem:[%s963] sm:$0xff pattern:$0x99999180]
    %s965 = scalar_lea.vmem [#allocation0], 112
    %v966 = vld.sshfl [vmem:[%s965] sm:$0xff pattern:$0x91800000]
    %vm967 = vcmask 1047556
    %v968 = vsel %vm967, %v966, %v964
    %969 = vrot.lane.b32.xlu0 %v968, 64
    %v970 = vpop.permute.xlu0 %969
    %vm971 = vcmask 64512
    %s972 = scalar_lea.vmem %s1, 200
    %973 = vst.msk [vmem:[%s972] ss:$16 sm:$0x3] %vm971, %v970
    %s974 = scalar_lea.vmem %s1, 520
    %975 = vst.msk [vmem:[%s974] ss:$16 sm:$0xc] %vm971, %v970
    %s976 = scalar_lea.vmem %s1, 168
    %977 = vst.msk [vmem:[%s976] ss:$16 sm:$0x30] %vm971, %v970
    %s978 = scalar_lea.vmem %s1, 488
    %979 = vst.msk [vmem:[%s978] ss:$16 sm:$0xc0] %vm971, %v970
    %s980 = scalar_lea.vmem [#allocation0], 128
    %v981 = vld.sshfl [vmem:[%s980] sm:$0xff pattern:$0x99999180]
    %s982 = scalar_lea.vmem [#allocation0], 144
    %v983 = vld.sshfl [vmem:[%s982] sm:$0xff pattern:$0x91800000]
    %vm984 = vcmask 1047556
    %v985 = vsel %vm984, %v983, %v981
    %986 = vrot.lane.b32.xlu0 %v985, 64
    %v987 = vpop.permute.xlu0 %986
    %vm988 = vcmask 64512
    %s989 = scalar_lea.vmem %s1, 264
    %990 = vst.msk [vmem:[%s989] ss:$16 sm:$0x3] %vm988, %v987
    %s991 = scalar_lea.vmem %s1, 584
    %992 = vst.msk [vmem:[%s991] ss:$16 sm:$0xc] %vm988, %v987
    %s993 = scalar_lea.vmem %s1, 232
    %994 = vst.msk [vmem:[%s993] ss:$16 sm:$0x30] %vm988, %v987
    %s995 = scalar_lea.vmem %s1, 552
    %996 = vst.msk [vmem:[%s995] ss:$16 sm:$0xc0] %vm988, %v987
    %s997 = scalar_lea.vmem [#allocation0], 160
    %v998 = vld.sshfl [vmem:[%s997] sm:$0xff pattern:$0x99999180]
    %999 = vrot.lane.b32.xlu0 %v998, 64
    %v1000 = vpop.permute.xlu0 %999
    %vm1001 = vcmask 64512
    %s1002 = scalar_lea.vmem %s1, 328
    %1003 = vst.msk [vmem:[%s1002] ss:$16 sm:$0x3] %vm1001, %v1000
    %s1004 = scalar_lea.vmem %s1, 648
    %1005 = vst.msk [vmem:[%s1004] ss:$16 sm:$0xc] %vm1001, %v1000
    %v1006 = vld.sshfl [vmem:[#allocation0] sm:$0xff pattern:$0x99999180]
    %s1007 = scalar_lea.vmem [#allocation0], 16
    %v1008 = vld.sshfl [vmem:[%s1007] sm:$0xff pattern:$0x91800000]
    %vm1009 = vcmask 1047556
    %v1010 = vsel %vm1009, %v1008, %v1006
    %1011 = vrot.lane.b32.xlu0 %v1010, 56
    %v1012 = vpop.permute.xlu0 %1011
    %vm1013 = vcmask 64512
    %s1014 = scalar_lea.vmem %s1, 9
    %1015 = vst.msk [vmem:[%s1014] ss:$16 sm:$0x3] %vm1013, %v1012
    %s1016 = scalar_lea.vmem %s1, 329
    %1017 = vst.msk [vmem:[%s1016] ss:$16 sm:$0xc] %vm1013, %v1012
    %s1018 = scalar_lea.vmem %s1, 4294967273
    %1019 = vst.msk [vmem:[%s1018] ss:$16 sm:$0x30] %vm1013, %v1012
    %s1020 = scalar_lea.vmem %s1, 297
    %1021 = vst.msk [vmem:[%s1020] ss:$16 sm:$0xc0] %vm1013, %v1012
    %s1022 = scalar_lea.vmem [#allocation0], 32
    %v1023 = vld.sshfl [vmem:[%s1022] sm:$0xff pattern:$0x99999180]
    %s1024 = scalar_lea.vmem [#allocation0], 48
    %v1025 = vld.sshfl [vmem:[%s1024] sm:$0xff pattern:$0x91800000]
    %vm1026 = vcmask 1047556
    %v1027 = vsel %vm1026, %v1025, %v1023
    %1028 = vrot.lane.b32.xlu0 %v1027, 56
    %v1029 = vpop.permute.xlu0 %1028
    %vm1030 = vcmask 64512
    %s1031 = scalar_lea.vmem %s1, 73
    %1032 = vst.msk [vmem:[%s1031] ss:$16 sm:$0x3] %vm1030, %v1029
    %s1033 = scalar_lea.vmem %s1, 393
    %1034 = vst.msk [vmem:[%s1033] ss:$16 sm:$0xc] %vm1030, %v1029
    %s1035 = scalar_lea.vmem %s1, 41
    %1036 = vst.msk [vmem:[%s1035] ss:$16 sm:$0x30] %vm1030, %v1029
    %s1037 = scalar_lea.vmem %s1, 361
    %1038 = vst.msk [vmem:[%s1037] ss:$16 sm:$0xc0] %vm1030, %v1029
    %s1039 = scalar_lea.vmem [#allocation0], 64
    %v1040 = vld.sshfl [vmem:[%s1039] sm:$0xff pattern:$0x99999180]
    %s1041 = scalar_lea.vmem [#allocation0], 80
    %v1042 = vld.sshfl [vmem:[%s1041] sm:$0xff pattern:$0x91800000]
    %vm1043 = vcmask 1047556
    %v1044 = vsel %vm1043, %v1042, %v1040
    %1045 = vrot.lane.b32.xlu0 %v1044, 56
    %v1046 = vpop.permute.xlu0 %1045
    %vm1047 = vcmask 64512
    %s1048 = scalar_lea.vmem %s1, 137
    %1049 = vst.msk [vmem:[%s1048] ss:$16 sm:$0x3] %vm1047, %v1046
    %s1050 = scalar_lea.vmem %s1, 457
    %1051 = vst.msk [vmem:[%s1050] ss:$16 sm:$0xc] %vm1047, %v1046
    %s1052 = scalar_lea.vmem %s1, 105
    %1053 = vst.msk [vmem:[%s1052] ss:$16 sm:$0x30] %vm1047, %v1046
    %s1054 = scalar_lea.vmem %s1, 425
    %1055 = vst.msk [vmem:[%s1054] ss:$16 sm:$0xc0] %vm1047, %v1046
    %s1056 = scalar_lea.vmem [#allocation0], 96
    %v1057 = vld.sshfl [vmem:[%s1056] sm:$0xff pattern:$0x99999180]
    %s1058 = scalar_lea.vmem [#allocation0], 112
    %v1059 = vld.sshfl [vmem:[%s1058] sm:$0xff pattern:$0x91800000]
    %vm1060 = vcmask 1047556
    %v1061 = vsel %vm1060, %v1059, %v1057
    %1062 = vrot.lane.b32.xlu0 %v1061, 56
    %v1063 = vpop.permute.xlu0 %1062
    %vm1064 = vcmask 64512
    %s1065 = scalar_lea.vmem %s1, 201
    %1066 = vst.msk [vmem:[%s1065] ss:$16 sm:$0x3] %vm1064, %v1063
    %s1067 = scalar_lea.vmem %s1, 521
    %1068 = vst.msk [vmem:[%s1067] ss:$16 sm:$0xc] %vm1064, %v1063
    %s1069 = scalar_lea.vmem %s1, 169
    %1070 = vst.msk [vmem:[%s1069] ss:$16 sm:$0x30] %vm1064, %v1063
    %s1071 = scalar_lea.vmem %s1, 489
    %1072 = vst.msk [vmem:[%s1071] ss:$16 sm:$0xc0] %vm1064, %v1063
    %s1073 = scalar_lea.vmem [#allocation0], 128
    %v1074 = vld.sshfl [vmem:[%s1073] sm:$0xff pattern:$0x99999180]
    %s1075 = scalar_lea.vmem [#allocation0], 144
    %v1076 = vld.sshfl [vmem:[%s1075] sm:$0xff pattern:$0x91800000]
    %vm1077 = vcmask 1047556
    %v1078 = vsel %vm1077, %v1076, %v1074
    %1079 = vrot.lane.b32.xlu0 %v1078, 56
    %v1080 = vpop.permute.xlu0 %1079
    %vm1081 = vcmask 64512
    %s1082 = scalar_lea.vmem %s1, 265
    %1083 = vst.msk [vmem:[%s1082] ss:$16 sm:$0x3] %vm1081, %v1080
    %s1084 = scalar_lea.vmem %s1, 585
    %1085 = vst.msk [vmem:[%s1084] ss:$16 sm:$0xc] %vm1081, %v1080
    %s1086 = scalar_lea.vmem %s1, 233
    %1087 = vst.msk [vmem:[%s1086] ss:$16 sm:$0x30] %vm1081, %v1080
    %s1088 = scalar_lea.vmem %s1, 553
    %1089 = vst.msk [vmem:[%s1088] ss:$16 sm:$0xc0] %vm1081, %v1080
    %s1090 = scalar_lea.vmem [#allocation0], 160
    %v1091 = vld.sshfl [vmem:[%s1090] sm:$0xff pattern:$0x99999180]
    %1092 = vrot.lane.b32.xlu0 %v1091, 56
    %v1093 = vpop.permute.xlu0 %1092
    %vm1094 = vcmask 64512
    %s1095 = scalar_lea.vmem %s1, 329
    %1096 = vst.msk [vmem:[%s1095] ss:$16 sm:$0x3] %vm1094, %v1093
    %s1097 = scalar_lea.vmem %s1, 649
    %1098 = vst.msk [vmem:[%s1097] ss:$16 sm:$0xc] %vm1094, %v1093
    %v1099 = vld.sshfl [vmem:[#allocation0] sm:$0xff pattern:$0x99999180]
    %s1100 = scalar_lea.vmem [#allocation0], 16
    %v1101 = vld.sshfl [vmem:[%s1100] sm:$0xff pattern:$0x91800000]
    %vm1102 = vcmask 1047556
    %v1103 = vsel %vm1102, %v1101, %v1099
    %1104 = vrot.lane.b32.xlu0 %v1103, 48
    %v1105 = vpop.permute.xlu0 %1104
    %vm1106 = vcmask 64512
    %s1107 = scalar_lea.vmem %s1, 10
    %1108 = vst.msk [vmem:[%s1107] ss:$16 sm:$0x3] %vm1106, %v1105
    %s1109 = scalar_lea.vmem %s1, 330
    %1110 = vst.msk [vmem:[%s1109] ss:$16 sm:$0xc] %vm1106, %v1105
    %s1111 = scalar_lea.vmem %s1, 4294967274
    %1112 = vst.msk [vmem:[%s1111] ss:$16 sm:$0x30] %vm1106, %v1105
    %s1113 = scalar_lea.vmem %s1, 298
    %1114 = vst.msk [vmem:[%s1113] ss:$16 sm:$0xc0] %vm1106, %v1105
    %s1115 = scalar_lea.vmem [#allocation0], 32
    %v1116 = vld.sshfl [vmem:[%s1115] sm:$0xff pattern:$0x99999180]
    %s1117 = scalar_lea.vmem [#allocation0], 48
    %v1118 = vld.sshfl [vmem:[%s1117] sm:$0xff pattern:$0x91800000]
    %vm1119 = vcmask 1047556
    %v1120 = vsel %vm1119, %v1118, %v1116
    %1121 = vrot.lane.b32.xlu0 %v1120, 48
    %v1122 = vpop.permute.xlu0 %1121
    %vm1123 = vcmask 64512
    %s1124 = scalar_lea.vmem %s1, 74
    %1125 = vst.msk [vmem:[%s1124] ss:$16 sm:$0x3] %vm1123, %v1122
    %s1126 = scalar_lea.vmem %s1, 394
    %1127 = vst.msk [vmem:[%s1126] ss:$16 sm:$0xc] %vm1123, %v1122
    %s1128 = scalar_lea.vmem %s1, 42
    %1129 = vst.msk [vmem:[%s1128] ss:$16 sm:$0x30] %vm1123, %v1122
    %s1130 = scalar_lea.vmem %s1, 362
    %1131 = vst.msk [vmem:[%s1130] ss:$16 sm:$0xc0] %vm1123, %v1122
    %s1132 = scalar_lea.vmem [#allocation0], 64
    %v1133 = vld.sshfl [vmem:[%s1132] sm:$0xff pattern:$0x99999180]
    %s1134 = scalar_lea.vmem [#allocation0], 80
    %v1135 = vld.sshfl [vmem:[%s1134] sm:$0xff pattern:$0x91800000]
    %vm1136 = vcmask 1047556
    %v1137 = vsel %vm1136, %v1135, %v1133
    %1138 = vrot.lane.b32.xlu0 %v1137, 48
    %v1139 = vpop.permute.xlu0 %1138
    %vm1140 = vcmask 64512
    %s1141 = scalar_lea.vmem %s1, 138
    %1142 = vst.msk [vmem:[%s1141] ss:$16 sm:$0x3] %vm1140, %v1139
    %s1143 = scalar_lea.vmem %s1, 458
    %1144 = vst.msk [vmem:[%s1143] ss:$16 sm:$0xc] %vm1140, %v1139
    %s1145 = scalar_lea.vmem %s1, 106
    %1146 = vst.msk [vmem:[%s1145] ss:$16 sm:$0x30] %vm1140, %v1139
    %s1147 = scalar_lea.vmem %s1, 426
    %1148 = vst.msk [vmem:[%s1147] ss:$16 sm:$0xc0] %vm1140, %v1139
    %s1149 = scalar_lea.vmem [#allocation0], 96
    %v1150 = vld.sshfl [vmem:[%s1149] sm:$0xff pattern:$0x99999180]
    %s1151 = scalar_lea.vmem [#allocation0], 112
    %v1152 = vld.sshfl [vmem:[%s1151] sm:$0xff pattern:$0x91800000]
    %vm1153 = vcmask 1047556
    %v1154 = vsel %vm1153, %v1152, %v1150
    %1155 = vrot.lane.b32.xlu0 %v1154, 48
    %v1156 = vpop.permute.xlu0 %1155
    %vm1157 = vcmask 64512
    %s1158 = scalar_lea.vmem %s1, 202
    %1159 = vst.msk [vmem:[%s1158] ss:$16 sm:$0x3] %vm1157, %v1156
    %s1160 = scalar_lea.vmem %s1, 522
    %1161 = vst.msk [vmem:[%s1160] ss:$16 sm:$0xc] %vm1157, %v1156
    %s1162 = scalar_lea.vmem %s1, 170
    %1163 = vst.msk [vmem:[%s1162] ss:$16 sm:$0x30] %vm1157, %v1156
    %s1164 = scalar_lea.vmem %s1, 490
    %1165 = vst.msk [vmem:[%s1164] ss:$16 sm:$0xc0] %vm1157, %v1156
    %s1166 = scalar_lea.vmem [#allocation0], 128
    %v1167 = vld.sshfl [vmem:[%s1166] sm:$0xff pattern:$0x99999180]
    %s1168 = scalar_lea.vmem [#allocation0], 144
    %v1169 = vld.sshfl [vmem:[%s1168] sm:$0xff pattern:$0x91800000]
    %vm1170 = vcmask 1047556
    %v1171 = vsel %vm1170, %v1169, %v1167
    %1172 = vrot.lane.b32.xlu0 %v1171, 48
    %v1173 = vpop.permute.xlu0 %1172
    %vm1174 = vcmask 64512
    %s1175 = scalar_lea.vmem %s1, 266
    %1176 = vst.msk [vmem:[%s1175] ss:$16 sm:$0x3] %vm1174, %v1173
    %s1177 = scalar_lea.vmem %s1, 586
    %1178 = vst.msk [vmem:[%s1177] ss:$16 sm:$0xc] %vm1174, %v1173
    %s1179 = scalar_lea.vmem %s1, 234
    %1180 = vst.msk [vmem:[%s1179] ss:$16 sm:$0x30] %vm1174, %v1173
    %s1181 = scalar_lea.vmem %s1, 554
    %1182 = vst.msk [vmem:[%s1181] ss:$16 sm:$0xc0] %vm1174, %v1173
    %s1183 = scalar_lea.vmem [#allocation0], 160
    %v1184 = vld.sshfl [vmem:[%s1183] sm:$0xff pattern:$0x99999180]
    %1185 = vrot.lane.b32.xlu0 %v1184, 48
    %v1186 = vpop.permute.xlu0 %1185
    %vm1187 = vcmask 64512
    %s1188 = scalar_lea.vmem %s1, 330
    %1189 = vst.msk [vmem:[%s1188] ss:$16 sm:$0x3] %vm1187, %v1186
    %s1190 = scalar_lea.vmem %s1, 650
    %1191 = vst.msk [vmem:[%s1190] ss:$16 sm:$0xc] %vm1187, %v1186
    %v1192 = vld.sshfl [vmem:[#allocation0] sm:$0xff pattern:$0x99999180]
    %s1193 = scalar_lea.vmem [#allocation0], 16
    %v1194 = vld.sshfl [vmem:[%s1193] sm:$0xff pattern:$0x91800000]
    %vm1195 = vcmask 1047556
    %v1196 = vsel %vm1195, %v1194, %v1192
    %1197 = vrot.lane.b32.xlu0 %v1196, 40
    %v1198 = vpop.permute.xlu0 %1197
    %vm1199 = vcmask 64512
    %s1200 = scalar_lea.vmem %s1, 11
    %1201 = vst.msk [vmem:[%s1200] ss:$16 sm:$0x3] %vm1199, %v1198
    %s1202 = scalar_lea.vmem %s1, 331
    %1203 = vst.msk [vmem:[%s1202] ss:$16 sm:$0xc] %vm1199, %v1198
    %s1204 = scalar_lea.vmem %s1, 4294967275
    %1205 = vst.msk [vmem:[%s1204] ss:$16 sm:$0x30] %vm1199, %v1198
    %s1206 = scalar_lea.vmem %s1, 299
    %1207 = vst.msk [vmem:[%s1206] ss:$16 sm:$0xc0] %vm1199, %v1198
    %s1208 = scalar_lea.vmem [#allocation0], 32
    %v1209 = vld.sshfl [vmem:[%s1208] sm:$0xff pattern:$0x99999180]
    %s1210 = scalar_lea.vmem [#allocation0], 48
    %v1211 = vld.sshfl [vmem:[%s1210] sm:$0xff pattern:$0x91800000]
    %vm1212 = vcmask 1047556
    %v1213 = vsel %vm1212, %v1211, %v1209
    %1214 = vrot.lane.b32.xlu0 %v1213, 40
    %v1215 = vpop.permute.xlu0 %1214
    %vm1216 = vcmask 64512
    %s1217 = scalar_lea.vmem %s1, 75
    %1218 = vst.msk [vmem:[%s1217] ss:$16 sm:$0x3] %vm1216, %v1215
    %s1219 = scalar_lea.vmem %s1, 395
    %1220 = vst.msk [vmem:[%s1219] ss:$16 sm:$0xc] %vm1216, %v1215
    %s1221 = scalar_lea.vmem %s1, 43
    %1222 = vst.msk [vmem:[%s1221] ss:$16 sm:$0x30] %vm1216, %v1215
    %s1223 = scalar_lea.vmem %s1, 363
    %1224 = vst.msk [vmem:[%s1223] ss:$16 sm:$0xc0] %vm1216, %v1215
    %s1225 = scalar_lea.vmem [#allocation0], 64
    %v1226 = vld.sshfl [vmem:[%s1225] sm:$0xff pattern:$0x99999180]
    %s1227 = scalar_lea.vmem [#allocation0], 80
    %v1228 = vld.sshfl [vmem:[%s1227] sm:$0xff pattern:$0x91800000]
    %vm1229 = vcmask 1047556
    %v1230 = vsel %vm1229, %v1228, %v1226
    %1231 = vrot.lane.b32.xlu0 %v1230, 40
    %v1232 = vpop.permute.xlu0 %1231
    %vm1233 = vcmask 64512
    %s1234 = scalar_lea.vmem %s1, 139
    %1235 = vst.msk [vmem:[%s1234] ss:$16 sm:$0x3] %vm1233, %v1232
    %s1236 = scalar_lea.vmem %s1, 459
    %1237 = vst.msk [vmem:[%s1236] ss:$16 sm:$0xc] %vm1233, %v1232
    %s1238 = scalar_lea.vmem %s1, 107
    %1239 = vst.msk [vmem:[%s1238] ss:$16 sm:$0x30] %vm1233, %v1232
    %s1240 = scalar_lea.vmem %s1, 427
    %1241 = vst.msk [vmem:[%s1240] ss:$16 sm:$0xc0] %vm1233, %v1232
    %s1242 = scalar_lea.vmem [#allocation0], 96
    %v1243 = vld.sshfl [vmem:[%s1242] sm:$0xff pattern:$0x99999180]
    %s1244 = scalar_lea.vmem [#allocation0], 112
    %v1245 = vld.sshfl [vmem:[%s1244] sm:$0xff pattern:$0x91800000]
    %vm1246 = vcmask 1047556
    %v1247 = vsel %vm1246, %v1245, %v1243
    %1248 = vrot.lane.b32.xlu0 %v1247, 40
    %v1249 = vpop.permute.xlu0 %1248
    %vm1250 = vcmask 64512
    %s1251 = scalar_lea.vmem %s1, 203
    %1252 = vst.msk [vmem:[%s1251] ss:$16 sm:$0x3] %vm1250, %v1249
    %s1253 = scalar_lea.vmem %s1, 523
    %1254 = vst.msk [vmem:[%s1253] ss:$16 sm:$0xc] %vm1250, %v1249
    %s1255 = scalar_lea.vmem %s1, 171
    %1256 = vst.msk [vmem:[%s1255] ss:$16 sm:$0x30] %vm1250, %v1249
    %s1257 = scalar_lea.vmem %s1, 491
    %1258 = vst.msk [vmem:[%s1257] ss:$16 sm:$0xc0] %vm1250, %v1249
    %s1259 = scalar_lea.vmem [#allocation0], 128
    %v1260 = vld.sshfl [vmem:[%s1259] sm:$0xff pattern:$0x99999180]
    %s1261 = scalar_lea.vmem [#allocation0], 144
    %v1262 = vld.sshfl [vmem:[%s1261] sm:$0xff pattern:$0x91800000]
    %vm1263 = vcmask 1047556
    %v1264 = vsel %vm1263, %v1262, %v1260
    %1265 = vrot.lane.b32.xlu0 %v1264, 40
    %v1266 = vpop.permute.xlu0 %1265
    %vm1267 = vcmask 64512
    %s1268 = scalar_lea.vmem %s1, 267
    %1269 = vst.msk [vmem:[%s1268] ss:$16 sm:$0x3] %vm1267, %v1266
    %s1270 = scalar_lea.vmem %s1, 587
    %1271 = vst.msk [vmem:[%s1270] ss:$16 sm:$0xc] %vm1267, %v1266
    %s1272 = scalar_lea.vmem %s1, 235
    %1273 = vst.msk [vmem:[%s1272] ss:$16 sm:$0x30] %vm1267, %v1266
    %s1274 = scalar_lea.vmem %s1, 555
    %1275 = vst.msk [vmem:[%s1274] ss:$16 sm:$0xc0] %vm1267, %v1266
    %s1276 = scalar_lea.vmem [#allocation0], 160
    %v1277 = vld.sshfl [vmem:[%s1276] sm:$0xff pattern:$0x99999180]
    %1278 = vrot.lane.b32.xlu0 %v1277, 40
    %v1279 = vpop.permute.xlu0 %1278
    %vm1280 = vcmask 64512
    %s1281 = scalar_lea.vmem %s1, 331
    %1282 = vst.msk [vmem:[%s1281] ss:$16 sm:$0x3] %vm1280, %v1279
    %s1283 = scalar_lea.vmem %s1, 651
    %1284 = vst.msk [vmem:[%s1283] ss:$16 sm:$0xc] %vm1280, %v1279
    %v1285 = vld.sshfl [vmem:[#allocation0] sm:$0xff pattern:$0x99999180]
    %s1286 = scalar_lea.vmem [#allocation0], 16
    %v1287 = vld.sshfl [vmem:[%s1286] sm:$0xff pattern:$0x91800000]
    %vm1288 = vcmask 1047556
    %v1289 = vsel %vm1288, %v1287, %v1285
    %1290 = vrot.lane.b32.xlu0 %v1289, 32
    %v1291 = vpop.permute.xlu0 %1290
    %vm1292 = vcmask 64512
    %s1293 = scalar_lea.vmem %s1, 12
    %1294 = vst.msk [vmem:[%s1293] ss:$16 sm:$0x3] %vm1292, %v1291
    %s1295 = scalar_lea.vmem %s1, 332
    %1296 = vst.msk [vmem:[%s1295] ss:$16 sm:$0xc] %vm1292, %v1291
    %s1297 = scalar_lea.vmem %s1, 4294967276
    %1298 = vst.msk [vmem:[%s1297] ss:$16 sm:$0x30] %vm1292, %v1291
    %s1299 = scalar_lea.vmem %s1, 300
    %1300 = vst.msk [vmem:[%s1299] ss:$16 sm:$0xc0] %vm1292, %v1291
    %s1301 = scalar_lea.vmem [#allocation0], 32
    %v1302 = vld.sshfl [vmem:[%s1301] sm:$0xff pattern:$0x99999180]
    %s1303 = scalar_lea.vmem [#allocation0], 48
    %v1304 = vld.sshfl [vmem:[%s1303] sm:$0xff pattern:$0x91800000]
    %vm1305 = vcmask 1047556
    %v1306 = vsel %vm1305, %v1304, %v1302
    %1307 = vrot.lane.b32.xlu0 %v1306, 32
    %v1308 = vpop.permute.xlu0 %1307
    %vm1309 = vcmask 64512
    %s1310 = scalar_lea.vmem %s1, 76
    %1311 = vst.msk [vmem:[%s1310] ss:$16 sm:$0x3] %vm1309, %v1308
    %s1312 = scalar_lea.vmem %s1, 396
    %1313 = vst.msk [vmem:[%s1312] ss:$16 sm:$0xc] %vm1309, %v1308
    %s1314 = scalar_lea.vmem %s1, 44
    %1315 = vst.msk [vmem:[%s1314] ss:$16 sm:$0x30] %vm1309, %v1308
    %s1316 = scalar_lea.vmem %s1, 364
    %1317 = vst.msk [vmem:[%s1316] ss:$16 sm:$0xc0] %vm1309, %v1308
    %s1318 = scalar_lea.vmem [#allocation0], 64
    %v1319 = vld.sshfl [vmem:[%s1318] sm:$0xff pattern:$0x99999180]
    %s1320 = scalar_lea.vmem [#allocation0], 80
    %v1321 = vld.sshfl [vmem:[%s1320] sm:$0xff pattern:$0x91800000]
    %vm1322 = vcmask 1047556
    %v1323 = vsel %vm1322, %v1321, %v1319
    %1324 = vrot.lane.b32.xlu0 %v1323, 32
    %v1325 = vpop.permute.xlu0 %1324
    %vm1326 = vcmask 64512
    %s1327 = scalar_lea.vmem %s1, 140
    %1328 = vst.msk [vmem:[%s1327] ss:$16 sm:$0x3] %vm1326, %v1325
    %s1329 = scalar_lea.vmem %s1, 460
    %1330 = vst.msk [vmem:[%s1329] ss:$16 sm:$0xc] %vm1326, %v1325
    %s1331 = scalar_lea.vmem %s1, 108
    %1332 = vst.msk [vmem:[%s1331] ss:$16 sm:$0x30] %vm1326, %v1325
    %s1333 = scalar_lea.vmem %s1, 428
    %1334 = vst.msk [vmem:[%s1333] ss:$16 sm:$0xc0] %vm1326, %v1325
    %s1335 = scalar_lea.vmem [#allocation0], 96
    %v1336 = vld.sshfl [vmem:[%s1335] sm:$0xff pattern:$0x99999180]
    %s1337 = scalar_lea.vmem [#allocation0], 112
    %v1338 = vld.sshfl [vmem:[%s1337] sm:$0xff pattern:$0x91800000]
    %vm1339 = vcmask 1047556
    %v1340 = vsel %vm1339, %v1338, %v1336
    %1341 = vrot.lane.b32.xlu0 %v1340, 32
    %v1342 = vpop.permute.xlu0 %1341
    %vm1343 = vcmask 64512
    %s1344 = scalar_lea.vmem %s1, 204
    %1345 = vst.msk [vmem:[%s1344] ss:$16 sm:$0x3] %vm1343, %v1342
    %s1346 = scalar_lea.vmem %s1, 524
    %1347 = vst.msk [vmem:[%s1346] ss:$16 sm:$0xc] %vm1343, %v1342
    %s1348 = scalar_lea.vmem %s1, 172
    %1349 = vst.msk [vmem:[%s1348] ss:$16 sm:$0x30] %vm1343, %v1342
    %s1350 = scalar_lea.vmem %s1, 492
    %1351 = vst.msk [vmem:[%s1350] ss:$16 sm:$0xc0] %vm1343, %v1342
    %s1352 = scalar_lea.vmem [#allocation0], 128
    %v1353 = vld.sshfl [vmem:[%s1352] sm:$0xff pattern:$0x99999180]
    %s1354 = scalar_lea.vmem [#allocation0], 144
    %v1355 = vld.sshfl [vmem:[%s1354] sm:$0xff pattern:$0x91800000]
    %vm1356 = vcmask 1047556
    %v1357 = vsel %vm1356, %v1355, %v1353
    %1358 = vrot.lane.b32.xlu0 %v1357, 32
    %v1359 = vpop.permute.xlu0 %1358
    %vm1360 = vcmask 64512
    %s1361 = scalar_lea.vmem %s1, 268
    %1362 = vst.msk [vmem:[%s1361] ss:$16 sm:$0x3] %vm1360, %v1359
    %s1363 = scalar_lea.vmem %s1, 588
    %1364 = vst.msk [vmem:[%s1363] ss:$16 sm:$0xc] %vm1360, %v1359
    %s1365 = scalar_lea.vmem %s1, 236
    %1366 = vst.msk [vmem:[%s1365] ss:$16 sm:$0x30] %vm1360, %v1359
    %s1367 = scalar_lea.vmem %s1, 556
    %1368 = vst.msk [vmem:[%s1367] ss:$16 sm:$0xc0] %vm1360, %v1359
    %s1369 = scalar_lea.vmem [#allocation0], 160
    %v1370 = vld.sshfl [vmem:[%s1369] sm:$0xff pattern:$0x99999180]
    %1371 = vrot.lane.b32.xlu0 %v1370, 32
    %v1372 = vpop.permute.xlu0 %1371
    %vm1373 = vcmask 64512
    %s1374 = scalar_lea.vmem %s1, 332
    %1375 = vst.msk [vmem:[%s1374] ss:$16 sm:$0x3] %vm1373, %v1372
    %s1376 = scalar_lea.vmem %s1, 652
    %1377 = vst.msk [vmem:[%s1376] ss:$16 sm:$0xc] %vm1373, %v1372
    %v1378 = vld.sshfl [vmem:[#allocation0] sm:$0xff pattern:$0x99999180]
    %s1379 = scalar_lea.vmem [#allocation0], 16
    %v1380 = vld.sshfl [vmem:[%s1379] sm:$0xff pattern:$0x91800000]
    %vm1381 = vcmask 1047556
    %v1382 = vsel %vm1381, %v1380, %v1378
    %1383 = vrot.lane.b32.xlu0 %v1382, 24
    %v1384 = vpop.permute.xlu0 %1383
    %vm1385 = vcmask 64512
    %s1386 = scalar_lea.vmem %s1, 13
    %1387 = vst.msk [vmem:[%s1386] ss:$16 sm:$0x3] %vm1385, %v1384
    %s1388 = scalar_lea.vmem %s1, 333
    %1389 = vst.msk [vmem:[%s1388] ss:$16 sm:$0xc] %vm1385, %v1384
    %s1390 = scalar_lea.vmem %s1, 4294967277
    %1391 = vst.msk [vmem:[%s1390] ss:$16 sm:$0x30] %vm1385, %v1384
    %s1392 = scalar_lea.vmem %s1, 301
    %1393 = vst.msk [vmem:[%s1392] ss:$16 sm:$0xc0] %vm1385, %v1384
    %s1394 = scalar_lea.vmem [#allocation0], 32
    %v1395 = vld.sshfl [vmem:[%s1394] sm:$0xff pattern:$0x99999180]
    %s1396 = scalar_lea.vmem [#allocation0], 48
    %v1397 = vld.sshfl [vmem:[%s1396] sm:$0xff pattern:$0x91800000]
    %vm1398 = vcmask 1047556
    %v1399 = vsel %vm1398, %v1397, %v1395
    %1400 = vrot.lane.b32.xlu0 %v1399, 24
    %v1401 = vpop.permute.xlu0 %1400
    %vm1402 = vcmask 64512
    %s1403 = scalar_lea.vmem %s1, 77
    %1404 = vst.msk [vmem:[%s1403] ss:$16 sm:$0x3] %vm1402, %v1401
    %s1405 = scalar_lea.vmem %s1, 397
    %1406 = vst.msk [vmem:[%s1405] ss:$16 sm:$0xc] %vm1402, %v1401
    %s1407 = scalar_lea.vmem %s1, 45
    %1408 = vst.msk [vmem:[%s1407] ss:$16 sm:$0x30] %vm1402, %v1401
    %s1409 = scalar_lea.vmem %s1, 365
    %1410 = vst.msk [vmem:[%s1409] ss:$16 sm:$0xc0] %vm1402, %v1401
    %s1411 = scalar_lea.vmem [#allocation0], 64
    %v1412 = vld.sshfl [vmem:[%s1411] sm:$0xff pattern:$0x99999180]
    %s1413 = scalar_lea.vmem [#allocation0], 80
    %v1414 = vld.sshfl [vmem:[%s1413] sm:$0xff pattern:$0x91800000]
    %vm1415 = vcmask 1047556
    %v1416 = vsel %vm1415, %v1414, %v1412
    %1417 = vrot.lane.b32.xlu0 %v1416, 24
    %v1418 = vpop.permute.xlu0 %1417
    %vm1419 = vcmask 64512
    %s1420 = scalar_lea.vmem %s1, 141
    %1421 = vst.msk [vmem:[%s1420] ss:$16 sm:$0x3] %vm1419, %v1418
    %s1422 = scalar_lea.vmem %s1, 461
    %1423 = vst.msk [vmem:[%s1422] ss:$16 sm:$0xc] %vm1419, %v1418
    %s1424 = scalar_lea.vmem %s1, 109
    %1425 = vst.msk [vmem:[%s1424] ss:$16 sm:$0x30] %vm1419, %v1418
    %s1426 = scalar_lea.vmem %s1, 429
    %1427 = vst.msk [vmem:[%s1426] ss:$16 sm:$0xc0] %vm1419, %v1418
    %s1428 = scalar_lea.vmem [#allocation0], 96
    %v1429 = vld.sshfl [vmem:[%s1428] sm:$0xff pattern:$0x99999180]
    %s1430 = scalar_lea.vmem [#allocation0], 112
    %v1431 = vld.sshfl [vmem:[%s1430] sm:$0xff pattern:$0x91800000]
    %vm1432 = vcmask 1047556
    %v1433 = vsel %vm1432, %v1431, %v1429
    %1434 = vrot.lane.b32.xlu0 %v1433, 24
    %v1435 = vpop.permute.xlu0 %1434
    %vm1436 = vcmask 64512
    %s1437 = scalar_lea.vmem %s1, 205
    %1438 = vst.msk [vmem:[%s1437] ss:$16 sm:$0x3] %vm1436, %v1435
    %s1439 = scalar_lea.vmem %s1, 525
    %1440 = vst.msk [vmem:[%s1439] ss:$16 sm:$0xc] %vm1436, %v1435
    %s1441 = scalar_lea.vmem %s1, 173
    %1442 = vst.msk [vmem:[%s1441] ss:$16 sm:$0x30] %vm1436, %v1435
    %s1443 = scalar_lea.vmem %s1, 493
    %1444 = vst.msk [vmem:[%s1443] ss:$16 sm:$0xc0] %vm1436, %v1435
    %s1445 = scalar_lea.vmem [#allocation0], 128
    %v1446 = vld.sshfl [vmem:[%s1445] sm:$0xff pattern:$0x99999180]
    %s1447 = scalar_lea.vmem [#allocation0], 144
    %v1448 = vld.sshfl [vmem:[%s1447] sm:$0xff pattern:$0x91800000]
    %vm1449 = vcmask 1047556
    %v1450 = vsel %vm1449, %v1448, %v1446
    %1451 = vrot.lane.b32.xlu0 %v1450, 24
    %v1452 = vpop.permute.xlu0 %1451
    %vm1453 = vcmask 64512
    %s1454 = scalar_lea.vmem %s1, 269
    %1455 = vst.msk [vmem:[%s1454] ss:$16 sm:$0x3] %vm1453, %v1452
    %s1456 = scalar_lea.vmem %s1, 589
    %1457 = vst.msk [vmem:[%s1456] ss:$16 sm:$0xc] %vm1453, %v1452
    %s1458 = scalar_lea.vmem %s1, 237
    %1459 = vst.msk [vmem:[%s1458] ss:$16 sm:$0x30] %vm1453, %v1452
    %s1460 = scalar_lea.vmem %s1, 557
    %1461 = vst.msk [vmem:[%s1460] ss:$16 sm:$0xc0] %vm1453, %v1452
    %s1462 = scalar_lea.vmem [#allocation0], 160
    %v1463 = vld.sshfl [vmem:[%s1462] sm:$0xff pattern:$0x99999180]
    %1464 = vrot.lane.b32.xlu0 %v1463, 24
    %v1465 = vpop.permute.xlu0 %1464
    %vm1466 = vcmask 64512
    %s1467 = scalar_lea.vmem %s1, 333
    %1468 = vst.msk [vmem:[%s1467] ss:$16 sm:$0x3] %vm1466, %v1465
    %s1469 = scalar_lea.vmem %s1, 653
    %1470 = vst.msk [vmem:[%s1469] ss:$16 sm:$0xc] %vm1466, %v1465
    %v1471 = vld.sshfl [vmem:[#allocation0] sm:$0xff pattern:$0x99999180]
    %s1472 = scalar_lea.vmem [#allocation0], 16
    %v1473 = vld.sshfl [vmem:[%s1472] sm:$0xff pattern:$0x91800000]
    %vm1474 = vcmask 1047556
    %v1475 = vsel %vm1474, %v1473, %v1471
    %1476 = vrot.lane.b32.xlu0 %v1475, 16
    %v1477 = vpop.permute.xlu0 %1476
    %vm1478 = vcmask 64512
    %s1479 = scalar_lea.vmem %s1, 14
    %1480 = vst.msk [vmem:[%s1479] ss:$16 sm:$0x3] %vm1478, %v1477
    %s1481 = scalar_lea.vmem %s1, 334
    %1482 = vst.msk [vmem:[%s1481] ss:$16 sm:$0xc] %vm1478, %v1477
    %s1483 = scalar_lea.vmem %s1, 4294967278
    %1484 = vst.msk [vmem:[%s1483] ss:$16 sm:$0x30] %vm1478, %v1477
    %s1485 = scalar_lea.vmem %s1, 302
    %1486 = vst.msk [vmem:[%s1485] ss:$16 sm:$0xc0] %vm1478, %v1477
    %s1487 = scalar_lea.vmem [#allocation0], 32
    %v1488 = vld.sshfl [vmem:[%s1487] sm:$0xff pattern:$0x99999180]
    %s1489 = scalar_lea.vmem [#allocation0], 48
    %v1490 = vld.sshfl [vmem:[%s1489] sm:$0xff pattern:$0x91800000]
    %vm1491 = vcmask 1047556
    %v1492 = vsel %vm1491, %v1490, %v1488
    %1493 = vrot.lane.b32.xlu0 %v1492, 16
    %v1494 = vpop.permute.xlu0 %1493
    %vm1495 = vcmask 64512
    %s1496 = scalar_lea.vmem %s1, 78
    %1497 = vst.msk [vmem:[%s1496] ss:$16 sm:$0x3] %vm1495, %v1494
    %s1498 = scalar_lea.vmem %s1, 398
    %1499 = vst.msk [vmem:[%s1498] ss:$16 sm:$0xc] %vm1495, %v1494
    %s1500 = scalar_lea.vmem %s1, 46
    %1501 = vst.msk [vmem:[%s1500] ss:$16 sm:$0x30] %vm1495, %v1494
    %s1502 = scalar_lea.vmem %s1, 366
    %1503 = vst.msk [vmem:[%s1502] ss:$16 sm:$0xc0] %vm1495, %v1494
    %s1504 = scalar_lea.vmem [#allocation0], 64
    %v1505 = vld.sshfl [vmem:[%s1504] sm:$0xff pattern:$0x99999180]
    %s1506 = scalar_lea.vmem [#allocation0], 80
    %v1507 = vld.sshfl [vmem:[%s1506] sm:$0xff pattern:$0x91800000]
    %vm1508 = vcmask 1047556
    %v1509 = vsel %vm1508, %v1507, %v1505
    %1510 = vrot.lane.b32.xlu0 %v1509, 16
    %v1511 = vpop.permute.xlu0 %1510
    %vm1512 = vcmask 64512
    %s1513 = scalar_lea.vmem %s1, 142
    %1514 = vst.msk [vmem:[%s1513] ss:$16 sm:$0x3] %vm1512, %v1511
    %s1515 = scalar_lea.vmem %s1, 462
    %1516 = vst.msk [vmem:[%s1515] ss:$16 sm:$0xc] %vm1512, %v1511
    %s1517 = scalar_lea.vmem %s1, 110
    %1518 = vst.msk [vmem:[%s1517] ss:$16 sm:$0x30] %vm1512, %v1511
    %s1519 = scalar_lea.vmem %s1, 430
    %1520 = vst.msk [vmem:[%s1519] ss:$16 sm:$0xc0] %vm1512, %v1511
    %s1521 = scalar_lea.vmem [#allocation0], 96
    %v1522 = vld.sshfl [vmem:[%s1521] sm:$0xff pattern:$0x99999180]
    %s1523 = scalar_lea.vmem [#allocation0], 112
    %v1524 = vld.sshfl [vmem:[%s1523] sm:$0xff pattern:$0x91800000]
    %vm1525 = vcmask 1047556
    %v1526 = vsel %vm1525, %v1524, %v1522
    %1527 = vrot.lane.b32.xlu0 %v1526, 16
    %v1528 = vpop.permute.xlu0 %1527
    %vm1529 = vcmask 64512
    %s1530 = scalar_lea.vmem %s1, 206
    %1531 = vst.msk [vmem:[%s1530] ss:$16 sm:$0x3] %vm1529, %v1528
    %s1532 = scalar_lea.vmem %s1, 526
    %1533 = vst.msk [vmem:[%s1532] ss:$16 sm:$0xc] %vm1529, %v1528
    %s1534 = scalar_lea.vmem %s1, 174
    %1535 = vst.msk [vmem:[%s1534] ss:$16 sm:$0x30] %vm1529, %v1528
    %s1536 = scalar_lea.vmem %s1, 494
    %1537 = vst.msk [vmem:[%s1536] ss:$16 sm:$0xc0] %vm1529, %v1528
    %s1538 = scalar_lea.vmem [#allocation0], 128
    %v1539 = vld.sshfl [vmem:[%s1538] sm:$0xff pattern:$0x99999180]
    %s1540 = scalar_lea.vmem [#allocation0], 144
    %v1541 = vld.sshfl [vmem:[%s1540] sm:$0xff pattern:$0x91800000]
    %vm1542 = vcmask 1047556
    %v1543 = vsel %vm1542, %v1541, %v1539
    %1544 = vrot.lane.b32.xlu0 %v1543, 16
    %v1545 = vpop.permute.xlu0 %1544
    %vm1546 = vcmask 64512
    %s1547 = scalar_lea.vmem %s1, 270
    %1548 = vst.msk [vmem:[%s1547] ss:$16 sm:$0x3] %vm1546, %v1545
    %s1549 = scalar_lea.vmem %s1, 590
    %1550 = vst.msk [vmem:[%s1549] ss:$16 sm:$0xc] %vm1546, %v1545
    %s1551 = scalar_lea.vmem %s1, 238
    %1552 = vst.msk [vmem:[%s1551] ss:$16 sm:$0x30] %vm1546, %v1545
    %s1553 = scalar_lea.vmem %s1, 558
    %1554 = vst.msk [vmem:[%s1553] ss:$16 sm:$0xc0] %vm1546, %v1545
    %s1555 = scalar_lea.vmem [#allocation0], 160
    %v1556 = vld.sshfl [vmem:[%s1555] sm:$0xff pattern:$0x99999180]
    %1557 = vrot.lane.b32.xlu0 %v1556, 16
    %v1558 = vpop.permute.xlu0 %1557
    %vm1559 = vcmask 64512
    %s1560 = scalar_lea.vmem %s1, 334
    %1561 = vst.msk [vmem:[%s1560] ss:$16 sm:$0x3] %vm1559, %v1558
    %s1562 = scalar_lea.vmem %s1, 654
    %1563 = vst.msk [vmem:[%s1562] ss:$16 sm:$0xc] %vm1559, %v1558
    %v1564 = vld.sshfl [vmem:[#allocation0] sm:$0xff pattern:$0x99999180]
    %s1565 = scalar_lea.vmem [#allocation0], 16
    %v1566 = vld.sshfl [vmem:[%s1565] sm:$0xff pattern:$0x91800000]
    %vm1567 = vcmask 1047556
    %v1568 = vsel %vm1567, %v1566, %v1564
    %1569 = vrot.lane.b32.xlu0 %v1568, 8
    %v1570 = vpop.permute.xlu0 %1569
    %vm1571 = vcmask 64512
    %s1572 = scalar_lea.vmem %s1, 15
    %1573 = vst.msk [vmem:[%s1572] ss:$16 sm:$0x3] %vm1571, %v1570
    %s1574 = scalar_lea.vmem %s1, 335
    %1575 = vst.msk [vmem:[%s1574] ss:$16 sm:$0xc] %vm1571, %v1570
    %s1576 = scalar_lea.vmem %s1, 4294967279
    %1577 = vst.msk [vmem:[%s1576] ss:$16 sm:$0x30] %vm1571, %v1570
    %s1578 = scalar_lea.vmem %s1, 303
    %1579 = vst.msk [vmem:[%s1578] ss:$16 sm:$0xc0] %vm1571, %v1570
    %s1580 = scalar_lea.vmem [#allocation0], 32
    %v1581 = vld.sshfl [vmem:[%s1580] sm:$0xff pattern:$0x99999180]
    %s1582 = scalar_lea.vmem [#allocation0], 48
    %v1583 = vld.sshfl [vmem:[%s1582] sm:$0xff pattern:$0x91800000]
    %vm1584 = vcmask 1047556
    %v1585 = vsel %vm1584, %v1583, %v1581
    %1586 = vrot.lane.b32.xlu0 %v1585, 8
    %v1587 = vpop.permute.xlu0 %1586
    %vm1588 = vcmask 64512
    %s1589 = scalar_lea.vmem %s1, 79
    %1590 = vst.msk [vmem:[%s1589] ss:$16 sm:$0x3] %vm1588, %v1587
    %s1591 = scalar_lea.vmem %s1, 399
    %1592 = vst.msk [vmem:[%s1591] ss:$16 sm:$0xc] %vm1588, %v1587
    %s1593 = scalar_lea.vmem %s1, 47
    %1594 = vst.msk [vmem:[%s1593] ss:$16 sm:$0x30] %vm1588, %v1587
    %s1595 = scalar_lea.vmem %s1, 367
    %1596 = vst.msk [vmem:[%s1595] ss:$16 sm:$0xc0] %vm1588, %v1587
    %s1597 = scalar_lea.vmem [#allocation0], 64
    %v1598 = vld.sshfl [vmem:[%s1597] sm:$0xff pattern:$0x99999180]
    %s1599 = scalar_lea.vmem [#allocation0], 80
    %v1600 = vld.sshfl [vmem:[%s1599] sm:$0xff pattern:$0x91800000]
    %vm1601 = vcmask 1047556
    %v1602 = vsel %vm1601, %v1600, %v1598
    %1603 = vrot.lane.b32.xlu0 %v1602, 8
    %v1604 = vpop.permute.xlu0 %1603
    %vm1605 = vcmask 64512
    %s1606 = scalar_lea.vmem %s1, 143
    %1607 = vst.msk [vmem:[%s1606] ss:$16 sm:$0x3] %vm1605, %v1604
    %s1608 = scalar_lea.vmem %s1, 463
    %1609 = vst.msk [vmem:[%s1608] ss:$16 sm:$0xc] %vm1605, %v1604
    %s1610 = scalar_lea.vmem %s1, 111
    %1611 = vst.msk [vmem:[%s1610] ss:$16 sm:$0x30] %vm1605, %v1604
    %s1612 = scalar_lea.vmem %s1, 431
    %1613 = vst.msk [vmem:[%s1612] ss:$16 sm:$0xc0] %vm1605, %v1604
    %s1614 = scalar_lea.vmem [#allocation0], 96
    %v1615 = vld.sshfl [vmem:[%s1614] sm:$0xff pattern:$0x99999180]
    %s1616 = scalar_lea.vmem [#allocation0], 112
    %v1617 = vld.sshfl [vmem:[%s1616] sm:$0xff pattern:$0x91800000]
    %vm1618 = vcmask 1047556
    %v1619 = vsel %vm1618, %v1617, %v1615
    %1620 = vrot.lane.b32.xlu0 %v1619, 8
    %v1621 = vpop.permute.xlu0 %1620
    %vm1622 = vcmask 64512
    %s1623 = scalar_lea.vmem %s1, 207
    %1624 = vst.msk [vmem:[%s1623] ss:$16 sm:$0x3] %vm1622, %v1621
    %s1625 = scalar_lea.vmem %s1, 527
    %1626 = vst.msk [vmem:[%s1625] ss:$16 sm:$0xc] %vm1622, %v1621
    %s1627 = scalar_lea.vmem %s1, 175
    %1628 = vst.msk [vmem:[%s1627] ss:$16 sm:$0x30] %vm1622, %v1621
    %s1629 = scalar_lea.vmem %s1, 495
    %1630 = vst.msk [vmem:[%s1629] ss:$16 sm:$0xc0] %vm1622, %v1621
    %s1631 = scalar_lea.vmem [#allocation0], 128
    %v1632 = vld.sshfl [vmem:[%s1631] sm:$0xff pattern:$0x99999180]
    %s1633 = scalar_lea.vmem [#allocation0], 144
    %v1634 = vld.sshfl [vmem:[%s1633] sm:$0xff pattern:$0x91800000]
    %vm1635 = vcmask 1047556
    %v1636 = vsel %vm1635, %v1634, %v1632
    %1637 = vrot.lane.b32.xlu0 %v1636, 8
    %v1638 = vpop.permute.xlu0 %1637
    %vm1639 = vcmask 64512
    %s1640 = scalar_lea.vmem %s1, 271
    %1641 = vst.msk [vmem:[%s1640] ss:$16 sm:$0x3] %vm1639, %v1638
    %s1642 = scalar_lea.vmem %s1, 591
    %1643 = vst.msk [vmem:[%s1642] ss:$16 sm:$0xc] %vm1639, %v1638
    %s1644 = scalar_lea.vmem %s1, 239
    %1645 = vst.msk [vmem:[%s1644] ss:$16 sm:$0x30] %vm1639, %v1638
    %s1646 = scalar_lea.vmem %s1, 559
    %1647 = vst.msk [vmem:[%s1646] ss:$16 sm:$0xc0] %vm1639, %v1638
    %s1648 = scalar_lea.vmem [#allocation0], 160
    %v1649 = vld.sshfl [vmem:[%s1648] sm:$0xff pattern:$0x99999180]
    %1650 = vrot.lane.b32.xlu0 %v1649, 8
    %v1651 = vpop.permute.xlu0 %1650
    %vm1652 = vcmask 64512
    %s1653 = scalar_lea.vmem %s1, 335
    %1654 = vst.msk [vmem:[%s1653] ss:$16 sm:$0x3] %vm1652, %v1651
    %s1655 = scalar_lea.vmem %s1, 655
    %1656 = vst.msk [vmem:[%s1655] ss:$16 sm:$0xc] %vm1652, %v1651

// kernel: conv1d_model_forward.2
$region0: #{conv1d_model_forward.2}
  #allocation0 [shape = 'u32[]', space=smem, size = 0x4, offset = 0x4, fixed_abs, tag = 'smem constant byte address 0x4 - core index']
  #allocation1 [shape = 'u32[144,128]{1,0:T(1,128)}', space=vmem, size = 0x12000, scoped, tag = 'internal scratch']
  %s0 = inlined_call_operand.vmem [shape: f32[2,20,351], index: 0, kind: input, shape index: {}]
  %s1 = inlined_call_operand.vmem [shape: f32[128,20], index: 1, kind: input, shape index: {}]
  %s2 = inlined_call_operand.vmem [shape: f32[128,1], index: 2, kind: input, shape index: {}]
  %s3 = inlined_call_operand.hbm [shape: f32[64,160], index: 3, kind: input, shape index: {}]
  %s4 = inlined_call_operand.vmem [shape: f32[64,1], index: 4, kind: input, shape index: {}]
  %s5 = inlined_call_operand.vmem [shape: bf16[2,64,349], index: 5, kind: output, shape index: {}]
  %s6 = sld [smem:[#allocation0]]
  $region57: #{conv1d_model_forward.2} parent=0
    _
  %s8 = ssub.s32 1, %s6
  %s9 = scalar_select 0, %s8, %s6
  $region1: #{conv1d_model_forward.2} parent=0
    #allocation2 [shape = 'u8[65536]{0}', space=vmem, size = 0x10000, scoped, tag = 'input window, operand 3, single buffered']
    #allocation3 [shape = 's32[2]{0}', space=sflag, size = 0x8, scoped, tag = 'scoped memory for conv1d_model_forward.2']
    %10 = vsyncpa [#allocation3], 0
    loop: start=0, step=1, limit=4
    $region2: #{conv1d_model_forward.2} parent=1 // loop_pre_header
      _
    $region3: #{conv1d_model_forward.2} parent=1 // loop_header
      %s12 = sphi 0, %s16
      %p13 = scmp.ge.s32.totalorder %s12, 4
      %s22 = sphi 0, %s24
      %s25 = sphi 0, %s22
      %s26 = sphi 0, %s25
      %s42 = sphi 0, %s26
      %s46 = sphi 0, %s46
      %s48 = sphi 0, %s46
      %s49 = sphi 0, %s48
      %s63 = sphi 0, %s49
      %s67 = sphi 0, %s67
      %s69 = sphi 0, %s67
      %s70 = sphi 0, %s69
      %s84 = sphi 0, %s70
      %s88 = sphi 0, %s88
      %s90 = sphi 0, %s88
      %s91 = sphi 0, %s90
      %s105 = sphi 0, %s91
      %s109 = sphi 0, %s109
      %s111 = sphi 0, %s109
      %s112 = sphi 0, %s111
      %s126 = sphi 0, %s112
      %s132 = sphi 0, %s134
      %s135 = sphi 0, %s132
      %s136 = sphi 0, %s135
      %s152 = sphi 0, %s136
    $region4: #{conv1d_model_forward.2} parent=1 // loop_header_branch
      %15 = sbr.rel (%p13) target = $region8
    $region5: #{conv1d_model_forward.2} parent=1 // loop_body
      %s17 = ssub.s32 %s12, 1
      %s18 = ssub.s32 %s12, 2
      %s19 = sadd.s32 %s12, 1
      %s20 = ssub.s32 %s12, %s19
      %p21 = scmp.eq.s32.totalorder %s20, 0
      %s23 = sadd.s32 %s22, 1
      %s24 = scalar_select %p21, %s22, %s23
      %p27 = pneg %p21
      %p28 = scmp.eq.s32.totalorder %s12, 1
      %p29 = por %p27, %p28
      %p30 = scmp.ne.s32.totalorder %s22, %s25
      %p31 = scmp.eq.s32.totalorder %s12, 0
      %p32 = por %p30, %p31
      %p33 = scmp.ne.s32.totalorder %s22, %s25
      %p34 = scmp.eq.s32.totalorder %s17, 1
      %p35 = por %p33, %p34
      %p36 = scmp.ne.s32.totalorder %s25, %s26
      %p37 = scmp.eq.s32.totalorder %s17, 0
      %p38 = por %p36, %p37
      %p39 = scmp.ne.s32.totalorder %s25, %s26
      %p40 = scmp.eq.s32.totalorder %s18, 1
      %p41 = por %p39, %p40
      %p43 = scmp.ne.s32.totalorder %s26, %s42
      %p44 = scmp.eq.s32.totalorder %s18, 0
      %p45 = por %p43, %p44
      %s47 = sadd.s32 %s46, 1
      %p50 = scmp.eq.s32.totalorder %s12, 1
      %p51 = scmp.ne.s32.totalorder %s46, %s48
      %p52 = scmp.eq.s32.totalorder %s12, 0
      %p53 = por %p51, %p52
      %p54 = scmp.ne.s32.totalorder %s46, %s48
      %p55 = scmp.eq.s32.totalorder %s17, 1
      %p56 = por %p54, %p55
      %p57 = scmp.ne.s32.totalorder %s48, %s49
      %p58 = scmp.eq.s32.totalorder %s17, 0
      %p59 = por %p57, %p58
      %p60 = scmp.ne.s32.totalorder %s48, %s49
      %p61 = scmp.eq.s32.totalorder %s18, 1
      %p62 = por %p60, %p61
      %p64 = scmp.ne.s32.totalorder %s49, %s63
      %p65 = scmp.eq.s32.totalorder %s18, 0
      %p66 = por %p64, %p65
      %s68 = sadd.s32 %s67, 1
      %p71 = scmp.eq.s32.totalorder %s12, 1
      %p72 = scmp.ne.s32.totalorder %s67, %s69
      %p73 = scmp.eq.s32.totalorder %s12, 0
      %p74 = por %p72, %p73
      %p75 = scmp.ne.s32.totalorder %s67, %s69
      %p76 = scmp.eq.s32.totalorder %s17, 1
      %p77 = por %p75, %p76
      %p78 = scmp.ne.s32.totalorder %s69, %s70
      %p79 = scmp.eq.s32.totalorder %s17, 0
      %p80 = por %p78, %p79
      %p81 = scmp.ne.s32.totalorder %s69, %s70
      %p82 = scmp.eq.s32.totalorder %s18, 1
      %p83 = por %p81, %p82
      %p85 = scmp.ne.s32.totalorder %s70, %s84
      %p86 = scmp.eq.s32.totalorder %s18, 0
      %p87 = por %p85, %p86
      %s89 = sadd.s32 %s88, 1
      %p92 = scmp.eq.s32.totalorder %s12, 1
      %p93 = scmp.ne.s32.totalorder %s88, %s90
      %p94 = scmp.eq.s32.totalorder %s12, 0
      %p95 = por %p93, %p94
      %p96 = scmp.ne.s32.totalorder %s88, %s90
      %p97 = scmp.eq.s32.totalorder %s17, 1
      %p98 = por %p96, %p97
      %p99 = scmp.ne.s32.totalorder %s90, %s91
      %p100 = scmp.eq.s32.totalorder %s17, 0
      %p101 = por %p99, %p100
      %p102 = scmp.ne.s32.totalorder %s90, %s91
      %p103 = scmp.eq.s32.totalorder %s18, 1
      %p104 = por %p102, %p103
      %p106 = scmp.ne.s32.totalorder %s91, %s105
      %p107 = scmp.eq.s32.totalorder %s18, 0
      %p108 = por %p106, %p107
      %s110 = sadd.s32 %s109, 1
      %p113 = scmp.eq.s32.totalorder %s12, 1
      %p114 = scmp.ne.s32.totalorder %s109, %s111
      %p115 = scmp.eq.s32.totalorder %s12, 0
      %p116 = por %p114, %p115
      %p117 = scmp.ne.s32.totalorder %s109, %s111
      %p118 = scmp.eq.s32.totalorder %s17, 1
      %p119 = por %p117, %p118
      %p120 = scmp.ne.s32.totalorder %s111, %s112
      %p121 = scmp.eq.s32.totalorder %s17, 0
      %p122 = por %p120, %p121
      %p123 = scmp.ne.s32.totalorder %s111, %s112
      %p124 = scmp.eq.s32.totalorder %s18, 1
      %p125 = por %p123, %p124
      %p127 = scmp.ne.s32.totalorder %s112, %s126
      %p128 = scmp.eq.s32.totalorder %s18, 0
      %p129 = por %p127, %p128
      %s130 = ssub.s32 %s12, %s19
      %p131 = scmp.eq.s32.totalorder %s130, 0
      %s133 = sadd.s32 %s132, 1
      %s134 = scalar_select %p131, %s132, %s133
      %p137 = pneg %p131
      %p138 = scmp.eq.s32.totalorder %s12, 1
      %p139 = por %p137, %p138
      %p140 = scmp.ne.s32.totalorder %s132, %s135
      %p141 = scmp.eq.s32.totalorder %s12, 0
      %p142 = por %p140, %p141
      %p143 = scmp.ne.s32.totalorder %s132, %s135
      %p144 = scmp.eq.s32.totalorder %s17, 1
      %p145 = por %p143, %p144
      %p146 = scmp.ne.s32.totalorder %s135, %s136
      %p147 = scmp.eq.s32.totalorder %s17, 0
      %p148 = por %p146, %p147
      %p149 = scmp.ne.s32.totalorder %s135, %s136
      %p150 = scmp.eq.s32.totalorder %s18, 1
      %p151 = por %p149, %p150
      %p153 = scmp.ne.s32.totalorder %s136, %s152
      %p154 = scmp.eq.s32.totalorder %s18, 0
      %p155 = por %p153, %p154
      %p156 = scmp.le.s32.totalorder 1, %s12
      %p157 = scmp.lt.s32.totalorder %s12, 3
      %p158 = pnand %p156, %p157
      %p159 = pneg %p158
      // Predicated region
      $region9: #{conv1d_model_forward.2} parent=5 // pred_check
        _
      $region10: #{conv1d_model_forward.2} parent=5 // pred_check_branch
        %161 = sbr.rel (%p158) target = $region12
      $region11: #{conv1d_model_forward.2} parent=5 // pred_region
        %s162 = ssub.s32 %s12, 1
        // Predicated region
        $region13: #{conv1d_model_forward.2} parent=11 // pred_check
          %p163 = pneg %p59
        $region14: #{conv1d_model_forward.2} parent=11 // pred_check_branch
          %165 = sbr.rel (%p163) target = $region16
        $region15: #{conv1d_model_forward.2} parent=11 // pred_region
          _
        $region16: #{conv1d_model_forward.2} parent=11 // pred_fallthru
          _
        // Predicated region
        $region17: #{conv1d_model_forward.2} parent=11 // pred_check
          %p166 = pneg %p80
        $region18: #{conv1d_model_forward.2} parent=11 // pred_check_branch
          %168 = sbr.rel (%p166) target = $region20
        $region19: #{conv1d_model_forward.2} parent=11 // pred_region
          _
        $region20: #{conv1d_model_forward.2} parent=11 // pred_fallthru
          _
        // Predicated region
        $region21: #{conv1d_model_forward.2} parent=11 // pred_check
          %p169 = pneg %p101
        $region22: #{conv1d_model_forward.2} parent=11 // pred_check_branch
          %171 = sbr.rel (%p169) target = $region24
        $region23: #{conv1d_model_forward.2} parent=11 // pred_region
          %s173 = ssub.s32 2048, 2048
          %174 = vsyncadd [#allocation3], %s173
          %s175 = sshll.u32 [#allocation2], 4
          %s176 = int_to_ptr.vmem [resolvable:$true] %s175
          %181 = dma.hbm_to_vmem [thread:$0]  %s3, 2048, %s176, [#allocation3], 256, 256, 16
        $region24: #{conv1d_model_forward.2} parent=11 // pred_fallthru
          _
        // Predicated region
        $region25: #{conv1d_model_forward.2} parent=11 // pred_check
          %p182 = pneg %p122
        $region26: #{conv1d_model_forward.2} parent=11 // pred_check_branch
          %184 = sbr.rel (%p182) target = $region28
        $region27: #{conv1d_model_forward.2} parent=11 // pred_region
          _
        $region28: #{conv1d_model_forward.2} parent=11 // pred_fallthru
          _
      $region12: #{conv1d_model_forward.2} parent=5 // pred_fallthru
        _
      %p185 = scmp.lt.s32.totalorder %s12, 2
      // Predicated region
      $region29: #{conv1d_model_forward.2} parent=5 // pred_check
        %p186 = pneg %p185
      $region30: #{conv1d_model_forward.2} parent=5 // pred_check_branch
        %188 = sbr.rel (%p186) target = $region32
      $region31: #{conv1d_model_forward.2} parent=5 // pred_region
        // Predicated region
        $region33: #{conv1d_model_forward.2} parent=31 // pred_check
          %p189 = pneg %p32
        $region34: #{conv1d_model_forward.2} parent=31 // pred_check_branch
          %191 = sbr.rel (%p189) target = $region36
        $region35: #{conv1d_model_forward.2} parent=31 // pred_region
          %p192 = scmp.lt.s32.totalorder %s12, 1
          %s193 = scalar_select %p192, %s12, 1
          %s194 = smul.addr %s193, 9
          %s195 = smul.addr %s194, 8
          %s196 = scalar_lea.vmem %s0, %s195
        $region36: #{conv1d_model_forward.2} parent=31 // pred_fallthru
          _
      $region32: #{conv1d_model_forward.2} parent=5 // pred_fallthru
        _
      %p197 = scmp.le.s32.totalorder 1, %s12
      %p198 = scmp.lt.s32.totalorder %s12, 3
      %p199 = pnand %p197, %p198
      %p200 = pneg %p199
      // Predicated region
      $region37: #{conv1d_model_forward.2} parent=5 // pred_check
        _
      $region38: #{conv1d_model_forward.2} parent=5 // pred_check_branch
        %202 = sbr.rel (%p199) target = $region40
      $region39: #{conv1d_model_forward.2} parent=5 // pred_region
        %s203 = ssub.s32 %s12, 1
        // Predicated region
        $region41: #{conv1d_model_forward.2} parent=39 // pred_check
          %p204 = pneg %p101
        $region42: #{conv1d_model_forward.2} parent=39 // pred_check_branch
          %206 = sbr.rel (%p204) target = $region44
        $region43: #{conv1d_model_forward.2} parent=39 // pred_region
          %207 = dma.done [#allocation3], 2048
        $region44: #{conv1d_model_forward.2} parent=39 // pred_fallthru
          _
        %p208 = scmp.lt.s32.totalorder %s17, 1
        %s209 = scalar_select %p208, %s17, 1
        %s210 = smul.addr %s209, 9
        %s211 = smul.addr %s210, 8
        %s212 = scalar_lea.vmem %s0, %s211
        %p213 = pneg %p38
        %p214 = pneg %p35
        %p215 = pneg %p59
        %p216 = pneg %p56
        %p217 = pneg %p80
        %p218 = pneg %p77
        %p219 = pneg %p101
        %p220 = pneg %p98
        %p221 = pneg %p122
        %p222 = pneg %p119
        %p223 = pneg %p148
        %p224 = pneg %p145
        %p225 = scmp.lt.s32.totalorder %s17, 1
        %s226 = scalar_select %p225, %s17, 1
        %s227 = smul.addr %s226, 24
        %s228 = smul.addr %s227, 4
        %s229 = scalar_lea.vmem %s5, %s228
        %p230 = scmp.lt.s32.totalorder %s17, 1
        %s231 = scalar_select %p230, %s17, 1
        %s232 = smul.addr %s231, 9
        %s233 = smul.addr %s232, 8
        %s234 = scalar_lea.vmem %s0, %s233
        %p235 = scmp.lt.s32.totalorder %s17, 1
        %s236 = scalar_select %p235, %s17, 1
        %s237 = smul.addr %s236, 24
        %s238 = smul.addr %s237, 4
        %s239 = scalar_lea.vmem %s5, %s238
        %v240 = vld [vmem:[%s234] sm:$0xff]
        %v241 = vld [vmem:[%s234 + $0x8] sm:$0xff]
        %v242 = vld [vmem:[%s234 + $0x10] sm:$0xff]
        %v243 = vld [vmem:[%s234 + $0x18] sm:$0xff]
        %v244 = vld [vmem:[%s234 + $0x20] sm:$0xff]
        %v245 = vld [vmem:[%s234 + $0x28] sm:$0xff]
        %v246 = vld [vmem:[%s234 + $0x30] sm:$0xf]
        %v247 = vld [vmem:[%s234 + $0x38] sm:$0xf]
        %v248 = vld [vmem:[%s234 + $0x40] sm:$0xf]
        %v249 = vld [vmem:[%s1] sm:$0xff]
        %v250 = vld [vmem:[%s1 + $0x8] sm:$0xff]
        %v251 = vld [vmem:[%s1 + $0x10] sm:$0xff]
        %v252 = vld [vmem:[%s1 + $0x18] sm:$0xff]
        %v253 = vld [vmem:[%s1 + $0x20] sm:$0xff]
        %v254 = vld [vmem:[%s1 + $0x28] sm:$0xff]
        %v255 = vld [vmem:[%s1 + $0x30] sm:$0xff]
        %v256 = vld [vmem:[%s1 + $0x38] sm:$0xff]
        %v257 = vld [vmem:[%s1 + $0x40] sm:$0xff]
        %v258 = vld [vmem:[%s1 + $0x48] sm:$0xff]
        %v259 = vld [vmem:[%s1 + $0x50] sm:$0xff]
        %v260 = vld [vmem:[%s1 + $0x58] sm:$0xff]
        %v261 = vld [vmem:[%s1 + $0x60] sm:$0xff]
        %v262 = vld [vmem:[%s1 + $0x68] sm:$0xff]
        %v263 = vld [vmem:[%s1 + $0x70] sm:$0xff]
        %v264 = vld [vmem:[%s1 + $0x78] sm:$0xff]
        %v265 = vld [vmem:[%s2] sm:$0xff]
        %v266 = vld [vmem:[%s2 + $0x8] sm:$0xff]
        %v267 = vld [vmem:[%s2 + $0x10] sm:$0xff]
        %v268 = vld [vmem:[%s2 + $0x18] sm:$0xff]
        %v269 = vld [vmem:[%s2 + $0x20] sm:$0xff]
        %v270 = vld [vmem:[%s2 + $0x28] sm:$0xff]
        %v271 = vld [vmem:[%s2 + $0x30] sm:$0xff]
        %v272 = vld [vmem:[%s2 + $0x38] sm:$0xff]
        %v273 = vld [vmem:[%s2 + $0x40] sm:$0xff]
        %v274 = vld [vmem:[%s2 + $0x48] sm:$0xff]
        %v275 = vld [vmem:[%s2 + $0x50] sm:$0xff]
        %v276 = vld [vmem:[%s2 + $0x58] sm:$0xff]
        %v277 = vld [vmem:[%s2 + $0x60] sm:$0xff]
        %v278 = vld [vmem:[%s2 + $0x68] sm:$0xff]
        %v279 = vld [vmem:[%s2 + $0x70] sm:$0xff]
        %v280 = vld [vmem:[%s2 + $0x78] sm:$0xff]
        %282 = vset.pattern.permute.xlu0 0
        %283 = vperm.xlu0 %282, %v265
        %v284 = vpop.permute.xlu0 %283
        %287 = vset.pattern.permute.xlu0 0
        %288 = vperm.xlu0 %287, %v266
        %v289 = vpop.permute.xlu0 %288
        %292 = vset.pattern.permute.xlu0 0
        %293 = vperm.xlu0 %292, %v267
        %v294 = vpop.permute.xlu0 %293
        %297 = vset.pattern.permute.xlu0 0
        %298 = vperm.xlu0 %297, %v268
        %v299 = vpop.permute.xlu0 %298
        %302 = vset.pattern.permute.xlu0 0
        %303 = vperm.xlu0 %302, %v269
        %v304 = vpop.permute.xlu0 %303
        %307 = vset.pattern.permute.xlu0 0
        %308 = vperm.xlu0 %307, %v270
        %v309 = vpop.permute.xlu0 %308
        %312 = vset.pattern.permute.xlu0 0
        %313 = vperm.xlu0 %312, %v271
        %v314 = vpop.permute.xlu0 %313
        %317 = vset.pattern.permute.xlu0 0
        %318 = vperm.xlu0 %317, %v272
        %v319 = vpop.permute.xlu0 %318
        %322 = vset.pattern.permute.xlu0 0
        %323 = vperm.xlu0 %322, %v273
        %v324 = vpop.permute.xlu0 %323
        %327 = vset.pattern.permute.xlu0 0
        %328 = vperm.xlu0 %327, %v274
        %v329 = vpop.permute.xlu0 %328
        %332 = vset.pattern.permute.xlu0 0
        %333 = vperm.xlu0 %332, %v275
        %v334 = vpop.permute.xlu0 %333
        %337 = vset.pattern.permute.xlu0 0
        %338 = vperm.xlu0 %337, %v276
        %v339 = vpop.permute.xlu0 %338
        %342 = vset.pattern.permute.xlu0 0
        %343 = vperm.xlu0 %342, %v277
        %v344 = vpop.permute.xlu0 %343
        %347 = vset.pattern.permute.xlu0 0
        %348 = vperm.xlu0 %347, %v278
        %v349 = vpop.permute.xlu0 %348
        %352 = vset.pattern.permute.xlu0 0
        %353 = vperm.xlu0 %352, %v279
        %v354 = vpop.permute.xlu0 %353
        %357 = vset.pattern.permute.xlu0 0
        %358 = vperm.xlu0 %357, %v280
        %v359 = vpop.permute.xlu0 %358
        %vm361 = vcmask 162816
        %v363 = vsel %vm361, %v249, 0
        %v366 = vsel %vm361, %v250, 0
        %v369 = vsel %vm361, %v251, 0
        %v372 = vsel %vm361, %v252, 0
        %v375 = vsel %vm361, %v253, 0
        %v378 = vsel %vm361, %v254, 0
        %v381 = vsel %vm361, %v255, 0
        %v384 = vsel %vm361, %v256, 0
        %v387 = vsel %vm361, %v257, 0
        %v390 = vsel %vm361, %v258, 0
        %v393 = vsel %vm361, %v259, 0
        %v396 = vsel %vm361, %v260, 0
        %v399 = vsel %vm361, %v261, 0
        %v402 = vsel %vm361, %v262, 0
        %v405 = vsel %vm361, %v263, 0
        %v408 = vsel %vm361, %v264, 0
        %vm410 = vcmask 1043456
        %v412 = vsel %vm410, %v246, 0
        %v415 = vsel %vm410, %v247, 0
        %v418 = vsel %vm410, %v248, 0
        %420 = vmatprep.subr.mxu0 %v241
        %421 = vmatpush1.msra.mxu0 %v240
        %422 = vmatprep.subr.mxu0 %v244
        %423 = vmatpush1.msra.mxu0 %v243
        %424 = vmatprep.subr.mxu0 %v415
        %425 = vmatpush1.msra.mxu0 %v412
        %426 = vmatprep.subr.mxu0 0.0
        %427 = vmatpush1.msra.mxu0 0.0
        %428 = vmatprep.subr.mxu0 0.0
        %429 = vmatpush1.msra.mxu0 0.0
        %430 = vmatprep.subr.mxu0 0.0
        %431 = vmatpush1.msra.mxu0 0.0
        %432 = vmatprep.subr.mxu0 0.0
        %433 = vmatpush1.msra.mxu0 0.0
        %434 = vmatprep.subr.mxu0 0.0
        %435 = vmatpush1.msra.mxu0 0.0
        %436 = vmatprep.subr.mxu0 0.0
        %437 = vmatpush1.msra.mxu0 0.0
        %438 = vmatprep.subr.mxu0 0.0
        %439 = vmatpush1.msra.mxu0 0.0
        %440 = vmatprep.subr.mxu0 0.0
        %441 = vmatpush1.msra.mxu0 0.0
        %442 = vmatprep.subr.mxu0 0.0
        %443 = vmatpush1.msra.mxu0 0.0
        %444 = vmatprep.subr.mxu0 0.0
        %445 = vmatpush1.msra.mxu0 0.0
        %446 = vmatprep.subr.mxu0 0.0
        %447 = vmatpush1.msra.mxu0 0.0
        %448 = vmatprep.subr.mxu0 0.0
        %449 = vmatpush1.msra.mxu0 0.0
        %450 = vmatprep.subr.mxu0 0.0
        %451 = vmatpush1.msra.mxu0 0.0
        %452 = vmatprep.subr.mxu0 0.0
        %453 = vmatpush1.msra.mxu0 0.0
        %454 = vmatprep.subr.mxu0 0.0
        %455 = vmatpush1.msra.mxu0 0.0
        %456 = vmatprep.subr.mxu0 0.0
        %457 = vmatpush1.msra.mxu0 0.0
        %458 = vmatprep.subr.mxu0 0.0
        %459 = vmatpush1.msra.mxu0 0.0
        %460 = vmatprep.subr.mxu0 0.0
        %461 = vmatpush1.msra.mxu0 0.0
        %462 = vmatprep.subr.mxu0 0.0
        %463 = vmatpush1.msra.mxu0 0.0
        %464 = vmatprep.subr.mxu0 0.0
        %465 = vmatpush1.msra.mxu0 0.0
        %466 = vmatprep.subr.mxu0 0.0
        %467 = vmatpush1.msra.mxu0 0.0
        %468 = vmatprep.subr.mxu0 0.0
        %469 = vmatpush1.msra.mxu0 0.0
        %470 = vmatprep.subr.mxu0 0.0
        %471 = vmatpush1.msra.mxu0 0.0
        %472 = vmatprep.subr.mxu0 0.0
        %473 = vmatpush1.msra.mxu0 0.0
        %474 = vmatprep.subr.mxu0 0.0
        %475 = vmatpush1.msra.mxu0 0.0
        %476 = vmatprep.subr.mxu0 0.0
        %477 = vmatpush1.msra.mxu0 0.0
        %478 = vmatprep.subr.mxu0 0.0
        %479 = vmatpush1.msra.mxu0 0.0
        %480 = vmatprep.subr.mxu0 0.0
        %481 = vmatpush1.msra.mxu0 0.0
        %482 = vmatprep.subr.mxu0 0.0
        %483 = vmatpush1.msra.mxu0 0.0
        %484 = vmatprep.mubr.f32.mxu0 0.0
        %485 = vmatmul.mubr.f32.gmra.mrb[0].mxu0 %v363
        %v486 = vpop.f32.mrb[0].mxu0
        %v487 = vadd.f32 %v284, %v486
        %v488 = vpop.f32.mrb[0].mxu0
        %v489 = vadd.f32 %v284, %v488
        %490 = vmatprep.mubr.f32.mxu0 0.0
        %491 = vmatmul.mubr.f32.gmra.mrb[0].mxu0 %v366
        %v492 = vpop.f32.mrb[0].mxu0
        %v493 = vadd.f32 %v289, %v492
        %v494 = vpop.f32.mrb[0].mxu0
        %v495 = vadd.f32 %v289, %v494
        %496 = vmatprep.mubr.f32.mxu0 0.0
        %497 = vmatmul.mubr.f32.gmra.mrb[0].mxu0 %v369
        %v498 = vpop.f32.mrb[0].mxu0
        %v499 = vadd.f32 %v294, %v498
        %v500 = vpop.f32.mrb[0].mxu0
        %v501 = vadd.f32 %v294, %v500
        %502 = vmatprep.mubr.f32.mxu0 0.0
        %503 = vmatmul.mubr.f32.gmra.mrb[0].mxu0 %v372
        %v504 = vpop.f32.mrb[0].mxu0
        %v505 = vadd.f32 %v299, %v504
        %v506 = vpop.f32.mrb[0].mxu0
        %v507 = vadd.f32 %v299, %v506
        %508 = vmatprep.mubr.f32.mxu0 0.0
        %509 = vmatmul.mubr.f32.gmra.mrb[0].mxu0 %v375
        %v510 = vpop.f32.mrb[0].mxu0
        %v511 = vadd.f32 %v304, %v510
        %v512 = vpop.f32.mrb[0].mxu0
        %v513 = vadd.f32 %v304, %v512
        %514 = vmatprep.mubr.f32.mxu0 0.0
        %515 = vmatmul.mubr.f32.gmra.mrb[0].mxu0 %v378
        %v516 = vpop.f32.mrb[0].mxu0
        %v517 = vadd.f32 %v309, %v516
        %v518 = vpop.f32.mrb[0].mxu0
        %v519 = vadd.f32 %v309, %v518
        %520 = vmatprep.mubr.f32.mxu0 0.0
        %521 = vmatmul.mubr.f32.gmra.mrb[0].mxu0 %v381
        %v522 = vpop.f32.mrb[0].mxu0
        %v523 = vadd.f32 %v314, %v522
        %v524 = vpop.f32.mrb[0].mxu0
        %v525 = vadd.f32 %v314, %v524
        %526 = vmatprep.mubr.f32.mxu0 0.0
        %527 = vmatmul.mubr.f32.gmra.mrb[0].mxu0 %v384
        %v528 = vpop.f32.mrb[0].mxu0
        %v529 = vadd.f32 %v319, %v528
        %v530 = vpop.f32.mrb[0].mxu0
        %v531 = vadd.f32 %v319, %v530
        %532 = vmatprep.mubr.f32.mxu0 0.0
        %533 = vmatmul.mubr.f32.gmra.mrb[0].mxu0 %v387
        %v534 = vpop.f32.mrb[0].mxu0
        %v535 = vadd.f32 %v324, %v534
        %v536 = vpop.f32.mrb[0].mxu0
        %v537 = vadd.f32 %v324, %v536
        %538 = vmatprep.mubr.f32.mxu0 0.0
        %539 = vmatmul.mubr.f32.gmra.mrb[0].mxu0 %v390
        %v540 = vpop.f32.mrb[0].mxu0
        %v541 = vadd.f32 %v329, %v540
        %v542 = vpop.f32.mrb[0].mxu0
        %v543 = vadd.f32 %v329, %v542
        %544 = vmatprep.mubr.f32.mxu0 0.0
        %545 = vmatmul.mubr.f32.gmra.mrb[0].mxu0 %v393
        %v546 = vpop.f32.mrb[0].mxu0
        %v547 = vadd.f32 %v334, %v546
        %v548 = vpop.f32.mrb[0].mxu0
        %v549 = vadd.f32 %v334, %v548
        %550 = vmatprep.mubr.f32.mxu0 0.0
        %551 = vmatmul.mubr.f32.gmra.mrb[0].mxu0 %v396
        %v552 = vpop.f32.mrb[0].mxu0
        %v553 = vadd.f32 %v339, %v552
        %v554 = vpop.f32.mrb[0].mxu0
        %v555 = vadd.f32 %v339, %v554
        %556 = vmatprep.mubr.f32.mxu0 0.0
        %557 = vmatmul.mubr.f32.gmra.mrb[0].mxu0 %v399
        %v558 = vpop.f32.mrb[0].mxu0
        %v559 = vadd.f32 %v344, %v558
        %v560 = vpop.f32.mrb[0].mxu0
        %v561 = vadd.f32 %v344, %v560
        %562 = vmatprep.mubr.f32.mxu0 0.0
        %563 = vmatmul.mubr.f32.gmra.mrb[0].mxu0 %v402
        %v564 = vpop.f32.mrb[0].mxu0
        %v565 = vadd.f32 %v349, %v564
        %v566 = vpop.f32.mrb[0].mxu0
        %v567 = vadd.f32 %v349, %v566
        %568 = vmatprep.mubr.f32.mxu0 0.0
        %569 = vmatmul.mubr.f32.gmra.mrb[0].mxu0 %v405
        %v570 = vpop.f32.mrb[0].mxu0
        %v571 = vadd.f32 %v354, %v570
        %v572 = vpop.f32.mrb[0].mxu0
        %v573 = vadd.f32 %v354, %v572
        %574 = vmatprep.mubr.f32.mxu0 0.0
        %575 = vmatmul.mubr.f32.gmra.mrb[0].mxu0 %v408
        %v576 = vpop.f32.mrb[0].mxu0
        %v577 = vadd.f32 %v359, %v576
        %v578 = vpop.f32.mrb[0].mxu0
        %v579 = vadd.f32 %v359, %v578
        %580 = vdwg.mxu0
        %581 = vmatprep.subr.mxu0 0.0
        %582 = vmatpush1.msra.mxu0 %v242
        %583 = vmatprep.subr.mxu0 0.0
        %584 = vmatpush1.msra.mxu0 %v245
        %585 = vmatprep.subr.mxu0 0.0
        %586 = vmatpush1.msra.mxu0 %v418
        %587 = vmatprep.subr.mxu0 0.0
        %588 = vmatpush1.msra.mxu0 0.0
        %589 = vmatprep.subr.mxu0 0.0
        %590 = vmatpush1.msra.mxu0 0.0
        %591 = vmatprep.subr.mxu0 0.0
        %592 = vmatpush1.msra.mxu0 0.0
        %593 = vmatprep.subr.mxu0 0.0
        %594 = vmatpush1.msra.mxu0 0.0
        %595 = vmatprep.subr.mxu0 0.0
        %596 = vmatpush1.msra.mxu0 0.0
        %597 = vmatprep.subr.mxu0 0.0
        %598 = vmatpush1.msra.mxu0 0.0
        %599 = vmatprep.subr.mxu0 0.0
        %600 = vmatpush1.msra.mxu0 0.0
        %601 = vmatprep.subr.mxu0 0.0
        %602 = vmatpush1.msra.mxu0 0.0
        %603 = vmatprep.subr.mxu0 0.0
        %604 = vmatpush1.msra.mxu0 0.0
        %605 = vmatprep.subr.mxu0 0.0
        %606 = vmatpush1.msra.mxu0 0.0
        %607 = vmatprep.subr.mxu0 0.0
        %608 = vmatpush1.msra.mxu0 0.0
        %609 = vmatprep.subr.mxu0 0.0
        %610 = vmatpush1.msra.mxu0 0.0
        %611 = vmatprep.subr.mxu0 0.0
        %612 = vmatpush1.msra.mxu0 0.0
        %613 = vmatprep.subr.mxu0 0.0
        %614 = vmatpush1.msra.mxu0 0.0
        %615 = vmatprep.subr.mxu0 0.0
        %616 = vmatpush1.msra.mxu0 0.0
        %617 = vmatprep.subr.mxu0 0.0
        %618 = vmatpush1.msra.mxu0 0.0
        %619 = vmatprep.subr.mxu0 0.0
        %620 = vmatpush1.msra.mxu0 0.0
        %621 = vmatprep.subr.mxu0 0.0
        %622 = vmatpush1.msra.mxu0 0.0
        %623 = vmatprep.subr.mxu0 0.0
        %624 = vmatpush1.msra.mxu0 0.0
        %625 = vmatprep.subr.mxu0 0.0
        %626 = vmatpush1.msra.mxu0 0.0
        %627 = vmatprep.subr.mxu0 0.0
        %628 = vmatpush1.msra.mxu0 0.0
        %629 = vmatprep.subr.mxu0 0.0
        %630 = vmatpush1.msra.mxu0 0.0
        %631 = vmatprep.subr.mxu0 0.0
        %632 = vmatpush1.msra.mxu0 0.0
        %633 = vmatprep.subr.mxu0 0.0
        %634 = vmatpush1.msra.mxu0 0.0
        %635 = vmatprep.subr.mxu0 0.0
        %636 = vmatpush1.msra.mxu0 0.0
        %637 = vmatprep.subr.mxu0 0.0
        %638 = vmatpush1.msra.mxu0 0.0
        %639 = vmatprep.subr.mxu0 0.0
        %640 = vmatpush1.msra.mxu0 0.0
        %641 = vmatprep.subr.mxu0 0.0
        %642 = vmatpush1.msra.mxu0 0.0
        %643 = vmatprep.subr.mxu0 0.0
        %644 = vmatpush1.msra.mxu0 0.0
        %645 = vmatprep.mubr.f32.mxu0 0.0
        %646 = vmatmul.mubr.f32.gmra.mrb[0].mxu0 %v363
        %v647 = vpop.f32.mrb[0].mxu0
        %v648 = vadd.f32 %v284, %v647
        %v649 = vpop.f32.mrb[0].mxu0
        %650 = vmatprep.mubr.f32.mxu0 0.0
        %651 = vmatmul.mubr.f32.gmra.mrb[0].mxu0 %v366
        %v652 = vpop.f32.mrb[0].mxu0
        %v653 = vadd.f32 %v289, %v652
        %v654 = vpop.f32.mrb[0].mxu0
        %655 = vmatprep.mubr.f32.mxu0 0.0
        %656 = vmatmul.mubr.f32.gmra.mrb[0].mxu0 %v369
        %v657 = vpop.f32.mrb[0].mxu0
        %v658 = vadd.f32 %v294, %v657
        %v659 = vpop.f32.mrb[0].mxu0
        %660 = vmatprep.mubr.f32.mxu0 0.0
        %661 = vmatmul.mubr.f32.gmra.mrb[0].mxu0 %v372
        %v662 = vpop.f32.mrb[0].mxu0
        %v663 = vadd.f32 %v299, %v662
        %v664 = vpop.f32.mrb[0].mxu0
        %665 = vmatprep.mubr.f32.mxu0 0.0
        %666 = vmatmul.mubr.f32.gmra.mrb[0].mxu0 %v375
        %v667 = vpop.f32.mrb[0].mxu0
        %v668 = vadd.f32 %v304, %v667
        %v669 = vpop.f32.mrb[0].mxu0
        %670 = vmatprep.mubr.f32.mxu0 0.0
        %671 = vmatmul.mubr.f32.gmra.mrb[0].mxu0 %v378
        %v672 = vpop.f32.mrb[0].mxu0
        %v673 = vadd.f32 %v309, %v672
        %v674 = vpop.f32.mrb[0].mxu0
        %675 = vmatprep.mubr.f32.mxu0 0.0
        %676 = vmatmul.mubr.f32.gmra.mrb[0].mxu0 %v381
        %v677 = vpop.f32.mrb[0].mxu0
        %v678 = vadd.f32 %v314, %v677
        %v679 = vpop.f32.mrb[0].mxu0
        %680 = vmatprep.mubr.f32.mxu0 0.0
        %681 = vmatmul.mubr.f32.gmra.mrb[0].mxu0 %v384
        %v682 = vpop.f32.mrb[0].mxu0
        %v683 = vadd.f32 %v319, %v682
        %v684 = vpop.f32.mrb[0].mxu0
        %685 = vmatprep.mubr.f32.mxu0 0.0
        %686 = vmatmul.mubr.f32.gmra.mrb[0].mxu0 %v387
        %v687 = vpop.f32.mrb[0].mxu0
        %v688 = vadd.f32 %v324, %v687
        %v689 = vpop.f32.mrb[0].mxu0
        %690 = vmatprep.mubr.f32.mxu0 0.0
        %691 = vmatmul.mubr.f32.gmra.mrb[0].mxu0 %v390
        %v692 = vpop.f32.mrb[0].mxu0
        %v693 = vadd.f32 %v329, %v692
        %v694 = vpop.f32.mrb[0].mxu0
        %695 = vmatprep.mubr.f32.mxu0 0.0
        %696 = vmatmul.mubr.f32.gmra.mrb[0].mxu0 %v393
        %v697 = vpop.f32.mrb[0].mxu0
        %v698 = vadd.f32 %v334, %v697
        %v699 = vpop.f32.mrb[0].mxu0
        %700 = vmatprep.mubr.f32.mxu0 0.0
        %701 = vmatmul.mubr.f32.gmra.mrb[0].mxu0 %v396
        %v702 = vpop.f32.mrb[0].mxu0
        %v703 = vadd.f32 %v339, %v702
        %v704 = vpop.f32.mrb[0].mxu0
        %705 = vmatprep.mubr.f32.mxu0 0.0
        %706 = vmatmul.mubr.f32.gmra.mrb[0].mxu0 %v399
        %v707 = vpop.f32.mrb[0].mxu0
        %v708 = vadd.f32 %v344, %v707
        %v709 = vpop.f32.mrb[0].mxu0
        %710 = vmatprep.mubr.f32.mxu0 0.0
        %711 = vmatmul.mubr.f32.gmra.mrb[0].mxu0 %v402
        %v712 = vpop.f32.mrb[0].mxu0
        %v713 = vadd.f32 %v349, %v712
        %v714 = vpop.f32.mrb[0].mxu0
        %715 = vmatprep.mubr.f32.mxu0 0.0
        %716 = vmatmul.mubr.f32.gmra.mrb[0].mxu0 %v405
        %v717 = vpop.f32.mrb[0].mxu0
        %v718 = vadd.f32 %v354, %v717
        %v719 = vpop.f32.mrb[0].mxu0
        %720 = vmatprep.mubr.f32.mxu0 0.0
        %721 = vmatmul.mubr.f32.gmra.mrb[0].mxu0 %v408
        %v722 = vpop.f32.mrb[0].mxu0
        %v723 = vadd.f32 %v359, %v722
        %v724 = vpop.f32.mrb[0].mxu0
        %725 = vdwg.mxu0
        %v726 = vmax.f32 %v487, 0.0
        %v727 = vmax.f32 %v489, 0.0
        %v728 = vmax.f32 %v648, 0.0
        %v729 = vmax.f32 %v493, 0.0
        %v730 = vmax.f32 %v495, 0.0
        %v731 = vmax.f32 %v653, 0.0
        %v732 = vmax.f32 %v499, 0.0
        %v733 = vmax.f32 %v501, 0.0
        %v734 = vmax.f32 %v658, 0.0
        %v735 = vmax.f32 %v505, 0.0
        %v736 = vmax.f32 %v507, 0.0
        %v737 = vmax.f32 %v663, 0.0
        %v738 = vmax.f32 %v511, 0.0
        %v739 = vmax.f32 %v513, 0.0
        %v740 = vmax.f32 %v668, 0.0
        %v741 = vmax.f32 %v517, 0.0
        %v742 = vmax.f32 %v519, 0.0
        %v743 = vmax.f32 %v673, 0.0
        %v744 = vmax.f32 %v523, 0.0
        %v745 = vmax.f32 %v525, 0.0
        %v746 = vmax.f32 %v678, 0.0
        %v747 = vmax.f32 %v529, 0.0
        %v748 = vmax.f32 %v531, 0.0
        %v749 = vmax.f32 %v683, 0.0
        %v750 = vmax.f32 %v535, 0.0
        %v751 = vmax.f32 %v537, 0.0
        %v752 = vmax.f32 %v688, 0.0
        %v753 = vmax.f32 %v541, 0.0
        %v754 = vmax.f32 %v543, 0.0
        %v755 = vmax.f32 %v693, 0.0
        %v756 = vmax.f32 %v547, 0.0
        %v757 = vmax.f32 %v549, 0.0
        %v758 = vmax.f32 %v698, 0.0
        %v759 = vmax.f32 %v553, 0.0
        %v760 = vmax.f32 %v555, 0.0
        %v761 = vmax.f32 %v703, 0.0
        %v762 = vmax.f32 %v559, 0.0
        %v763 = vmax.f32 %v561, 0.0
        %v764 = vmax.f32 %v708, 0.0
        %v765 = vmax.f32 %v565, 0.0
        %v766 = vmax.f32 %v567, 0.0
        %v767 = vmax.f32 %v713, 0.0
        %v768 = vmax.f32 %v571, 0.0
        %v769 = vmax.f32 %v573, 0.0
        %v770 = vmax.f32 %v718, 0.0
        %v771 = vmax.f32 %v577, 0.0
        %v772 = vmax.f32 %v579, 0.0
        %v773 = vmax.f32 %v723, 0.0
        %v774 = vmax.f32 %v726, %v738
        %v775 = vmax.f32 %v727, %v739
        %v776 = vmax.f32 %v728, %v740
        %v777 = vmax.f32 %v729, %v741
        %v778 = vmax.f32 %v730, %v742
        %v779 = vmax.f32 %v731, %v743
        %v780 = vmax.f32 %v732, %v744
        %v781 = vmax.f32 %v733, %v745
        %v782 = vmax.f32 %v734, %v746
        %v783 = vmax.f32 %v735, %v747
        %v784 = vmax.f32 %v736, %v748
        %v785 = vmax.f32 %v737, %v749
        %v786 = vmax.f32 %v750, %v762
        %v787 = vmax.f32 %v751, %v763
        %v788 = vmax.f32 %v752, %v764
        %v789 = vmax.f32 %v753, %v765
        %v790 = vmax.f32 %v754, %v766
        %v791 = vmax.f32 %v755, %v767
        %v792 = vmax.f32 %v756, %v768
        %v793 = vmax.f32 %v757, %v769
        %v794 = vmax.f32 %v758, %v770
        %v795 = vmax.f32 %v759, %v771
        %v796 = vmax.f32 %v760, %v772
        %v797 = vmax.f32 %v761, %v773
        %810 = vrot.lane.b32.xlu0 %v774, 127
        %v811 = vpop.permute.xlu0 %810
        %812 = vrot.lane.b32.xlu0 %v775, 127
        %v813 = vpop.permute.xlu0 %812
        %814 = vrot.lane.b32.xlu0 %v776, 127
        %v815 = vpop.permute.xlu0 %814
        %816 = vrot.lane.b32.xlu0 %v777, 127
        %v817 = vpop.permute.xlu0 %816
        %818 = vrot.lane.b32.xlu0 %v778, 127
        %v819 = vpop.permute.xlu0 %818
        %820 = vrot.lane.b32.xlu0 %v779, 127
        %v821 = vpop.permute.xlu0 %820
        %822 = vrot.lane.b32.xlu0 %v780, 127
        %v823 = vpop.permute.xlu0 %822
        %824 = vrot.lane.b32.xlu0 %v781, 127
        %v825 = vpop.permute.xlu0 %824
        %826 = vrot.lane.b32.xlu0 %v782, 127
        %v827 = vpop.permute.xlu0 %826
        %828 = vrot.lane.b32.xlu0 %v783, 127
        %v829 = vpop.permute.xlu0 %828
        %830 = vrot.lane.b32.xlu0 %v784, 127
        %v831 = vpop.permute.xlu0 %830
        %832 = vrot.lane.b32.xlu0 %v785, 127
        %v833 = vpop.permute.xlu0 %832
        %vm834 = vcmask 1039360
        %v835 = vsel %vm834, %v811, %v813
        %v836 = vsel %vm834, %v813, %v815
        %v837 = vsel %vm834, %v817, %v819
        %v838 = vsel %vm834, %v819, %v821
        %v839 = vsel %vm834, %v823, %v825
        %v840 = vsel %vm834, %v825, %v827
        %v841 = vsel %vm834, %v829, %v831
        %v842 = vsel %vm834, %v831, %v833
        %867 = vrot.lane.b32.xlu0 %v786, 127
        %v868 = vpop.permute.xlu0 %867
        %869 = vrot.lane.b32.xlu0 %v787, 127
        %v870 = vpop.permute.xlu0 %869
        %871 = vrot.lane.b32.xlu0 %v788, 127
        %v872 = vpop.permute.xlu0 %871
        %873 = vrot.lane.b32.xlu0 %v789, 127
        %v874 = vpop.permute.xlu0 %873
        %875 = vrot.lane.b32.xlu0 %v790, 127
        %v876 = vpop.permute.xlu0 %875
        %877 = vrot.lane.b32.xlu0 %v791, 127
        %v878 = vpop.permute.xlu0 %877
        %879 = vrot.lane.b32.xlu0 %v792, 127
        %v880 = vpop.permute.xlu0 %879
        %881 = vrot.lane.b32.xlu0 %v793, 127
        %v882 = vpop.permute.xlu0 %881
        %883 = vrot.lane.b32.xlu0 %v794, 127
        %v884 = vpop.permute.xlu0 %883
        %885 = vrot.lane.b32.xlu0 %v795, 127
        %v886 = vpop.permute.xlu0 %885
        %887 = vrot.lane.b32.xlu0 %v796, 127
        %v888 = vpop.permute.xlu0 %887
        %889 = vrot.lane.b32.xlu0 %v797, 127
        %v890 = vpop.permute.xlu0 %889
        %v891 = vsel %vm834, %v868, %v870
        %v892 = vsel %vm834, %v870, %v872
        %v893 = vsel %vm834, %v874, %v876
        %v894 = vsel %vm834, %v876, %v878
        %v895 = vsel %vm834, %v880, %v882
        %v896 = vsel %vm834, %v882, %v884
        %v897 = vsel %vm834, %v886, %v888
        %v898 = vsel %vm834, %v888, %v890
        %911 = vrot.lane.b32.xlu0 %v774, 126
        %v912 = vpop.permute.xlu0 %911
        %913 = vrot.lane.b32.xlu0 %v775, 126
        %v914 = vpop.permute.xlu0 %913
        %915 = vrot.lane.b32.xlu0 %v776, 126
        %v916 = vpop.permute.xlu0 %915
        %917 = vrot.lane.b32.xlu0 %v777, 126
        %v918 = vpop.permute.xlu0 %917
        %919 = vrot.lane.b32.xlu0 %v778, 126
        %v920 = vpop.permute.xlu0 %919
        %921 = vrot.lane.b32.xlu0 %v779, 126
        %v922 = vpop.permute.xlu0 %921
        %923 = vrot.lane.b32.xlu0 %v780, 126
        %v924 = vpop.permute.xlu0 %923
        %925 = vrot.lane.b32.xlu0 %v781, 126
        %v926 = vpop.permute.xlu0 %925
        %927 = vrot.lane.b32.xlu0 %v782, 126
        %v928 = vpop.permute.xlu0 %927
        %929 = vrot.lane.b32.xlu0 %v783, 126
        %v930 = vpop.permute.xlu0 %929
        %931 = vrot.lane.b32.xlu0 %v784, 126
        %v932 = vpop.permute.xlu0 %931
        %933 = vrot.lane.b32.xlu0 %v785, 126
        %v934 = vpop.permute.xlu0 %933
        %vm935 = vcmask 1031168
        %v936 = vsel %vm935, %v912, %v914
        %v937 = vsel %vm935, %v914, %v916
        %v938 = vsel %vm935, %v918, %v920
        %v939 = vsel %vm935, %v920, %v922
        %v940 = vsel %vm935, %v924, %v926
        %v941 = vsel %vm935, %v926, %v928
        %v942 = vsel %vm935, %v930, %v932
        %v943 = vsel %vm935, %v932, %v934
        %956 = vrot.lane.b32.xlu0 %v786, 126
        %v957 = vpop.permute.xlu0 %956
        %958 = vrot.lane.b32.xlu0 %v787, 126
        %v959 = vpop.permute.xlu0 %958
        %960 = vrot.lane.b32.xlu0 %v788, 126
        %v961 = vpop.permute.xlu0 %960
        %962 = vrot.lane.b32.xlu0 %v789, 126
        %v963 = vpop.permute.xlu0 %962
        %964 = vrot.lane.b32.xlu0 %v790, 126
        %v965 = vpop.permute.xlu0 %964
        %966 = vrot.lane.b32.xlu0 %v791, 126
        %v967 = vpop.permute.xlu0 %966
        %968 = vrot.lane.b32.xlu0 %v792, 126
        %v969 = vpop.permute.xlu0 %968
        %970 = vrot.lane.b32.xlu0 %v793, 126
        %v971 = vpop.permute.xlu0 %970
        %972 = vrot.lane.b32.xlu0 %v794, 126
        %v973 = vpop.permute.xlu0 %972
        %974 = vrot.lane.b32.xlu0 %v795, 126
        %v975 = vpop.permute.xlu0 %974
        %976 = vrot.lane.b32.xlu0 %v796, 126
        %v977 = vpop.permute.xlu0 %976
        %978 = vrot.lane.b32.xlu0 %v797, 126
        %v979 = vpop.permute.xlu0 %978
        %v980 = vsel %vm935, %v957, %v959
        %v981 = vsel %vm935, %v959, %v961
        %v982 = vsel %vm935, %v963, %v965
        %v983 = vsel %vm935, %v965, %v967
        %v984 = vsel %vm935, %v969, %v971
        %v985 = vsel %vm935, %v971, %v973
        %v986 = vsel %vm935, %v975, %v977
        %v987 = vsel %vm935, %v977, %v979
        %v1000 = vld [vmem:[#allocation2] sm:$0xff]
        %v1001 = vld [vmem:[#allocation2 + $0x8] sm:$0xff]
        %v1002 = vld [vmem:[#allocation2 + $0x10] sm:$0xff]
        %v1003 = vld [vmem:[#allocation2 + $0x18] sm:$0xff]
        %v1004 = vld [vmem:[#allocation2 + $0x20] sm:$0xff]
        %v1005 = vld [vmem:[#allocation2 + $0x28] sm:$0xff]
        %v1006 = vld [vmem:[#allocation2 + $0x30] sm:$0xff]
        %v1007 = vld [vmem:[#allocation2 + $0x38] sm:$0xff]
        %v1008 = vld [vmem:[#allocation2 + $0x40] sm:$0xff]
        %v1009 = vld [vmem:[#allocation2 + $0x48] sm:$0xff]
        %v1010 = vld [vmem:[#allocation2 + $0x50] sm:$0xff]
        %v1011 = vld [vmem:[#allocation2 + $0x58] sm:$0xff]
        %v1012 = vld [vmem:[#allocation2 + $0x60] sm:$0xff]
        %v1013 = vld [vmem:[#allocation2 + $0x68] sm:$0xff]
        %v1014 = vld [vmem:[#allocation2 + $0x70] sm:$0xff]
        %v1015 = vld [vmem:[#allocation2 + $0x78] sm:$0xff]
        %v1016 = vld [vmem:[%s4] sm:$0xff]
        %v1017 = vld [vmem:[%s4 + $0x8] sm:$0xff]
        %v1018 = vld [vmem:[%s4 + $0x10] sm:$0xff]
        %v1019 = vld [vmem:[%s4 + $0x18] sm:$0xff]
        %v1020 = vld [vmem:[%s4 + $0x20] sm:$0xff]
        %v1021 = vld [vmem:[%s4 + $0x28] sm:$0xff]
        %v1022 = vld [vmem:[%s4 + $0x30] sm:$0xff]
        %v1023 = vld [vmem:[%s4 + $0x38] sm:$0xff]
        %1025 = vset.pattern.permute.xlu0 0
        %1026 = vperm.xlu0 %1025, %v1016
        %v1027 = vpop.permute.xlu0 %1026
        %1030 = vset.pattern.permute.xlu0 0
        %1031 = vperm.xlu0 %1030, %v1017
        %v1032 = vpop.permute.xlu0 %1031
        %1035 = vset.pattern.permute.xlu0 0
        %1036 = vperm.xlu0 %1035, %v1018
        %v1037 = vpop.permute.xlu0 %1036
        %1040 = vset.pattern.permute.xlu0 0
        %1041 = vperm.xlu0 %1040, %v1019
        %v1042 = vpop.permute.xlu0 %1041
        %1045 = vset.pattern.permute.xlu0 0
        %1046 = vperm.xlu0 %1045, %v1020
        %v1047 = vpop.permute.xlu0 %1046
        %1050 = vset.pattern.permute.xlu0 0
        %1051 = vperm.xlu0 %1050, %v1021
        %v1052 = vpop.permute.xlu0 %1051
        %1055 = vset.pattern.permute.xlu0 0
        %1056 = vperm.xlu0 %1055, %v1022
        %v1057 = vpop.permute.xlu0 %1056
        %1060 = vset.pattern.permute.xlu0 0
        %1061 = vperm.xlu0 %1060, %v1023
        %v1062 = vpop.permute.xlu0 %1061
        %vm1064 = vcmask 261120
        %v1066 = vsel %vm1064, %v1001, 0
        %v1069 = vsel %vm1064, %v1003, 0
        %v1072 = vsel %vm1064, %v1005, 0
        %v1075 = vsel %vm1064, %v1007, 0
        %v1078 = vsel %vm1064, %v1009, 0
        %v1081 = vsel %vm1064, %v1011, 0
        %v1084 = vsel %vm1064, %v1013, 0
        %v1087 = vsel %vm1064, %v1015, 0
        %1089 = vmatprep.subr.mxu0 %v775
        %1090 = vmatpush1.msra.mxu0 %v774
        %1091 = vmatprep.subr.mxu0 %v778
        %1092 = vmatpush1.msra.mxu0 %v777
        %1093 = vmatprep.subr.mxu0 %v781
        %1094 = vmatpush1.msra.mxu0 %v780
        %1095 = vmatprep.subr.mxu0 %v784
        %1096 = vmatpush1.msra.mxu0 %v783
        %1097 = vmatprep.subr.mxu0 %v787
        %1098 = vmatpush1.msra.mxu0 %v786
        %1099 = vmatprep.subr.mxu0 %v790
        %1100 = vmatpush1.msra.mxu0 %v789
        %1101 = vmatprep.subr.mxu0 %v793
        %1102 = vmatpush1.msra.mxu0 %v792
        %1103 = vmatprep.subr.mxu0 %v796
        %1104 = vmatpush1.msra.mxu0 %v795
        %1105 = vmatprep.subr.mxu0 %v836
        %1106 = vmatpush1.msra.mxu0 %v835
        %1107 = vmatprep.subr.mxu0 %v838
        %1108 = vmatpush1.msra.mxu0 %v837
        %1109 = vmatprep.subr.mxu0 %v840
        %1110 = vmatpush1.msra.mxu0 %v839
        %1111 = vmatprep.subr.mxu0 %v842
        %1112 = vmatpush1.msra.mxu0 %v841
        %1113 = vmatprep.subr.mxu0 %v892
        %1114 = vmatpush1.msra.mxu0 %v891
        %1115 = vmatprep.subr.mxu0 %v894
        %1116 = vmatpush1.msra.mxu0 %v893
        %1117 = vmatprep.subr.mxu0 %v896
        %1118 = vmatpush1.msra.mxu0 %v895
        %1119 = vmatprep.subr.mxu0 %v898
        %1120 = vmatpush1.msra.mxu0 %v897
        %1121 = vmatprep.subr.mxu0 %v937
        %1122 = vmatpush1.msra.mxu0 %v936
        %1123 = vmatprep.subr.mxu0 %v939
        %1124 = vmatpush1.msra.mxu0 %v938
        %1125 = vmatprep.subr.mxu0 %v941
        %1126 = vmatpush1.msra.mxu0 %v940
        %1127 = vmatprep.subr.mxu0 %v943
        %1128 = vmatpush1.msra.mxu0 %v942
        %1129 = vmatprep.subr.mxu0 0.0
        %1130 = vmatpush1.msra.mxu0 0.0
        %1131 = vmatprep.subr.mxu0 0.0
        %1132 = vmatpush1.msra.mxu0 0.0
        %1133 = vmatprep.subr.mxu0 0.0
        %1134 = vmatpush1.msra.mxu0 0.0
        %1135 = vmatprep.subr.mxu0 0.0
        %1136 = vmatpush1.msra.mxu0 0.0
        %1137 = vmatprep.subr.mxu0 0.0
        %1138 = vmatpush1.msra.mxu0 0.0
        %1139 = vmatprep.subr.mxu0 0.0
        %1140 = vmatpush1.msra.mxu0 0.0
        %1141 = vmatprep.subr.mxu0 0.0
        %1142 = vmatpush1.msra.mxu0 0.0
        %1143 = vmatprep.subr.mxu0 0.0
        %1144 = vmatpush1.msra.mxu0 0.0
        %1145 = vmatprep.subr.mxu0 0.0
        %1146 = vmatpush1.msra.mxu0 0.0
        %1147 = vmatprep.subr.mxu0 0.0
        %1148 = vmatpush1.msra.mxu0 0.0
        %1149 = vmatprep.subr.mxu0 0.0
        %1150 = vmatpush1.msra.mxu0 0.0
        %1151 = vmatprep.subr.mxu0 0.0
        %1152 = vmatpush1.msra.mxu0 0.0
        %1153 = vmatprep.mubr.f32.mxu0 %v1066
        %1154 = vmatmul.mubr.f32.gmra.mrb[0].mxu0 %v1000
        %v1155 = vpop.f32.mrb[0].mxu0
        %v1156 = vadd.f32 %v1027, %v1155
        %v1157 = vpop.f32.mrb[0].mxu0
        %v1158 = vadd.f32 %v1027, %v1157
        %1159 = vmatprep.mubr.f32.mxu0 %v1069
        %1160 = vmatmul.mubr.f32.gmra.mrb[0].mxu0 %v1002
        %v1161 = vpop.f32.mrb[0].mxu0
        %v1162 = vadd.f32 %v1032, %v1161
        %v1163 = vpop.f32.mrb[0].mxu0
        %v1164 = vadd.f32 %v1032, %v1163
        %1165 = vmatprep.mubr.f32.mxu0 %v1072
        %1166 = vmatmul.mubr.f32.gmra.mrb[0].mxu0 %v1004
        %v1167 = vpop.f32.mrb[0].mxu0
        %v1168 = vadd.f32 %v1037, %v1167
        %v1169 = vpop.f32.mrb[0].mxu0
        %v1170 = vadd.f32 %v1037, %v1169
        %1171 = vmatprep.mubr.f32.mxu0 %v1075
        %1172 = vmatmul.mubr.f32.gmra.mrb[0].mxu0 %v1006
        %v1173 = vpop.f32.mrb[0].mxu0
        %v1174 = vadd.f32 %v1042, %v1173
        %v1175 = vpop.f32.mrb[0].mxu0
        %v1176 = vadd.f32 %v1042, %v1175
        %1177 = vmatprep.mubr.f32.mxu0 %v1078
        %1178 = vmatmul.mubr.f32.gmra.mrb[0].mxu0 %v1008
        %v1179 = vpop.f32.mrb[0].mxu0
        %v1180 = vadd.f32 %v1047, %v1179
        %v1181 = vpop.f32.mrb[0].mxu0
        %v1182 = vadd.f32 %v1047, %v1181
        %1183 = vmatprep.mubr.f32.mxu0 %v1081
        %1184 = vmatmul.mubr.f32.gmra.mrb[0].mxu0 %v1010
        %v1185 = vpop.f32.mrb[0].mxu0
        %v1186 = vadd.f32 %v1052, %v1185
        %v1187 = vpop.f32.mrb[0].mxu0
        %v1188 = vadd.f32 %v1052, %v1187
        %1189 = vmatprep.mubr.f32.mxu0 %v1084
        %1190 = vmatmul.mubr.f32.gmra.mrb[0].mxu0 %v1012
        %v1191 = vpop.f32.mrb[0].mxu0
        %v1192 = vadd.f32 %v1057, %v1191
        %v1193 = vpop.f32.mrb[0].mxu0
        %v1194 = vadd.f32 %v1057, %v1193
        %1195 = vmatprep.mubr.f32.mxu0 %v1087
        %1196 = vmatmul.mubr.f32.gmra.mrb[0].mxu0 %v1014
        %v1197 = vpop.f32.mrb[0].mxu0
        %v1198 = vadd.f32 %v1062, %v1197
        %v1199 = vpop.f32.mrb[0].mxu0
        %v1200 = vadd.f32 %v1062, %v1199
        %1201 = vdwg.mxu0
        %1202 = vmatprep.subr.mxu0 0.0
        %1203 = vmatpush1.msra.mxu0 %v776
        %1204 = vmatprep.subr.mxu0 0.0
        %1205 = vmatpush1.msra.mxu0 %v779
        %1206 = vmatprep.subr.mxu0 0.0
        %1207 = vmatpush1.msra.mxu0 %v782
        %1208 = vmatprep.subr.mxu0 0.0
        %1209 = vmatpush1.msra.mxu0 %v785
        %1210 = vmatprep.subr.mxu0 0.0
        %1211 = vmatpush1.msra.mxu0 %v788
        %1212 = vmatprep.subr.mxu0 0.0
        %1213 = vmatpush1.msra.mxu0 %v791
        %1214 = vmatprep.subr.mxu0 0.0
        %1215 = vmatpush1.msra.mxu0 %v794
        %1216 = vmatprep.subr.mxu0 0.0
        %1217 = vmatpush1.msra.mxu0 %v797
        %1218 = vmatprep.subr.mxu0 0.0
        %1219 = vmatpush1.msra.mxu0 %v815
        %1220 = vmatprep.subr.mxu0 0.0
        %1221 = vmatpush1.msra.mxu0 %v821
        %1222 = vmatprep.subr.mxu0 0.0
        %1223 = vmatpush1.msra.mxu0 %v827
        %1224 = vmatprep.subr.mxu0 0.0
        %1225 = vmatpush1.msra.mxu0 %v833
        %1226 = vmatprep.subr.mxu0 0.0
        %1227 = vmatpush1.msra.mxu0 %v872
        %1228 = vmatprep.subr.mxu0 0.0
        %1229 = vmatpush1.msra.mxu0 %v878
        %1230 = vmatprep.subr.mxu0 0.0
        %1231 = vmatpush1.msra.mxu0 %v884
        %1232 = vmatprep.subr.mxu0 0.0
        %1233 = vmatpush1.msra.mxu0 %v890
        %1234 = vmatprep.subr.mxu0 0.0
        %1235 = vmatpush1.msra.mxu0 %v916
        %1236 = vmatprep.subr.mxu0 0.0
        %1237 = vmatpush1.msra.mxu0 %v922
        %1238 = vmatprep.subr.mxu0 0.0
        %1239 = vmatpush1.msra.mxu0 %v928
        %1240 = vmatprep.subr.mxu0 0.0
        %1241 = vmatpush1.msra.mxu0 %v934
        %1242 = vmatprep.subr.mxu0 0.0
        %1243 = vmatpush1.msra.mxu0 0.0
        %1244 = vmatprep.subr.mxu0 0.0
        %1245 = vmatpush1.msra.mxu0 0.0
        %1246 = vmatprep.subr.mxu0 0.0
        %1247 = vmatpush1.msra.mxu0 0.0
        %1248 = vmatprep.subr.mxu0 0.0
        %1249 = vmatpush1.msra.mxu0 0.0
        %1250 = vmatprep.subr.mxu0 0.0
        %1251 = vmatpush1.msra.mxu0 0.0
        %1252 = vmatprep.subr.mxu0 0.0
        %1253 = vmatpush1.msra.mxu0 0.0
        %1254 = vmatprep.subr.mxu0 0.0
        %1255 = vmatpush1.msra.mxu0 0.0
        %1256 = vmatprep.subr.mxu0 0.0
        %1257 = vmatpush1.msra.mxu0 0.0
        %1258 = vmatprep.subr.mxu0 0.0
        %1259 = vmatpush1.msra.mxu0 0.0
        %1260 = vmatprep.subr.mxu0 0.0
        %1261 = vmatpush1.msra.mxu0 0.0
        %1262 = vmatprep.subr.mxu0 0.0
        %1263 = vmatpush1.msra.mxu0 0.0
        %1264 = vmatprep.subr.mxu0 0.0
        %1265 = vmatpush1.msra.mxu0 0.0
        %1266 = vmatprep.mubr.f32.mxu0 %v1066
        %1267 = vmatmul.mubr.f32.gmra.mrb[0].mxu0 %v1000
        %v1268 = vpop.f32.mrb[0].mxu0
        %v1269 = vadd.f32 %v1027, %v1268
        %v1270 = vpop.f32.mrb[0].mxu0
        %1271 = vmatprep.mubr.f32.mxu0 %v1069
        %1272 = vmatmul.mubr.f32.gmra.mrb[0].mxu0 %v1002
        %v1273 = vpop.f32.mrb[0].mxu0
        %v1274 = vadd.f32 %v1032, %v1273
        %v1275 = vpop.f32.mrb[0].mxu0
        %1276 = vmatprep.mubr.f32.mxu0 %v1072
        %1277 = vmatmul.mubr.f32.gmra.mrb[0].mxu0 %v1004
        %v1278 = vpop.f32.mrb[0].mxu0
        %v1279 = vadd.f32 %v1037, %v1278
        %v1280 = vpop.f32.mrb[0].mxu0
        %1281 = vmatprep.mubr.f32.mxu0 %v1075
        %1282 = vmatmul.mubr.f32.gmra.mrb[0].mxu0 %v1006
        %v1283 = vpop.f32.mrb[0].mxu0
        %v1284 = vadd.f32 %v1042, %v1283
        %v1285 = vpop.f32.mrb[0].mxu0
        %1286 = vmatprep.mubr.f32.mxu0 %v1078
        %1287 = vmatmul.mubr.f32.gmra.mrb[0].mxu0 %v1008
        %v1288 = vpop.f32.mrb[0].mxu0
        %v1289 = vadd.f32 %v1047, %v1288
        %v1290 = vpop.f32.mrb[0].mxu0
        %1291 = vmatprep.mubr.f32.mxu0 %v1081
        %1292 = vmatmul.mubr.f32.gmra.mrb[0].mxu0 %v1010
        %v1293 = vpop.f32.mrb[0].mxu0
        %v1294 = vadd.f32 %v1052, %v1293
        %v1295 = vpop.f32.mrb[0].mxu0
        %1296 = vmatprep.mubr.f32.mxu0 %v1084
        %1297 = vmatmul.mubr.f32.gmra.mrb[0].mxu0 %v1012
        %v1298 = vpop.f32.mrb[0].mxu0
        %v1299 = vadd.f32 %v1057, %v1298
        %v1300 = vpop.f32.mrb[0].mxu0
        %1301 = vmatprep.mubr.f32.mxu0 %v1087
        %1302 = vmatmul.mubr.f32.gmra.mrb[0].mxu0 %v1014
        %v1303 = vpop.f32.mrb[0].mxu0
        %v1304 = vadd.f32 %v1062, %v1303
        %v1305 = vpop.f32.mrb[0].mxu0
        %1306 = vdwg.mxu0
        %1307 = vmatprep.subr.mxu0 %v787
        %1308 = vmatpush1.msra.mxu0 %v786
        %1309 = vmatprep.subr.mxu0 %v790
        %1310 = vmatpush1.msra.mxu0 %v789
        %1311 = vmatprep.subr.mxu0 %v793
        %1312 = vmatpush1.msra.mxu0 %v792
        %1313 = vmatprep.subr.mxu0 %v796
        %1314 = vmatpush1.msra.mxu0 %v795
        %1315 = vmatprep.subr.mxu0 %v836
        %1316 = vmatpush1.msra.mxu0 %v835
        %1317 = vmatprep.subr.mxu0 %v838
        %1318 = vmatpush1.msra.mxu0 %v837
        %1319 = vmatprep.subr.mxu0 %v840
        %1320 = vmatpush1.msra.mxu0 %v839
        %1321 = vmatprep.subr.mxu0 %v842
        %1322 = vmatpush1.msra.mxu0 %v841
        %1323 = vmatprep.subr.mxu0 %v892
        %1324 = vmatpush1.msra.mxu0 %v891
        %1325 = vmatprep.subr.mxu0 %v894
        %1326 = vmatpush1.msra.mxu0 %v893
        %1327 = vmatprep.subr.mxu0 %v896
        %1328 = vmatpush1.msra.mxu0 %v895
        %1329 = vmatprep.subr.mxu0 %v898
        %1330 = vmatpush1.msra.mxu0 %v897
        %1331 = vmatprep.subr.mxu0 %v937
        %1332 = vmatpush1.msra.mxu0 %v936
        %1333 = vmatprep.subr.mxu0 %v939
        %1334 = vmatpush1.msra.mxu0 %v938
        %1335 = vmatprep.subr.mxu0 %v941
        %1336 = vmatpush1.msra.mxu0 %v940
        %1337 = vmatprep.subr.mxu0 %v943
        %1338 = vmatpush1.msra.mxu0 %v942
        %1339 = vmatprep.subr.mxu0 %v981
        %1340 = vmatpush1.msra.mxu0 %v980
        %1341 = vmatprep.subr.mxu0 %v983
        %1342 = vmatpush1.msra.mxu0 %v982
        %1343 = vmatprep.subr.mxu0 %v985
        %1344 = vmatpush1.msra.mxu0 %v984
        %1345 = vmatprep.subr.mxu0 %v987
        %1346 = vmatpush1.msra.mxu0 %v986
        %1347 = vmatprep.subr.mxu0 0.0
        %1348 = vmatpush1.msra.mxu0 0.0
        %1349 = vmatprep.subr.mxu0 0.0
        %1350 = vmatpush1.msra.mxu0 0.0
        %1351 = vmatprep.subr.mxu0 0.0
        %1352 = vmatpush1.msra.mxu0 0.0
        %1353 = vmatprep.subr.mxu0 0.0
        %1354 = vmatpush1.msra.mxu0 0.0
        %1355 = vmatprep.subr.mxu0 0.0
        %1356 = vmatpush1.msra.mxu0 0.0
        %1357 = vmatprep.subr.mxu0 0.0
        %1358 = vmatpush1.msra.mxu0 0.0
        %1359 = vmatprep.subr.mxu0 0.0
        %1360 = vmatpush1.msra.mxu0 0.0
        %1361 = vmatprep.subr.mxu0 0.0
        %1362 = vmatpush1.msra.mxu0 0.0
        %1363 = vmatprep.subr.mxu0 0.0
        %1364 = vmatpush1.msra.mxu0 0.0
        %1365 = vmatprep.subr.mxu0 0.0
        %1366 = vmatpush1.msra.mxu0 0.0
        %1367 = vmatprep.subr.mxu0 0.0
        %1368 = vmatpush1.msra.mxu0 0.0
        %1369 = vmatprep.subr.mxu0 0.0
        %1370 = vmatpush1.msra.mxu0 0.0
        %1371 = vmatprep.mubr.f32.mxu0 %v1066
        %1372 = vmatmul.mubr.f32.gmra.mrb[0].mxu0 %v1000
        %v1373 = vpop.f32.mrb[0].mxu0
        %v1374 = vadd.f32 %v1027, %v1373
        %v1375 = vpop.f32.mrb[0].mxu0
        %v1376 = vadd.f32 %v1027, %v1375
        %1377 = vmatprep.mubr.f32.mxu0 %v1069
        %1378 = vmatmul.mubr.f32.gmra.mrb[0].mxu0 %v1002
        %v1379 = vpop.f32.mrb[0].mxu0
        %v1380 = vadd.f32 %v1032, %v1379
        %v1381 = vpop.f32.mrb[0].mxu0
        %v1382 = vadd.f32 %v1032, %v1381
        %1383 = vmatprep.mubr.f32.mxu0 %v1072
        %1384 = vmatmul.mubr.f32.gmra.mrb[0].mxu0 %v1004
        %v1385 = vpop.f32.mrb[0].mxu0
        %v1386 = vadd.f32 %v1037, %v1385
        %v1387 = vpop.f32.mrb[0].mxu0
        %v1388 = vadd.f32 %v1037, %v1387
        %1389 = vmatprep.mubr.f32.mxu0 %v1075
        %1390 = vmatmul.mubr.f32.gmra.mrb[0].mxu0 %v1006
        %v1391 = vpop.f32.mrb[0].mxu0
        %v1392 = vadd.f32 %v1042, %v1391
        %v1393 = vpop.f32.mrb[0].mxu0
        %v1394 = vadd.f32 %v1042, %v1393
        %1395 = vmatprep.mubr.f32.mxu0 %v1078
        %1396 = vmatmul.mubr.f32.gmra.mrb[0].mxu0 %v1008
        %v1397 = vpop.f32.mrb[0].mxu0
        %v1398 = vadd.f32 %v1047, %v1397
        %v1399 = vpop.f32.mrb[0].mxu0
        %v1400 = vadd.f32 %v1047, %v1399
        %1401 = vmatprep.mubr.f32.mxu0 %v1081
        %1402 = vmatmul.mubr.f32.gmra.mrb[0].mxu0 %v1010
        %v1403 = vpop.f32.mrb[0].mxu0
        %v1404 = vadd.f32 %v1052, %v1403
        %v1405 = vpop.f32.mrb[0].mxu0
        %v1406 = vadd.f32 %v1052, %v1405
        %1407 = vmatprep.mubr.f32.mxu0 %v1084
        %1408 = vmatmul.mubr.f32.gmra.mrb[0].mxu0 %v1012
        %v1409 = vpop.f32.mrb[0].mxu0
        %v1410 = vadd.f32 %v1057, %v1409
        %v1411 = vpop.f32.mrb[0].mxu0
        %v1412 = vadd.f32 %v1057, %v1411
        %1413 = vmatprep.mubr.f32.mxu0 %v1087
        %1414 = vmatmul.mubr.f32.gmra.mrb[0].mxu0 %v1014
        %v1415 = vpop.f32.mrb[0].mxu0
        %v1416 = vadd.f32 %v1062, %v1415
        %v1417 = vpop.f32.mrb[0].mxu0
        %v1418 = vadd.f32 %v1062, %v1417
        %1419 = vdwg.mxu0
        %1420 = vmatprep.subr.mxu0 0.0
        %1421 = vmatpush1.msra.mxu0 %v788
        %1422 = vmatprep.subr.mxu0 0.0
        %1423 = vmatpush1.msra.mxu0 %v791
        %1424 = vmatprep.subr.mxu0 0.0
        %1425 = vmatpush1.msra.mxu0 %v794
        %1426 = vmatprep.subr.mxu0 0.0
        %1427 = vmatpush1.msra.mxu0 %v797
        %1428 = vmatprep.subr.mxu0 0.0
        %1429 = vmatpush1.msra.mxu0 %v815
        %1430 = vmatprep.subr.mxu0 0.0
        %1431 = vmatpush1.msra.mxu0 %v821
        %1432 = vmatprep.subr.mxu0 0.0
        %1433 = vmatpush1.msra.mxu0 %v827
        %1434 = vmatprep.subr.mxu0 0.0
        %1435 = vmatpush1.msra.mxu0 %v833
        %1436 = vmatprep.subr.mxu0 0.0
        %1437 = vmatpush1.msra.mxu0 %v872
        %1438 = vmatprep.subr.mxu0 0.0
        %1439 = vmatpush1.msra.mxu0 %v878
        %1440 = vmatprep.subr.mxu0 0.0
        %1441 = vmatpush1.msra.mxu0 %v884
        %1442 = vmatprep.subr.mxu0 0.0
        %1443 = vmatpush1.msra.mxu0 %v890
        %1444 = vmatprep.subr.mxu0 0.0
        %1445 = vmatpush1.msra.mxu0 %v916
        %1446 = vmatprep.subr.mxu0 0.0
        %1447 = vmatpush1.msra.mxu0 %v922
        %1448 = vmatprep.subr.mxu0 0.0
        %1449 = vmatpush1.msra.mxu0 %v928
        %1450 = vmatprep.subr.mxu0 0.0
        %1451 = vmatpush1.msra.mxu0 %v934
        %1452 = vmatprep.subr.mxu0 0.0
        %1453 = vmatpush1.msra.mxu0 %v961
        %1454 = vmatprep.subr.mxu0 0.0
        %1455 = vmatpush1.msra.mxu0 %v967
        %1456 = vmatprep.subr.mxu0 0.0
        %1457 = vmatpush1.msra.mxu0 %v973
        %1458 = vmatprep.subr.mxu0 0.0
        %1459 = vmatpush1.msra.mxu0 %v979
        %1460 = vmatprep.subr.mxu0 0.0
        %1461 = vmatpush1.msra.mxu0 0.0
        %1462 = vmatprep.subr.mxu0 0.0
        %1463 = vmatpush1.msra.mxu0 0.0
        %1464 = vmatprep.subr.mxu0 0.0
        %1465 = vmatpush1.msra.mxu0 0.0
        %1466 = vmatprep.subr.mxu0 0.0
        %1467 = vmatpush1.msra.mxu0 0.0
        %1468 = vmatprep.subr.mxu0 0.0
        %1469 = vmatpush1.msra.mxu0 0.0
        %1470 = vmatprep.subr.mxu0 0.0
        %1471 = vmatpush1.msra.mxu0 0.0
        %1472 = vmatprep.subr.mxu0 0.0
        %1473 = vmatpush1.msra.mxu0 0.0
        %1474 = vmatprep.subr.mxu0 0.0
        %1475 = vmatpush1.msra.mxu0 0.0
        %1476 = vmatprep.subr.mxu0 0.0
        %1477 = vmatpush1.msra.mxu0 0.0
        %1478 = vmatprep.subr.mxu0 0.0
        %1479 = vmatpush1.msra.mxu0 0.0
        %1480 = vmatprep.subr.mxu0 0.0
        %1481 = vmatpush1.msra.mxu0 0.0
        %1482 = vmatprep.subr.mxu0 0.0
        %1483 = vmatpush1.msra.mxu0 0.0
        %1484 = vmatprep.mubr.f32.mxu0 %v1066
        %1485 = vmatmul.mubr.f32.gmra.mrb[0].mxu0 %v1000
        %v1486 = vpop.f32.mrb[0].mxu0
        %v1487 = vadd.f32 %v1027, %v1486
        %v1488 = vpop.f32.mrb[0].mxu0
        %1489 = vmatprep.mubr.f32.mxu0 %v1069
        %1490 = vmatmul.mubr.f32.gmra.mrb[0].mxu0 %v1002
        %v1491 = vpop.f32.mrb[0].mxu0
        %v1492 = vadd.f32 %v1032, %v1491
        %v1493 = vpop.f32.mrb[0].mxu0
        %1494 = vmatprep.mubr.f32.mxu0 %v1072
        %1495 = vmatmul.mubr.f32.gmra.mrb[0].mxu0 %v1004
        %v1496 = vpop.f32.mrb[0].mxu0
        %v1497 = vadd.f32 %v1037, %v1496
        %v1498 = vpop.f32.mrb[0].mxu0
        %1499 = vmatprep.mubr.f32.mxu0 %v1075
        %1500 = vmatmul.mubr.f32.gmra.mrb[0].mxu0 %v1006
        %v1501 = vpop.f32.mrb[0].mxu0
        %v1502 = vadd.f32 %v1042, %v1501
        %v1503 = vpop.f32.mrb[0].mxu0
        %1504 = vmatprep.mubr.f32.mxu0 %v1078
        %1505 = vmatmul.mubr.f32.gmra.mrb[0].mxu0 %v1008
        %v1506 = vpop.f32.mrb[0].mxu0
        %v1507 = vadd.f32 %v1047, %v1506
        %v1508 = vpop.f32.mrb[0].mxu0
        %1509 = vmatprep.mubr.f32.mxu0 %v1081
        %1510 = vmatmul.mubr.f32.gmra.mrb[0].mxu0 %v1010
        %v1511 = vpop.f32.mrb[0].mxu0
        %v1512 = vadd.f32 %v1052, %v1511
        %v1513 = vpop.f32.mrb[0].mxu0
        %1514 = vmatprep.mubr.f32.mxu0 %v1084
        %1515 = vmatmul.mubr.f32.gmra.mrb[0].mxu0 %v1012
        %v1516 = vpop.f32.mrb[0].mxu0
        %v1517 = vadd.f32 %v1057, %v1516
        %v1518 = vpop.f32.mrb[0].mxu0
        %1519 = vmatprep.mubr.f32.mxu0 %v1087
        %1520 = vmatmul.mubr.f32.gmra.mrb[0].mxu0 %v1014
        %v1521 = vpop.f32.mrb[0].mxu0
        %v1522 = vadd.f32 %v1062, %v1521
        %v1523 = vpop.f32.mrb[0].mxu0
        %1524 = vdwg.mxu0
        %v1525 = vmax.f32 %v1156, 0.0
        %v1526 = vmax.f32 %v1158, 0.0
        %v1527 = vmax.f32 %v1269, 0.0
        %v1528 = vmax.f32 %v1162, 0.0
        %v1529 = vmax.f32 %v1164, 0.0
        %v1530 = vmax.f32 %v1274, 0.0
        %v1531 = vmax.f32 %v1168, 0.0
        %v1532 = vmax.f32 %v1170, 0.0
        %v1533 = vmax.f32 %v1279, 0.0
        %v1534 = vmax.f32 %v1174, 0.0
        %v1535 = vmax.f32 %v1176, 0.0
        %v1536 = vmax.f32 %v1284, 0.0
        %v1537 = vmax.f32 %v1180, 0.0
        %v1538 = vmax.f32 %v1182, 0.0
        %v1539 = vmax.f32 %v1289, 0.0
        %v1540 = vmax.f32 %v1186, 0.0
        %v1541 = vmax.f32 %v1188, 0.0
        %v1542 = vmax.f32 %v1294, 0.0
        %v1543 = vmax.f32 %v1192, 0.0
        %v1544 = vmax.f32 %v1194, 0.0
        %v1545 = vmax.f32 %v1299, 0.0
        %v1546 = vmax.f32 %v1198, 0.0
        %v1547 = vmax.f32 %v1200, 0.0
        %v1548 = vmax.f32 %v1304, 0.0
        %v1549 = vmax.f32 %v1374, 0.0
        %v1550 = vmax.f32 %v1376, 0.0
        %v1551 = vmax.f32 %v1487, 0.0
        %v1552 = vmax.f32 %v1380, 0.0
        %v1553 = vmax.f32 %v1382, 0.0
        %v1554 = vmax.f32 %v1492, 0.0
        %v1555 = vmax.f32 %v1386, 0.0
        %v1556 = vmax.f32 %v1388, 0.0
        %v1557 = vmax.f32 %v1497, 0.0
        %v1558 = vmax.f32 %v1392, 0.0
        %v1559 = vmax.f32 %v1394, 0.0
        %v1560 = vmax.f32 %v1502, 0.0
        %v1561 = vmax.f32 %v1398, 0.0
        %v1562 = vmax.f32 %v1400, 0.0
        %v1563 = vmax.f32 %v1507, 0.0
        %v1564 = vmax.f32 %v1404, 0.0
        %v1565 = vmax.f32 %v1406, 0.0
        %v1566 = vmax.f32 %v1512, 0.0
        %v1567 = vmax.f32 %v1410, 0.0
        %v1568 = vmax.f32 %v1412, 0.0
        %v1569 = vmax.f32 %v1517, 0.0
        %v1570 = vmax.f32 %v1416, 0.0
        %v1571 = vmax.f32 %v1418, 0.0
        %v1572 = vmax.f32 %v1522, 0.0
        %v1573 = vmax.f32 %v1525, %v1549
        %v1574 = vmax.f32 %v1526, %v1550
        %v1575 = vmax.f32 %v1527, %v1551
        %v1576 = vmax.f32 %v1528, %v1552
        %v1577 = vmax.f32 %v1529, %v1553
        %v1578 = vmax.f32 %v1530, %v1554
        %v1579 = vmax.f32 %v1531, %v1555
        %v1580 = vmax.f32 %v1532, %v1556
        %v1581 = vmax.f32 %v1533, %v1557
        %v1582 = vmax.f32 %v1534, %v1558
        %v1583 = vmax.f32 %v1535, %v1559
        %v1584 = vmax.f32 %v1536, %v1560
        %v1585 = vmax.f32 %v1537, %v1561
        %v1586 = vmax.f32 %v1538, %v1562
        %v1587 = vmax.f32 %v1539, %v1563
        %v1588 = vmax.f32 %v1540, %v1564
        %v1589 = vmax.f32 %v1541, %v1565
        %v1590 = vmax.f32 %v1542, %v1566
        %v1591 = vmax.f32 %v1543, %v1567
        %v1592 = vmax.f32 %v1544, %v1568
        %v1593 = vmax.f32 %v1545, %v1569
        %v1594 = vmax.f32 %v1546, %v1570
        %v1595 = vmax.f32 %v1547, %v1571
        %v1596 = vmax.f32 %v1548, %v1572
        %v1597 = vpack.c.bf16 %v1576, %v1573
        %v1598 = vpack.c.bf16 %v1577, %v1574
        %v1599 = vpack.c.bf16 %v1578, %v1575
        %v1600 = vpack.c.bf16 %v1582, %v1579
        %v1601 = vpack.c.bf16 %v1583, %v1580
        %v1602 = vpack.c.bf16 %v1584, %v1581
        %v1603 = vpack.c.bf16 %v1588, %v1585
        %v1604 = vpack.c.bf16 %v1589, %v1586
        %v1605 = vpack.c.bf16 %v1590, %v1587
        %v1606 = vpack.c.bf16 %v1594, %v1591
        %v1607 = vpack.c.bf16 %v1595, %v1592
        %v1608 = vpack.c.bf16 %v1596, %v1593
        %v1621 = vunpack.c.l.b16 %v1597
        %v1622 = vunpack.c.l.b16 %v1598
        %v1623 = vunpack.c.l.b16 %v1599
        %v1624 = vunpack.c.h.b16 %v1597
        %v1625 = vunpack.c.h.b16 %v1598
        %v1626 = vunpack.c.h.b16 %v1599
        %v1627 = vunpack.c.l.b16 %v1600
        %v1628 = vunpack.c.l.b16 %v1601
        %v1629 = vunpack.c.l.b16 %v1602
        %v1630 = vunpack.c.h.b16 %v1600
        %v1631 = vunpack.c.h.b16 %v1601
        %v1632 = vunpack.c.h.b16 %v1602
        %v1633 = vunpack.c.l.b16 %v1603
        %v1634 = vunpack.c.l.b16 %v1604
        %v1635 = vunpack.c.l.b16 %v1605
        %v1636 = vunpack.c.h.b16 %v1603
        %v1637 = vunpack.c.h.b16 %v1604
        %v1638 = vunpack.c.h.b16 %v1605
        %v1639 = vunpack.c.l.b16 %v1606
        %v1640 = vunpack.c.l.b16 %v1607
        %v1641 = vunpack.c.l.b16 %v1608
        %v1642 = vunpack.c.h.b16 %v1606
        %v1643 = vunpack.c.h.b16 %v1607
        %v1644 = vunpack.c.h.b16 %v1608
        %v1645 = vpack.c.b16 %v1622, %v1621
        %v1646 = vpack.c.b16 %v1623, %v1623
        %v1647 = vpack.c.b16 %v1625, %v1624
        %v1648 = vpack.c.b16 %v1626, %v1626
        %v1649 = vpack.c.b16 %v1628, %v1627
        %v1650 = vpack.c.b16 %v1629, %v1629
        %v1651 = vpack.c.b16 %v1631, %v1630
        %v1652 = vpack.c.b16 %v1632, %v1632
        %v1653 = vpack.c.b16 %v1634, %v1633
        %v1654 = vpack.c.b16 %v1635, %v1635
        %v1655 = vpack.c.b16 %v1637, %v1636
        %v1656 = vpack.c.b16 %v1638, %v1638
        %v1657 = vpack.c.b16 %v1640, %v1639
        %v1658 = vpack.c.b16 %v1641, %v1641
        %v1659 = vpack.c.b16 %v1643, %v1642
        %v1660 = vpack.c.b16 %v1644, %v1644
        %1677 = vst [vmem:[%s239] sm:$0xff] %v1645
        %vm1678 = vcmask 756736
        %1679 = vst.msk [vmem:[%s239 + $0x8] sm:$0xf] %vm1678, %v1646
        %1680 = vst [vmem:[%s239 + $0xc] sm:$0xff] %v1647
        %1681 = vst.msk [vmem:[%s239 + $0x14] sm:$0xf] %vm1678, %v1648
        %1682 = vst [vmem:[%s239 + $0x18] sm:$0xff] %v1649
        %1683 = vst.msk [vmem:[%s239 + $0x20] sm:$0xf] %vm1678, %v1650
        %1684 = vst [vmem:[%s239 + $0x24] sm:$0xff] %v1651
        %1685 = vst.msk [vmem:[%s239 + $0x2c] sm:$0xf] %vm1678, %v1652
        %1686 = vst [vmem:[%s239 + $0x30] sm:$0xff] %v1653
        %1687 = vst.msk [vmem:[%s239 + $0x38] sm:$0xf] %vm1678, %v1654
        %1688 = vst [vmem:[%s239 + $0x3c] sm:$0xff] %v1655
        %1689 = vst.msk [vmem:[%s239 + $0x44] sm:$0xf] %vm1678, %v1656
        %1690 = vst [vmem:[%s239 + $0x48] sm:$0xff] %v1657
        %1691 = vst.msk [vmem:[%s239 + $0x50] sm:$0xf] %vm1678, %v1658
        %1692 = vst [vmem:[%s239 + $0x54] sm:$0xff] %v1659
        %1693 = vst.msk [vmem:[%s239 + $0x5c] sm:$0xf] %vm1678, %v1660
        %p1694 = scmp.lt.s32.totalorder %s17, 1
        %s1695 = scalar_select %p1694, %s17, 1
        %s1696 = smul.addr %s1695, 24
        %s1697 = smul.addr %s1696, 4
        %s1698 = scalar_lea.vmem %s5, %s1697
        // Predicated region
        $region45: #{conv1d_model_forward.2} parent=39 // pred_check
          %p1699 = pneg %p145
        $region46: #{conv1d_model_forward.2} parent=39 // pred_check_branch
          %1701 = sbr.rel (%p1699) target = $region48
        $region47: #{conv1d_model_forward.2} parent=39 // pred_region
          _
        $region48: #{conv1d_model_forward.2} parent=39 // pred_fallthru
          _
      $region40: #{conv1d_model_forward.2} parent=5 // pred_fallthru
        _
      %p1702 = scmp.le.s32.totalorder 2, %s12
      // Predicated region
      $region49: #{conv1d_model_forward.2} parent=5 // pred_check
        %p1703 = pneg %p1702
      $region50: #{conv1d_model_forward.2} parent=5 // pred_check_branch
        %1705 = sbr.rel (%p1703) target = $region52
      $region51: #{conv1d_model_forward.2} parent=5 // pred_region
        %s1706 = ssub.s32 %s12, 2
        // Predicated region
        $region53: #{conv1d_model_forward.2} parent=51 // pred_check
          %p1707 = pneg %p151
        $region54: #{conv1d_model_forward.2} parent=51 // pred_check_branch
          %1709 = sbr.rel (%p1707) target = $region56
        $region55: #{conv1d_model_forward.2} parent=51 // pred_region
          %p1710 = scmp.lt.s32.totalorder %s18, 1
          %s1711 = scalar_select %p1710, %s18, 1
          %s1712 = smul.addr %s1711, 24
          %s1713 = smul.addr %s1712, 4
          %s1714 = scalar_lea.vmem %s5, %s1713
        $region56: #{conv1d_model_forward.2} parent=51 // pred_fallthru
          _
      $region52: #{conv1d_model_forward.2} parent=5 // pred_fallthru
        _
    $region6: #{conv1d_model_forward.2} parent=1 // loop_footer
      %s16 = sadd.s32 1, %s12
    $region7: #{conv1d_model_forward.2} parent=1 // loop_footer_branch
      %11 = sbr.rel target = $region3
    $region8: #{conv1d_model_forward.2} parent=1 // loop_exit
      _
    %1715 = vsyncpa [#allocation3], 1
    %s1716 = scalar_lea.sflag [#allocation3], 1
    %1717 = vsyncpa %s1716, 1

// kernel: conv1d_model_forward.3
$region0: #{conv1d_model_forward.3}
  #allocation0 [shape = 'u32[]', space=smem, size = 0x4, offset = 0x4, fixed_abs, tag = 'smem constant byte address 0x4 - core index']
  #allocation1 [shape = 'u32[144,128]{1,0:T(1,128)}', space=vmem, size = 0x12000, scoped, tag = 'internal scratch']
  %s0 = inlined_call_operand.vmem [shape: bf16[2,22528], index: 0, kind: input, shape index: {}]
  %s1 = inlined_call_operand.hbm [shape: bf16[22528,512], index: 1, kind: input, shape index: {}]
  %s2 = inlined_call_operand.hbm [shape: f32[1,512], index: 2, kind: input, shape index: {}]
  %s3 = inlined_call_operand.vmem [shape: f32[2,512], index: 3, kind: output, shape index: {}]
  %s4 = sld [smem:[#allocation0]]
  $region57: #{conv1d_model_forward.3} parent=0
    _
  %s6 = ssub.s32 1, %s4
  %s7 = scalar_select 0, %s6, %s4
  $region1: #{conv1d_model_forward.3} parent=0
    #allocation2 [shape = 'u8[5767168]{0}', space=vmem, size = 0x580000, scoped, tag = 'input window, operand 1']
    #allocation3 [shape = 's32[2]{0}', space=sflag, size = 0x8, scoped, tag = 'scoped memory for conv1d_model_forward.3']
    #allocation4 [shape = 'u8[2048]{0}', space=vmem, size = 0x800, scoped, tag = 'input window, operand 2']
    #allocation5 [shape = 's32[2]{0}', space=sflag, size = 0x8, scoped, tag = 'scoped memory for conv1d_model_forward.3']
    %8 = vsyncpa [#allocation3], 0
    %s9 = scalar_lea.sflag [#allocation3], 1
    %10 = vsyncpa %s9, 0
    %11 = vsyncpa [#allocation5], 0
    %s12 = scalar_lea.sflag [#allocation5], 1
    %13 = vsyncpa %s12, 0
    loop: start=0, step=1, limit=10
    $region2: #{conv1d_model_forward.3} parent=1 // loop_pre_header
      _
    $region3: #{conv1d_model_forward.3} parent=1 // loop_header
      %s15 = sphi 0, %s19
      %p16 = scmp.ge.s32.totalorder %s15, 10
      %s22 = sphi 0, %s34
      %s23 = sphi 0, %s30
      %s24 = sphi 0, %s22
      %s25 = sphi 0, %s23
      %s26 = sphi 0, %s24
      %s27 = sphi 0, %s25
      %s37 = sphi 0, %s39
      %s40 = sphi 0, %s37
      %s41 = sphi 0, %s40
      %s57 = sphi 0, %s41
      %s65 = sphi 0, %s67
      %s68 = sphi 0, %s65
      %s69 = sphi 0, %s68
      %s85 = sphi 0, %s69
      %s91 = sphi 0, %s93
      %s94 = sphi 0, %s91
      %s95 = sphi 0, %s94
      %s111 = sphi 0, %s95
      %s117 = sphi 0, %s119
      %s120 = sphi 0, %s117
      %s121 = sphi 0, %s120
      %s137 = sphi 0, %s121
    $region4: #{conv1d_model_forward.3} parent=1 // loop_header_branch
      %18 = sbr.rel (%p16) target = $region8
    $region5: #{conv1d_model_forward.3} parent=1 // loop_body
      %s20 = ssub.s32 %s15, 1
      %s21 = ssub.s32 %s15, 2
      %s28 = sadd.s32 1, %s23
      %p29 = scmp.ge.s32.totalorder %s28, 4
      %s30 = scalar_select %p29, 0, %s28
      %s31 = sadd.s32 1, %s22
      %s32 = scalar_select %p29, %s31, %s22
      %p33 = scmp.ge.s32.totalorder %s32, 2
      %s34 = scalar_select %p33, 0, %s32
      %s35 = ssub.s32 %s23, %s30
      %p36 = scmp.eq.s32.totalorder %s35, 0
      %s38 = sadd.s32 %s37, 1
      %s39 = scalar_select %p36, %s37, %s38
      %p42 = pneg %p36
      %p43 = scmp.eq.s32.totalorder %s15, 7
      %p44 = por %p42, %p43
      %p45 = scmp.ne.s32.totalorder %s37, %s40
      %p46 = scmp.eq.s32.totalorder %s15, 0
      %p47 = por %p45, %p46
      %p48 = scmp.ne.s32.totalorder %s37, %s40
      %p49 = scmp.eq.s32.totalorder %s20, 7
      %p50 = por %p48, %p49
      %p51 = scmp.ne.s32.totalorder %s40, %s41
      %p52 = scmp.eq.s32.totalorder %s20, 0
      %p53 = por %p51, %p52
      %p54 = scmp.ne.s32.totalorder %s40, %s41
      %p55 = scmp.eq.s32.totalorder %s21, 7
      %p56 = por %p54, %p55
      %p58 = scmp.ne.s32.totalorder %s41, %s57
      %p59 = scmp.eq.s32.totalorder %s21, 0
      %p60 = por %p58, %p59
      %s61 = ssub.s32 %s23, %s30
      %s62 = ssub.s32 %s22, %s34
      %s63 = sor.u32 %s61, %s62
      %p64 = scmp.eq.s32.totalorder %s63, 0
      %s66 = sadd.s32 %s65, 1
      %s67 = scalar_select %p64, %s65, %s66
      %p70 = pneg %p64
      %p71 = scmp.eq.s32.totalorder %s15, 7
      %p72 = por %p70, %p71
      %p73 = scmp.ne.s32.totalorder %s65, %s68
      %p74 = scmp.eq.s32.totalorder %s15, 0
      %p75 = por %p73, %p74
      %p76 = scmp.ne.s32.totalorder %s65, %s68
      %p77 = scmp.eq.s32.totalorder %s20, 7
      %p78 = por %p76, %p77
      %p79 = scmp.ne.s32.totalorder %s68, %s69
      %p80 = scmp.eq.s32.totalorder %s20, 0
      %p81 = por %p79, %p80
      %p82 = scmp.ne.s32.totalorder %s68, %s69
      %p83 = scmp.eq.s32.totalorder %s21, 7
      %p84 = por %p82, %p83
      %p86 = scmp.ne.s32.totalorder %s69, %s85
      %p87 = scmp.eq.s32.totalorder %s21, 0
      %p88 = por %p86, %p87
      %s89 = ssub.s32 %s22, %s34
      %p90 = scmp.eq.s32.totalorder %s89, 0
      %s92 = sadd.s32 %s91, 1
      %s93 = scalar_select %p90, %s91, %s92
      %p96 = pneg %p90
      %p97 = scmp.eq.s32.totalorder %s15, 7
      %p98 = por %p96, %p97
      %p99 = scmp.ne.s32.totalorder %s91, %s94
      %p100 = scmp.eq.s32.totalorder %s15, 0
      %p101 = por %p99, %p100
      %p102 = scmp.ne.s32.totalorder %s91, %s94
      %p103 = scmp.eq.s32.totalorder %s20, 7
      %p104 = por %p102, %p103
      %p105 = scmp.ne.s32.totalorder %s94, %s95
      %p106 = scmp.eq.s32.totalorder %s20, 0
      %p107 = por %p105, %p106
      %p108 = scmp.ne.s32.totalorder %s94, %s95
      %p109 = scmp.eq.s32.totalorder %s21, 7
      %p110 = por %p108, %p109
      %p112 = scmp.ne.s32.totalorder %s95, %s111
      %p113 = scmp.eq.s32.totalorder %s21, 0
      %p114 = por %p112, %p113
      %s115 = ssub.s32 %s22, %s34
      %p116 = scmp.eq.s32.totalorder %s115, 0
      %s118 = sadd.s32 %s117, 1
      %s119 = scalar_select %p116, %s117, %s118
      %p122 = pneg %p116
      %p123 = scmp.eq.s32.totalorder %s15, 7
      %p124 = por %p122, %p123
      %p125 = scmp.ne.s32.totalorder %s117, %s120
      %p126 = scmp.eq.s32.totalorder %s15, 0
      %p127 = por %p125, %p126
      %p128 = scmp.ne.s32.totalorder %s117, %s120
      %p129 = scmp.eq.s32.totalorder %s20, 7
      %p130 = por %p128, %p129
      %p131 = scmp.ne.s32.totalorder %s120, %s121
      %p132 = scmp.eq.s32.totalorder %s20, 0
      %p133 = por %p131, %p132
      %p134 = scmp.ne.s32.totalorder %s120, %s121
      %p135 = scmp.eq.s32.totalorder %s21, 7
      %p136 = por %p134, %p135
      %p138 = scmp.ne.s32.totalorder %s121, %s137
      %p139 = scmp.eq.s32.totalorder %s21, 0
      %p140 = por %p138, %p139
      %p141 = scmp.le.s32.totalorder 1, %s15
      %p142 = scmp.lt.s32.totalorder %s15, 9
      %p143 = pnand %p141, %p142
      %p144 = pneg %p143
      // Predicated region
      $region9: #{conv1d_model_forward.3} parent=5 // pred_check
        _
      $region10: #{conv1d_model_forward.3} parent=5 // pred_check_branch
        %146 = sbr.rel (%p143) target = $region12
      $region11: #{conv1d_model_forward.3} parent=5 // pred_region
        %s147 = ssub.s32 %s15, 1
      $region12: #{conv1d_model_forward.3} parent=5 // pred_fallthru
        _
      %p148 = scmp.lt.s32.totalorder %s15, 8
      // Predicated region
      $region13: #{conv1d_model_forward.3} parent=5 // pred_check
        %p149 = pneg %p148
      $region14: #{conv1d_model_forward.3} parent=5 // pred_check_branch
        %151 = sbr.rel (%p149) target = $region16
      $region15: #{conv1d_model_forward.3} parent=5 // pred_region
        // Predicated region
        $region17: #{conv1d_model_forward.3} parent=15 // pred_check
          %p152 = pneg %p47
        $region18: #{conv1d_model_forward.3} parent=15 // pred_check_branch
          %154 = sbr.rel (%p152) target = $region20
        $region19: #{conv1d_model_forward.3} parent=15 // pred_region
          %s155 = smul.u32 44, %s23
          %p156 = scmp.lt.s32.totalorder %s155, 175
          %s157 = scalar_select %p156, %s155, 175
          %s158 = scalar_lea.vmem %s0, %s157
          %s159 = smul.u32 44, %s23
        $region20: #{conv1d_model_forward.3} parent=15 // pred_fallthru
          _
        // Predicated region
        $region21: #{conv1d_model_forward.3} parent=15 // pred_check
          %p160 = pneg %p75
        $region22: #{conv1d_model_forward.3} parent=15 // pred_check_branch
          %162 = sbr.rel (%p160) target = $region24
        $region23: #{conv1d_model_forward.3} parent=15 // pred_region
          %s163 = sand.u32 %s65, 1
          %s164 = scalar_lea.sflag [#allocation3], %s163
          %s165 = sand.u32 %s65, 1
          %s166 = smul.addr %s165, 5632
          %s167 = scalar_lea.vmem [#allocation2], %s166
          %s168 = smul.u32 704, %s23
          %s169 = smul.u32 2, %s22
          %s171 = ssub.s32 90112, 90112
          %172 = vsyncadd %s164, %s171
          %s173 = smul.addr %s168, 4
          %s174 = sadd.s32 %s169, %s173
          %s175 = smul.addr %s174, 64
          %s176 = scalar_lea.hbm %s1, %s175
          %s177 = sshll.u32 %s167, 4
          %s178 = int_to_ptr.vmem [resolvable:$true] %s177
          %183 = dma.hbm_to_vmem [thread:$0]  %s176, 90112, %s178, %s164, 256, 128, 8
        $region24: #{conv1d_model_forward.3} parent=15 // pred_fallthru
          _
        // Predicated region
        $region25: #{conv1d_model_forward.3} parent=15 // pred_check
          %p184 = pneg %p101
        $region26: #{conv1d_model_forward.3} parent=15 // pred_check_branch
          %186 = sbr.rel (%p184) target = $region28
        $region27: #{conv1d_model_forward.3} parent=15 // pred_region
          %s187 = sand.u32 %s91, 1
          %s188 = scalar_lea.sflag [#allocation5], %s187
          %s189 = sand.u32 %s91, 1
          %s190 = smul.addr %s189, 2
          %s191 = scalar_lea.vmem [#allocation4], %s190
          %s192 = smul.u32 2, %s22
          %s194 = ssub.s32 32, 32
          %195 = vsyncadd %s188, %s194
          %s196 = smul.addr %s192, 16
          %s197 = scalar_lea.hbm %s2, %s196
          %s199 = sshll.u32 %s191, 4
          %s200 = int_to_ptr.vmem [resolvable:$true] %s199
          %202 = dma.hbm_to_vmem [thread:$0]  %s197, 32, %s200, %s188
        $region28: #{conv1d_model_forward.3} parent=15 // pred_fallthru
          _
      $region16: #{conv1d_model_forward.3} parent=5 // pred_fallthru
        _
      %p203 = scmp.le.s32.totalorder 1, %s15
      %p204 = scmp.lt.s32.totalorder %s15, 9
      %p205 = pnand %p203, %p204
      %p206 = pneg %p205
      // Predicated region
      $region29: #{conv1d_model_forward.3} parent=5 // pred_check
        _
      $region30: #{conv1d_model_forward.3} parent=5 // pred_check_branch
        %208 = sbr.rel (%p205) target = $region32
      $region31: #{conv1d_model_forward.3} parent=5 // pred_region
        %s209 = ssub.s32 %s15, 1
        %s210 = sand.u32 %s68, 1
        %s211 = scalar_lea.sflag [#allocation3], %s210
        %s212 = sand.u32 %s68, 1
        %s213 = smul.addr %s212, 5632
        %s214 = scalar_lea.vmem [#allocation2], %s213
        // Predicated region
        $region33: #{conv1d_model_forward.3} parent=31 // pred_check
          %p215 = pneg %p81
        $region34: #{conv1d_model_forward.3} parent=31 // pred_check_branch
          %217 = sbr.rel (%p215) target = $region36
        $region35: #{conv1d_model_forward.3} parent=31 // pred_region
          %218 = dma.done %s211, 90112
        $region36: #{conv1d_model_forward.3} parent=31 // pred_fallthru
          _
        %s219 = sand.u32 %s94, 1
        %s220 = scalar_lea.sflag [#allocation5], %s219
        %s221 = sand.u32 %s94, 1
        %s222 = smul.addr %s221, 2
        %s223 = scalar_lea.vmem [#allocation4], %s222
        // Predicated region
        $region37: #{conv1d_model_forward.3} parent=31 // pred_check
          %p224 = pneg %p107
        $region38: #{conv1d_model_forward.3} parent=31 // pred_check_branch
          %226 = sbr.rel (%p224) target = $region40
        $region39: #{conv1d_model_forward.3} parent=31 // pred_region
          %227 = dma.done %s220, 32
        $region40: #{conv1d_model_forward.3} parent=31 // pred_fallthru
          _
        %s228 = smul.u32 44, %s25
        %p229 = scmp.lt.s32.totalorder %s228, 175
        %s230 = scalar_select %p229, %s228, 175
        %s231 = scalar_lea.vmem %s0, %s230
        %p232 = pneg %p53
        %p233 = pneg %p50
        %s234 = sand.u32 %s68, 1
        %s235 = scalar_lea.sflag [#allocation3], %s234
        %s236 = sand.u32 %s68, 1
        %s237 = smul.addr %s236, 5632
        %s238 = scalar_lea.vmem [#allocation2], %s237
        %p239 = pneg %p81
        %p240 = pneg %p78
        %s241 = sand.u32 %s94, 1
        %s242 = scalar_lea.sflag [#allocation5], %s241
        %s243 = sand.u32 %s94, 1
        %s244 = smul.addr %s243, 2
        %s245 = scalar_lea.vmem [#allocation4], %s244
        %p246 = pneg %p107
        %p247 = pneg %p104
        %p248 = pneg %p133
        %p249 = pneg %p130
        %s250 = smul.u32 2, %s24
        %p251 = scmp.lt.s32.totalorder %s250, 3
        %s252 = scalar_select %p251, %s250, 3
        %s253 = smul.addr %s252, 2
        %s254 = scalar_lea.vmem %s3, %s253
        %s255 = smul.u32 44, %s25
        %p256 = scmp.lt.s32.totalorder %s255, 175
        %s257 = scalar_select %p256, %s255, 175
        %s258 = scalar_lea.vmem %s0, %s257
        %s259 = smul.u32 44, %s25
        %s260 = smul.u32 704, %s25
        %s261 = smul.u32 2, %s24
        %s262 = smul.u32 2, %s24
        %s263 = smul.u32 2, %s24
        %p264 = scmp.lt.s32.totalorder %s263, 3
        %s265 = scalar_select %p264, %s263, 3
        %s266 = smul.addr %s265, 2
        %s267 = scalar_lea.vmem %s3, %s266
        %s268 = smul.u32 2, %s24
        %p269 = scmp.eq.s32.totalorder %s25, 0
        // Predicated region
        $region41: #{conv1d_model_forward.3} parent=31 // pred_check
          %p270 = pneg %p269
        $region42: #{conv1d_model_forward.3} parent=31 // pred_check_branch
          %272 = sbr.rel (%p270) target = $region44
        $region43: #{conv1d_model_forward.3} parent=31 // pred_region
          %v273 = vld [vmem:[%s223] sm:$0x3]
          %v275 = vlaneseq
          %v276 = vshrl.u32 %v275, 7
          %v277 = vsub.s32 0, %v276
          %v278 = vrot.slane %v273, %v277
          %v279 = vlaneseq
          %v280 = vshrl.u32 %v279, 7
          %v281 = vsub.s32 1, %v280
          %v282 = vrot.slane %v273, %v281
          %v283 = vcombine.low %v278, %v282
          %v285 = vunpack.c.l.s4 1983009808
          %v286 = vunpack.c.0.s8 %v285
          %v287 = vlaneseq
          %v288 = vshrl.u32 %v287, 7
          %v289 = vsub.s32 %v286, %v288
          %v290 = vrot.slane %v283, %v289
          %292 = vst [vmem:[%s267] sm:$0xf] %v290
        $region44: #{conv1d_model_forward.3} parent=31 // pred_fallthru
          _
        %v293 = vld [vmem:[%s267] sm:$0xf]
        %v294 = vld [vmem:[%s258] sm:$0xff]
        %v295 = vld [vmem:[%s258 + $0x8] sm:$0xff]
        %v296 = vld [vmem:[%s258 + $0x10] sm:$0xff]
        %v297 = vld [vmem:[%s258 + $0x18] sm:$0xff]
        %v298 = vld [vmem:[%s258 + $0x20] sm:$0xff]
        %v299 = vld [vmem:[%s258 + $0x28] sm:$0xf]
        %v300 = vld [vmem:[%s214] sm:$0xff]
        %v301 = vld [vmem:[%s214 + $0x8] sm:$0xff]
        %v302 = vld [vmem:[%s214 + $0x10] sm:$0xff]
        %v303 = vld [vmem:[%s214 + $0x18] sm:$0xff]
        %v304 = vld [vmem:[%s214 + $0x20] sm:$0xff]
        %v305 = vld [vmem:[%s214 + $0x28] sm:$0xff]
        %v306 = vld [vmem:[%s214 + $0x30] sm:$0xff]
        %v307 = vld [vmem:[%s214 + $0x38] sm:$0xff]
        %v308 = vld [vmem:[%s214 + $0x40] sm:$0xff]
        %v309 = vld [vmem:[%s214 + $0x48] sm:$0xff]
        %v310 = vld [vmem:[%s214 + $0x50] sm:$0xff]
        %v311 = vld [vmem:[%s214 + $0x58] sm:$0xff]
        %v312 = vld [vmem:[%s214 + $0x60] sm:$0xff]
        %v313 = vld [vmem:[%s214 + $0x68] sm:$0xff]
        %v314 = vld [vmem:[%s214 + $0x70] sm:$0xff]
        %v315 = vld [vmem:[%s214 + $0x78] sm:$0xff]
        %v316 = vld [vmem:[%s214 + $0x80] sm:$0xff]
        %v317 = vld [vmem:[%s214 + $0x88] sm:$0xff]
        %v318 = vld [vmem:[%s214 + $0x90] sm:$0xff]
        %v319 = vld [vmem:[%s214 + $0x98] sm:$0xff]
        %v320 = vld [vmem:[%s214 + $0xa0] sm:$0xff]
        %v321 = vld [vmem:[%s214 + $0xa8] sm:$0xff]
        %v322 = vld [vmem:[%s214 + $0xb0] sm:$0xff]
        %v323 = vld [vmem:[%s214 + $0xb8] sm:$0xff]
        %v324 = vld [vmem:[%s214 + $0xc0] sm:$0xff]
        %v325 = vld [vmem:[%s214 + $0xc8] sm:$0xff]
        %v326 = vld [vmem:[%s214 + $0xd0] sm:$0xff]
        %v327 = vld [vmem:[%s214 + $0xd8] sm:$0xff]
        %v328 = vld [vmem:[%s214 + $0xe0] sm:$0xff]
        %v329 = vld [vmem:[%s214 + $0xe8] sm:$0xff]
        %v330 = vld [vmem:[%s214 + $0xf0] sm:$0xff]
        %v331 = vld [vmem:[%s214 + $0xf8] sm:$0xff]
        %v332 = vld [vmem:[%s214 + $0x100] sm:$0xff]
        %v333 = vld [vmem:[%s214 + $0x108] sm:$0xff]
        %v334 = vld [vmem:[%s214 + $0x110] sm:$0xff]
        %v335 = vld [vmem:[%s214 + $0x118] sm:$0xff]
        %v336 = vld [vmem:[%s214 + $0x120] sm:$0xff]
        %v337 = vld [vmem:[%s214 + $0x128] sm:$0xff]
        %v338 = vld [vmem:[%s214 + $0x130] sm:$0xff]
        %v339 = vld [vmem:[%s214 + $0x138] sm:$0xff]
        %v340 = vld [vmem:[%s214 + $0x140] sm:$0xff]
        %v341 = vld [vmem:[%s214 + $0x148] sm:$0xff]
        %v342 = vld [vmem:[%s214 + $0x150] sm:$0xff]
        %v343 = vld [vmem:[%s214 + $0x158] sm:$0xff]
        %v344 = vld [vmem:[%s214 + $0x160] sm:$0xff]
        %v345 = vld [vmem:[%s214 + $0x168] sm:$0xff]
        %v346 = vld [vmem:[%s214 + $0x170] sm:$0xff]
        %v347 = vld [vmem:[%s214 + $0x178] sm:$0xff]
        %v348 = vld [vmem:[%s214 + $0x180] sm:$0xff]
        %v349 = vld [vmem:[%s214 + $0x188] sm:$0xff]
        %v350 = vld [vmem:[%s214 + $0x190] sm:$0xff]
        %v351 = vld [vmem:[%s214 + $0x198] sm:$0xff]
        %v352 = vld [vmem:[%s214 + $0x1a0] sm:$0xff]
        %v353 = vld [vmem:[%s214 + $0x1a8] sm:$0xff]
        %v354 = vld [vmem:[%s214 + $0x1b0] sm:$0xff]
        %v355 = vld [vmem:[%s214 + $0x1b8] sm:$0xff]
        %v356 = vld [vmem:[%s214 + $0x1c0] sm:$0xff]
        %v357 = vld [vmem:[%s214 + $0x1c8] sm:$0xff]
        %v358 = vld [vmem:[%s214 + $0x1d0] sm:$0xff]
        %v359 = vld [vmem:[%s214 + $0x1d8] sm:$0xff]
        %v360 = vld [vmem:[%s214 + $0x1e0] sm:$0xff]
        %v361 = vld [vmem:[%s214 + $0x1e8] sm:$0xff]
        %v362 = vld [vmem:[%s214 + $0x1f0] sm:$0xff]
        %v363 = vld [vmem:[%s214 + $0x1f8] sm:$0xff]
        %v364 = vld [vmem:[%s214 + $0x200] sm:$0xff]
        %v365 = vld [vmem:[%s214 + $0x208] sm:$0xff]
        %v366 = vld [vmem:[%s214 + $0x210] sm:$0xff]
        %v367 = vld [vmem:[%s214 + $0x218] sm:$0xff]
        %v368 = vld [vmem:[%s214 + $0x220] sm:$0xff]
        %v369 = vld [vmem:[%s214 + $0x228] sm:$0xff]
        %v370 = vld [vmem:[%s214 + $0x230] sm:$0xff]
        %v371 = vld [vmem:[%s214 + $0x238] sm:$0xff]
        %v372 = vld [vmem:[%s214 + $0x240] sm:$0xff]
        %v373 = vld [vmem:[%s214 + $0x248] sm:$0xff]
        %v374 = vld [vmem:[%s214 + $0x250] sm:$0xff]
        %v375 = vld [vmem:[%s214 + $0x258] sm:$0xff]
        %v376 = vld [vmem:[%s214 + $0x260] sm:$0xff]
        %v377 = vld [vmem:[%s214 + $0x268] sm:$0xff]
        %v378 = vld [vmem:[%s214 + $0x270] sm:$0xff]
        %v379 = vld [vmem:[%s214 + $0x278] sm:$0xff]
        %v380 = vld [vmem:[%s214 + $0x280] sm:$0xff]
        %v381 = vld [vmem:[%s214 + $0x288] sm:$0xff]
        %v382 = vld [vmem:[%s214 + $0x290] sm:$0xff]
        %v383 = vld [vmem:[%s214 + $0x298] sm:$0xff]
        %v384 = vld [vmem:[%s214 + $0x2a0] sm:$0xff]
        %v385 = vld [vmem:[%s214 + $0x2a8] sm:$0xff]
        %v386 = vld [vmem:[%s214 + $0x2b0] sm:$0xff]
        %v387 = vld [vmem:[%s214 + $0x2b8] sm:$0xff]
        %v388 = vld [vmem:[%s214 + $0x2c0] sm:$0xff]
        %v389 = vld [vmem:[%s214 + $0x2c8] sm:$0xff]
        %v390 = vld [vmem:[%s214 + $0x2d0] sm:$0xff]
        %v391 = vld [vmem:[%s214 + $0x2d8] sm:$0xff]
        %v392 = vld [vmem:[%s214 + $0x2e0] sm:$0xff]
        %v393 = vld [vmem:[%s214 + $0x2e8] sm:$0xff]
        %v394 = vld [vmem:[%s214 + $0x2f0] sm:$0xff]
        %v395 = vld [vmem:[%s214 + $0x2f8] sm:$0xff]
        %v396 = vld [vmem:[%s214 + $0x300] sm:$0xff]
        %v397 = vld [vmem:[%s214 + $0x308] sm:$0xff]
        %v398 = vld [vmem:[%s214 + $0x310] sm:$0xff]
        %v399 = vld [vmem:[%s214 + $0x318] sm:$0xff]
        %v400 = vld [vmem:[%s214 + $0x320] sm:$0xff]
        %v401 = vld [vmem:[%s214 + $0x328] sm:$0xff]
        %v402 = vld [vmem:[%s214 + $0x330] sm:$0xff]
        %v403 = vld [vmem:[%s214 + $0x338] sm:$0xff]
        %v404 = vld [vmem:[%s214 + $0x340] sm:$0xff]
        %v405 = vld [vmem:[%s214 + $0x348] sm:$0xff]
        %v406 = vld [vmem:[%s214 + $0x350] sm:$0xff]
        %v407 = vld [vmem:[%s214 + $0x358] sm:$0xff]
        %v408 = vld [vmem:[%s214 + $0x360] sm:$0xff]
        %v409 = vld [vmem:[%s214 + $0x368] sm:$0xff]
        %v410 = vld [vmem:[%s214 + $0x370] sm:$0xff]
        %v411 = vld [vmem:[%s214 + $0x378] sm:$0xff]
        %v412 = vld [vmem:[%s214 + $0x380] sm:$0xff]
        %v413 = vld [vmem:[%s214 + $0x388] sm:$0xff]
        %v414 = vld [vmem:[%s214 + $0x390] sm:$0xff]
        %v415 = vld [vmem:[%s214 + $0x398] sm:$0xff]
        %v416 = vld [vmem:[%s214 + $0x3a0] sm:$0xff]
        %v417 = vld [vmem:[%s214 + $0x3a8] sm:$0xff]
        %v418 = vld [vmem:[%s214 + $0x3b0] sm:$0xff]
        %v419 = vld [vmem:[%s214 + $0x3b8] sm:$0xff]
        %v420 = vld [vmem:[%s214 + $0x3c0] sm:$0xff]
        %v421 = vld [vmem:[%s214 + $0x3c8] sm:$0xff]
        %v422 = vld [vmem:[%s214 + $0x3d0] sm:$0xff]
        %v423 = vld [vmem:[%s214 + $0x3d8] sm:$0xff]
        %v424 = vld [vmem:[%s214 + $0x3e0] sm:$0xff]
        %v425 = vld [vmem:[%s214 + $0x3e8] sm:$0xff]
        %v426 = vld [vmem:[%s214 + $0x3f0] sm:$0xff]
        %v427 = vld [vmem:[%s214 + $0x3f8] sm:$0xff]
        %v428 = vld [vmem:[%s214 + $0x400] sm:$0xff]
        %v429 = vld [vmem:[%s214 + $0x408] sm:$0xff]
        %v430 = vld [vmem:[%s214 + $0x410] sm:$0xff]
        %v431 = vld [vmem:[%s214 + $0x418] sm:$0xff]
        %v432 = vld [vmem:[%s214 + $0x420] sm:$0xff]
        %v433 = vld [vmem:[%s214 + $0x428] sm:$0xff]
        %v434 = vld [vmem:[%s214 + $0x430] sm:$0xff]
        %v435 = vld [vmem:[%s214 + $0x438] sm:$0xff]
        %v436 = vld [vmem:[%s214 + $0x440] sm:$0xff]
        %v437 = vld [vmem:[%s214 + $0x448] sm:$0xff]
        %v438 = vld [vmem:[%s214 + $0x450] sm:$0xff]
        %v439 = vld [vmem:[%s214 + $0x458] sm:$0xff]
        %v440 = vld [vmem:[%s214 + $0x460] sm:$0xff]
        %v441 = vld [vmem:[%s214 + $0x468] sm:$0xff]
        %v442 = vld [vmem:[%s214 + $0x470] sm:$0xff]
        %v443 = vld [vmem:[%s214 + $0x478] sm:$0xff]
        %v444 = vld [vmem:[%s214 + $0x480] sm:$0xff]
        %v445 = vld [vmem:[%s214 + $0x488] sm:$0xff]
        %v446 = vld [vmem:[%s214 + $0x490] sm:$0xff]
        %v447 = vld [vmem:[%s214 + $0x498] sm:$0xff]
        %v448 = vld [vmem:[%s214 + $0x4a0] sm:$0xff]
        %v449 = vld [vmem:[%s214 + $0x4a8] sm:$0xff]
        %v450 = vld [vmem:[%s214 + $0x4b0] sm:$0xff]
        %v451 = vld [vmem:[%s214 + $0x4b8] sm:$0xff]
        %v452 = vld [vmem:[%s214 + $0x4c0] sm:$0xff]
        %v453 = vld [vmem:[%s214 + $0x4c8] sm:$0xff]
        %v454 = vld [vmem:[%s214 + $0x4d0] sm:$0xff]
        %v455 = vld [vmem:[%s214 + $0x4d8] sm:$0xff]
        %v456 = vld [vmem:[%s214 + $0x4e0] sm:$0xff]
        %v457 = vld [vmem:[%s214 + $0x4e8] sm:$0xff]
        %v458 = vld [vmem:[%s214 + $0x4f0] sm:$0xff]
        %v459 = vld [vmem:[%s214 + $0x4f8] sm:$0xff]
        %v460 = vld [vmem:[%s214 + $0x500] sm:$0xff]
        %v461 = vld [vmem:[%s214 + $0x508] sm:$0xff]
        %v462 = vld [vmem:[%s214 + $0x510] sm:$0xff]
        %v463 = vld [vmem:[%s214 + $0x518] sm:$0xff]
        %v464 = vld [vmem:[%s214 + $0x520] sm:$0xff]
        %v465 = vld [vmem:[%s214 + $0x528] sm:$0xff]
        %v466 = vld [vmem:[%s214 + $0x530] sm:$0xff]
        %v467 = vld [vmem:[%s214 + $0x538] sm:$0xff]
        %v468 = vld [vmem:[%s214 + $0x540] sm:$0xff]
        %v469 = vld [vmem:[%s214 + $0x548] sm:$0xff]
        %v470 = vld [vmem:[%s214 + $0x550] sm:$0xff]
        %v471 = vld [vmem:[%s214 + $0x558] sm:$0xff]
        %v472 = vld [vmem:[%s214 + $0x560] sm:$0xff]
        %v473 = vld [vmem:[%s214 + $0x568] sm:$0xff]
        %v474 = vld [vmem:[%s214 + $0x570] sm:$0xff]
        %v475 = vld [vmem:[%s214 + $0x578] sm:$0xff]
        %v476 = vld [vmem:[%s214 + $0x580] sm:$0xff]
        %v477 = vld [vmem:[%s214 + $0x588] sm:$0xff]
        %v478 = vld [vmem:[%s214 + $0x590] sm:$0xff]
        %v479 = vld [vmem:[%s214 + $0x598] sm:$0xff]
        %v480 = vld [vmem:[%s214 + $0x5a0] sm:$0xff]
        %v481 = vld [vmem:[%s214 + $0x5a8] sm:$0xff]
        %v482 = vld [vmem:[%s214 + $0x5b0] sm:$0xff]
        %v483 = vld [vmem:[%s214 + $0x5b8] sm:$0xff]
        %v484 = vld [vmem:[%s214 + $0x5c0] sm:$0xff]
        %v485 = vld [vmem:[%s214 + $0x5c8] sm:$0xff]
        %v486 = vld [vmem:[%s214 + $0x5d0] sm:$0xff]
        %v487 = vld [vmem:[%s214 + $0x5d8] sm:$0xff]
        %v488 = vld [vmem:[%s214 + $0x5e0] sm:$0xff]
        %v489 = vld [vmem:[%s214 + $0x5e8] sm:$0xff]
        %v490 = vld [vmem:[%s214 + $0x5f0] sm:$0xff]
        %v491 = vld [vmem:[%s214 + $0x5f8] sm:$0xff]
        %v492 = vld [vmem:[%s214 + $0x600] sm:$0xff]
        %v493 = vld [vmem:[%s214 + $0x608] sm:$0xff]
        %v494 = vld [vmem:[%s214 + $0x610] sm:$0xff]
        %v495 = vld [vmem:[%s214 + $0x618] sm:$0xff]
        %v496 = vld [vmem:[%s214 + $0x620] sm:$0xff]
        %v497 = vld [vmem:[%s214 + $0x628] sm:$0xff]
        %v498 = vld [vmem:[%s214 + $0x630] sm:$0xff]
        %v499 = vld [vmem:[%s214 + $0x638] sm:$0xff]
        %v500 = vld [vmem:[%s214 + $0x640] sm:$0xff]
        %v501 = vld [vmem:[%s214 + $0x648] sm:$0xff]
        %v502 = vld [vmem:[%s214 + $0x650] sm:$0xff]
        %v503 = vld [vmem:[%s214 + $0x658] sm:$0xff]
        %v504 = vld [vmem:[%s214 + $0x660] sm:$0xff]
        %v505 = vld [vmem:[%s214 + $0x668] sm:$0xff]
        %v506 = vld [vmem:[%s214 + $0x670] sm:$0xff]
        %v507 = vld [vmem:[%s214 + $0x678] sm:$0xff]
        %v508 = vld [vmem:[%s214 + $0x680] sm:$0xff]
        %v509 = vld [vmem:[%s214 + $0x688] sm:$0xff]
        %v510 = vld [vmem:[%s214 + $0x690] sm:$0xff]
        %v511 = vld [vmem:[%s214 + $0x698] sm:$0xff]
        %v512 = vld [vmem:[%s214 + $0x6a0] sm:$0xff]
        %v513 = vld [vmem:[%s214 + $0x6a8] sm:$0xff]
        %v514 = vld [vmem:[%s214 + $0x6b0] sm:$0xff]
        %v515 = vld [vmem:[%s214 + $0x6b8] sm:$0xff]
        %v516 = vld [vmem:[%s214 + $0x6c0] sm:$0xff]
        %v517 = vld [vmem:[%s214 + $0x6c8] sm:$0xff]
        %v518 = vld [vmem:[%s214 + $0x6d0] sm:$0xff]
        %v519 = vld [vmem:[%s214 + $0x6d8] sm:$0xff]
        %v520 = vld [vmem:[%s214 + $0x6e0] sm:$0xff]
        %v521 = vld [vmem:[%s214 + $0x6e8] sm:$0xff]
        %v522 = vld [vmem:[%s214 + $0x6f0] sm:$0xff]
        %v523 = vld [vmem:[%s214 + $0x6f8] sm:$0xff]
        %v524 = vld [vmem:[%s214 + $0x700] sm:$0xff]
        %v525 = vld [vmem:[%s214 + $0x708] sm:$0xff]
        %v526 = vld [vmem:[%s214 + $0x710] sm:$0xff]
        %v527 = vld [vmem:[%s214 + $0x718] sm:$0xff]
        %v528 = vld [vmem:[%s214 + $0x720] sm:$0xff]
        %v529 = vld [vmem:[%s214 + $0x728] sm:$0xff]
        %v530 = vld [vmem:[%s214 + $0x730] sm:$0xff]
        %v531 = vld [vmem:[%s214 + $0x738] sm:$0xff]
        %v532 = vld [vmem:[%s214 + $0x740] sm:$0xff]
        %v533 = vld [vmem:[%s214 + $0x748] sm:$0xff]
        %v534 = vld [vmem:[%s214 + $0x750] sm:$0xff]
        %v535 = vld [vmem:[%s214 + $0x758] sm:$0xff]
        %v536 = vld [vmem:[%s214 + $0x760] sm:$0xff]
        %v537 = vld [vmem:[%s214 + $0x768] sm:$0xff]
        %v538 = vld [vmem:[%s214 + $0x770] sm:$0xff]
        %v539 = vld [vmem:[%s214 + $0x778] sm:$0xff]
        %v540 = vld [vmem:[%s214 + $0x780] sm:$0xff]
        %v541 = vld [vmem:[%s214 + $0x788] sm:$0xff]
        %v542 = vld [vmem:[%s214 + $0x790] sm:$0xff]
        %v543 = vld [vmem:[%s214 + $0x798] sm:$0xff]
        %v544 = vld [vmem:[%s214 + $0x7a0] sm:$0xff]
        %v545 = vld [vmem:[%s214 + $0x7a8] sm:$0xff]
        %v546 = vld [vmem:[%s214 + $0x7b0] sm:$0xff]
        %v547 = vld [vmem:[%s214 + $0x7b8] sm:$0xff]
        %v548 = vld [vmem:[%s214 + $0x7c0] sm:$0xff]
        %v549 = vld [vmem:[%s214 + $0x7c8] sm:$0xff]
        %v550 = vld [vmem:[%s214 + $0x7d0] sm:$0xff]
        %v551 = vld [vmem:[%s214 + $0x7d8] sm:$0xff]
        %v552 = vld [vmem:[%s214 + $0x7e0] sm:$0xff]
        %v553 = vld [vmem:[%s214 + $0x7e8] sm:$0xff]
        %v554 = vld [vmem:[%s214 + $0x7f0] sm:$0xff]
        %v555 = vld [vmem:[%s214 + $0x7f8] sm:$0xff]
        %v556 = vld [vmem:[%s214 + $0x800] sm:$0xff]
        %v557 = vld [vmem:[%s214 + $0x808] sm:$0xff]
        %v558 = vld [vmem:[%s214 + $0x810] sm:$0xff]
        %v559 = vld [vmem:[%s214 + $0x818] sm:$0xff]
        %v560 = vld [vmem:[%s214 + $0x820] sm:$0xff]
        %v561 = vld [vmem:[%s214 + $0x828] sm:$0xff]
        %v562 = vld [vmem:[%s214 + $0x830] sm:$0xff]
        %v563 = vld [vmem:[%s214 + $0x838] sm:$0xff]
        %v564 = vld [vmem:[%s214 + $0x840] sm:$0xff]
        %v565 = vld [vmem:[%s214 + $0x848] sm:$0xff]
        %v566 = vld [vmem:[%s214 + $0x850] sm:$0xff]
        %v567 = vld [vmem:[%s214 + $0x858] sm:$0xff]
        %v568 = vld [vmem:[%s214 + $0x860] sm:$0xff]
        %v569 = vld [vmem:[%s214 + $0x868] sm:$0xff]
        %v570 = vld [vmem:[%s214 + $0x870] sm:$0xff]
        %v571 = vld [vmem:[%s214 + $0x878] sm:$0xff]
        %v572 = vld [vmem:[%s214 + $0x880] sm:$0xff]
        %v573 = vld [vmem:[%s214 + $0x888] sm:$0xff]
        %v574 = vld [vmem:[%s214 + $0x890] sm:$0xff]
        %v575 = vld [vmem:[%s214 + $0x898] sm:$0xff]
        %v576 = vld [vmem:[%s214 + $0x8a0] sm:$0xff]
        %v577 = vld [vmem:[%s214 + $0x8a8] sm:$0xff]
        %v578 = vld [vmem:[%s214 + $0x8b0] sm:$0xff]
        %v579 = vld [vmem:[%s214 + $0x8b8] sm:$0xff]
        %v580 = vld [vmem:[%s214 + $0x8c0] sm:$0xff]
        %v581 = vld [vmem:[%s214 + $0x8c8] sm:$0xff]
        %v582 = vld [vmem:[%s214 + $0x8d0] sm:$0xff]
        %v583 = vld [vmem:[%s214 + $0x8d8] sm:$0xff]
        %v584 = vld [vmem:[%s214 + $0x8e0] sm:$0xff]
        %v585 = vld [vmem:[%s214 + $0x8e8] sm:$0xff]
        %v586 = vld [vmem:[%s214 + $0x8f0] sm:$0xff]
        %v587 = vld [vmem:[%s214 + $0x8f8] sm:$0xff]
        %v588 = vld [vmem:[%s214 + $0x900] sm:$0xff]
        %v589 = vld [vmem:[%s214 + $0x908] sm:$0xff]
        %v590 = vld [vmem:[%s214 + $0x910] sm:$0xff]
        %v591 = vld [vmem:[%s214 + $0x918] sm:$0xff]
        %v592 = vld [vmem:[%s214 + $0x920] sm:$0xff]
        %v593 = vld [vmem:[%s214 + $0x928] sm:$0xff]
        %v594 = vld [vmem:[%s214 + $0x930] sm:$0xff]
        %v595 = vld [vmem:[%s214 + $0x938] sm:$0xff]
        %v596 = vld [vmem:[%s214 + $0x940] sm:$0xff]
        %v597 = vld [vmem:[%s214 + $0x948] sm:$0xff]
        %v598 = vld [vmem:[%s214 + $0x950] sm:$0xff]
        %v599 = vld [vmem:[%s214 + $0x958] sm:$0xff]
        %v600 = vld [vmem:[%s214 + $0x960] sm:$0xff]
        %v601 = vld [vmem:[%s214 + $0x968] sm:$0xff]
        %v602 = vld [vmem:[%s214 + $0x970] sm:$0xff]
        %v603 = vld [vmem:[%s214 + $0x978] sm:$0xff]
        %v604 = vld [vmem:[%s214 + $0x980] sm:$0xff]
        %v605 = vld [vmem:[%s214 + $0x988] sm:$0xff]
        %v606 = vld [vmem:[%s214 + $0x990] sm:$0xff]
        %v607 = vld [vmem:[%s214 + $0x998] sm:$0xff]
        %v608 = vld [vmem:[%s214 + $0x9a0] sm:$0xff]
        %v609 = vld [vmem:[%s214 + $0x9a8] sm:$0xff]
        %v610 = vld [vmem:[%s214 + $0x9b0] sm:$0xff]
        %v611 = vld [vmem:[%s214 + $0x9b8] sm:$0xff]
        %v612 = vld [vmem:[%s214 + $0x9c0] sm:$0xff]
        %v613 = vld [vmem:[%s214 + $0x9c8] sm:$0xff]
        %v614 = vld [vmem:[%s214 + $0x9d0] sm:$0xff]
        %v615 = vld [vmem:[%s214 + $0x9d8] sm:$0xff]
        %v616 = vld [vmem:[%s214 + $0x9e0] sm:$0xff]
        %v617 = vld [vmem:[%s214 + $0x9e8] sm:$0xff]
        %v618 = vld [vmem:[%s214 + $0x9f0] sm:$0xff]
        %v619 = vld [vmem:[%s214 + $0x9f8] sm:$0xff]
        %v620 = vld [vmem:[%s214 + $0xa00] sm:$0xff]
        %v621 = vld [vmem:[%s214 + $0xa08] sm:$0xff]
        %v622 = vld [vmem:[%s214 + $0xa10] sm:$0xff]
        %v623 = vld [vmem:[%s214 + $0xa18] sm:$0xff]
        %v624 = vld [vmem:[%s214 + $0xa20] sm:$0xff]
        %v625 = vld [vmem:[%s214 + $0xa28] sm:$0xff]
        %v626 = vld [vmem:[%s214 + $0xa30] sm:$0xff]
        %v627 = vld [vmem:[%s214 + $0xa38] sm:$0xff]
        %v628 = vld [vmem:[%s214 + $0xa40] sm:$0xff]
        %v629 = vld [vmem:[%s214 + $0xa48] sm:$0xff]
        %v630 = vld [vmem:[%s214 + $0xa50] sm:$0xff]
        %v631 = vld [vmem:[%s214 + $0xa58] sm:$0xff]
        %v632 = vld [vmem:[%s214 + $0xa60] sm:$0xff]
        %v633 = vld [vmem:[%s214 + $0xa68] sm:$0xff]
        %v634 = vld [vmem:[%s214 + $0xa70] sm:$0xff]
        %v635 = vld [vmem:[%s214 + $0xa78] sm:$0xff]
        %v636 = vld [vmem:[%s214 + $0xa80] sm:$0xff]
        %v637 = vld [vmem:[%s214 + $0xa88] sm:$0xff]
        %v638 = vld [vmem:[%s214 + $0xa90] sm:$0xff]
        %v639 = vld [vmem:[%s214 + $0xa98] sm:$0xff]
        %v640 = vld [vmem:[%s214 + $0xaa0] sm:$0xff]
        %v641 = vld [vmem:[%s214 + $0xaa8] sm:$0xff]
        %v642 = vld [vmem:[%s214 + $0xab0] sm:$0xff]
        %v643 = vld [vmem:[%s214 + $0xab8] sm:$0xff]
        %v644 = vld [vmem:[%s214 + $0xac0] sm:$0xff]
        %v645 = vld [vmem:[%s214 + $0xac8] sm:$0xff]
        %v646 = vld [vmem:[%s214 + $0xad0] sm:$0xff]
        %v647 = vld [vmem:[%s214 + $0xad8] sm:$0xff]
        %v648 = vld [vmem:[%s214 + $0xae0] sm:$0xff]
        %v649 = vld [vmem:[%s214 + $0xae8] sm:$0xff]
        %v650 = vld [vmem:[%s214 + $0xaf0] sm:$0xff]
        %v651 = vld [vmem:[%s214 + $0xaf8] sm:$0xff]
        %v652 = vld [vmem:[%s214 + $0xb00] sm:$0xff]
        %v653 = vld [vmem:[%s214 + $0xb08] sm:$0xff]
        %v654 = vld [vmem:[%s214 + $0xb10] sm:$0xff]
        %v655 = vld [vmem:[%s214 + $0xb18] sm:$0xff]
        %v656 = vld [vmem:[%s214 + $0xb20] sm:$0xff]
        %v657 = vld [vmem:[%s214 + $0xb28] sm:$0xff]
        %v658 = vld [vmem:[%s214 + $0xb30] sm:$0xff]
        %v659 = vld [vmem:[%s214 + $0xb38] sm:$0xff]
        %v660 = vld [vmem:[%s214 + $0xb40] sm:$0xff]
        %v661 = vld [vmem:[%s214 + $0xb48] sm:$0xff]
        %v662 = vld [vmem:[%s214 + $0xb50] sm:$0xff]
        %v663 = vld [vmem:[%s214 + $0xb58] sm:$0xff]
        %v664 = vld [vmem:[%s214 + $0xb60] sm:$0xff]
        %v665 = vld [vmem:[%s214 + $0xb68] sm:$0xff]
        %v666 = vld [vmem:[%s214 + $0xb70] sm:$0xff]
        %v667 = vld [vmem:[%s214 + $0xb78] sm:$0xff]
        %v668 = vld [vmem:[%s214 + $0xb80] sm:$0xff]
        %v669 = vld [vmem:[%s214 + $0xb88] sm:$0xff]
        %v670 = vld [vmem:[%s214 + $0xb90] sm:$0xff]
        %v671 = vld [vmem:[%s214 + $0xb98] sm:$0xff]
        %v672 = vld [vmem:[%s214 + $0xba0] sm:$0xff]
        %v673 = vld [vmem:[%s214 + $0xba8] sm:$0xff]
        %v674 = vld [vmem:[%s214 + $0xbb0] sm:$0xff]
        %v675 = vld [vmem:[%s214 + $0xbb8] sm:$0xff]
        %v676 = vld [vmem:[%s214 + $0xbc0] sm:$0xff]
        %v677 = vld [vmem:[%s214 + $0xbc8] sm:$0xff]
        %v678 = vld [vmem:[%s214 + $0xbd0] sm:$0xff]
        %v679 = vld [vmem:[%s214 + $0xbd8] sm:$0xff]
        %v680 = vld [vmem:[%s214 + $0xbe0] sm:$0xff]
        %v681 = vld [vmem:[%s214 + $0xbe8] sm:$0xff]
        %v682 = vld [vmem:[%s214 + $0xbf0] sm:$0xff]
        %v683 = vld [vmem:[%s214 + $0xbf8] sm:$0xff]
        %v684 = vld [vmem:[%s214 + $0xc00] sm:$0xff]
        %v685 = vld [vmem:[%s214 + $0xc08] sm:$0xff]
        %v686 = vld [vmem:[%s214 + $0xc10] sm:$0xff]
        %v687 = vld [vmem:[%s214 + $0xc18] sm:$0xff]
        %v688 = vld [vmem:[%s214 + $0xc20] sm:$0xff]
        %v689 = vld [vmem:[%s214 + $0xc28] sm:$0xff]
        %v690 = vld [vmem:[%s214 + $0xc30] sm:$0xff]
        %v691 = vld [vmem:[%s214 + $0xc38] sm:$0xff]
        %v692 = vld [vmem:[%s214 + $0xc40] sm:$0xff]
        %v693 = vld [vmem:[%s214 + $0xc48] sm:$0xff]
        %v694 = vld [vmem:[%s214 + $0xc50] sm:$0xff]
        %v695 = vld [vmem:[%s214 + $0xc58] sm:$0xff]
        %v696 = vld [vmem:[%s214 + $0xc60] sm:$0xff]
        %v697 = vld [vmem:[%s214 + $0xc68] sm:$0xff]
        %v698 = vld [vmem:[%s214 + $0xc70] sm:$0xff]
        %v699 = vld [vmem:[%s214 + $0xc78] sm:$0xff]
        %v700 = vld [vmem:[%s214 + $0xc80] sm:$0xff]
        %v701 = vld [vmem:[%s214 + $0xc88] sm:$0xff]
        %v702 = vld [vmem:[%s214 + $0xc90] sm:$0xff]
        %v703 = vld [vmem:[%s214 + $0xc98] sm:$0xff]
        %v704 = vld [vmem:[%s214 + $0xca0] sm:$0xff]
        %v705 = vld [vmem:[%s214 + $0xca8] sm:$0xff]
        %v706 = vld [vmem:[%s214 + $0xcb0] sm:$0xff]
        %v707 = vld [vmem:[%s214 + $0xcb8] sm:$0xff]
        %v708 = vld [vmem:[%s214 + $0xcc0] sm:$0xff]
        %v709 = vld [vmem:[%s214 + $0xcc8] sm:$0xff]
        %v710 = vld [vmem:[%s214 + $0xcd0] sm:$0xff]
        %v711 = vld [vmem:[%s214 + $0xcd8] sm:$0xff]
        %v712 = vld [vmem:[%s214 + $0xce0] sm:$0xff]
        %v713 = vld [vmem:[%s214 + $0xce8] sm:$0xff]
        %v714 = vld [vmem:[%s214 + $0xcf0] sm:$0xff]
        %v715 = vld [vmem:[%s214 + $0xcf8] sm:$0xff]
        %v716 = vld [vmem:[%s214 + $0xd00] sm:$0xff]
        %v717 = vld [vmem:[%s214 + $0xd08] sm:$0xff]
        %v718 = vld [vmem:[%s214 + $0xd10] sm:$0xff]
        %v719 = vld [vmem:[%s214 + $0xd18] sm:$0xff]
        %v720 = vld [vmem:[%s214 + $0xd20] sm:$0xff]
        %v721 = vld [vmem:[%s214 + $0xd28] sm:$0xff]
        %v722 = vld [vmem:[%s214 + $0xd30] sm:$0xff]
        %v723 = vld [vmem:[%s214 + $0xd38] sm:$0xff]
        %v724 = vld [vmem:[%s214 + $0xd40] sm:$0xff]
        %v725 = vld [vmem:[%s214 + $0xd48] sm:$0xff]
        %v726 = vld [vmem:[%s214 + $0xd50] sm:$0xff]
        %v727 = vld [vmem:[%s214 + $0xd58] sm:$0xff]
        %v728 = vld [vmem:[%s214 + $0xd60] sm:$0xff]
        %v729 = vld [vmem:[%s214 + $0xd68] sm:$0xff]
        %v730 = vld [vmem:[%s214 + $0xd70] sm:$0xff]
        %v731 = vld [vmem:[%s214 + $0xd78] sm:$0xff]
        %v732 = vld [vmem:[%s214 + $0xd80] sm:$0xff]
        %v733 = vld [vmem:[%s214 + $0xd88] sm:$0xff]
        %v734 = vld [vmem:[%s214 + $0xd90] sm:$0xff]
        %v735 = vld [vmem:[%s214 + $0xd98] sm:$0xff]
        %v736 = vld [vmem:[%s214 + $0xda0] sm:$0xff]
        %v737 = vld [vmem:[%s214 + $0xda8] sm:$0xff]
        %v738 = vld [vmem:[%s214 + $0xdb0] sm:$0xff]
        %v739 = vld [vmem:[%s214 + $0xdb8] sm:$0xff]
        %v740 = vld [vmem:[%s214 + $0xdc0] sm:$0xff]
        %v741 = vld [vmem:[%s214 + $0xdc8] sm:$0xff]
        %v742 = vld [vmem:[%s214 + $0xdd0] sm:$0xff]
        %v743 = vld [vmem:[%s214 + $0xdd8] sm:$0xff]
        %v744 = vld [vmem:[%s214 + $0xde0] sm:$0xff]
        %v745 = vld [vmem:[%s214 + $0xde8] sm:$0xff]
        %v746 = vld [vmem:[%s214 + $0xdf0] sm:$0xff]
        %v747 = vld [vmem:[%s214 + $0xdf8] sm:$0xff]
        %v748 = vld [vmem:[%s214 + $0xe00] sm:$0xff]
        %v749 = vld [vmem:[%s214 + $0xe08] sm:$0xff]
        %v750 = vld [vmem:[%s214 + $0xe10] sm:$0xff]
        %v751 = vld [vmem:[%s214 + $0xe18] sm:$0xff]
        %v752 = vld [vmem:[%s214 + $0xe20] sm:$0xff]
        %v753 = vld [vmem:[%s214 + $0xe28] sm:$0xff]
        %v754 = vld [vmem:[%s214 + $0xe30] sm:$0xff]
        %v755 = vld [vmem:[%s214 + $0xe38] sm:$0xff]
        %v756 = vld [vmem:[%s214 + $0xe40] sm:$0xff]
        %v757 = vld [vmem:[%s214 + $0xe48] sm:$0xff]
        %v758 = vld [vmem:[%s214 + $0xe50] sm:$0xff]
        %v759 = vld [vmem:[%s214 + $0xe58] sm:$0xff]
        %v760 = vld [vmem:[%s214 + $0xe60] sm:$0xff]
        %v761 = vld [vmem:[%s214 + $0xe68] sm:$0xff]
        %v762 = vld [vmem:[%s214 + $0xe70] sm:$0xff]
        %v763 = vld [vmem:[%s214 + $0xe78] sm:$0xff]
        %v764 = vld [vmem:[%s214 + $0xe80] sm:$0xff]
        %v765 = vld [vmem:[%s214 + $0xe88] sm:$0xff]
        %v766 = vld [vmem:[%s214 + $0xe90] sm:$0xff]
        %v767 = vld [vmem:[%s214 + $0xe98] sm:$0xff]
        %v768 = vld [vmem:[%s214 + $0xea0] sm:$0xff]
        %v769 = vld [vmem:[%s214 + $0xea8] sm:$0xff]
        %v770 = vld [vmem:[%s214 + $0xeb0] sm:$0xff]
        %v771 = vld [vmem:[%s214 + $0xeb8] sm:$0xff]
        %v772 = vld [vmem:[%s214 + $0xec0] sm:$0xff]
        %v773 = vld [vmem:[%s214 + $0xec8] sm:$0xff]
        %v774 = vld [vmem:[%s214 + $0xed0] sm:$0xff]
        %v775 = vld [vmem:[%s214 + $0xed8] sm:$0xff]
        %v776 = vld [vmem:[%s214 + $0xee0] sm:$0xff]
        %v777 = vld [vmem:[%s214 + $0xee8] sm:$0xff]
        %v778 = vld [vmem:[%s214 + $0xef0] sm:$0xff]
        %v779 = vld [vmem:[%s214 + $0xef8] sm:$0xff]
        %v780 = vld [vmem:[%s214 + $0xf00] sm:$0xff]
        %v781 = vld [vmem:[%s214 + $0xf08] sm:$0xff]
        %v782 = vld [vmem:[%s214 + $0xf10] sm:$0xff]
        %v783 = vld [vmem:[%s214 + $0xf18] sm:$0xff]
        %v784 = vld [vmem:[%s214 + $0xf20] sm:$0xff]
        %v785 = vld [vmem:[%s214 + $0xf28] sm:$0xff]
        %v786 = vld [vmem:[%s214 + $0xf30] sm:$0xff]
        %v787 = vld [vmem:[%s214 + $0xf38] sm:$0xff]
        %v788 = vld [vmem:[%s214 + $0xf40] sm:$0xff]
        %v789 = vld [vmem:[%s214 + $0xf48] sm:$0xff]
        %v790 = vld [vmem:[%s214 + $0xf50] sm:$0xff]
        %v791 = vld [vmem:[%s214 + $0xf58] sm:$0xff]
        %v792 = vld [vmem:[%s214 + $0xf60] sm:$0xff]
        %v793 = vld [vmem:[%s214 + $0xf68] sm:$0xff]
        %v794 = vld [vmem:[%s214 + $0xf70] sm:$0xff]
        %v795 = vld [vmem:[%s214 + $0xf78] sm:$0xff]
        %v796 = vld [vmem:[%s214 + $0xf80] sm:$0xff]
        %v797 = vld [vmem:[%s214 + $0xf88] sm:$0xff]
        %v798 = vld [vmem:[%s214 + $0xf90] sm:$0xff]
        %v799 = vld [vmem:[%s214 + $0xf98] sm:$0xff]
        %v800 = vld [vmem:[%s214 + $0xfa0] sm:$0xff]
        %v801 = vld [vmem:[%s214 + $0xfa8] sm:$0xff]
        %v802 = vld [vmem:[%s214 + $0xfb0] sm:$0xff]
        %v803 = vld [vmem:[%s214 + $0xfb8] sm:$0xff]
        %v804 = vld [vmem:[%s214 + $0xfc0] sm:$0xff]
        %v805 = vld [vmem:[%s214 + $0xfc8] sm:$0xff]
        %v806 = vld [vmem:[%s214 + $0xfd0] sm:$0xff]
        %v807 = vld [vmem:[%s214 + $0xfd8] sm:$0xff]
        %v808 = vld [vmem:[%s214 + $0xfe0] sm:$0xff]
        %v809 = vld [vmem:[%s214 + $0xfe8] sm:$0xff]
        %v810 = vld [vmem:[%s214 + $0xff0] sm:$0xff]
        %v811 = vld [vmem:[%s214 + $0xff8] sm:$0xff]
        %v812 = vld [vmem:[%s214 + $0x1000] sm:$0xff]
        %v813 = vld [vmem:[%s214 + $0x1008] sm:$0xff]
        %v814 = vld [vmem:[%s214 + $0x1010] sm:$0xff]
        %v815 = vld [vmem:[%s214 + $0x1018] sm:$0xff]
        %v816 = vld [vmem:[%s214 + $0x1020] sm:$0xff]
        %v817 = vld [vmem:[%s214 + $0x1028] sm:$0xff]
        %v818 = vld [vmem:[%s214 + $0x1030] sm:$0xff]
        %v819 = vld [vmem:[%s214 + $0x1038] sm:$0xff]
        %v820 = vld [vmem:[%s214 + $0x1040] sm:$0xff]
        %v821 = vld [vmem:[%s214 + $0x1048] sm:$0xff]
        %v822 = vld [vmem:[%s214 + $0x1050] sm:$0xff]
        %v823 = vld [vmem:[%s214 + $0x1058] sm:$0xff]
        %v824 = vld [vmem:[%s214 + $0x1060] sm:$0xff]
        %v825 = vld [vmem:[%s214 + $0x1068] sm:$0xff]
        %v826 = vld [vmem:[%s214 + $0x1070] sm:$0xff]
        %v827 = vld [vmem:[%s214 + $0x1078] sm:$0xff]
        %v828 = vld [vmem:[%s214 + $0x1080] sm:$0xff]
        %v829 = vld [vmem:[%s214 + $0x1088] sm:$0xff]
        %v830 = vld [vmem:[%s214 + $0x1090] sm:$0xff]
        %v831 = vld [vmem:[%s214 + $0x1098] sm:$0xff]
        %v832 = vld [vmem:[%s214 + $0x10a0] sm:$0xff]
        %v833 = vld [vmem:[%s214 + $0x10a8] sm:$0xff]
        %v834 = vld [vmem:[%s214 + $0x10b0] sm:$0xff]
        %v835 = vld [vmem:[%s214 + $0x10b8] sm:$0xff]
        %v836 = vld [vmem:[%s214 + $0x10c0] sm:$0xff]
        %v837 = vld [vmem:[%s214 + $0x10c8] sm:$0xff]
        %v838 = vld [vmem:[%s214 + $0x10d0] sm:$0xff]
        %v839 = vld [vmem:[%s214 + $0x10d8] sm:$0xff]
        %v840 = vld [vmem:[%s214 + $0x10e0] sm:$0xff]
        %v841 = vld [vmem:[%s214 + $0x10e8] sm:$0xff]
        %v842 = vld [vmem:[%s214 + $0x10f0] sm:$0xff]
        %v843 = vld [vmem:[%s214 + $0x10f8] sm:$0xff]
        %v844 = vld [vmem:[%s214 + $0x1100] sm:$0xff]
        %v845 = vld [vmem:[%s214 + $0x1108] sm:$0xff]
        %v846 = vld [vmem:[%s214 + $0x1110] sm:$0xff]
        %v847 = vld [vmem:[%s214 + $0x1118] sm:$0xff]
        %v848 = vld [vmem:[%s214 + $0x1120] sm:$0xff]
        %v849 = vld [vmem:[%s214 + $0x1128] sm:$0xff]
        %v850 = vld [vmem:[%s214 + $0x1130] sm:$0xff]
        %v851 = vld [vmem:[%s214 + $0x1138] sm:$0xff]
        %v852 = vld [vmem:[%s214 + $0x1140] sm:$0xff]
        %v853 = vld [vmem:[%s214 + $0x1148] sm:$0xff]
        %v854 = vld [vmem:[%s214 + $0x1150] sm:$0xff]
        %v855 = vld [vmem:[%s214 + $0x1158] sm:$0xff]
        %v856 = vld [vmem:[%s214 + $0x1160] sm:$0xff]
        %v857 = vld [vmem:[%s214 + $0x1168] sm:$0xff]
        %v858 = vld [vmem:[%s214 + $0x1170] sm:$0xff]
        %v859 = vld [vmem:[%s214 + $0x1178] sm:$0xff]
        %v860 = vld [vmem:[%s214 + $0x1180] sm:$0xff]
        %v861 = vld [vmem:[%s214 + $0x1188] sm:$0xff]
        %v862 = vld [vmem:[%s214 + $0x1190] sm:$0xff]
        %v863 = vld [vmem:[%s214 + $0x1198] sm:$0xff]
        %v864 = vld [vmem:[%s214 + $0x11a0] sm:$0xff]
        %v865 = vld [vmem:[%s214 + $0x11a8] sm:$0xff]
        %v866 = vld [vmem:[%s214 + $0x11b0] sm:$0xff]
        %v867 = vld [vmem:[%s214 + $0x11b8] sm:$0xff]
        %v868 = vld [vmem:[%s214 + $0x11c0] sm:$0xff]
        %v869 = vld [vmem:[%s214 + $0x11c8] sm:$0xff]
        %v870 = vld [vmem:[%s214 + $0x11d0] sm:$0xff]
        %v871 = vld [vmem:[%s214 + $0x11d8] sm:$0xff]
        %v872 = vld [vmem:[%s214 + $0x11e0] sm:$0xff]
        %v873 = vld [vmem:[%s214 + $0x11e8] sm:$0xff]
        %v874 = vld [vmem:[%s214 + $0x11f0] sm:$0xff]
        %v875 = vld [vmem:[%s214 + $0x11f8] sm:$0xff]
        %v876 = vld [vmem:[%s214 + $0x1200] sm:$0xff]
        %v877 = vld [vmem:[%s214 + $0x1208] sm:$0xff]
        %v878 = vld [vmem:[%s214 + $0x1210] sm:$0xff]
        %v879 = vld [vmem:[%s214 + $0x1218] sm:$0xff]
        %v880 = vld [vmem:[%s214 + $0x1220] sm:$0xff]
        %v881 = vld [vmem:[%s214 + $0x1228] sm:$0xff]
        %v882 = vld [vmem:[%s214 + $0x1230] sm:$0xff]
        %v883 = vld [vmem:[%s214 + $0x1238] sm:$0xff]
        %v884 = vld [vmem:[%s214 + $0x1240] sm:$0xff]
        %v885 = vld [vmem:[%s214 + $0x1248] sm:$0xff]
        %v886 = vld [vmem:[%s214 + $0x1250] sm:$0xff]
        %v887 = vld [vmem:[%s214 + $0x1258] sm:$0xff]
        %v888 = vld [vmem:[%s214 + $0x1260] sm:$0xff]
        %v889 = vld [vmem:[%s214 + $0x1268] sm:$0xff]
        %v890 = vld [vmem:[%s214 + $0x1270] sm:$0xff]
        %v891 = vld [vmem:[%s214 + $0x1278] sm:$0xff]
        %v892 = vld [vmem:[%s214 + $0x1280] sm:$0xff]
        %v893 = vld [vmem:[%s214 + $0x1288] sm:$0xff]
        %v894 = vld [vmem:[%s214 + $0x1290] sm:$0xff]
        %v895 = vld [vmem:[%s214 + $0x1298] sm:$0xff]
        %v896 = vld [vmem:[%s214 + $0x12a0] sm:$0xff]
        %v897 = vld [vmem:[%s214 + $0x12a8] sm:$0xff]
        %v898 = vld [vmem:[%s214 + $0x12b0] sm:$0xff]
        %v899 = vld [vmem:[%s214 + $0x12b8] sm:$0xff]
        %v900 = vld [vmem:[%s214 + $0x12c0] sm:$0xff]
        %v901 = vld [vmem:[%s214 + $0x12c8] sm:$0xff]
        %v902 = vld [vmem:[%s214 + $0x12d0] sm:$0xff]
        %v903 = vld [vmem:[%s214 + $0x12d8] sm:$0xff]
        %v904 = vld [vmem:[%s214 + $0x12e0] sm:$0xff]
        %v905 = vld [vmem:[%s214 + $0x12e8] sm:$0xff]
        %v906 = vld [vmem:[%s214 + $0x12f0] sm:$0xff]
        %v907 = vld [vmem:[%s214 + $0x12f8] sm:$0xff]
        %v908 = vld [vmem:[%s214 + $0x1300] sm:$0xff]
        %v909 = vld [vmem:[%s214 + $0x1308] sm:$0xff]
        %v910 = vld [vmem:[%s214 + $0x1310] sm:$0xff]
        %v911 = vld [vmem:[%s214 + $0x1318] sm:$0xff]
        %v912 = vld [vmem:[%s214 + $0x1320] sm:$0xff]
        %v913 = vld [vmem:[%s214 + $0x1328] sm:$0xff]
        %v914 = vld [vmem:[%s214 + $0x1330] sm:$0xff]
        %v915 = vld [vmem:[%s214 + $0x1338] sm:$0xff]
        %v916 = vld [vmem:[%s214 + $0x1340] sm:$0xff]
        %v917 = vld [vmem:[%s214 + $0x1348] sm:$0xff]
        %v918 = vld [vmem:[%s214 + $0x1350] sm:$0xff]
        %v919 = vld [vmem:[%s214 + $0x1358] sm:$0xff]
        %v920 = vld [vmem:[%s214 + $0x1360] sm:$0xff]
        %v921 = vld [vmem:[%s214 + $0x1368] sm:$0xff]
        %v922 = vld [vmem:[%s214 + $0x1370] sm:$0xff]
        %v923 = vld [vmem:[%s214 + $0x1378] sm:$0xff]
        %v924 = vld [vmem:[%s214 + $0x1380] sm:$0xff]
        %v925 = vld [vmem:[%s214 + $0x1388] sm:$0xff]
        %v926 = vld [vmem:[%s214 + $0x1390] sm:$0xff]
        %v927 = vld [vmem:[%s214 + $0x1398] sm:$0xff]
        %v928 = vld [vmem:[%s214 + $0x13a0] sm:$0xff]
        %v929 = vld [vmem:[%s214 + $0x13a8] sm:$0xff]
        %v930 = vld [vmem:[%s214 + $0x13b0] sm:$0xff]
        %v931 = vld [vmem:[%s214 + $0x13b8] sm:$0xff]
        %v932 = vld [vmem:[%s214 + $0x13c0] sm:$0xff]
        %v933 = vld [vmem:[%s214 + $0x13c8] sm:$0xff]
        %v934 = vld [vmem:[%s214 + $0x13d0] sm:$0xff]
        %v935 = vld [vmem:[%s214 + $0x13d8] sm:$0xff]
        %v936 = vld [vmem:[%s214 + $0x13e0] sm:$0xff]
        %v937 = vld [vmem:[%s214 + $0x13e8] sm:$0xff]
        %v938 = vld [vmem:[%s214 + $0x13f0] sm:$0xff]
        %v939 = vld [vmem:[%s214 + $0x13f8] sm:$0xff]
        %v940 = vld [vmem:[%s214 + $0x1400] sm:$0xff]
        %v941 = vld [vmem:[%s214 + $0x1408] sm:$0xff]
        %v942 = vld [vmem:[%s214 + $0x1410] sm:$0xff]
        %v943 = vld [vmem:[%s214 + $0x1418] sm:$0xff]
        %v944 = vld [vmem:[%s214 + $0x1420] sm:$0xff]
        %v945 = vld [vmem:[%s214 + $0x1428] sm:$0xff]
        %v946 = vld [vmem:[%s214 + $0x1430] sm:$0xff]
        %v947 = vld [vmem:[%s214 + $0x1438] sm:$0xff]
        %v948 = vld [vmem:[%s214 + $0x1440] sm:$0xff]
        %v949 = vld [vmem:[%s214 + $0x1448] sm:$0xff]
        %v950 = vld [vmem:[%s214 + $0x1450] sm:$0xff]
        %v951 = vld [vmem:[%s214 + $0x1458] sm:$0xff]
        %v952 = vld [vmem:[%s214 + $0x1460] sm:$0xff]
        %v953 = vld [vmem:[%s214 + $0x1468] sm:$0xff]
        %v954 = vld [vmem:[%s214 + $0x1470] sm:$0xff]
        %v955 = vld [vmem:[%s214 + $0x1478] sm:$0xff]
        %v956 = vld [vmem:[%s214 + $0x1480] sm:$0xff]
        %v957 = vld [vmem:[%s214 + $0x1488] sm:$0xff]
        %v958 = vld [vmem:[%s214 + $0x1490] sm:$0xff]
        %v959 = vld [vmem:[%s214 + $0x1498] sm:$0xff]
        %v960 = vld [vmem:[%s214 + $0x14a0] sm:$0xff]
        %v961 = vld [vmem:[%s214 + $0x14a8] sm:$0xff]
        %v962 = vld [vmem:[%s214 + $0x14b0] sm:$0xff]
        %v963 = vld [vmem:[%s214 + $0x14b8] sm:$0xff]
        %v964 = vld [vmem:[%s214 + $0x14c0] sm:$0xff]
        %v965 = vld [vmem:[%s214 + $0x14c8] sm:$0xff]
        %v966 = vld [vmem:[%s214 + $0x14d0] sm:$0xff]
        %v967 = vld [vmem:[%s214 + $0x14d8] sm:$0xff]
        %v968 = vld [vmem:[%s214 + $0x14e0] sm:$0xff]
        %v969 = vld [vmem:[%s214 + $0x14e8] sm:$0xff]
        %v970 = vld [vmem:[%s214 + $0x14f0] sm:$0xff]
        %v971 = vld [vmem:[%s214 + $0x14f8] sm:$0xff]
        %v972 = vld [vmem:[%s214 + $0x1500] sm:$0xff]
        %v973 = vld [vmem:[%s214 + $0x1508] sm:$0xff]
        %v974 = vld [vmem:[%s214 + $0x1510] sm:$0xff]
        %v975 = vld [vmem:[%s214 + $0x1518] sm:$0xff]
        %v976 = vld [vmem:[%s214 + $0x1520] sm:$0xff]
        %v977 = vld [vmem:[%s214 + $0x1528] sm:$0xff]
        %v978 = vld [vmem:[%s214 + $0x1530] sm:$0xff]
        %v979 = vld [vmem:[%s214 + $0x1538] sm:$0xff]
        %v980 = vld [vmem:[%s214 + $0x1540] sm:$0xff]
        %v981 = vld [vmem:[%s214 + $0x1548] sm:$0xff]
        %v982 = vld [vmem:[%s214 + $0x1550] sm:$0xff]
        %v983 = vld [vmem:[%s214 + $0x1558] sm:$0xff]
        %v984 = vld [vmem:[%s214 + $0x1560] sm:$0xff]
        %v985 = vld [vmem:[%s214 + $0x1568] sm:$0xff]
        %v986 = vld [vmem:[%s214 + $0x1570] sm:$0xff]
        %v987 = vld [vmem:[%s214 + $0x1578] sm:$0xff]
        %v988 = vld [vmem:[%s214 + $0x1580] sm:$0xff]
        %v989 = vld [vmem:[%s214 + $0x1588] sm:$0xff]
        %v990 = vld [vmem:[%s214 + $0x1590] sm:$0xff]
        %v991 = vld [vmem:[%s214 + $0x1598] sm:$0xff]
        %v992 = vld [vmem:[%s214 + $0x15a0] sm:$0xff]
        %v993 = vld [vmem:[%s214 + $0x15a8] sm:$0xff]
        %v994 = vld [vmem:[%s214 + $0x15b0] sm:$0xff]
        %v995 = vld [vmem:[%s214 + $0x15b8] sm:$0xff]
        %v996 = vld [vmem:[%s214 + $0x15c0] sm:$0xff]
        %v997 = vld [vmem:[%s214 + $0x15c8] sm:$0xff]
        %v998 = vld [vmem:[%s214 + $0x15d0] sm:$0xff]
        %v999 = vld [vmem:[%s214 + $0x15d8] sm:$0xff]
        %v1000 = vld [vmem:[%s214 + $0x15e0] sm:$0xff]
        %v1001 = vld [vmem:[%s214 + $0x15e8] sm:$0xff]
        %v1002 = vld [vmem:[%s214 + $0x15f0] sm:$0xff]
        %v1003 = vld [vmem:[%s214 + $0x15f8] sm:$0xff]
        %v1010 = vcombine.high %v294, %v294
        %v1012 = vunpack.c.l.s4 1966171168
        %v1013 = vunpack.c.0.s8 %v1012
        %v1014 = vlaneseq
        %v1015 = vshrl.u32 %v1014, 7
        %v1016 = vsub.s32 %v1013, %v1015
        %v1017 = vrot.slane %v294, %v1016
        %v1019 = vunpack.c.l.s4 1966171168
        %v1020 = vunpack.c.0.s8 %v1019
        %v1021 = vlaneseq
        %v1022 = vshrl.u32 %v1021, 7
        %v1023 = vsub.s32 %v1020, %v1022
        %v1024 = vrot.slane %v1010, %v1023
        %v1025 = vcombine.high %v1017, %v1017
        %v1026 = vcombine.high %v1024, %v1024
        %v1028 = vunpack.c.l.s4 1966171168
        %v1029 = vunpack.c.0.s8 %v1028
        %v1030 = vlaneseq
        %v1031 = vshrl.u32 %v1030, 7
        %v1032 = vsub.s32 %v1029, %v1031
        %v1033 = vrot.slane %v1017, %v1032
        %v1035 = vunpack.c.l.s4 1966171168
        %v1036 = vunpack.c.0.s8 %v1035
        %v1037 = vlaneseq
        %v1038 = vshrl.u32 %v1037, 7
        %v1039 = vsub.s32 %v1036, %v1038
        %v1040 = vrot.slane %v1024, %v1039
        %v1042 = vunpack.c.l.s4 1966171168
        %v1043 = vunpack.c.0.s8 %v1042
        %v1044 = vlaneseq
        %v1045 = vshrl.u32 %v1044, 7
        %v1046 = vsub.s32 %v1043, %v1045
        %v1047 = vrot.slane %v1025, %v1046
        %v1049 = vunpack.c.l.s4 1966171168
        %v1050 = vunpack.c.0.s8 %v1049
        %v1051 = vlaneseq
        %v1052 = vshrl.u32 %v1051, 7
        %v1053 = vsub.s32 %v1050, %v1052
        %v1054 = vrot.slane %v1026, %v1053
        %v1055 = vcombine.high %v1033, %v1033
        %v1056 = vcombine.high %v1040, %v1040
        %v1057 = vcombine.high %v1047, %v1047
        %v1058 = vcombine.high %v1054, %v1054
        %v1059 = vcombine.high %v295, %v295
        %v1061 = vunpack.c.l.s4 1966171168
        %v1062 = vunpack.c.0.s8 %v1061
        %v1063 = vlaneseq
        %v1064 = vshrl.u32 %v1063, 7
        %v1065 = vsub.s32 %v1062, %v1064
        %v1066 = vrot.slane %v295, %v1065
        %v1068 = vunpack.c.l.s4 1966171168
        %v1069 = vunpack.c.0.s8 %v1068
        %v1070 = vlaneseq
        %v1071 = vshrl.u32 %v1070, 7
        %v1072 = vsub.s32 %v1069, %v1071
        %v1073 = vrot.slane %v1059, %v1072
        %v1074 = vcombine.high %v1066, %v1066
        %v1075 = vcombine.high %v1073, %v1073
        %v1077 = vunpack.c.l.s4 1966171168
        %v1078 = vunpack.c.0.s8 %v1077
        %v1079 = vlaneseq
        %v1080 = vshrl.u32 %v1079, 7
        %v1081 = vsub.s32 %v1078, %v1080
        %v1082 = vrot.slane %v1066, %v1081
        %v1084 = vunpack.c.l.s4 1966171168
        %v1085 = vunpack.c.0.s8 %v1084
        %v1086 = vlaneseq
        %v1087 = vshrl.u32 %v1086, 7
        %v1088 = vsub.s32 %v1085, %v1087
        %v1089 = vrot.slane %v1073, %v1088
        %v1091 = vunpack.c.l.s4 1966171168
        %v1092 = vunpack.c.0.s8 %v1091
        %v1093 = vlaneseq
        %v1094 = vshrl.u32 %v1093, 7
        %v1095 = vsub.s32 %v1092, %v1094
        %v1096 = vrot.slane %v1074, %v1095
        %v1098 = vunpack.c.l.s4 1966171168
        %v1099 = vunpack.c.0.s8 %v1098
        %v1100 = vlaneseq
        %v1101 = vshrl.u32 %v1100, 7
        %v1102 = vsub.s32 %v1099, %v1101
        %v1103 = vrot.slane %v1075, %v1102
        %v1104 = vcombine.high %v1082, %v1082
        %v1105 = vcombine.high %v1089, %v1089
        %v1106 = vcombine.high %v1096, %v1096
        %v1107 = vcombine.high %v1103, %v1103
        %v1108 = vcombine.high %v296, %v296
        %v1110 = vunpack.c.l.s4 1966171168
        %v1111 = vunpack.c.0.s8 %v1110
        %v1112 = vlaneseq
        %v1113 = vshrl.u32 %v1112, 7
        %v1114 = vsub.s32 %v1111, %v1113
        %v1115 = vrot.slane %v296, %v1114
        %v1117 = vunpack.c.l.s4 1966171168
        %v1118 = vunpack.c.0.s8 %v1117
        %v1119 = vlaneseq
        %v1120 = vshrl.u32 %v1119, 7
        %v1121 = vsub.s32 %v1118, %v1120
        %v1122 = vrot.slane %v1108, %v1121
        %v1123 = vcombine.high %v1115, %v1115
        %v1124 = vcombine.high %v1122, %v1122
        %v1126 = vunpack.c.l.s4 1966171168
        %v1127 = vunpack.c.0.s8 %v1126
        %v1128 = vlaneseq
        %v1129 = vshrl.u32 %v1128, 7
        %v1130 = vsub.s32 %v1127, %v1129
        %v1131 = vrot.slane %v1115, %v1130
        %v1133 = vunpack.c.l.s4 1966171168
        %v1134 = vunpack.c.0.s8 %v1133
        %v1135 = vlaneseq
        %v1136 = vshrl.u32 %v1135, 7
        %v1137 = vsub.s32 %v1134, %v1136
        %v1138 = vrot.slane %v1122, %v1137
        %v1140 = vunpack.c.l.s4 1966171168
        %v1141 = vunpack.c.0.s8 %v1140
        %v1142 = vlaneseq
        %v1143 = vshrl.u32 %v1142, 7
        %v1144 = vsub.s32 %v1141, %v1143
        %v1145 = vrot.slane %v1123, %v1144
        %v1147 = vunpack.c.l.s4 1966171168
        %v1148 = vunpack.c.0.s8 %v1147
        %v1149 = vlaneseq
        %v1150 = vshrl.u32 %v1149, 7
        %v1151 = vsub.s32 %v1148, %v1150
        %v1152 = vrot.slane %v1124, %v1151
        %v1153 = vcombine.high %v1131, %v1131
        %v1154 = vcombine.high %v1138, %v1138
        %v1155 = vcombine.high %v1145, %v1145
        %v1156 = vcombine.high %v1152, %v1152
        %v1157 = vcombine.high %v297, %v297
        %v1159 = vunpack.c.l.s4 1966171168
        %v1160 = vunpack.c.0.s8 %v1159
        %v1161 = vlaneseq
        %v1162 = vshrl.u32 %v1161, 7
        %v1163 = vsub.s32 %v1160, %v1162
        %v1164 = vrot.slane %v297, %v1163
        %v1166 = vunpack.c.l.s4 1966171168
        %v1167 = vunpack.c.0.s8 %v1166
        %v1168 = vlaneseq
        %v1169 = vshrl.u32 %v1168, 7
        %v1170 = vsub.s32 %v1167, %v1169
        %v1171 = vrot.slane %v1157, %v1170
        %v1172 = vcombine.high %v1164, %v1164
        %v1173 = vcombine.high %v1171, %v1171
        %v1175 = vunpack.c.l.s4 1966171168
        %v1176 = vunpack.c.0.s8 %v1175
        %v1177 = vlaneseq
        %v1178 = vshrl.u32 %v1177, 7
        %v1179 = vsub.s32 %v1176, %v1178
        %v1180 = vrot.slane %v1164, %v1179
        %v1182 = vunpack.c.l.s4 1966171168
        %v1183 = vunpack.c.0.s8 %v1182
        %v1184 = vlaneseq
        %v1185 = vshrl.u32 %v1184, 7
        %v1186 = vsub.s32 %v1183, %v1185
        %v1187 = vrot.slane %v1171, %v1186
        %v1189 = vunpack.c.l.s4 1966171168
        %v1190 = vunpack.c.0.s8 %v1189
        %v1191 = vlaneseq
        %v1192 = vshrl.u32 %v1191, 7
        %v1193 = vsub.s32 %v1190, %v1192
        %v1194 = vrot.slane %v1172, %v1193
        %v1196 = vunpack.c.l.s4 1966171168
        %v1197 = vunpack.c.0.s8 %v1196
        %v1198 = vlaneseq
        %v1199 = vshrl.u32 %v1198, 7
        %v1200 = vsub.s32 %v1197, %v1199
        %v1201 = vrot.slane %v1173, %v1200
        %v1202 = vcombine.high %v1180, %v1180
        %v1203 = vcombine.high %v1187, %v1187
        %v1204 = vcombine.high %v1194, %v1194
        %v1205 = vcombine.high %v1201, %v1201
        %v1206 = vcombine.high %v298, %v298
        %v1208 = vunpack.c.l.s4 1966171168
        %v1209 = vunpack.c.0.s8 %v1208
        %v1210 = vlaneseq
        %v1211 = vshrl.u32 %v1210, 7
        %v1212 = vsub.s32 %v1209, %v1211
        %v1213 = vrot.slane %v298, %v1212
        %v1215 = vunpack.c.l.s4 1966171168
        %v1216 = vunpack.c.0.s8 %v1215
        %v1217 = vlaneseq
        %v1218 = vshrl.u32 %v1217, 7
        %v1219 = vsub.s32 %v1216, %v1218
        %v1220 = vrot.slane %v1206, %v1219
        %v1221 = vcombine.high %v1213, %v1213
        %v1222 = vcombine.high %v1220, %v1220
        %v1224 = vunpack.c.l.s4 1966171168
        %v1225 = vunpack.c.0.s8 %v1224
        %v1226 = vlaneseq
        %v1227 = vshrl.u32 %v1226, 7
        %v1228 = vsub.s32 %v1225, %v1227
        %v1229 = vrot.slane %v1213, %v1228
        %v1231 = vunpack.c.l.s4 1966171168
        %v1232 = vunpack.c.0.s8 %v1231
        %v1233 = vlaneseq
        %v1234 = vshrl.u32 %v1233, 7
        %v1235 = vsub.s32 %v1232, %v1234
        %v1236 = vrot.slane %v1220, %v1235
        %v1238 = vunpack.c.l.s4 1966171168
        %v1239 = vunpack.c.0.s8 %v1238
        %v1240 = vlaneseq
        %v1241 = vshrl.u32 %v1240, 7
        %v1242 = vsub.s32 %v1239, %v1241
        %v1243 = vrot.slane %v1221, %v1242
        %v1245 = vunpack.c.l.s4 1966171168
        %v1246 = vunpack.c.0.s8 %v1245
        %v1247 = vlaneseq
        %v1248 = vshrl.u32 %v1247, 7
        %v1249 = vsub.s32 %v1246, %v1248
        %v1250 = vrot.slane %v1222, %v1249
        %v1251 = vcombine.high %v1229, %v1229
        %v1252 = vcombine.high %v1236, %v1236
        %v1253 = vcombine.high %v1243, %v1243
        %v1254 = vcombine.high %v1250, %v1250
        %v1256 = vunpack.c.l.s4 1966171168
        %v1257 = vunpack.c.0.s8 %v1256
        %v1258 = vlaneseq
        %v1259 = vshrl.u32 %v1258, 7
        %v1260 = vsub.s32 %v1257, %v1259
        %v1261 = vrot.slane %v299, %v1260
        %v1262 = vcombine.high %v1261, %v1261
        %v1264 = vunpack.c.l.s4 1966171168
        %v1265 = vunpack.c.0.s8 %v1264
        %v1266 = vlaneseq
        %v1267 = vshrl.u32 %v1266, 7
        %v1268 = vsub.s32 %v1265, %v1267
        %v1269 = vrot.slane %v1261, %v1268
        %v1271 = vunpack.c.l.s4 1966171168
        %v1272 = vunpack.c.0.s8 %v1271
        %v1273 = vlaneseq
        %v1274 = vshrl.u32 %v1273, 7
        %v1275 = vsub.s32 %v1272, %v1274
        %v1276 = vrot.slane %v1262, %v1275
        %v1277 = vcombine.high %v1269, %v1269
        %v1278 = vcombine.high %v1276, %v1276
        %v2027 = vunpack.c.l.b16 %v300
        %v2028 = vunpack.c.h.b16 %v300
        %v2029 = vunpack.c.l.b16 %v301
        %v2030 = vunpack.c.h.b16 %v301
        %v2031 = vunpack.c.l.b16 %v302
        %v2032 = vunpack.c.h.b16 %v302
        %v2033 = vunpack.c.l.b16 %v303
        %v2034 = vunpack.c.h.b16 %v303
        %v2035 = vunpack.c.l.b16 %v304
        %v2036 = vunpack.c.h.b16 %v304
        %v2037 = vunpack.c.l.b16 %v305
        %v2038 = vunpack.c.h.b16 %v305
        %v2039 = vunpack.c.l.b16 %v306
        %v2040 = vunpack.c.h.b16 %v306
        %v2041 = vunpack.c.l.b16 %v307
        %v2042 = vunpack.c.h.b16 %v307
        %v2043 = vunpack.c.l.b16 %v308
        %v2044 = vunpack.c.h.b16 %v308
        %v2045 = vunpack.c.l.b16 %v309
        %v2046 = vunpack.c.h.b16 %v309
        %v2047 = vunpack.c.l.b16 %v310
        %v2048 = vunpack.c.h.b16 %v310
        %v2049 = vunpack.c.l.b16 %v311
        %v2050 = vunpack.c.h.b16 %v311
        %v2051 = vunpack.c.l.b16 %v312
        %v2052 = vunpack.c.h.b16 %v312
        %v2053 = vunpack.c.l.b16 %v313
        %v2054 = vunpack.c.h.b16 %v313
        %v2055 = vunpack.c.l.b16 %v314
        %v2056 = vunpack.c.h.b16 %v314
        %v2057 = vunpack.c.l.b16 %v315
        %v2058 = vunpack.c.h.b16 %v315
        %v2059 = vunpack.c.l.b16 %v316
        %v2060 = vunpack.c.h.b16 %v316
        %v2061 = vunpack.c.l.b16 %v317
        %v2062 = vunpack.c.h.b16 %v317
        %v2063 = vunpack.c.l.b16 %v318
        %v2064 = vunpack.c.h.b16 %v318
        %v2065 = vunpack.c.l.b16 %v319
        %v2066 = vunpack.c.h.b16 %v319
        %v2067 = vunpack.c.l.b16 %v320
        %v2068 = vunpack.c.h.b16 %v320
        %v2069 = vunpack.c.l.b16 %v321
        %v2070 = vunpack.c.h.b16 %v321
        %v2071 = vunpack.c.l.b16 %v322
        %v2072 = vunpack.c.h.b16 %v322
        %v2073 = vunpack.c.l.b16 %v323
        %v2074 = vunpack.c.h.b16 %v323
        %v2075 = vunpack.c.l.b16 %v324
        %v2076 = vunpack.c.h.b16 %v324
        %v2077 = vunpack.c.l.b16 %v325
        %v2078 = vunpack.c.h.b16 %v325
        %v2079 = vunpack.c.l.b16 %v326
        %v2080 = vunpack.c.h.b16 %v326
        %v2081 = vunpack.c.l.b16 %v327
        %v2082 = vunpack.c.h.b16 %v327
        %v2083 = vunpack.c.l.b16 %v328
        %v2084 = vunpack.c.h.b16 %v328
        %v2085 = vunpack.c.l.b16 %v329
        %v2086 = vunpack.c.h.b16 %v329
        %v2087 = vunpack.c.l.b16 %v330
        %v2088 = vunpack.c.h.b16 %v330
        %v2089 = vunpack.c.l.b16 %v331
        %v2090 = vunpack.c.h.b16 %v331
        %v2091 = vunpack.c.l.b16 %v332
        %v2092 = vunpack.c.h.b16 %v332
        %v2093 = vunpack.c.l.b16 %v333
        %v2094 = vunpack.c.h.b16 %v333
        %v2095 = vunpack.c.l.b16 %v334
        %v2096 = vunpack.c.h.b16 %v334
        %v2097 = vunpack.c.l.b16 %v335
        %v2098 = vunpack.c.h.b16 %v335
        %v2099 = vunpack.c.l.b16 %v336
        %v2100 = vunpack.c.h.b16 %v336
        %v2101 = vunpack.c.l.b16 %v337
        %v2102 = vunpack.c.h.b16 %v337
        %v2103 = vunpack.c.l.b16 %v338
        %v2104 = vunpack.c.h.b16 %v338
        %v2105 = vunpack.c.l.b16 %v339
        %v2106 = vunpack.c.h.b16 %v339
        %v2107 = vunpack.c.l.b16 %v340
        %v2108 = vunpack.c.h.b16 %v340
        %v2109 = vunpack.c.l.b16 %v341
        %v2110 = vunpack.c.h.b16 %v341
        %v2111 = vunpack.c.l.b16 %v342
        %v2112 = vunpack.c.h.b16 %v342
        %v2113 = vunpack.c.l.b16 %v343
        %v2114 = vunpack.c.h.b16 %v343
        %v2115 = vunpack.c.l.b16 %v344
        %v2116 = vunpack.c.h.b16 %v344
        %v2117 = vunpack.c.l.b16 %v345
        %v2118 = vunpack.c.h.b16 %v345
        %v2119 = vunpack.c.l.b16 %v346
        %v2120 = vunpack.c.h.b16 %v346
        %v2121 = vunpack.c.l.b16 %v347
        %v2122 = vunpack.c.h.b16 %v347
        %v2123 = vunpack.c.l.b16 %v348
        %v2124 = vunpack.c.h.b16 %v348
        %v2125 = vunpack.c.l.b16 %v349
        %v2126 = vunpack.c.h.b16 %v349
        %v2127 = vunpack.c.l.b16 %v350
        %v2128 = vunpack.c.h.b16 %v350
        %v2129 = vunpack.c.l.b16 %v351
        %v2130 = vunpack.c.h.b16 %v351
        %v2131 = vunpack.c.l.b16 %v352
        %v2132 = vunpack.c.h.b16 %v352
        %v2133 = vunpack.c.l.b16 %v353
        %v2134 = vunpack.c.h.b16 %v353
        %v2135 = vunpack.c.l.b16 %v354
        %v2136 = vunpack.c.h.b16 %v354
        %v2137 = vunpack.c.l.b16 %v355
        %v2138 = vunpack.c.h.b16 %v355
        %v2139 = vunpack.c.l.b16 %v356
        %v2140 = vunpack.c.h.b16 %v356
        %v2141 = vunpack.c.l.b16 %v357
        %v2142 = vunpack.c.h.b16 %v357
        %v2143 = vunpack.c.l.b16 %v358
        %v2144 = vunpack.c.h.b16 %v358
        %v2145 = vunpack.c.l.b16 %v359
        %v2146 = vunpack.c.h.b16 %v359
        %v2147 = vunpack.c.l.b16 %v360
        %v2148 = vunpack.c.h.b16 %v360
        %v2149 = vunpack.c.l.b16 %v361
        %v2150 = vunpack.c.h.b16 %v361
        %v2151 = vunpack.c.l.b16 %v362
        %v2152 = vunpack.c.h.b16 %v362
        %v2153 = vunpack.c.l.b16 %v363
        %v2154 = vunpack.c.h.b16 %v363
        %v2155 = vunpack.c.l.b16 %v364
        %v2156 = vunpack.c.h.b16 %v364
        %v2157 = vunpack.c.l.b16 %v365
        %v2158 = vunpack.c.h.b16 %v365
        %v2159 = vunpack.c.l.b16 %v366
        %v2160 = vunpack.c.h.b16 %v366
        %v2161 = vunpack.c.l.b16 %v367
        %v2162 = vunpack.c.h.b16 %v367
        %v2163 = vunpack.c.l.b16 %v368
        %v2164 = vunpack.c.h.b16 %v368
        %v2165 = vunpack.c.l.b16 %v369
        %v2166 = vunpack.c.h.b16 %v369
        %v2167 = vunpack.c.l.b16 %v370
        %v2168 = vunpack.c.h.b16 %v370
        %v2169 = vunpack.c.l.b16 %v371
        %v2170 = vunpack.c.h.b16 %v371
        %v2171 = vunpack.c.l.b16 %v372
        %v2172 = vunpack.c.h.b16 %v372
        %v2173 = vunpack.c.l.b16 %v373
        %v2174 = vunpack.c.h.b16 %v373
        %v2175 = vunpack.c.l.b16 %v374
        %v2176 = vunpack.c.h.b16 %v374
        %v2177 = vunpack.c.l.b16 %v375
        %v2178 = vunpack.c.h.b16 %v375
        %v2179 = vunpack.c.l.b16 %v376
        %v2180 = vunpack.c.h.b16 %v376
        %v2181 = vunpack.c.l.b16 %v377
        %v2182 = vunpack.c.h.b16 %v377
        %v2183 = vunpack.c.l.b16 %v378
        %v2184 = vunpack.c.h.b16 %v378
        %v2185 = vunpack.c.l.b16 %v379
        %v2186 = vunpack.c.h.b16 %v379
        %v2187 = vunpack.c.l.b16 %v380
        %v2188 = vunpack.c.h.b16 %v380
        %v2189 = vunpack.c.l.b16 %v381
        %v2190 = vunpack.c.h.b16 %v381
        %v2191 = vunpack.c.l.b16 %v382
        %v2192 = vunpack.c.h.b16 %v382
        %v2193 = vunpack.c.l.b16 %v383
        %v2194 = vunpack.c.h.b16 %v383
        %v2195 = vunpack.c.l.b16 %v384
        %v2196 = vunpack.c.h.b16 %v384
        %v2197 = vunpack.c.l.b16 %v385
        %v2198 = vunpack.c.h.b16 %v385
        %v2199 = vunpack.c.l.b16 %v386
        %v2200 = vunpack.c.h.b16 %v386
        %v2201 = vunpack.c.l.b16 %v387
        %v2202 = vunpack.c.h.b16 %v387
        %v2203 = vunpack.c.l.b16 %v388
        %v2204 = vunpack.c.h.b16 %v388
        %v2205 = vunpack.c.l.b16 %v389
        %v2206 = vunpack.c.h.b16 %v389
        %v2207 = vunpack.c.l.b16 %v390
        %v2208 = vunpack.c.h.b16 %v390
        %v2209 = vunpack.c.l.b16 %v391
        %v2210 = vunpack.c.h.b16 %v391
        %v2211 = vunpack.c.l.b16 %v392
        %v2212 = vunpack.c.h.b16 %v392
        %v2213 = vunpack.c.l.b16 %v393
        %v2214 = vunpack.c.h.b16 %v393
        %v2215 = vunpack.c.l.b16 %v394
        %v2216 = vunpack.c.h.b16 %v394
        %v2217 = vunpack.c.l.b16 %v395
        %v2218 = vunpack.c.h.b16 %v395
        %v2219 = vunpack.c.l.b16 %v396
        %v2220 = vunpack.c.h.b16 %v396
        %v2221 = vunpack.c.l.b16 %v397
        %v2222 = vunpack.c.h.b16 %v397
        %v2223 = vunpack.c.l.b16 %v398
        %v2224 = vunpack.c.h.b16 %v398
        %v2225 = vunpack.c.l.b16 %v399
        %v2226 = vunpack.c.h.b16 %v399
        %v2227 = vunpack.c.l.b16 %v400
        %v2228 = vunpack.c.h.b16 %v400
        %v2229 = vunpack.c.l.b16 %v401
        %v2230 = vunpack.c.h.b16 %v401
        %v2231 = vunpack.c.l.b16 %v402
        %v2232 = vunpack.c.h.b16 %v402
        %v2233 = vunpack.c.l.b16 %v403
        %v2234 = vunpack.c.h.b16 %v403
        %v2235 = vunpack.c.l.b16 %v404
        %v2236 = vunpack.c.h.b16 %v404
        %v2237 = vunpack.c.l.b16 %v405
        %v2238 = vunpack.c.h.b16 %v405
        %v2239 = vunpack.c.l.b16 %v406
        %v2240 = vunpack.c.h.b16 %v406
        %v2241 = vunpack.c.l.b16 %v407
        %v2242 = vunpack.c.h.b16 %v407
        %v2243 = vunpack.c.l.b16 %v408
        %v2244 = vunpack.c.h.b16 %v408
        %v2245 = vunpack.c.l.b16 %v409
        %v2246 = vunpack.c.h.b16 %v409
        %v2247 = vunpack.c.l.b16 %v410
        %v2248 = vunpack.c.h.b16 %v410
        %v2249 = vunpack.c.l.b16 %v411
        %v2250 = vunpack.c.h.b16 %v411
        %v2251 = vunpack.c.l.b16 %v412
        %v2252 = vunpack.c.h.b16 %v412
        %v2253 = vunpack.c.l.b16 %v413
        %v2254 = vunpack.c.h.b16 %v413
        %v2255 = vunpack.c.l.b16 %v414
        %v2256 = vunpack.c.h.b16 %v414
        %v2257 = vunpack.c.l.b16 %v415
        %v2258 = vunpack.c.h.b16 %v415
        %v2259 = vunpack.c.l.b16 %v416
        %v2260 = vunpack.c.h.b16 %v416
        %v2261 = vunpack.c.l.b16 %v417
        %v2262 = vunpack.c.h.b16 %v417
        %v2263 = vunpack.c.l.b16 %v418
        %v2264 = vunpack.c.h.b16 %v418
        %v2265 = vunpack.c.l.b16 %v419
        %v2266 = vunpack.c.h.b16 %v419
        %v2267 = vunpack.c.l.b16 %v420
        %v2268 = vunpack.c.h.b16 %v420
        %v2269 = vunpack.c.l.b16 %v421
        %v2270 = vunpack.c.h.b16 %v421
        %v2271 = vunpack.c.l.b16 %v422
        %v2272 = vunpack.c.h.b16 %v422
        %v2273 = vunpack.c.l.b16 %v423
        %v2274 = vunpack.c.h.b16 %v423
        %v2275 = vunpack.c.l.b16 %v424
        %v2276 = vunpack.c.h.b16 %v424
        %v2277 = vunpack.c.l.b16 %v425
        %v2278 = vunpack.c.h.b16 %v425
        %v2279 = vunpack.c.l.b16 %v426
        %v2280 = vunpack.c.h.b16 %v426
        %v2281 = vunpack.c.l.b16 %v427
        %v2282 = vunpack.c.h.b16 %v427
        %v2283 = vunpack.c.l.b16 %v428
        %v2284 = vunpack.c.h.b16 %v428
        %v2285 = vunpack.c.l.b16 %v429
        %v2286 = vunpack.c.h.b16 %v429
        %v2287 = vunpack.c.l.b16 %v430
        %v2288 = vunpack.c.h.b16 %v430
        %v2289 = vunpack.c.l.b16 %v431
        %v2290 = vunpack.c.h.b16 %v431
        %v2291 = vunpack.c.l.b16 %v432
        %v2292 = vunpack.c.h.b16 %v432
        %v2293 = vunpack.c.l.b16 %v433
        %v2294 = vunpack.c.h.b16 %v433
        %v2295 = vunpack.c.l.b16 %v434
        %v2296 = vunpack.c.h.b16 %v434
        %v2297 = vunpack.c.l.b16 %v435
        %v2298 = vunpack.c.h.b16 %v435
        %v2299 = vunpack.c.l.b16 %v436
        %v2300 = vunpack.c.h.b16 %v436
        %v2301 = vunpack.c.l.b16 %v437
        %v2302 = vunpack.c.h.b16 %v437
        %v2303 = vunpack.c.l.b16 %v438
        %v2304 = vunpack.c.h.b16 %v438
        %v2305 = vunpack.c.l.b16 %v439
        %v2306 = vunpack.c.h.b16 %v439
        %v2307 = vunpack.c.l.b16 %v440
        %v2308 = vunpack.c.h.b16 %v440
        %v2309 = vunpack.c.l.b16 %v441
        %v2310 = vunpack.c.h.b16 %v441
        %v2311 = vunpack.c.l.b16 %v442
        %v2312 = vunpack.c.h.b16 %v442
        %v2313 = vunpack.c.l.b16 %v443
        %v2314 = vunpack.c.h.b16 %v443
        %v2315 = vunpack.c.l.b16 %v444
        %v2316 = vunpack.c.h.b16 %v444
        %v2317 = vunpack.c.l.b16 %v445
        %v2318 = vunpack.c.h.b16 %v445
        %v2319 = vunpack.c.l.b16 %v446
        %v2320 = vunpack.c.h.b16 %v446
        %v2321 = vunpack.c.l.b16 %v447
        %v2322 = vunpack.c.h.b16 %v447
        %v2323 = vunpack.c.l.b16 %v448
        %v2324 = vunpack.c.h.b16 %v448
        %v2325 = vunpack.c.l.b16 %v449
        %v2326 = vunpack.c.h.b16 %v449
        %v2327 = vunpack.c.l.b16 %v450
        %v2328 = vunpack.c.h.b16 %v450
        %v2329 = vunpack.c.l.b16 %v451
        %v2330 = vunpack.c.h.b16 %v451
        %v2331 = vunpack.c.l.b16 %v452
        %v2332 = vunpack.c.h.b16 %v452
        %v2333 = vunpack.c.l.b16 %v453
        %v2334 = vunpack.c.h.b16 %v453
        %v2335 = vunpack.c.l.b16 %v454
        %v2336 = vunpack.c.h.b16 %v454
        %v2337 = vunpack.c.l.b16 %v455
        %v2338 = vunpack.c.h.b16 %v455
        %v2339 = vunpack.c.l.b16 %v456
        %v2340 = vunpack.c.h.b16 %v456
        %v2341 = vunpack.c.l.b16 %v457
        %v2342 = vunpack.c.h.b16 %v457
        %v2343 = vunpack.c.l.b16 %v458
        %v2344 = vunpack.c.h.b16 %v458
        %v2345 = vunpack.c.l.b16 %v459
        %v2346 = vunpack.c.h.b16 %v459
        %v2347 = vunpack.c.l.b16 %v460
        %v2348 = vunpack.c.h.b16 %v460
        %v2349 = vunpack.c.l.b16 %v461
        %v2350 = vunpack.c.h.b16 %v461
        %v2351 = vunpack.c.l.b16 %v462
        %v2352 = vunpack.c.h.b16 %v462
        %v2353 = vunpack.c.l.b16 %v463
        %v2354 = vunpack.c.h.b16 %v463
        %v2355 = vunpack.c.l.b16 %v464
        %v2356 = vunpack.c.h.b16 %v464
        %v2357 = vunpack.c.l.b16 %v465
        %v2358 = vunpack.c.h.b16 %v465
        %v2359 = vunpack.c.l.b16 %v466
        %v2360 = vunpack.c.h.b16 %v466
        %v2361 = vunpack.c.l.b16 %v467
        %v2362 = vunpack.c.h.b16 %v467
        %v2363 = vunpack.c.l.b16 %v468
        %v2364 = vunpack.c.h.b16 %v468
        %v2365 = vunpack.c.l.b16 %v469
        %v2366 = vunpack.c.h.b16 %v469
        %v2367 = vunpack.c.l.b16 %v470
        %v2368 = vunpack.c.h.b16 %v470
        %v2369 = vunpack.c.l.b16 %v471
        %v2370 = vunpack.c.h.b16 %v471
        %v2371 = vunpack.c.l.b16 %v472
        %v2372 = vunpack.c.h.b16 %v472
        %v2373 = vunpack.c.l.b16 %v473
        %v2374 = vunpack.c.h.b16 %v473
        %v2375 = vunpack.c.l.b16 %v474
        %v2376 = vunpack.c.h.b16 %v474
        %v2377 = vunpack.c.l.b16 %v475
        %v2378 = vunpack.c.h.b16 %v475
        %v2379 = vunpack.c.l.b16 %v476
        %v2380 = vunpack.c.h.b16 %v476
        %v2381 = vunpack.c.l.b16 %v477
        %v2382 = vunpack.c.h.b16 %v477
        %v2383 = vunpack.c.l.b16 %v478
        %v2384 = vunpack.c.h.b16 %v478
        %v2385 = vunpack.c.l.b16 %v479
        %v2386 = vunpack.c.h.b16 %v479
        %v2387 = vunpack.c.l.b16 %v480
        %v2388 = vunpack.c.h.b16 %v480
        %v2389 = vunpack.c.l.b16 %v481
        %v2390 = vunpack.c.h.b16 %v481
        %v2391 = vunpack.c.l.b16 %v482
        %v2392 = vunpack.c.h.b16 %v482
        %v2393 = vunpack.c.l.b16 %v483
        %v2394 = vunpack.c.h.b16 %v483
        %v2395 = vunpack.c.l.b16 %v484
        %v2396 = vunpack.c.h.b16 %v484
        %v2397 = vunpack.c.l.b16 %v485
        %v2398 = vunpack.c.h.b16 %v485
        %v2399 = vunpack.c.l.b16 %v486
        %v2400 = vunpack.c.h.b16 %v486
        %v2401 = vunpack.c.l.b16 %v487
        %v2402 = vunpack.c.h.b16 %v487
        %v2403 = vunpack.c.l.b16 %v488
        %v2404 = vunpack.c.h.b16 %v488
        %v2405 = vunpack.c.l.b16 %v489
        %v2406 = vunpack.c.h.b16 %v489
        %v2407 = vunpack.c.l.b16 %v490
        %v2408 = vunpack.c.h.b16 %v490
        %v2409 = vunpack.c.l.b16 %v491
        %v2410 = vunpack.c.h.b16 %v491
        %v2411 = vunpack.c.l.b16 %v492
        %v2412 = vunpack.c.h.b16 %v492
        %v2413 = vunpack.c.l.b16 %v493
        %v2414 = vunpack.c.h.b16 %v493
        %v2415 = vunpack.c.l.b16 %v494
        %v2416 = vunpack.c.h.b16 %v494
        %v2417 = vunpack.c.l.b16 %v495
        %v2418 = vunpack.c.h.b16 %v495
        %v2419 = vunpack.c.l.b16 %v496
        %v2420 = vunpack.c.h.b16 %v496
        %v2421 = vunpack.c.l.b16 %v497
        %v2422 = vunpack.c.h.b16 %v497
        %v2423 = vunpack.c.l.b16 %v498
        %v2424 = vunpack.c.h.b16 %v498
        %v2425 = vunpack.c.l.b16 %v499
        %v2426 = vunpack.c.h.b16 %v499
        %v2427 = vunpack.c.l.b16 %v500
        %v2428 = vunpack.c.h.b16 %v500
        %v2429 = vunpack.c.l.b16 %v501
        %v2430 = vunpack.c.h.b16 %v501
        %v2431 = vunpack.c.l.b16 %v502
        %v2432 = vunpack.c.h.b16 %v502
        %v2433 = vunpack.c.l.b16 %v503
        %v2434 = vunpack.c.h.b16 %v503
        %v2435 = vunpack.c.l.b16 %v504
        %v2436 = vunpack.c.h.b16 %v504
        %v2437 = vunpack.c.l.b16 %v505
        %v2438 = vunpack.c.h.b16 %v505
        %v2439 = vunpack.c.l.b16 %v506
        %v2440 = vunpack.c.h.b16 %v506
        %v2441 = vunpack.c.l.b16 %v507
        %v2442 = vunpack.c.h.b16 %v507
        %v2443 = vunpack.c.l.b16 %v508
        %v2444 = vunpack.c.h.b16 %v508
        %v2445 = vunpack.c.l.b16 %v509
        %v2446 = vunpack.c.h.b16 %v509
        %v2447 = vunpack.c.l.b16 %v510
        %v2448 = vunpack.c.h.b16 %v510
        %v2449 = vunpack.c.l.b16 %v511
        %v2450 = vunpack.c.h.b16 %v511
        %v2451 = vunpack.c.l.b16 %v512
        %v2452 = vunpack.c.h.b16 %v512
        %v2453 = vunpack.c.l.b16 %v513
        %v2454 = vunpack.c.h.b16 %v513
        %v2455 = vunpack.c.l.b16 %v514
        %v2456 = vunpack.c.h.b16 %v514
        %v2457 = vunpack.c.l.b16 %v515
        %v2458 = vunpack.c.h.b16 %v515
        %v2459 = vunpack.c.l.b16 %v516
        %v2460 = vunpack.c.h.b16 %v516
        %v2461 = vunpack.c.l.b16 %v517
        %v2462 = vunpack.c.h.b16 %v517
        %v2463 = vunpack.c.l.b16 %v518
        %v2464 = vunpack.c.h.b16 %v518
        %v2465 = vunpack.c.l.b16 %v519
        %v2466 = vunpack.c.h.b16 %v519
        %v2467 = vunpack.c.l.b16 %v520
        %v2468 = vunpack.c.h.b16 %v520
        %v2469 = vunpack.c.l.b16 %v521
        %v2470 = vunpack.c.h.b16 %v521
        %v2471 = vunpack.c.l.b16 %v522
        %v2472 = vunpack.c.h.b16 %v522
        %v2473 = vunpack.c.l.b16 %v523
        %v2474 = vunpack.c.h.b16 %v523
        %v2475 = vunpack.c.l.b16 %v524
        %v2476 = vunpack.c.h.b16 %v524
        %v2477 = vunpack.c.l.b16 %v525
        %v2478 = vunpack.c.h.b16 %v525
        %v2479 = vunpack.c.l.b16 %v526
        %v2480 = vunpack.c.h.b16 %v526
        %v2481 = vunpack.c.l.b16 %v527
        %v2482 = vunpack.c.h.b16 %v527
        %v2483 = vunpack.c.l.b16 %v528
        %v2484 = vunpack.c.h.b16 %v528
        %v2485 = vunpack.c.l.b16 %v529
        %v2486 = vunpack.c.h.b16 %v529
        %v2487 = vunpack.c.l.b16 %v530
        %v2488 = vunpack.c.h.b16 %v530
        %v2489 = vunpack.c.l.b16 %v531
        %v2490 = vunpack.c.h.b16 %v531
        %v2491 = vunpack.c.l.b16 %v532
        %v2492 = vunpack.c.h.b16 %v532
        %v2493 = vunpack.c.l.b16 %v533
        %v2494 = vunpack.c.h.b16 %v533
        %v2495 = vunpack.c.l.b16 %v534
        %v2496 = vunpack.c.h.b16 %v534
        %v2497 = vunpack.c.l.b16 %v535
        %v2498 = vunpack.c.h.b16 %v535
        %v2499 = vunpack.c.l.b16 %v536
        %v2500 = vunpack.c.h.b16 %v536
        %v2501 = vunpack.c.l.b16 %v537
        %v2502 = vunpack.c.h.b16 %v537
        %v2503 = vunpack.c.l.b16 %v538
        %v2504 = vunpack.c.h.b16 %v538
        %v2505 = vunpack.c.l.b16 %v539
        %v2506 = vunpack.c.h.b16 %v539
        %v2507 = vunpack.c.l.b16 %v540
        %v2508 = vunpack.c.h.b16 %v540
        %v2509 = vunpack.c.l.b16 %v541
        %v2510 = vunpack.c.h.b16 %v541
        %v2511 = vunpack.c.l.b16 %v542
        %v2512 = vunpack.c.h.b16 %v542
        %v2513 = vunpack.c.l.b16 %v543
        %v2514 = vunpack.c.h.b16 %v543
        %v2515 = vunpack.c.l.b16 %v544
        %v2516 = vunpack.c.h.b16 %v544
        %v2517 = vunpack.c.l.b16 %v545
        %v2518 = vunpack.c.h.b16 %v545
        %v2519 = vunpack.c.l.b16 %v546
        %v2520 = vunpack.c.h.b16 %v546
        %v2521 = vunpack.c.l.b16 %v547
        %v2522 = vunpack.c.h.b16 %v547
        %v2523 = vunpack.c.l.b16 %v548
        %v2524 = vunpack.c.h.b16 %v548
        %v2525 = vunpack.c.l.b16 %v549
        %v2526 = vunpack.c.h.b16 %v549
        %v2527 = vunpack.c.l.b16 %v550
        %v2528 = vunpack.c.h.b16 %v550
        %v2529 = vunpack.c.l.b16 %v551
        %v2530 = vunpack.c.h.b16 %v551
        %v2531 = vunpack.c.l.b16 %v552
        %v2532 = vunpack.c.h.b16 %v552
        %v2533 = vunpack.c.l.b16 %v553
        %v2534 = vunpack.c.h.b16 %v553
        %v2535 = vunpack.c.l.b16 %v554
        %v2536 = vunpack.c.h.b16 %v554
        %v2537 = vunpack.c.l.b16 %v555
        %v2538 = vunpack.c.h.b16 %v555
        %v2539 = vunpack.c.l.b16 %v556
        %v2540 = vunpack.c.h.b16 %v556
        %v2541 = vunpack.c.l.b16 %v557
        %v2542 = vunpack.c.h.b16 %v557
        %v2543 = vunpack.c.l.b16 %v558
        %v2544 = vunpack.c.h.b16 %v558
        %v2545 = vunpack.c.l.b16 %v559
        %v2546 = vunpack.c.h.b16 %v559
        %v2547 = vunpack.c.l.b16 %v560
        %v2548 = vunpack.c.h.b16 %v560
        %v2549 = vunpack.c.l.b16 %v561
        %v2550 = vunpack.c.h.b16 %v561
        %v2551 = vunpack.c.l.b16 %v562
        %v2552 = vunpack.c.h.b16 %v562
        %v2553 = vunpack.c.l.b16 %v563
        %v2554 = vunpack.c.h.b16 %v563
        %v2555 = vunpack.c.l.b16 %v564
        %v2556 = vunpack.c.h.b16 %v564
        %v2557 = vunpack.c.l.b16 %v565
        %v2558 = vunpack.c.h.b16 %v565
        %v2559 = vunpack.c.l.b16 %v566
        %v2560 = vunpack.c.h.b16 %v566
        %v2561 = vunpack.c.l.b16 %v567
        %v2562 = vunpack.c.h.b16 %v567
        %v2563 = vunpack.c.l.b16 %v568
        %v2564 = vunpack.c.h.b16 %v568
        %v2565 = vunpack.c.l.b16 %v569
        %v2566 = vunpack.c.h.b16 %v569
        %v2567 = vunpack.c.l.b16 %v570
        %v2568 = vunpack.c.h.b16 %v570
        %v2569 = vunpack.c.l.b16 %v571
        %v2570 = vunpack.c.h.b16 %v571
        %v2571 = vunpack.c.l.b16 %v572
        %v2572 = vunpack.c.h.b16 %v572
        %v2573 = vunpack.c.l.b16 %v573
        %v2574 = vunpack.c.h.b16 %v573
        %v2575 = vunpack.c.l.b16 %v574
        %v2576 = vunpack.c.h.b16 %v574
        %v2577 = vunpack.c.l.b16 %v575
        %v2578 = vunpack.c.h.b16 %v575
        %v2579 = vunpack.c.l.b16 %v576
        %v2580 = vunpack.c.h.b16 %v576
        %v2581 = vunpack.c.l.b16 %v577
        %v2582 = vunpack.c.h.b16 %v577
        %v2583 = vunpack.c.l.b16 %v578
        %v2584 = vunpack.c.h.b16 %v578
        %v2585 = vunpack.c.l.b16 %v579
        %v2586 = vunpack.c.h.b16 %v579
        %v2587 = vunpack.c.l.b16 %v580
        %v2588 = vunpack.c.h.b16 %v580
        %v2589 = vunpack.c.l.b16 %v581
        %v2590 = vunpack.c.h.b16 %v581
        %v2591 = vunpack.c.l.b16 %v582
        %v2592 = vunpack.c.h.b16 %v582
        %v2593 = vunpack.c.l.b16 %v583
        %v2594 = vunpack.c.h.b16 %v583
        %v2595 = vunpack.c.l.b16 %v584
        %v2596 = vunpack.c.h.b16 %v584
        %v2597 = vunpack.c.l.b16 %v585
        %v2598 = vunpack.c.h.b16 %v585
        %v2599 = vunpack.c.l.b16 %v586
        %v2600 = vunpack.c.h.b16 %v586
        %v2601 = vunpack.c.l.b16 %v587
        %v2602 = vunpack.c.h.b16 %v587
        %v2603 = vunpack.c.l.b16 %v588
        %v2604 = vunpack.c.h.b16 %v588
        %v2605 = vunpack.c.l.b16 %v589
        %v2606 = vunpack.c.h.b16 %v589
        %v2607 = vunpack.c.l.b16 %v590
        %v2608 = vunpack.c.h.b16 %v590
        %v2609 = vunpack.c.l.b16 %v591
        %v2610 = vunpack.c.h.b16 %v591
        %v2611 = vunpack.c.l.b16 %v592
        %v2612 = vunpack.c.h.b16 %v592
        %v2613 = vunpack.c.l.b16 %v593
        %v2614 = vunpack.c.h.b16 %v593
        %v2615 = vunpack.c.l.b16 %v594
        %v2616 = vunpack.c.h.b16 %v594
        %v2617 = vunpack.c.l.b16 %v595
        %v2618 = vunpack.c.h.b16 %v595
        %v2619 = vunpack.c.l.b16 %v596
        %v2620 = vunpack.c.h.b16 %v596
        %v2621 = vunpack.c.l.b16 %v597
        %v2622 = vunpack.c.h.b16 %v597
        %v2623 = vunpack.c.l.b16 %v598
        %v2624 = vunpack.c.h.b16 %v598
        %v2625 = vunpack.c.l.b16 %v599
        %v2626 = vunpack.c.h.b16 %v599
        %v2627 = vunpack.c.l.b16 %v600
        %v2628 = vunpack.c.h.b16 %v600
        %v2629 = vunpack.c.l.b16 %v601
        %v2630 = vunpack.c.h.b16 %v601
        %v2631 = vunpack.c.l.b16 %v602
        %v2632 = vunpack.c.h.b16 %v602
        %v2633 = vunpack.c.l.b16 %v603
        %v2634 = vunpack.c.h.b16 %v603
        %v2635 = vunpack.c.l.b16 %v604
        %v2636 = vunpack.c.h.b16 %v604
        %v2637 = vunpack.c.l.b16 %v605
        %v2638 = vunpack.c.h.b16 %v605
        %v2639 = vunpack.c.l.b16 %v606
        %v2640 = vunpack.c.h.b16 %v606
        %v2641 = vunpack.c.l.b16 %v607
        %v2642 = vunpack.c.h.b16 %v607
        %v2643 = vunpack.c.l.b16 %v608
        %v2644 = vunpack.c.h.b16 %v608
        %v2645 = vunpack.c.l.b16 %v609
        %v2646 = vunpack.c.h.b16 %v609
        %v2647 = vunpack.c.l.b16 %v610
        %v2648 = vunpack.c.h.b16 %v610
        %v2649 = vunpack.c.l.b16 %v611
        %v2650 = vunpack.c.h.b16 %v611
        %v2651 = vunpack.c.l.b16 %v612
        %v2652 = vunpack.c.h.b16 %v612
        %v2653 = vunpack.c.l.b16 %v613
        %v2654 = vunpack.c.h.b16 %v613
        %v2655 = vunpack.c.l.b16 %v614
        %v2656 = vunpack.c.h.b16 %v614
        %v2657 = vunpack.c.l.b16 %v615
        %v2658 = vunpack.c.h.b16 %v615
        %v2659 = vunpack.c.l.b16 %v616
        %v2660 = vunpack.c.h.b16 %v616
        %v2661 = vunpack.c.l.b16 %v617
        %v2662 = vunpack.c.h.b16 %v617
        %v2663 = vunpack.c.l.b16 %v618
        %v2664 = vunpack.c.h.b16 %v618
        %v2665 = vunpack.c.l.b16 %v619
        %v2666 = vunpack.c.h.b16 %v619
        %v2667 = vunpack.c.l.b16 %v620
        %v2668 = vunpack.c.h.b16 %v620
        %v2669 = vunpack.c.l.b16 %v621
        %v2670 = vunpack.c.h.b16 %v621
        %v2671 = vunpack.c.l.b16 %v622
        %v2672 = vunpack.c.h.b16 %v622
        %v2673 = vunpack.c.l.b16 %v623
        %v2674 = vunpack.c.h.b16 %v623
        %v2675 = vunpack.c.l.b16 %v624
        %v2676 = vunpack.c.h.b16 %v624
        %v2677 = vunpack.c.l.b16 %v625
        %v2678 = vunpack.c.h.b16 %v625
        %v2679 = vunpack.c.l.b16 %v626
        %v2680 = vunpack.c.h.b16 %v626
        %v2681 = vunpack.c.l.b16 %v627
        %v2682 = vunpack.c.h.b16 %v627
        %v2683 = vunpack.c.l.b16 %v628
        %v2684 = vunpack.c.h.b16 %v628
        %v2685 = vunpack.c.l.b16 %v629
        %v2686 = vunpack.c.h.b16 %v629
        %v2687 = vunpack.c.l.b16 %v630
        %v2688 = vunpack.c.h.b16 %v630
        %v2689 = vunpack.c.l.b16 %v631
        %v2690 = vunpack.c.h.b16 %v631
        %v2691 = vunpack.c.l.b16 %v632
        %v2692 = vunpack.c.h.b16 %v632
        %v2693 = vunpack.c.l.b16 %v633
        %v2694 = vunpack.c.h.b16 %v633
        %v2695 = vunpack.c.l.b16 %v634
        %v2696 = vunpack.c.h.b16 %v634
        %v2697 = vunpack.c.l.b16 %v635
        %v2698 = vunpack.c.h.b16 %v635
        %v2699 = vunpack.c.l.b16 %v636
        %v2700 = vunpack.c.h.b16 %v636
        %v2701 = vunpack.c.l.b16 %v637
        %v2702 = vunpack.c.h.b16 %v637
        %v2703 = vunpack.c.l.b16 %v638
        %v2704 = vunpack.c.h.b16 %v638
        %v2705 = vunpack.c.l.b16 %v639
        %v2706 = vunpack.c.h.b16 %v639
        %v2707 = vunpack.c.l.b16 %v640
        %v2708 = vunpack.c.h.b16 %v640
        %v2709 = vunpack.c.l.b16 %v641
        %v2710 = vunpack.c.h.b16 %v641
        %v2711 = vunpack.c.l.b16 %v642
        %v2712 = vunpack.c.h.b16 %v642
        %v2713 = vunpack.c.l.b16 %v643
        %v2714 = vunpack.c.h.b16 %v643
        %v2715 = vunpack.c.l.b16 %v644
        %v2716 = vunpack.c.h.b16 %v644
        %v2717 = vunpack.c.l.b16 %v645
        %v2718 = vunpack.c.h.b16 %v645
        %v2719 = vunpack.c.l.b16 %v646
        %v2720 = vunpack.c.h.b16 %v646
        %v2721 = vunpack.c.l.b16 %v647
        %v2722 = vunpack.c.h.b16 %v647
        %v2723 = vunpack.c.l.b16 %v648
        %v2724 = vunpack.c.h.b16 %v648
        %v2725 = vunpack.c.l.b16 %v649
        %v2726 = vunpack.c.h.b16 %v649
        %v2727 = vunpack.c.l.b16 %v650
        %v2728 = vunpack.c.h.b16 %v650
        %v2729 = vunpack.c.l.b16 %v651
        %v2730 = vunpack.c.h.b16 %v651
        %v2731 = vunpack.c.l.b16 %v652
        %v2732 = vunpack.c.h.b16 %v652
        %v2733 = vunpack.c.l.b16 %v653
        %v2734 = vunpack.c.h.b16 %v653
        %v2735 = vunpack.c.l.b16 %v654
        %v2736 = vunpack.c.h.b16 %v654
        %v2737 = vunpack.c.l.b16 %v655
        %v2738 = vunpack.c.h.b16 %v655
        %v2739 = vunpack.c.l.b16 %v656
        %v2740 = vunpack.c.h.b16 %v656
        %v2741 = vunpack.c.l.b16 %v657
        %v2742 = vunpack.c.h.b16 %v657
        %v2743 = vunpack.c.l.b16 %v658
        %v2744 = vunpack.c.h.b16 %v658
        %v2745 = vunpack.c.l.b16 %v659
        %v2746 = vunpack.c.h.b16 %v659
        %v2747 = vunpack.c.l.b16 %v660
        %v2748 = vunpack.c.h.b16 %v660
        %v2749 = vunpack.c.l.b16 %v661
        %v2750 = vunpack.c.h.b16 %v661
        %v2751 = vunpack.c.l.b16 %v662
        %v2752 = vunpack.c.h.b16 %v662
        %v2753 = vunpack.c.l.b16 %v663
        %v2754 = vunpack.c.h.b16 %v663
        %v2755 = vunpack.c.l.b16 %v664
        %v2756 = vunpack.c.h.b16 %v664
        %v2757 = vunpack.c.l.b16 %v665
        %v2758 = vunpack.c.h.b16 %v665
        %v2759 = vunpack.c.l.b16 %v666
        %v2760 = vunpack.c.h.b16 %v666
        %v2761 = vunpack.c.l.b16 %v667
        %v2762 = vunpack.c.h.b16 %v667
        %v2763 = vunpack.c.l.b16 %v668
        %v2764 = vunpack.c.h.b16 %v668
        %v2765 = vunpack.c.l.b16 %v669
        %v2766 = vunpack.c.h.b16 %v669
        %v2767 = vunpack.c.l.b16 %v670
        %v2768 = vunpack.c.h.b16 %v670
        %v2769 = vunpack.c.l.b16 %v671
        %v2770 = vunpack.c.h.b16 %v671
        %v2771 = vunpack.c.l.b16 %v672
        %v2772 = vunpack.c.h.b16 %v672
        %v2773 = vunpack.c.l.b16 %v673
        %v2774 = vunpack.c.h.b16 %v673
        %v2775 = vunpack.c.l.b16 %v674
        %v2776 = vunpack.c.h.b16 %v674
        %v2777 = vunpack.c.l.b16 %v675
        %v2778 = vunpack.c.h.b16 %v675
        %v2779 = vunpack.c.l.b16 %v676
        %v2780 = vunpack.c.h.b16 %v676
        %v2781 = vunpack.c.l.b16 %v677
        %v2782 = vunpack.c.h.b16 %v677
        %v2783 = vunpack.c.l.b16 %v678
        %v2784 = vunpack.c.h.b16 %v678
        %v2785 = vunpack.c.l.b16 %v679
        %v2786 = vunpack.c.h.b16 %v679
        %v2787 = vunpack.c.l.b16 %v680
        %v2788 = vunpack.c.h.b16 %v680
        %v2789 = vunpack.c.l.b16 %v681
        %v2790 = vunpack.c.h.b16 %v681
        %v2791 = vunpack.c.l.b16 %v682
        %v2792 = vunpack.c.h.b16 %v682
        %v2793 = vunpack.c.l.b16 %v683
        %v2794 = vunpack.c.h.b16 %v683
        %v2795 = vunpack.c.l.b16 %v684
        %v2796 = vunpack.c.h.b16 %v684
        %v2797 = vunpack.c.l.b16 %v685
        %v2798 = vunpack.c.h.b16 %v685
        %v2799 = vunpack.c.l.b16 %v686
        %v2800 = vunpack.c.h.b16 %v686
        %v2801 = vunpack.c.l.b16 %v687
        %v2802 = vunpack.c.h.b16 %v687
        %v2803 = vunpack.c.l.b16 %v688
        %v2804 = vunpack.c.h.b16 %v688
        %v2805 = vunpack.c.l.b16 %v689
        %v2806 = vunpack.c.h.b16 %v689
        %v2807 = vunpack.c.l.b16 %v690
        %v2808 = vunpack.c.h.b16 %v690
        %v2809 = vunpack.c.l.b16 %v691
        %v2810 = vunpack.c.h.b16 %v691
        %v2811 = vunpack.c.l.b16 %v692
        %v2812 = vunpack.c.h.b16 %v692
        %v2813 = vunpack.c.l.b16 %v693
        %v2814 = vunpack.c.h.b16 %v693
        %v2815 = vunpack.c.l.b16 %v694
        %v2816 = vunpack.c.h.b16 %v694
        %v2817 = vunpack.c.l.b16 %v695
        %v2818 = vunpack.c.h.b16 %v695
        %v2819 = vunpack.c.l.b16 %v696
        %v2820 = vunpack.c.h.b16 %v696
        %v2821 = vunpack.c.l.b16 %v697
        %v2822 = vunpack.c.h.b16 %v697
        %v2823 = vunpack.c.l.b16 %v698
        %v2824 = vunpack.c.h.b16 %v698
        %v2825 = vunpack.c.l.b16 %v699
        %v2826 = vunpack.c.h.b16 %v699
        %v2827 = vunpack.c.l.b16 %v700
        %v2828 = vunpack.c.h.b16 %v700
        %v2829 = vunpack.c.l.b16 %v701
        %v2830 = vunpack.c.h.b16 %v701
        %v2831 = vunpack.c.l.b16 %v702
        %v2832 = vunpack.c.h.b16 %v702
        %v2833 = vunpack.c.l.b16 %v703
        %v2834 = vunpack.c.h.b16 %v703
        %v2835 = vunpack.c.l.b16 %v704
        %v2836 = vunpack.c.h.b16 %v704
        %v2837 = vunpack.c.l.b16 %v705
        %v2838 = vunpack.c.h.b16 %v705
        %v2839 = vunpack.c.l.b16 %v706
        %v2840 = vunpack.c.h.b16 %v706
        %v2841 = vunpack.c.l.b16 %v707
        %v2842 = vunpack.c.h.b16 %v707
        %v2843 = vunpack.c.l.b16 %v708
        %v2844 = vunpack.c.h.b16 %v708
        %v2845 = vunpack.c.l.b16 %v709
        %v2846 = vunpack.c.h.b16 %v709
        %v2847 = vunpack.c.l.b16 %v710
        %v2848 = vunpack.c.h.b16 %v710
        %v2849 = vunpack.c.l.b16 %v711
        %v2850 = vunpack.c.h.b16 %v711
        %v2851 = vunpack.c.l.b16 %v712
        %v2852 = vunpack.c.h.b16 %v712
        %v2853 = vunpack.c.l.b16 %v713
        %v2854 = vunpack.c.h.b16 %v713
        %v2855 = vunpack.c.l.b16 %v714
        %v2856 = vunpack.c.h.b16 %v714
        %v2857 = vunpack.c.l.b16 %v715
        %v2858 = vunpack.c.h.b16 %v715
        %v2859 = vunpack.c.l.b16 %v716
        %v2860 = vunpack.c.h.b16 %v716
        %v2861 = vunpack.c.l.b16 %v717
        %v2862 = vunpack.c.h.b16 %v717
        %v2863 = vunpack.c.l.b16 %v718
        %v2864 = vunpack.c.h.b16 %v718
        %v2865 = vunpack.c.l.b16 %v719
        %v2866 = vunpack.c.h.b16 %v719
        %v2867 = vunpack.c.l.b16 %v720
        %v2868 = vunpack.c.h.b16 %v720
        %v2869 = vunpack.c.l.b16 %v721
        %v2870 = vunpack.c.h.b16 %v721
        %v2871 = vunpack.c.l.b16 %v722
        %v2872 = vunpack.c.h.b16 %v722
        %v2873 = vunpack.c.l.b16 %v723
        %v2874 = vunpack.c.h.b16 %v723
        %v2875 = vunpack.c.l.b16 %v724
        %v2876 = vunpack.c.h.b16 %v724
        %v2877 = vunpack.c.l.b16 %v725
        %v2878 = vunpack.c.h.b16 %v725
        %v2879 = vunpack.c.l.b16 %v726
        %v2880 = vunpack.c.h.b16 %v726
        %v2881 = vunpack.c.l.b16 %v727
        %v2882 = vunpack.c.h.b16 %v727
        %v2883 = vunpack.c.l.b16 %v728
        %v2884 = vunpack.c.h.b16 %v728
        %v2885 = vunpack.c.l.b16 %v729
        %v2886 = vunpack.c.h.b16 %v729
        %v2887 = vunpack.c.l.b16 %v730
        %v2888 = vunpack.c.h.b16 %v730
        %v2889 = vunpack.c.l.b16 %v731
        %v2890 = vunpack.c.h.b16 %v731
        %v2891 = vunpack.c.l.b16 %v732
        %v2892 = vunpack.c.h.b16 %v732
        %v2893 = vunpack.c.l.b16 %v733
        %v2894 = vunpack.c.h.b16 %v733
        %v2895 = vunpack.c.l.b16 %v734
        %v2896 = vunpack.c.h.b16 %v734
        %v2897 = vunpack.c.l.b16 %v735
        %v2898 = vunpack.c.h.b16 %v735
        %v2899 = vunpack.c.l.b16 %v736
        %v2900 = vunpack.c.h.b16 %v736
        %v2901 = vunpack.c.l.b16 %v737
        %v2902 = vunpack.c.h.b16 %v737
        %v2903 = vunpack.c.l.b16 %v738
        %v2904 = vunpack.c.h.b16 %v738
        %v2905 = vunpack.c.l.b16 %v739
        %v2906 = vunpack.c.h.b16 %v739
        %v2907 = vunpack.c.l.b16 %v740
        %v2908 = vunpack.c.h.b16 %v740
        %v2909 = vunpack.c.l.b16 %v741
        %v2910 = vunpack.c.h.b16 %v741
        %v2911 = vunpack.c.l.b16 %v742
        %v2912 = vunpack.c.h.b16 %v742
        %v2913 = vunpack.c.l.b16 %v743
        %v2914 = vunpack.c.h.b16 %v743
        %v2915 = vunpack.c.l.b16 %v744
        %v2916 = vunpack.c.h.b16 %v744
        %v2917 = vunpack.c.l.b16 %v745
        %v2918 = vunpack.c.h.b16 %v745
        %v2919 = vunpack.c.l.b16 %v746
        %v2920 = vunpack.c.h.b16 %v746
        %v2921 = vunpack.c.l.b16 %v747
        %v2922 = vunpack.c.h.b16 %v747
        %v2923 = vunpack.c.l.b16 %v748
        %v2924 = vunpack.c.h.b16 %v748
        %v2925 = vunpack.c.l.b16 %v749
        %v2926 = vunpack.c.h.b16 %v749
        %v2927 = vunpack.c.l.b16 %v750
        %v2928 = vunpack.c.h.b16 %v750
        %v2929 = vunpack.c.l.b16 %v751
        %v2930 = vunpack.c.h.b16 %v751
        %v2931 = vunpack.c.l.b16 %v752
        %v2932 = vunpack.c.h.b16 %v752
        %v2933 = vunpack.c.l.b16 %v753
        %v2934 = vunpack.c.h.b16 %v753
        %v2935 = vunpack.c.l.b16 %v754
        %v2936 = vunpack.c.h.b16 %v754
        %v2937 = vunpack.c.l.b16 %v755
        %v2938 = vunpack.c.h.b16 %v755
        %v2939 = vunpack.c.l.b16 %v756
        %v2940 = vunpack.c.h.b16 %v756
        %v2941 = vunpack.c.l.b16 %v757
        %v2942 = vunpack.c.h.b16 %v757
        %v2943 = vunpack.c.l.b16 %v758
        %v2944 = vunpack.c.h.b16 %v758
        %v2945 = vunpack.c.l.b16 %v759
        %v2946 = vunpack.c.h.b16 %v759
        %v2947 = vunpack.c.l.b16 %v760
        %v2948 = vunpack.c.h.b16 %v760
        %v2949 = vunpack.c.l.b16 %v761
        %v2950 = vunpack.c.h.b16 %v761
        %v2951 = vunpack.c.l.b16 %v762
        %v2952 = vunpack.c.h.b16 %v762
        %v2953 = vunpack.c.l.b16 %v763
        %v2954 = vunpack.c.h.b16 %v763
        %v2955 = vunpack.c.l.b16 %v764
        %v2956 = vunpack.c.h.b16 %v764
        %v2957 = vunpack.c.l.b16 %v765
        %v2958 = vunpack.c.h.b16 %v765
        %v2959 = vunpack.c.l.b16 %v766
        %v2960 = vunpack.c.h.b16 %v766
        %v2961 = vunpack.c.l.b16 %v767
        %v2962 = vunpack.c.h.b16 %v767
        %v2963 = vunpack.c.l.b16 %v768
        %v2964 = vunpack.c.h.b16 %v768
        %v2965 = vunpack.c.l.b16 %v769
        %v2966 = vunpack.c.h.b16 %v769
        %v2967 = vunpack.c.l.b16 %v770
        %v2968 = vunpack.c.h.b16 %v770
        %v2969 = vunpack.c.l.b16 %v771
        %v2970 = vunpack.c.h.b16 %v771
        %v2971 = vunpack.c.l.b16 %v772
        %v2972 = vunpack.c.h.b16 %v772
        %v2973 = vunpack.c.l.b16 %v773
        %v2974 = vunpack.c.h.b16 %v773
        %v2975 = vunpack.c.l.b16 %v774
        %v2976 = vunpack.c.h.b16 %v774
        %v2977 = vunpack.c.l.b16 %v775
        %v2978 = vunpack.c.h.b16 %v775
        %v2979 = vunpack.c.l.b16 %v776
        %v2980 = vunpack.c.h.b16 %v776
        %v2981 = vunpack.c.l.b16 %v777
        %v2982 = vunpack.c.h.b16 %v777
        %v2983 = vunpack.c.l.b16 %v778
        %v2984 = vunpack.c.h.b16 %v778
        %v2985 = vunpack.c.l.b16 %v779
        %v2986 = vunpack.c.h.b16 %v779
        %v2987 = vunpack.c.l.b16 %v780
        %v2988 = vunpack.c.h.b16 %v780
        %v2989 = vunpack.c.l.b16 %v781
        %v2990 = vunpack.c.h.b16 %v781
        %v2991 = vunpack.c.l.b16 %v782
        %v2992 = vunpack.c.h.b16 %v782
        %v2993 = vunpack.c.l.b16 %v783
        %v2994 = vunpack.c.h.b16 %v783
        %v2995 = vunpack.c.l.b16 %v784
        %v2996 = vunpack.c.h.b16 %v784
        %v2997 = vunpack.c.l.b16 %v785
        %v2998 = vunpack.c.h.b16 %v785
        %v2999 = vunpack.c.l.b16 %v786
        %v3000 = vunpack.c.h.b16 %v786
        %v3001 = vunpack.c.l.b16 %v787
        %v3002 = vunpack.c.h.b16 %v787
        %v3003 = vunpack.c.l.b16 %v788
        %v3004 = vunpack.c.h.b16 %v788
        %v3005 = vunpack.c.l.b16 %v789
        %v3006 = vunpack.c.h.b16 %v789
        %v3007 = vunpack.c.l.b16 %v790
        %v3008 = vunpack.c.h.b16 %v790
        %v3009 = vunpack.c.l.b16 %v791
        %v3010 = vunpack.c.h.b16 %v791
        %v3011 = vunpack.c.l.b16 %v792
        %v3012 = vunpack.c.h.b16 %v792
        %v3013 = vunpack.c.l.b16 %v793
        %v3014 = vunpack.c.h.b16 %v793
        %v3015 = vunpack.c.l.b16 %v794
        %v3016 = vunpack.c.h.b16 %v794
        %v3017 = vunpack.c.l.b16 %v795
        %v3018 = vunpack.c.h.b16 %v795
        %v3019 = vunpack.c.l.b16 %v796
        %v3020 = vunpack.c.h.b16 %v796
        %v3021 = vunpack.c.l.b16 %v797
        %v3022 = vunpack.c.h.b16 %v797
        %v3023 = vunpack.c.l.b16 %v798
        %v3024 = vunpack.c.h.b16 %v798
        %v3025 = vunpack.c.l.b16 %v799
        %v3026 = vunpack.c.h.b16 %v799
        %v3027 = vunpack.c.l.b16 %v800
        %v3028 = vunpack.c.h.b16 %v800
        %v3029 = vunpack.c.l.b16 %v801
        %v3030 = vunpack.c.h.b16 %v801
        %v3031 = vunpack.c.l.b16 %v802
        %v3032 = vunpack.c.h.b16 %v802
        %v3033 = vunpack.c.l.b16 %v803
        %v3034 = vunpack.c.h.b16 %v803
        %v3035 = vunpack.c.l.b16 %v804
        %v3036 = vunpack.c.h.b16 %v804
        %v3037 = vunpack.c.l.b16 %v805
        %v3038 = vunpack.c.h.b16 %v805
        %v3039 = vunpack.c.l.b16 %v806
        %v3040 = vunpack.c.h.b16 %v806
        %v3041 = vunpack.c.l.b16 %v807
        %v3042 = vunpack.c.h.b16 %v807
        %v3043 = vunpack.c.l.b16 %v808
        %v3044 = vunpack.c.h.b16 %v808
        %v3045 = vunpack.c.l.b16 %v809
        %v3046 = vunpack.c.h.b16 %v809
        %v3047 = vunpack.c.l.b16 %v810
        %v3048 = vunpack.c.h.b16 %v810
        %v3049 = vunpack.c.l.b16 %v811
        %v3050 = vunpack.c.h.b16 %v811
        %v3051 = vunpack.c.l.b16 %v812
        %v3052 = vunpack.c.h.b16 %v812
        %v3053 = vunpack.c.l.b16 %v813
        %v3054 = vunpack.c.h.b16 %v813
        %v3055 = vunpack.c.l.b16 %v814
        %v3056 = vunpack.c.h.b16 %v814
        %v3057 = vunpack.c.l.b16 %v815
        %v3058 = vunpack.c.h.b16 %v815
        %v3059 = vunpack.c.l.b16 %v816
        %v3060 = vunpack.c.h.b16 %v816
        %v3061 = vunpack.c.l.b16 %v817
        %v3062 = vunpack.c.h.b16 %v817
        %v3063 = vunpack.c.l.b16 %v818
        %v3064 = vunpack.c.h.b16 %v818
        %v3065 = vunpack.c.l.b16 %v819
        %v3066 = vunpack.c.h.b16 %v819
        %v3067 = vunpack.c.l.b16 %v820
        %v3068 = vunpack.c.h.b16 %v820
        %v3069 = vunpack.c.l.b16 %v821
        %v3070 = vunpack.c.h.b16 %v821
        %v3071 = vunpack.c.l.b16 %v822
        %v3072 = vunpack.c.h.b16 %v822
        %v3073 = vunpack.c.l.b16 %v823
        %v3074 = vunpack.c.h.b16 %v823
        %v3075 = vunpack.c.l.b16 %v824
        %v3076 = vunpack.c.h.b16 %v824
        %v3077 = vunpack.c.l.b16 %v825
        %v3078 = vunpack.c.h.b16 %v825
        %v3079 = vunpack.c.l.b16 %v826
        %v3080 = vunpack.c.h.b16 %v826
        %v3081 = vunpack.c.l.b16 %v827
        %v3082 = vunpack.c.h.b16 %v827
        %v3083 = vunpack.c.l.b16 %v828
        %v3084 = vunpack.c.h.b16 %v828
        %v3085 = vunpack.c.l.b16 %v829
        %v3086 = vunpack.c.h.b16 %v829
        %v3087 = vunpack.c.l.b16 %v830
        %v3088 = vunpack.c.h.b16 %v830
        %v3089 = vunpack.c.l.b16 %v831
        %v3090 = vunpack.c.h.b16 %v831
        %v3091 = vunpack.c.l.b16 %v832
        %v3092 = vunpack.c.h.b16 %v832
        %v3093 = vunpack.c.l.b16 %v833
        %v3094 = vunpack.c.h.b16 %v833
        %v3095 = vunpack.c.l.b16 %v834
        %v3096 = vunpack.c.h.b16 %v834
        %v3097 = vunpack.c.l.b16 %v835
        %v3098 = vunpack.c.h.b16 %v835
        %v3099 = vunpack.c.l.b16 %v836
        %v3100 = vunpack.c.h.b16 %v836
        %v3101 = vunpack.c.l.b16 %v837
        %v3102 = vunpack.c.h.b16 %v837
        %v3103 = vunpack.c.l.b16 %v838
        %v3104 = vunpack.c.h.b16 %v838
        %v3105 = vunpack.c.l.b16 %v839
        %v3106 = vunpack.c.h.b16 %v839
        %v3107 = vunpack.c.l.b16 %v840
        %v3108 = vunpack.c.h.b16 %v840
        %v3109 = vunpack.c.l.b16 %v841
        %v3110 = vunpack.c.h.b16 %v841
        %v3111 = vunpack.c.l.b16 %v842
        %v3112 = vunpack.c.h.b16 %v842
        %v3113 = vunpack.c.l.b16 %v843
        %v3114 = vunpack.c.h.b16 %v843
        %v3115 = vunpack.c.l.b16 %v844
        %v3116 = vunpack.c.h.b16 %v844
        %v3117 = vunpack.c.l.b16 %v845
        %v3118 = vunpack.c.h.b16 %v845
        %v3119 = vunpack.c.l.b16 %v846
        %v3120 = vunpack.c.h.b16 %v846
        %v3121 = vunpack.c.l.b16 %v847
        %v3122 = vunpack.c.h.b16 %v847
        %v3123 = vunpack.c.l.b16 %v848
        %v3124 = vunpack.c.h.b16 %v848
        %v3125 = vunpack.c.l.b16 %v849
        %v3126 = vunpack.c.h.b16 %v849
        %v3127 = vunpack.c.l.b16 %v850
        %v3128 = vunpack.c.h.b16 %v850
        %v3129 = vunpack.c.l.b16 %v851
        %v3130 = vunpack.c.h.b16 %v851
        %v3131 = vunpack.c.l.b16 %v852
        %v3132 = vunpack.c.h.b16 %v852
        %v3133 = vunpack.c.l.b16 %v853
        %v3134 = vunpack.c.h.b16 %v853
        %v3135 = vunpack.c.l.b16 %v854
        %v3136 = vunpack.c.h.b16 %v854
        %v3137 = vunpack.c.l.b16 %v855
        %v3138 = vunpack.c.h.b16 %v855
        %v3139 = vunpack.c.l.b16 %v856
        %v3140 = vunpack.c.h.b16 %v856
        %v3141 = vunpack.c.l.b16 %v857
        %v3142 = vunpack.c.h.b16 %v857
        %v3143 = vunpack.c.l.b16 %v858
        %v3144 = vunpack.c.h.b16 %v858
        %v3145 = vunpack.c.l.b16 %v859
        %v3146 = vunpack.c.h.b16 %v859
        %v3147 = vunpack.c.l.b16 %v860
        %v3148 = vunpack.c.h.b16 %v860
        %v3149 = vunpack.c.l.b16 %v861
        %v3150 = vunpack.c.h.b16 %v861
        %v3151 = vunpack.c.l.b16 %v862
        %v3152 = vunpack.c.h.b16 %v862
        %v3153 = vunpack.c.l.b16 %v863
        %v3154 = vunpack.c.h.b16 %v863
        %v3155 = vunpack.c.l.b16 %v864
        %v3156 = vunpack.c.h.b16 %v864
        %v3157 = vunpack.c.l.b16 %v865
        %v3158 = vunpack.c.h.b16 %v865
        %v3159 = vunpack.c.l.b16 %v866
        %v3160 = vunpack.c.h.b16 %v866
        %v3161 = vunpack.c.l.b16 %v867
        %v3162 = vunpack.c.h.b16 %v867
        %v3163 = vunpack.c.l.b16 %v868
        %v3164 = vunpack.c.h.b16 %v868
        %v3165 = vunpack.c.l.b16 %v869
        %v3166 = vunpack.c.h.b16 %v869
        %v3167 = vunpack.c.l.b16 %v870
        %v3168 = vunpack.c.h.b16 %v870
        %v3169 = vunpack.c.l.b16 %v871
        %v3170 = vunpack.c.h.b16 %v871
        %v3171 = vunpack.c.l.b16 %v872
        %v3172 = vunpack.c.h.b16 %v872
        %v3173 = vunpack.c.l.b16 %v873
        %v3174 = vunpack.c.h.b16 %v873
        %v3175 = vunpack.c.l.b16 %v874
        %v3176 = vunpack.c.h.b16 %v874
        %v3177 = vunpack.c.l.b16 %v875
        %v3178 = vunpack.c.h.b16 %v875
        %v3179 = vunpack.c.l.b16 %v876
        %v3180 = vunpack.c.h.b16 %v876
        %v3181 = vunpack.c.l.b16 %v877
        %v3182 = vunpack.c.h.b16 %v877
        %v3183 = vunpack.c.l.b16 %v878
        %v3184 = vunpack.c.h.b16 %v878
        %v3185 = vunpack.c.l.b16 %v879
        %v3186 = vunpack.c.h.b16 %v879
        %v3187 = vunpack.c.l.b16 %v880
        %v3188 = vunpack.c.h.b16 %v880
        %v3189 = vunpack.c.l.b16 %v881
        %v3190 = vunpack.c.h.b16 %v881
        %v3191 = vunpack.c.l.b16 %v882
        %v3192 = vunpack.c.h.b16 %v882
        %v3193 = vunpack.c.l.b16 %v883
        %v3194 = vunpack.c.h.b16 %v883
        %v3195 = vunpack.c.l.b16 %v884
        %v3196 = vunpack.c.h.b16 %v884
        %v3197 = vunpack.c.l.b16 %v885
        %v3198 = vunpack.c.h.b16 %v885
        %v3199 = vunpack.c.l.b16 %v886
        %v3200 = vunpack.c.h.b16 %v886
        %v3201 = vunpack.c.l.b16 %v887
        %v3202 = vunpack.c.h.b16 %v887
        %v3203 = vunpack.c.l.b16 %v888
        %v3204 = vunpack.c.h.b16 %v888
        %v3205 = vunpack.c.l.b16 %v889
        %v3206 = vunpack.c.h.b16 %v889
        %v3207 = vunpack.c.l.b16 %v890
        %v3208 = vunpack.c.h.b16 %v890
        %v3209 = vunpack.c.l.b16 %v891
        %v3210 = vunpack.c.h.b16 %v891
        %v3211 = vunpack.c.l.b16 %v892
        %v3212 = vunpack.c.h.b16 %v892
        %v3213 = vunpack.c.l.b16 %v893
        %v3214 = vunpack.c.h.b16 %v893
        %v3215 = vunpack.c.l.b16 %v894
        %v3216 = vunpack.c.h.b16 %v894
        %v3217 = vunpack.c.l.b16 %v895
        %v3218 = vunpack.c.h.b16 %v895
        %v3219 = vunpack.c.l.b16 %v896
        %v3220 = vunpack.c.h.b16 %v896
        %v3221 = vunpack.c.l.b16 %v897
        %v3222 = vunpack.c.h.b16 %v897
        %v3223 = vunpack.c.l.b16 %v898
        %v3224 = vunpack.c.h.b16 %v898
        %v3225 = vunpack.c.l.b16 %v899
        %v3226 = vunpack.c.h.b16 %v899
        %v3227 = vunpack.c.l.b16 %v900
        %v3228 = vunpack.c.h.b16 %v900
        %v3229 = vunpack.c.l.b16 %v901
        %v3230 = vunpack.c.h.b16 %v901
        %v3231 = vunpack.c.l.b16 %v902
        %v3232 = vunpack.c.h.b16 %v902
        %v3233 = vunpack.c.l.b16 %v903
        %v3234 = vunpack.c.h.b16 %v903
        %v3235 = vunpack.c.l.b16 %v904
        %v3236 = vunpack.c.h.b16 %v904
        %v3237 = vunpack.c.l.b16 %v905
        %v3238 = vunpack.c.h.b16 %v905
        %v3239 = vunpack.c.l.b16 %v906
        %v3240 = vunpack.c.h.b16 %v906
        %v3241 = vunpack.c.l.b16 %v907
        %v3242 = vunpack.c.h.b16 %v907
        %v3243 = vunpack.c.l.b16 %v908
        %v3244 = vunpack.c.h.b16 %v908
        %v3245 = vunpack.c.l.b16 %v909
        %v3246 = vunpack.c.h.b16 %v909
        %v3247 = vunpack.c.l.b16 %v910
        %v3248 = vunpack.c.h.b16 %v910
        %v3249 = vunpack.c.l.b16 %v911
        %v3250 = vunpack.c.h.b16 %v911
        %v3251 = vunpack.c.l.b16 %v912
        %v3252 = vunpack.c.h.b16 %v912
        %v3253 = vunpack.c.l.b16 %v913
        %v3254 = vunpack.c.h.b16 %v913
        %v3255 = vunpack.c.l.b16 %v914
        %v3256 = vunpack.c.h.b16 %v914
        %v3257 = vunpack.c.l.b16 %v915
        %v3258 = vunpack.c.h.b16 %v915
        %v3259 = vunpack.c.l.b16 %v916
        %v3260 = vunpack.c.h.b16 %v916
        %v3261 = vunpack.c.l.b16 %v917
        %v3262 = vunpack.c.h.b16 %v917
        %v3263 = vunpack.c.l.b16 %v918
        %v3264 = vunpack.c.h.b16 %v918
        %v3265 = vunpack.c.l.b16 %v919
        %v3266 = vunpack.c.h.b16 %v919
        %v3267 = vunpack.c.l.b16 %v920
        %v3268 = vunpack.c.h.b16 %v920
        %v3269 = vunpack.c.l.b16 %v921
        %v3270 = vunpack.c.h.b16 %v921
        %v3271 = vunpack.c.l.b16 %v922
        %v3272 = vunpack.c.h.b16 %v922
        %v3273 = vunpack.c.l.b16 %v923
        %v3274 = vunpack.c.h.b16 %v923
        %v3275 = vunpack.c.l.b16 %v924
        %v3276 = vunpack.c.h.b16 %v924
        %v3277 = vunpack.c.l.b16 %v925
        %v3278 = vunpack.c.h.b16 %v925
        %v3279 = vunpack.c.l.b16 %v926
        %v3280 = vunpack.c.h.b16 %v926
        %v3281 = vunpack.c.l.b16 %v927
        %v3282 = vunpack.c.h.b16 %v927
        %v3283 = vunpack.c.l.b16 %v928
        %v3284 = vunpack.c.h.b16 %v928
        %v3285 = vunpack.c.l.b16 %v929
        %v3286 = vunpack.c.h.b16 %v929
        %v3287 = vunpack.c.l.b16 %v930
        %v3288 = vunpack.c.h.b16 %v930
        %v3289 = vunpack.c.l.b16 %v931
        %v3290 = vunpack.c.h.b16 %v931
        %v3291 = vunpack.c.l.b16 %v932
        %v3292 = vunpack.c.h.b16 %v932
        %v3293 = vunpack.c.l.b16 %v933
        %v3294 = vunpack.c.h.b16 %v933
        %v3295 = vunpack.c.l.b16 %v934
        %v3296 = vunpack.c.h.b16 %v934
        %v3297 = vunpack.c.l.b16 %v935
        %v3298 = vunpack.c.h.b16 %v935
        %v3299 = vunpack.c.l.b16 %v936
        %v3300 = vunpack.c.h.b16 %v936
        %v3301 = vunpack.c.l.b16 %v937
        %v3302 = vunpack.c.h.b16 %v937
        %v3303 = vunpack.c.l.b16 %v938
        %v3304 = vunpack.c.h.b16 %v938
        %v3305 = vunpack.c.l.b16 %v939
        %v3306 = vunpack.c.h.b16 %v939
        %v3307 = vunpack.c.l.b16 %v940
        %v3308 = vunpack.c.h.b16 %v940
        %v3309 = vunpack.c.l.b16 %v941
        %v3310 = vunpack.c.h.b16 %v941
        %v3311 = vunpack.c.l.b16 %v942
        %v3312 = vunpack.c.h.b16 %v942
        %v3313 = vunpack.c.l.b16 %v943
        %v3314 = vunpack.c.h.b16 %v943
        %v3315 = vunpack.c.l.b16 %v944
        %v3316 = vunpack.c.h.b16 %v944
        %v3317 = vunpack.c.l.b16 %v945
        %v3318 = vunpack.c.h.b16 %v945
        %v3319 = vunpack.c.l.b16 %v946
        %v3320 = vunpack.c.h.b16 %v946
        %v3321 = vunpack.c.l.b16 %v947
        %v3322 = vunpack.c.h.b16 %v947
        %v3323 = vunpack.c.l.b16 %v948
        %v3324 = vunpack.c.h.b16 %v948
        %v3325 = vunpack.c.l.b16 %v949
        %v3326 = vunpack.c.h.b16 %v949
        %v3327 = vunpack.c.l.b16 %v950
        %v3328 = vunpack.c.h.b16 %v950
        %v3329 = vunpack.c.l.b16 %v951
        %v3330 = vunpack.c.h.b16 %v951
        %v3331 = vunpack.c.l.b16 %v952
        %v3332 = vunpack.c.h.b16 %v952
        %v3333 = vunpack.c.l.b16 %v953
        %v3334 = vunpack.c.h.b16 %v953
        %v3335 = vunpack.c.l.b16 %v954
        %v3336 = vunpack.c.h.b16 %v954
        %v3337 = vunpack.c.l.b16 %v955
        %v3338 = vunpack.c.h.b16 %v955
        %v3339 = vunpack.c.l.b16 %v956
        %v3340 = vunpack.c.h.b16 %v956
        %v3341 = vunpack.c.l.b16 %v957
        %v3342 = vunpack.c.h.b16 %v957
        %v3343 = vunpack.c.l.b16 %v958
        %v3344 = vunpack.c.h.b16 %v958
        %v3345 = vunpack.c.l.b16 %v959
        %v3346 = vunpack.c.h.b16 %v959
        %v3347 = vunpack.c.l.b16 %v960
        %v3348 = vunpack.c.h.b16 %v960
        %v3349 = vunpack.c.l.b16 %v961
        %v3350 = vunpack.c.h.b16 %v961
        %v3351 = vunpack.c.l.b16 %v962
        %v3352 = vunpack.c.h.b16 %v962
        %v3353 = vunpack.c.l.b16 %v963
        %v3354 = vunpack.c.h.b16 %v963
        %v3355 = vunpack.c.l.b16 %v964
        %v3356 = vunpack.c.h.b16 %v964
        %v3357 = vunpack.c.l.b16 %v965
        %v3358 = vunpack.c.h.b16 %v965
        %v3359 = vunpack.c.l.b16 %v966
        %v3360 = vunpack.c.h.b16 %v966
        %v3361 = vunpack.c.l.b16 %v967
        %v3362 = vunpack.c.h.b16 %v967
        %v3363 = vunpack.c.l.b16 %v968
        %v3364 = vunpack.c.h.b16 %v968
        %v3365 = vunpack.c.l.b16 %v969
        %v3366 = vunpack.c.h.b16 %v969
        %v3367 = vunpack.c.l.b16 %v970
        %v3368 = vunpack.c.h.b16 %v970
        %v3369 = vunpack.c.l.b16 %v971
        %v3370 = vunpack.c.h.b16 %v971
        %v3371 = vunpack.c.l.b16 %v972
        %v3372 = vunpack.c.h.b16 %v972
        %v3373 = vunpack.c.l.b16 %v973
        %v3374 = vunpack.c.h.b16 %v973
        %v3375 = vunpack.c.l.b16 %v974
        %v3376 = vunpack.c.h.b16 %v974
        %v3377 = vunpack.c.l.b16 %v975
        %v3378 = vunpack.c.h.b16 %v975
        %v3379 = vunpack.c.l.b16 %v976
        %v3380 = vunpack.c.h.b16 %v976
        %v3381 = vunpack.c.l.b16 %v977
        %v3382 = vunpack.c.h.b16 %v977
        %v3383 = vunpack.c.l.b16 %v978
        %v3384 = vunpack.c.h.b16 %v978
        %v3385 = vunpack.c.l.b16 %v979
        %v3386 = vunpack.c.h.b16 %v979
        %v3387 = vunpack.c.l.b16 %v980
        %v3388 = vunpack.c.h.b16 %v980
        %v3389 = vunpack.c.l.b16 %v981
        %v3390 = vunpack.c.h.b16 %v981
        %v3391 = vunpack.c.l.b16 %v982
        %v3392 = vunpack.c.h.b16 %v982
        %v3393 = vunpack.c.l.b16 %v983
        %v3394 = vunpack.c.h.b16 %v983
        %v3395 = vunpack.c.l.b16 %v984
        %v3396 = vunpack.c.h.b16 %v984
        %v3397 = vunpack.c.l.b16 %v985
        %v3398 = vunpack.c.h.b16 %v985
        %v3399 = vunpack.c.l.b16 %v986
        %v3400 = vunpack.c.h.b16 %v986
        %v3401 = vunpack.c.l.b16 %v987
        %v3402 = vunpack.c.h.b16 %v987
        %v3403 = vunpack.c.l.b16 %v988
        %v3404 = vunpack.c.h.b16 %v988
        %v3405 = vunpack.c.l.b16 %v989
        %v3406 = vunpack.c.h.b16 %v989
        %v3407 = vunpack.c.l.b16 %v990
        %v3408 = vunpack.c.h.b16 %v990
        %v3409 = vunpack.c.l.b16 %v991
        %v3410 = vunpack.c.h.b16 %v991
        %v3411 = vunpack.c.l.b16 %v992
        %v3412 = vunpack.c.h.b16 %v992
        %v3413 = vunpack.c.l.b16 %v993
        %v3414 = vunpack.c.h.b16 %v993
        %v3415 = vunpack.c.l.b16 %v994
        %v3416 = vunpack.c.h.b16 %v994
        %v3417 = vunpack.c.l.b16 %v995
        %v3418 = vunpack.c.h.b16 %v995
        %v3419 = vunpack.c.l.b16 %v996
        %v3420 = vunpack.c.h.b16 %v996
        %v3421 = vunpack.c.l.b16 %v997
        %v3422 = vunpack.c.h.b16 %v997
        %v3423 = vunpack.c.l.b16 %v998
        %v3424 = vunpack.c.h.b16 %v998
        %v3425 = vunpack.c.l.b16 %v999
        %v3426 = vunpack.c.h.b16 %v999
        %v3427 = vunpack.c.l.b16 %v1000
        %v3428 = vunpack.c.h.b16 %v1000
        %v3429 = vunpack.c.l.b16 %v1001
        %v3430 = vunpack.c.h.b16 %v1001
        %v3431 = vunpack.c.l.b16 %v1002
        %v3432 = vunpack.c.h.b16 %v1002
        %v3433 = vunpack.c.l.b16 %v1003
        %v3434 = vunpack.c.h.b16 %v1003
        %v3435 = vpack.c.b16 %v2029, %v2027
        %v3436 = vpack.c.b16 %v2030, %v2028
        %v3437 = vpack.c.b16 %v2033, %v2031
        %v3438 = vpack.c.b16 %v2034, %v2032
        %v3439 = vpack.c.b16 %v2037, %v2035
        %v3440 = vpack.c.b16 %v2038, %v2036
        %v3441 = vpack.c.b16 %v2041, %v2039
        %v3442 = vpack.c.b16 %v2042, %v2040
        %v3443 = vpack.c.b16 %v2045, %v2043
        %v3444 = vpack.c.b16 %v2046, %v2044
        %v3445 = vpack.c.b16 %v2049, %v2047
        %v3446 = vpack.c.b16 %v2050, %v2048
        %v3447 = vpack.c.b16 %v2053, %v2051
        %v3448 = vpack.c.b16 %v2054, %v2052
        %v3449 = vpack.c.b16 %v2057, %v2055
        %v3450 = vpack.c.b16 %v2058, %v2056
        %v3451 = vpack.c.b16 %v2061, %v2059
        %v3452 = vpack.c.b16 %v2062, %v2060
        %v3453 = vpack.c.b16 %v2065, %v2063
        %v3454 = vpack.c.b16 %v2066, %v2064
        %v3455 = vpack.c.b16 %v2069, %v2067
        %v3456 = vpack.c.b16 %v2070, %v2068
        %v3457 = vpack.c.b16 %v2073, %v2071
        %v3458 = vpack.c.b16 %v2074, %v2072
        %v3459 = vpack.c.b16 %v2077, %v2075
        %v3460 = vpack.c.b16 %v2078, %v2076
        %v3461 = vpack.c.b16 %v2081, %v2079
        %v3462 = vpack.c.b16 %v2082, %v2080
        %v3463 = vpack.c.b16 %v2085, %v2083
        %v3464 = vpack.c.b16 %v2086, %v2084
        %v3465 = vpack.c.b16 %v2089, %v2087
        %v3466 = vpack.c.b16 %v2090, %v2088
        %v3467 = vpack.c.b16 %v2093, %v2091
        %v3468 = vpack.c.b16 %v2094, %v2092
        %v3469 = vpack.c.b16 %v2097, %v2095
        %v3470 = vpack.c.b16 %v2098, %v2096
        %v3471 = vpack.c.b16 %v2101, %v2099
        %v3472 = vpack.c.b16 %v2102, %v2100
        %v3473 = vpack.c.b16 %v2105, %v2103
        %v3474 = vpack.c.b16 %v2106, %v2104
        %v3475 = vpack.c.b16 %v2109, %v2107
        %v3476 = vpack.c.b16 %v2110, %v2108
        %v3477 = vpack.c.b16 %v2113, %v2111
        %v3478 = vpack.c.b16 %v2114, %v2112
        %v3479 = vpack.c.b16 %v2117, %v2115
        %v3480 = vpack.c.b16 %v2118, %v2116
        %v3481 = vpack.c.b16 %v2121, %v2119
        %v3482 = vpack.c.b16 %v2122, %v2120
        %v3483 = vpack.c.b16 %v2125, %v2123
        %v3484 = vpack.c.b16 %v2126, %v2124
        %v3485 = vpack.c.b16 %v2129, %v2127
        %v3486 = vpack.c.b16 %v2130, %v2128
        %v3487 = vpack.c.b16 %v2133, %v2131
        %v3488 = vpack.c.b16 %v2134, %v2132
        %v3489 = vpack.c.b16 %v2137, %v2135
        %v3490 = vpack.c.b16 %v2138, %v2136
        %v3491 = vpack.c.b16 %v2141, %v2139
        %v3492 = vpack.c.b16 %v2142, %v2140
        %v3493 = vpack.c.b16 %v2145, %v2143
        %v3494 = vpack.c.b16 %v2146, %v2144
        %v3495 = vpack.c.b16 %v2149, %v2147
        %v3496 = vpack.c.b16 %v2150, %v2148
        %v3497 = vpack.c.b16 %v2153, %v2151
        %v3498 = vpack.c.b16 %v2154, %v2152
        %v3499 = vpack.c.b16 %v2157, %v2155
        %v3500 = vpack.c.b16 %v2158, %v2156
        %v3501 = vpack.c.b16 %v2161, %v2159
        %v3502 = vpack.c.b16 %v2162, %v2160
        %v3503 = vpack.c.b16 %v2165, %v2163
        %v3504 = vpack.c.b16 %v2166, %v2164
        %v3505 = vpack.c.b16 %v2169, %v2167
        %v3506 = vpack.c.b16 %v2170, %v2168
        %v3507 = vpack.c.b16 %v2173, %v2171
        %v3508 = vpack.c.b16 %v2174, %v2172
        %v3509 = vpack.c.b16 %v2177, %v2175
        %v3510 = vpack.c.b16 %v2178, %v2176
        %v3511 = vpack.c.b16 %v2181, %v2179
        %v3512 = vpack.c.b16 %v2182, %v2180
        %v3513 = vpack.c.b16 %v2185, %v2183
        %v3514 = vpack.c.b16 %v2186, %v2184
        %v3515 = vpack.c.b16 %v2189, %v2187
        %v3516 = vpack.c.b16 %v2190, %v2188
        %v3517 = vpack.c.b16 %v2193, %v2191
        %v3518 = vpack.c.b16 %v2194, %v2192
        %v3519 = vpack.c.b16 %v2197, %v2195
        %v3520 = vpack.c.b16 %v2198, %v2196
        %v3521 = vpack.c.b16 %v2201, %v2199
        %v3522 = vpack.c.b16 %v2202, %v2200
        %v3523 = vpack.c.b16 %v2205, %v2203
        %v3524 = vpack.c.b16 %v2206, %v2204
        %v3525 = vpack.c.b16 %v2209, %v2207
        %v3526 = vpack.c.b16 %v2210, %v2208
        %v3527 = vpack.c.b16 %v2213, %v2211
        %v3528 = vpack.c.b16 %v2214, %v2212
        %v3529 = vpack.c.b16 %v2217, %v2215
        %v3530 = vpack.c.b16 %v2218, %v2216
        %v3531 = vpack.c.b16 %v2221, %v2219
        %v3532 = vpack.c.b16 %v2222, %v2220
        %v3533 = vpack.c.b16 %v2225, %v2223
        %v3534 = vpack.c.b16 %v2226, %v2224
        %v3535 = vpack.c.b16 %v2229, %v2227
        %v3536 = vpack.c.b16 %v2230, %v2228
        %v3537 = vpack.c.b16 %v2233, %v2231
        %v3538 = vpack.c.b16 %v2234, %v2232
        %v3539 = vpack.c.b16 %v2237, %v2235
        %v3540 = vpack.c.b16 %v2238, %v2236
        %v3541 = vpack.c.b16 %v2241, %v2239
        %v3542 = vpack.c.b16 %v2242, %v2240
        %v3543 = vpack.c.b16 %v2245, %v2243
        %v3544 = vpack.c.b16 %v2246, %v2244
        %v3545 = vpack.c.b16 %v2249, %v2247
        %v3546 = vpack.c.b16 %v2250, %v2248
        %v3547 = vpack.c.b16 %v2253, %v2251
        %v3548 = vpack.c.b16 %v2254, %v2252
        %v3549 = vpack.c.b16 %v2257, %v2255
        %v3550 = vpack.c.b16 %v2258, %v2256
        %v3551 = vpack.c.b16 %v2261, %v2259
        %v3552 = vpack.c.b16 %v2262, %v2260
        %v3553 = vpack.c.b16 %v2265, %v2263
        %v3554 = vpack.c.b16 %v2266, %v2264
        %v3555 = vpack.c.b16 %v2269, %v2267
        %v3556 = vpack.c.b16 %v2270, %v2268
        %v3557 = vpack.c.b16 %v2273, %v2271
        %v3558 = vpack.c.b16 %v2274, %v2272
        %v3559 = vpack.c.b16 %v2277, %v2275
        %v3560 = vpack.c.b16 %v2278, %v2276
        %v3561 = vpack.c.b16 %v2281, %v2279
        %v3562 = vpack.c.b16 %v2282, %v2280
        %v3563 = vpack.c.b16 %v2285, %v2283
        %v3564 = vpack.c.b16 %v2286, %v2284
        %v3565 = vpack.c.b16 %v2289, %v2287
        %v3566 = vpack.c.b16 %v2290, %v2288
        %v3567 = vpack.c.b16 %v2293, %v2291
        %v3568 = vpack.c.b16 %v2294, %v2292
        %v3569 = vpack.c.b16 %v2297, %v2295
        %v3570 = vpack.c.b16 %v2298, %v2296
        %v3571 = vpack.c.b16 %v2301, %v2299
        %v3572 = vpack.c.b16 %v2302, %v2300
        %v3573 = vpack.c.b16 %v2305, %v2303
        %v3574 = vpack.c.b16 %v2306, %v2304
        %v3575 = vpack.c.b16 %v2309, %v2307
        %v3576 = vpack.c.b16 %v2310, %v2308
        %v3577 = vpack.c.b16 %v2313, %v2311
        %v3578 = vpack.c.b16 %v2314, %v2312
        %v3579 = vpack.c.b16 %v2317, %v2315
        %v3580 = vpack.c.b16 %v2318, %v2316
        %v3581 = vpack.c.b16 %v2321, %v2319
        %v3582 = vpack.c.b16 %v2322, %v2320
        %v3583 = vpack.c.b16 %v2325, %v2323
        %v3584 = vpack.c.b16 %v2326, %v2324
        %v3585 = vpack.c.b16 %v2329, %v2327
        %v3586 = vpack.c.b16 %v2330, %v2328
        %v3587 = vpack.c.b16 %v2333, %v2331
        %v3588 = vpack.c.b16 %v2334, %v2332
        %v3589 = vpack.c.b16 %v2337, %v2335
        %v3590 = vpack.c.b16 %v2338, %v2336
        %v3591 = vpack.c.b16 %v2341, %v2339
        %v3592 = vpack.c.b16 %v2342, %v2340
        %v3593 = vpack.c.b16 %v2345, %v2343
        %v3594 = vpack.c.b16 %v2346, %v2344
        %v3595 = vpack.c.b16 %v2349, %v2347
        %v3596 = vpack.c.b16 %v2350, %v2348
        %v3597 = vpack.c.b16 %v2353, %v2351
        %v3598 = vpack.c.b16 %v2354, %v2352
        %v3599 = vpack.c.b16 %v2357, %v2355
        %v3600 = vpack.c.b16 %v2358, %v2356
        %v3601 = vpack.c.b16 %v2361, %v2359
        %v3602 = vpack.c.b16 %v2362, %v2360
        %v3603 = vpack.c.b16 %v2365, %v2363
        %v3604 = vpack.c.b16 %v2366, %v2364
        %v3605 = vpack.c.b16 %v2369, %v2367
        %v3606 = vpack.c.b16 %v2370, %v2368
        %v3607 = vpack.c.b16 %v2373, %v2371
        %v3608 = vpack.c.b16 %v2374, %v2372
        %v3609 = vpack.c.b16 %v2377, %v2375
        %v3610 = vpack.c.b16 %v2378, %v2376
        %v3611 = vpack.c.b16 %v2381, %v2379
        %v3612 = vpack.c.b16 %v2382, %v2380
        %v3613 = vpack.c.b16 %v2385, %v2383
        %v3614 = vpack.c.b16 %v2386, %v2384
        %v3615 = vpack.c.b16 %v2389, %v2387
        %v3616 = vpack.c.b16 %v2390, %v2388
        %v3617 = vpack.c.b16 %v2393, %v2391
        %v3618 = vpack.c.b16 %v2394, %v2392
        %v3619 = vpack.c.b16 %v2397, %v2395
        %v3620 = vpack.c.b16 %v2398, %v2396
        %v3621 = vpack.c.b16 %v2401, %v2399
        %v3622 = vpack.c.b16 %v2402, %v2400
        %v3623 = vpack.c.b16 %v2405, %v2403
        %v3624 = vpack.c.b16 %v2406, %v2404
        %v3625 = vpack.c.b16 %v2409, %v2407
        %v3626 = vpack.c.b16 %v2410, %v2408
        %v3627 = vpack.c.b16 %v2413, %v2411
        %v3628 = vpack.c.b16 %v2414, %v2412
        %v3629 = vpack.c.b16 %v2417, %v2415
        %v3630 = vpack.c.b16 %v2418, %v2416
        %v3631 = vpack.c.b16 %v2421, %v2419
        %v3632 = vpack.c.b16 %v2422, %v2420
        %v3633 = vpack.c.b16 %v2425, %v2423
        %v3634 = vpack.c.b16 %v2426, %v2424
        %v3635 = vpack.c.b16 %v2429, %v2427
        %v3636 = vpack.c.b16 %v2430, %v2428
        %v3637 = vpack.c.b16 %v2433, %v2431
        %v3638 = vpack.c.b16 %v2434, %v2432
        %v3639 = vpack.c.b16 %v2437, %v2435
        %v3640 = vpack.c.b16 %v2438, %v2436
        %v3641 = vpack.c.b16 %v2441, %v2439
        %v3642 = vpack.c.b16 %v2442, %v2440
        %v3643 = vpack.c.b16 %v2445, %v2443
        %v3644 = vpack.c.b16 %v2446, %v2444
        %v3645 = vpack.c.b16 %v2449, %v2447
        %v3646 = vpack.c.b16 %v2450, %v2448
        %v3647 = vpack.c.b16 %v2453, %v2451
        %v3648 = vpack.c.b16 %v2454, %v2452
        %v3649 = vpack.c.b16 %v2457, %v2455
        %v3650 = vpack.c.b16 %v2458, %v2456
        %v3651 = vpack.c.b16 %v2461, %v2459
        %v3652 = vpack.c.b16 %v2462, %v2460
        %v3653 = vpack.c.b16 %v2465, %v2463
        %v3654 = vpack.c.b16 %v2466, %v2464
        %v3655 = vpack.c.b16 %v2469, %v2467
        %v3656 = vpack.c.b16 %v2470, %v2468
        %v3657 = vpack.c.b16 %v2473, %v2471
        %v3658 = vpack.c.b16 %v2474, %v2472
        %v3659 = vpack.c.b16 %v2477, %v2475
        %v3660 = vpack.c.b16 %v2478, %v2476
        %v3661 = vpack.c.b16 %v2481, %v2479
        %v3662 = vpack.c.b16 %v2482, %v2480
        %v3663 = vpack.c.b16 %v2485, %v2483
        %v3664 = vpack.c.b16 %v2486, %v2484
        %v3665 = vpack.c.b16 %v2489, %v2487
        %v3666 = vpack.c.b16 %v2490, %v2488
        %v3667 = vpack.c.b16 %v2493, %v2491
        %v3668 = vpack.c.b16 %v2494, %v2492
        %v3669 = vpack.c.b16 %v2497, %v2495
        %v3670 = vpack.c.b16 %v2498, %v2496
        %v3671 = vpack.c.b16 %v2501, %v2499
        %v3672 = vpack.c.b16 %v2502, %v2500
        %v3673 = vpack.c.b16 %v2505, %v2503
        %v3674 = vpack.c.b16 %v2506, %v2504
        %v3675 = vpack.c.b16 %v2509, %v2507
        %v3676 = vpack.c.b16 %v2510, %v2508
        %v3677 = vpack.c.b16 %v2513, %v2511
        %v3678 = vpack.c.b16 %v2514, %v2512
        %v3679 = vpack.c.b16 %v2517, %v2515
        %v3680 = vpack.c.b16 %v2518, %v2516
        %v3681 = vpack.c.b16 %v2521, %v2519
        %v3682 = vpack.c.b16 %v2522, %v2520
        %v3683 = vpack.c.b16 %v2525, %v2523
        %v3684 = vpack.c.b16 %v2526, %v2524
        %v3685 = vpack.c.b16 %v2529, %v2527
        %v3686 = vpack.c.b16 %v2530, %v2528
        %v3687 = vpack.c.b16 %v2533, %v2531
        %v3688 = vpack.c.b16 %v2534, %v2532
        %v3689 = vpack.c.b16 %v2537, %v2535
        %v3690 = vpack.c.b16 %v2538, %v2536
        %v3691 = vpack.c.b16 %v2541, %v2539
        %v3692 = vpack.c.b16 %v2542, %v2540
        %v3693 = vpack.c.b16 %v2545, %v2543
        %v3694 = vpack.c.b16 %v2546, %v2544
        %v3695 = vpack.c.b16 %v2549, %v2547
        %v3696 = vpack.c.b16 %v2550, %v2548
        %v3697 = vpack.c.b16 %v2553, %v2551
        %v3698 = vpack.c.b16 %v2554, %v2552
        %v3699 = vpack.c.b16 %v2557, %v2555
        %v3700 = vpack.c.b16 %v2558, %v2556
        %v3701 = vpack.c.b16 %v2561, %v2559
        %v3702 = vpack.c.b16 %v2562, %v2560
        %v3703 = vpack.c.b16 %v2565, %v2563
        %v3704 = vpack.c.b16 %v2566, %v2564
        %v3705 = vpack.c.b16 %v2569, %v2567
        %v3706 = vpack.c.b16 %v2570, %v2568
        %v3707 = vpack.c.b16 %v2573, %v2571
        %v3708 = vpack.c.b16 %v2574, %v2572
        %v3709 = vpack.c.b16 %v2577, %v2575
        %v3710 = vpack.c.b16 %v2578, %v2576
        %v3711 = vpack.c.b16 %v2581, %v2579
        %v3712 = vpack.c.b16 %v2582, %v2580
        %v3713 = vpack.c.b16 %v2585, %v2583
        %v3714 = vpack.c.b16 %v2586, %v2584
        %v3715 = vpack.c.b16 %v2589, %v2587
        %v3716 = vpack.c.b16 %v2590, %v2588
        %v3717 = vpack.c.b16 %v2593, %v2591
        %v3718 = vpack.c.b16 %v2594, %v2592
        %v3719 = vpack.c.b16 %v2597, %v2595
        %v3720 = vpack.c.b16 %v2598, %v2596
        %v3721 = vpack.c.b16 %v2601, %v2599
        %v3722 = vpack.c.b16 %v2602, %v2600
        %v3723 = vpack.c.b16 %v2605, %v2603
        %v3724 = vpack.c.b16 %v2606, %v2604
        %v3725 = vpack.c.b16 %v2609, %v2607
        %v3726 = vpack.c.b16 %v2610, %v2608
        %v3727 = vpack.c.b16 %v2613, %v2611
        %v3728 = vpack.c.b16 %v2614, %v2612
        %v3729 = vpack.c.b16 %v2617, %v2615
        %v3730 = vpack.c.b16 %v2618, %v2616
        %v3731 = vpack.c.b16 %v2621, %v2619
        %v3732 = vpack.c.b16 %v2622, %v2620
        %v3733 = vpack.c.b16 %v2625, %v2623
        %v3734 = vpack.c.b16 %v2626, %v2624
        %v3735 = vpack.c.b16 %v2629, %v2627
        %v3736 = vpack.c.b16 %v2630, %v2628
        %v3737 = vpack.c.b16 %v2633, %v2631
        %v3738 = vpack.c.b16 %v2634, %v2632
        %v3739 = vpack.c.b16 %v2637, %v2635
        %v3740 = vpack.c.b16 %v2638, %v2636
        %v3741 = vpack.c.b16 %v2641, %v2639
        %v3742 = vpack.c.b16 %v2642, %v2640
        %v3743 = vpack.c.b16 %v2645, %v2643
        %v3744 = vpack.c.b16 %v2646, %v2644
        %v3745 = vpack.c.b16 %v2649, %v2647
        %v3746 = vpack.c.b16 %v2650, %v2648
        %v3747 = vpack.c.b16 %v2653, %v2651
        %v3748 = vpack.c.b16 %v2654, %v2652
        %v3749 = vpack.c.b16 %v2657, %v2655
        %v3750 = vpack.c.b16 %v2658, %v2656
        %v3751 = vpack.c.b16 %v2661, %v2659
        %v3752 = vpack.c.b16 %v2662, %v2660
        %v3753 = vpack.c.b16 %v2665, %v2663
        %v3754 = vpack.c.b16 %v2666, %v2664
        %v3755 = vpack.c.b16 %v2669, %v2667
        %v3756 = vpack.c.b16 %v2670, %v2668
        %v3757 = vpack.c.b16 %v2673, %v2671
        %v3758 = vpack.c.b16 %v2674, %v2672
        %v3759 = vpack.c.b16 %v2677, %v2675
        %v3760 = vpack.c.b16 %v2678, %v2676
        %v3761 = vpack.c.b16 %v2681, %v2679
        %v3762 = vpack.c.b16 %v2682, %v2680
        %v3763 = vpack.c.b16 %v2685, %v2683
        %v3764 = vpack.c.b16 %v2686, %v2684
        %v3765 = vpack.c.b16 %v2689, %v2687
        %v3766 = vpack.c.b16 %v2690, %v2688
        %v3767 = vpack.c.b16 %v2693, %v2691
        %v3768 = vpack.c.b16 %v2694, %v2692
        %v3769 = vpack.c.b16 %v2697, %v2695
        %v3770 = vpack.c.b16 %v2698, %v2696
        %v3771 = vpack.c.b16 %v2701, %v2699
        %v3772 = vpack.c.b16 %v2702, %v2700
        %v3773 = vpack.c.b16 %v2705, %v2703
        %v3774 = vpack.c.b16 %v2706, %v2704
        %v3775 = vpack.c.b16 %v2709, %v2707
        %v3776 = vpack.c.b16 %v2710, %v2708
        %v3777 = vpack.c.b16 %v2713, %v2711
        %v3778 = vpack.c.b16 %v2714, %v2712
        %v3779 = vpack.c.b16 %v2717, %v2715
        %v3780 = vpack.c.b16 %v2718, %v2716
        %v3781 = vpack.c.b16 %v2721, %v2719
        %v3782 = vpack.c.b16 %v2722, %v2720
        %v3783 = vpack.c.b16 %v2725, %v2723
        %v3784 = vpack.c.b16 %v2726, %v2724
        %v3785 = vpack.c.b16 %v2729, %v2727
        %v3786 = vpack.c.b16 %v2730, %v2728
        %v3787 = vpack.c.b16 %v2733, %v2731
        %v3788 = vpack.c.b16 %v2734, %v2732
        %v3789 = vpack.c.b16 %v2737, %v2735
        %v3790 = vpack.c.b16 %v2738, %v2736
        %v3791 = vpack.c.b16 %v2741, %v2739
        %v3792 = vpack.c.b16 %v2742, %v2740
        %v3793 = vpack.c.b16 %v2745, %v2743
        %v3794 = vpack.c.b16 %v2746, %v2744
        %v3795 = vpack.c.b16 %v2749, %v2747
        %v3796 = vpack.c.b16 %v2750, %v2748
        %v3797 = vpack.c.b16 %v2753, %v2751
        %v3798 = vpack.c.b16 %v2754, %v2752
        %v3799 = vpack.c.b16 %v2757, %v2755
        %v3800 = vpack.c.b16 %v2758, %v2756
        %v3801 = vpack.c.b16 %v2761, %v2759
        %v3802 = vpack.c.b16 %v2762, %v2760
        %v3803 = vpack.c.b16 %v2765, %v2763
        %v3804 = vpack.c.b16 %v2766, %v2764
        %v3805 = vpack.c.b16 %v2769, %v2767
        %v3806 = vpack.c.b16 %v2770, %v2768
        %v3807 = vpack.c.b16 %v2773, %v2771
        %v3808 = vpack.c.b16 %v2774, %v2772
        %v3809 = vpack.c.b16 %v2777, %v2775
        %v3810 = vpack.c.b16 %v2778, %v2776
        %v3811 = vpack.c.b16 %v2781, %v2779
        %v3812 = vpack.c.b16 %v2782, %v2780
        %v3813 = vpack.c.b16 %v2785, %v2783
        %v3814 = vpack.c.b16 %v2786, %v2784
        %v3815 = vpack.c.b16 %v2789, %v2787
        %v3816 = vpack.c.b16 %v2790, %v2788
        %v3817 = vpack.c.b16 %v2793, %v2791
        %v3818 = vpack.c.b16 %v2794, %v2792
        %v3819 = vpack.c.b16 %v2797, %v2795
        %v3820 = vpack.c.b16 %v2798, %v2796
        %v3821 = vpack.c.b16 %v2801, %v2799
        %v3822 = vpack.c.b16 %v2802, %v2800
        %v3823 = vpack.c.b16 %v2805, %v2803
        %v3824 = vpack.c.b16 %v2806, %v2804
        %v3825 = vpack.c.b16 %v2809, %v2807
        %v3826 = vpack.c.b16 %v2810, %v2808
        %v3827 = vpack.c.b16 %v2813, %v2811
        %v3828 = vpack.c.b16 %v2814, %v2812
        %v3829 = vpack.c.b16 %v2817, %v2815
        %v3830 = vpack.c.b16 %v2818, %v2816
        %v3831 = vpack.c.b16 %v2821, %v2819
        %v3832 = vpack.c.b16 %v2822, %v2820
        %v3833 = vpack.c.b16 %v2825, %v2823
        %v3834 = vpack.c.b16 %v2826, %v2824
        %v3835 = vpack.c.b16 %v2829, %v2827
        %v3836 = vpack.c.b16 %v2830, %v2828
        %v3837 = vpack.c.b16 %v2833, %v2831
        %v3838 = vpack.c.b16 %v2834, %v2832
        %v3839 = vpack.c.b16 %v2837, %v2835
        %v3840 = vpack.c.b16 %v2838, %v2836
        %v3841 = vpack.c.b16 %v2841, %v2839
        %v3842 = vpack.c.b16 %v2842, %v2840
        %v3843 = vpack.c.b16 %v2845, %v2843
        %v3844 = vpack.c.b16 %v2846, %v2844
        %v3845 = vpack.c.b16 %v2849, %v2847
        %v3846 = vpack.c.b16 %v2850, %v2848
        %v3847 = vpack.c.b16 %v2853, %v2851
        %v3848 = vpack.c.b16 %v2854, %v2852
        %v3849 = vpack.c.b16 %v2857, %v2855
        %v3850 = vpack.c.b16 %v2858, %v2856
        %v3851 = vpack.c.b16 %v2861, %v2859
        %v3852 = vpack.c.b16 %v2862, %v2860
        %v3853 = vpack.c.b16 %v2865, %v2863
        %v3854 = vpack.c.b16 %v2866, %v2864
        %v3855 = vpack.c.b16 %v2869, %v2867
        %v3856 = vpack.c.b16 %v2870, %v2868
        %v3857 = vpack.c.b16 %v2873, %v2871
        %v3858 = vpack.c.b16 %v2874, %v2872
        %v3859 = vpack.c.b16 %v2877, %v2875
        %v3860 = vpack.c.b16 %v2878, %v2876
        %v3861 = vpack.c.b16 %v2881, %v2879
        %v3862 = vpack.c.b16 %v2882, %v2880
        %v3863 = vpack.c.b16 %v2885, %v2883
        %v3864 = vpack.c.b16 %v2886, %v2884
        %v3865 = vpack.c.b16 %v2889, %v2887
        %v3866 = vpack.c.b16 %v2890, %v2888
        %v3867 = vpack.c.b16 %v2893, %v2891
        %v3868 = vpack.c.b16 %v2894, %v2892
        %v3869 = vpack.c.b16 %v2897, %v2895
        %v3870 = vpack.c.b16 %v2898, %v2896
        %v3871 = vpack.c.b16 %v2901, %v2899
        %v3872 = vpack.c.b16 %v2902, %v2900
        %v3873 = vpack.c.b16 %v2905, %v2903
        %v3874 = vpack.c.b16 %v2906, %v2904
        %v3875 = vpack.c.b16 %v2909, %v2907
        %v3876 = vpack.c.b16 %v2910, %v2908
        %v3877 = vpack.c.b16 %v2913, %v2911
        %v3878 = vpack.c.b16 %v2914, %v2912
        %v3879 = vpack.c.b16 %v2917, %v2915
        %v3880 = vpack.c.b16 %v2918, %v2916
        %v3881 = vpack.c.b16 %v2921, %v2919
        %v3882 = vpack.c.b16 %v2922, %v2920
        %v3883 = vpack.c.b16 %v2925, %v2923
        %v3884 = vpack.c.b16 %v2926, %v2924
        %v3885 = vpack.c.b16 %v2929, %v2927
        %v3886 = vpack.c.b16 %v2930, %v2928
        %v3887 = vpack.c.b16 %v2933, %v2931
        %v3888 = vpack.c.b16 %v2934, %v2932
        %v3889 = vpack.c.b16 %v2937, %v2935
        %v3890 = vpack.c.b16 %v2938, %v2936
        %v3891 = vpack.c.b16 %v2941, %v2939
        %v3892 = vpack.c.b16 %v2942, %v2940
        %v3893 = vpack.c.b16 %v2945, %v2943
        %v3894 = vpack.c.b16 %v2946, %v2944
        %v3895 = vpack.c.b16 %v2949, %v2947
        %v3896 = vpack.c.b16 %v2950, %v2948
        %v3897 = vpack.c.b16 %v2953, %v2951
        %v3898 = vpack.c.b16 %v2954, %v2952
        %v3899 = vpack.c.b16 %v2957, %v2955
        %v3900 = vpack.c.b16 %v2958, %v2956
        %v3901 = vpack.c.b16 %v2961, %v2959
        %v3902 = vpack.c.b16 %v2962, %v2960
        %v3903 = vpack.c.b16 %v2965, %v2963
        %v3904 = vpack.c.b16 %v2966, %v2964
        %v3905 = vpack.c.b16 %v2969, %v2967
        %v3906 = vpack.c.b16 %v2970, %v2968
        %v3907 = vpack.c.b16 %v2973, %v2971
        %v3908 = vpack.c.b16 %v2974, %v2972
        %v3909 = vpack.c.b16 %v2977, %v2975
        %v3910 = vpack.c.b16 %v2978, %v2976
        %v3911 = vpack.c.b16 %v2981, %v2979
        %v3912 = vpack.c.b16 %v2982, %v2980
        %v3913 = vpack.c.b16 %v2985, %v2983
        %v3914 = vpack.c.b16 %v2986, %v2984
        %v3915 = vpack.c.b16 %v2989, %v2987
        %v3916 = vpack.c.b16 %v2990, %v2988
        %v3917 = vpack.c.b16 %v2993, %v2991
        %v3918 = vpack.c.b16 %v2994, %v2992
        %v3919 = vpack.c.b16 %v2997, %v2995
        %v3920 = vpack.c.b16 %v2998, %v2996
        %v3921 = vpack.c.b16 %v3001, %v2999
        %v3922 = vpack.c.b16 %v3002, %v3000
        %v3923 = vpack.c.b16 %v3005, %v3003
        %v3924 = vpack.c.b16 %v3006, %v3004
        %v3925 = vpack.c.b16 %v3009, %v3007
        %v3926 = vpack.c.b16 %v3010, %v3008
        %v3927 = vpack.c.b16 %v3013, %v3011
        %v3928 = vpack.c.b16 %v3014, %v3012
        %v3929 = vpack.c.b16 %v3017, %v3015
        %v3930 = vpack.c.b16 %v3018, %v3016
        %v3931 = vpack.c.b16 %v3021, %v3019
        %v3932 = vpack.c.b16 %v3022, %v3020
        %v3933 = vpack.c.b16 %v3025, %v3023
        %v3934 = vpack.c.b16 %v3026, %v3024
        %v3935 = vpack.c.b16 %v3029, %v3027
        %v3936 = vpack.c.b16 %v3030, %v3028
        %v3937 = vpack.c.b16 %v3033, %v3031
        %v3938 = vpack.c.b16 %v3034, %v3032
        %v3939 = vpack.c.b16 %v3037, %v3035
        %v3940 = vpack.c.b16 %v3038, %v3036
        %v3941 = vpack.c.b16 %v3041, %v3039
        %v3942 = vpack.c.b16 %v3042, %v3040
        %v3943 = vpack.c.b16 %v3045, %v3043
        %v3944 = vpack.c.b16 %v3046, %v3044
        %v3945 = vpack.c.b16 %v3049, %v3047
        %v3946 = vpack.c.b16 %v3050, %v3048
        %v3947 = vpack.c.b16 %v3053, %v3051
        %v3948 = vpack.c.b16 %v3054, %v3052
        %v3949 = vpack.c.b16 %v3057, %v3055
        %v3950 = vpack.c.b16 %v3058, %v3056
        %v3951 = vpack.c.b16 %v3061, %v3059
        %v3952 = vpack.c.b16 %v3062, %v3060
        %v3953 = vpack.c.b16 %v3065, %v3063
        %v3954 = vpack.c.b16 %v3066, %v3064
        %v3955 = vpack.c.b16 %v3069, %v3067
        %v3956 = vpack.c.b16 %v3070, %v3068
        %v3957 = vpack.c.b16 %v3073, %v3071
        %v3958 = vpack.c.b16 %v3074, %v3072
        %v3959 = vpack.c.b16 %v3077, %v3075
        %v3960 = vpack.c.b16 %v3078, %v3076
        %v3961 = vpack.c.b16 %v3081, %v3079
        %v3962 = vpack.c.b16 %v3082, %v3080
        %v3963 = vpack.c.b16 %v3085, %v3083
        %v3964 = vpack.c.b16 %v3086, %v3084
        %v3965 = vpack.c.b16 %v3089, %v3087
        %v3966 = vpack.c.b16 %v3090, %v3088
        %v3967 = vpack.c.b16 %v3093, %v3091
        %v3968 = vpack.c.b16 %v3094, %v3092
        %v3969 = vpack.c.b16 %v3097, %v3095
        %v3970 = vpack.c.b16 %v3098, %v3096
        %v3971 = vpack.c.b16 %v3101, %v3099
        %v3972 = vpack.c.b16 %v3102, %v3100
        %v3973 = vpack.c.b16 %v3105, %v3103
        %v3974 = vpack.c.b16 %v3106, %v3104
        %v3975 = vpack.c.b16 %v3109, %v3107
        %v3976 = vpack.c.b16 %v3110, %v3108
        %v3977 = vpack.c.b16 %v3113, %v3111
        %v3978 = vpack.c.b16 %v3114, %v3112
        %v3979 = vpack.c.b16 %v3117, %v3115
        %v3980 = vpack.c.b16 %v3118, %v3116
        %v3981 = vpack.c.b16 %v3121, %v3119
        %v3982 = vpack.c.b16 %v3122, %v3120
        %v3983 = vpack.c.b16 %v3125, %v3123
        %v3984 = vpack.c.b16 %v3126, %v3124
        %v3985 = vpack.c.b16 %v3129, %v3127
        %v3986 = vpack.c.b16 %v3130, %v3128
        %v3987 = vpack.c.b16 %v3133, %v3131
        %v3988 = vpack.c.b16 %v3134, %v3132
        %v3989 = vpack.c.b16 %v3137, %v3135
        %v3990 = vpack.c.b16 %v3138, %v3136
        %v3991 = vpack.c.b16 %v3141, %v3139
        %v3992 = vpack.c.b16 %v3142, %v3140
        %v3993 = vpack.c.b16 %v3145, %v3143
        %v3994 = vpack.c.b16 %v3146, %v3144
        %v3995 = vpack.c.b16 %v3149, %v3147
        %v3996 = vpack.c.b16 %v3150, %v3148
        %v3997 = vpack.c.b16 %v3153, %v3151
        %v3998 = vpack.c.b16 %v3154, %v3152
        %v3999 = vpack.c.b16 %v3157, %v3155
        %v4000 = vpack.c.b16 %v3158, %v3156
        %v4001 = vpack.c.b16 %v3161, %v3159
        %v4002 = vpack.c.b16 %v3162, %v3160
        %v4003 = vpack.c.b16 %v3165, %v3163
        %v4004 = vpack.c.b16 %v3166, %v3164
        %v4005 = vpack.c.b16 %v3169, %v3167
        %v4006 = vpack.c.b16 %v3170, %v3168
        %v4007 = vpack.c.b16 %v3173, %v3171
        %v4008 = vpack.c.b16 %v3174, %v3172
        %v4009 = vpack.c.b16 %v3177, %v3175
        %v4010 = vpack.c.b16 %v3178, %v3176
        %v4011 = vpack.c.b16 %v3181, %v3179
        %v4012 = vpack.c.b16 %v3182, %v3180
        %v4013 = vpack.c.b16 %v3185, %v3183
        %v4014 = vpack.c.b16 %v3186, %v3184
        %v4015 = vpack.c.b16 %v3189, %v3187
        %v4016 = vpack.c.b16 %v3190, %v3188
        %v4017 = vpack.c.b16 %v3193, %v3191
        %v4018 = vpack.c.b16 %v3194, %v3192
        %v4019 = vpack.c.b16 %v3197, %v3195
        %v4020 = vpack.c.b16 %v3198, %v3196
        %v4021 = vpack.c.b16 %v3201, %v3199
        %v4022 = vpack.c.b16 %v3202, %v3200
        %v4023 = vpack.c.b16 %v3205, %v3203
        %v4024 = vpack.c.b16 %v3206, %v3204
        %v4025 = vpack.c.b16 %v3209, %v3207
        %v4026 = vpack.c.b16 %v3210, %v3208
        %v4027 = vpack.c.b16 %v3213, %v3211
        %v4028 = vpack.c.b16 %v3214, %v3212
        %v4029 = vpack.c.b16 %v3217, %v3215
        %v4030 = vpack.c.b16 %v3218, %v3216
        %v4031 = vpack.c.b16 %v3221, %v3219
        %v4032 = vpack.c.b16 %v3222, %v3220
        %v4033 = vpack.c.b16 %v3225, %v3223
        %v4034 = vpack.c.b16 %v3226, %v3224
        %v4035 = vpack.c.b16 %v3229, %v3227
        %v4036 = vpack.c.b16 %v3230, %v3228
        %v4037 = vpack.c.b16 %v3233, %v3231
        %v4038 = vpack.c.b16 %v3234, %v3232
        %v4039 = vpack.c.b16 %v3237, %v3235
        %v4040 = vpack.c.b16 %v3238, %v3236
        %v4041 = vpack.c.b16 %v3241, %v3239
        %v4042 = vpack.c.b16 %v3242, %v3240
        %v4043 = vpack.c.b16 %v3245, %v3243
        %v4044 = vpack.c.b16 %v3246, %v3244
        %v4045 = vpack.c.b16 %v3249, %v3247
        %v4046 = vpack.c.b16 %v3250, %v3248
        %v4047 = vpack.c.b16 %v3253, %v3251
        %v4048 = vpack.c.b16 %v3254, %v3252
        %v4049 = vpack.c.b16 %v3257, %v3255
        %v4050 = vpack.c.b16 %v3258, %v3256
        %v4051 = vpack.c.b16 %v3261, %v3259
        %v4052 = vpack.c.b16 %v3262, %v3260
        %v4053 = vpack.c.b16 %v3265, %v3263
        %v4054 = vpack.c.b16 %v3266, %v3264
        %v4055 = vpack.c.b16 %v3269, %v3267
        %v4056 = vpack.c.b16 %v3270, %v3268
        %v4057 = vpack.c.b16 %v3273, %v3271
        %v4058 = vpack.c.b16 %v3274, %v3272
        %v4059 = vpack.c.b16 %v3277, %v3275
        %v4060 = vpack.c.b16 %v3278, %v3276
        %v4061 = vpack.c.b16 %v3281, %v3279
        %v4062 = vpack.c.b16 %v3282, %v3280
        %v4063 = vpack.c.b16 %v3285, %v3283
        %v4064 = vpack.c.b16 %v3286, %v3284
        %v4065 = vpack.c.b16 %v3289, %v3287
        %v4066 = vpack.c.b16 %v3290, %v3288
        %v4067 = vpack.c.b16 %v3293, %v3291
        %v4068 = vpack.c.b16 %v3294, %v3292
        %v4069 = vpack.c.b16 %v3297, %v3295
        %v4070 = vpack.c.b16 %v3298, %v3296
        %v4071 = vpack.c.b16 %v3301, %v3299
        %v4072 = vpack.c.b16 %v3302, %v3300
        %v4073 = vpack.c.b16 %v3305, %v3303
        %v4074 = vpack.c.b16 %v3306, %v3304
        %v4075 = vpack.c.b16 %v3309, %v3307
        %v4076 = vpack.c.b16 %v3310, %v3308
        %v4077 = vpack.c.b16 %v3313, %v3311
        %v4078 = vpack.c.b16 %v3314, %v3312
        %v4079 = vpack.c.b16 %v3317, %v3315
        %v4080 = vpack.c.b16 %v3318, %v3316
        %v4081 = vpack.c.b16 %v3321, %v3319
        %v4082 = vpack.c.b16 %v3322, %v3320
        %v4083 = vpack.c.b16 %v3325, %v3323
        %v4084 = vpack.c.b16 %v3326, %v3324
        %v4085 = vpack.c.b16 %v3329, %v3327
        %v4086 = vpack.c.b16 %v3330, %v3328
        %v4087 = vpack.c.b16 %v3333, %v3331
        %v4088 = vpack.c.b16 %v3334, %v3332
        %v4089 = vpack.c.b16 %v3337, %v3335
        %v4090 = vpack.c.b16 %v3338, %v3336
        %v4091 = vpack.c.b16 %v3341, %v3339
        %v4092 = vpack.c.b16 %v3342, %v3340
        %v4093 = vpack.c.b16 %v3345, %v3343
        %v4094 = vpack.c.b16 %v3346, %v3344
        %v4095 = vpack.c.b16 %v3349, %v3347
        %v4096 = vpack.c.b16 %v3350, %v3348
        %v4097 = vpack.c.b16 %v3353, %v3351
        %v4098 = vpack.c.b16 %v3354, %v3352
        %v4099 = vpack.c.b16 %v3357, %v3355
        %v4100 = vpack.c.b16 %v3358, %v3356
        %v4101 = vpack.c.b16 %v3361, %v3359
        %v4102 = vpack.c.b16 %v3362, %v3360
        %v4103 = vpack.c.b16 %v3365, %v3363
        %v4104 = vpack.c.b16 %v3366, %v3364
        %v4105 = vpack.c.b16 %v3369, %v3367
        %v4106 = vpack.c.b16 %v3370, %v3368
        %v4107 = vpack.c.b16 %v3373, %v3371
        %v4108 = vpack.c.b16 %v3374, %v3372
        %v4109 = vpack.c.b16 %v3377, %v3375
        %v4110 = vpack.c.b16 %v3378, %v3376
        %v4111 = vpack.c.b16 %v3381, %v3379
        %v4112 = vpack.c.b16 %v3382, %v3380
        %v4113 = vpack.c.b16 %v3385, %v3383
        %v4114 = vpack.c.b16 %v3386, %v3384
        %v4115 = vpack.c.b16 %v3389, %v3387
        %v4116 = vpack.c.b16 %v3390, %v3388
        %v4117 = vpack.c.b16 %v3393, %v3391
        %v4118 = vpack.c.b16 %v3394, %v3392
        %v4119 = vpack.c.b16 %v3397, %v3395
        %v4120 = vpack.c.b16 %v3398, %v3396
        %v4121 = vpack.c.b16 %v3401, %v3399
        %v4122 = vpack.c.b16 %v3402, %v3400
        %v4123 = vpack.c.b16 %v3405, %v3403
        %v4124 = vpack.c.b16 %v3406, %v3404
        %v4125 = vpack.c.b16 %v3409, %v3407
        %v4126 = vpack.c.b16 %v3410, %v3408
        %v4127 = vpack.c.b16 %v3413, %v3411
        %v4128 = vpack.c.b16 %v3414, %v3412
        %v4129 = vpack.c.b16 %v3417, %v3415
        %v4130 = vpack.c.b16 %v3418, %v3416
        %v4131 = vpack.c.b16 %v3421, %v3419
        %v4132 = vpack.c.b16 %v3422, %v3420
        %v4133 = vpack.c.b16 %v3425, %v3423
        %v4134 = vpack.c.b16 %v3426, %v3424
        %v4135 = vpack.c.b16 %v3429, %v3427
        %v4136 = vpack.c.b16 %v3430, %v3428
        %v4137 = vpack.c.b16 %v3433, %v3431
        %v4138 = vpack.c.b16 %v3434, %v3432
        %4843 = vmatprep.subr.bf16.mxu0 %v3436
        %4844 = vmatpush1.bf16.msra.mxu0 %v3435
        %4845 = vmatprep.subr.bf16.mxu0 %v3438
        %4846 = vmatpush1.bf16.msra.mxu0 %v3437
        %4847 = vmatprep.subr.bf16.mxu0 %v3440
        %4848 = vmatpush1.bf16.msra.mxu0 %v3439
        %4849 = vmatprep.subr.bf16.mxu0 %v3442
        %4850 = vmatpush1.bf16.msra.mxu0 %v3441
        %4851 = vmatprep.subr.bf16.mxu0 %v3444
        %4852 = vmatpush1.bf16.msra.mxu0 %v3443
        %4853 = vmatprep.subr.bf16.mxu0 %v3446
        %4854 = vmatpush1.bf16.msra.mxu0 %v3445
        %4855 = vmatprep.subr.bf16.mxu0 %v3448
        %4856 = vmatpush1.bf16.msra.mxu0 %v3447
        %4857 = vmatprep.subr.bf16.mxu0 %v3450
        %4858 = vmatpush1.bf16.msra.mxu0 %v3449
        %4859 = vmatprep.subr.bf16.mxu0 %v3452
        %4860 = vmatpush1.bf16.msra.mxu0 %v3451
        %4861 = vmatprep.subr.bf16.mxu0 %v3454
        %4862 = vmatpush1.bf16.msra.mxu0 %v3453
        %4863 = vmatprep.subr.bf16.mxu0 %v3456
        %4864 = vmatpush1.bf16.msra.mxu0 %v3455
        %4865 = vmatprep.subr.bf16.mxu0 %v3458
        %4866 = vmatpush1.bf16.msra.mxu0 %v3457
        %4867 = vmatprep.subr.bf16.mxu0 %v3460
        %4868 = vmatpush1.bf16.msra.mxu0 %v3459
        %4869 = vmatprep.subr.bf16.mxu0 %v3462
        %4870 = vmatpush1.bf16.msra.mxu0 %v3461
        %4871 = vmatprep.subr.bf16.mxu0 %v3464
        %4872 = vmatpush1.bf16.msra.mxu0 %v3463
        %4873 = vmatprep.subr.bf16.mxu0 %v3466
        %4874 = vmatpush1.bf16.msra.mxu0 %v3465
        %4875 = vmatprep.mubr.bf16.mxu0 %v1047
        %4876 = vmatmul.mubr.bf16.gmra.mrb[0].mxu0 %v1033
        %v4877 = vpop.f32.mrb[0].mxu0
        %v4878 = vadd.f32 0.0, %v4877
        %v4879 = vpop.f32.mrb[0].mxu0
        %v4880 = vadd.f32 0.0, %v4879
        %v4881 = vpop.f32.mrb[0].mxu0
        %v4882 = vpop.f32.mrb[0].mxu0
        %4883 = vdwg.mxu0
        %4884 = vmatprep.subr.bf16.mxu0 %v3468
        %4885 = vmatpush1.bf16.msra.mxu0 %v3467
        %4886 = vmatprep.subr.bf16.mxu0 %v3470
        %4887 = vmatpush1.bf16.msra.mxu0 %v3469
        %4888 = vmatprep.subr.bf16.mxu0 %v3472
        %4889 = vmatpush1.bf16.msra.mxu0 %v3471
        %4890 = vmatprep.subr.bf16.mxu0 %v3474
        %4891 = vmatpush1.bf16.msra.mxu0 %v3473
        %4892 = vmatprep.subr.bf16.mxu0 %v3476
        %4893 = vmatpush1.bf16.msra.mxu0 %v3475
        %4894 = vmatprep.subr.bf16.mxu0 %v3478
        %4895 = vmatpush1.bf16.msra.mxu0 %v3477
        %4896 = vmatprep.subr.bf16.mxu0 %v3480
        %4897 = vmatpush1.bf16.msra.mxu0 %v3479
        %4898 = vmatprep.subr.bf16.mxu0 %v3482
        %4899 = vmatpush1.bf16.msra.mxu0 %v3481
        %4900 = vmatprep.subr.bf16.mxu0 %v3484
        %4901 = vmatpush1.bf16.msra.mxu0 %v3483
        %4902 = vmatprep.subr.bf16.mxu0 %v3486
        %4903 = vmatpush1.bf16.msra.mxu0 %v3485
        %4904 = vmatprep.subr.bf16.mxu0 %v3488
        %4905 = vmatpush1.bf16.msra.mxu0 %v3487
        %4906 = vmatprep.subr.bf16.mxu0 %v3490
        %4907 = vmatpush1.bf16.msra.mxu0 %v3489
        %4908 = vmatprep.subr.bf16.mxu0 %v3492
        %4909 = vmatpush1.bf16.msra.mxu0 %v3491
        %4910 = vmatprep.subr.bf16.mxu0 %v3494
        %4911 = vmatpush1.bf16.msra.mxu0 %v3493
        %4912 = vmatprep.subr.bf16.mxu0 %v3496
        %4913 = vmatpush1.bf16.msra.mxu0 %v3495
        %4914 = vmatprep.subr.bf16.mxu0 %v3498
        %4915 = vmatpush1.bf16.msra.mxu0 %v3497
        %4916 = vmatprep.mubr.bf16.mxu0 %v1057
        %4917 = vmatmul.mubr.bf16.gmra.mrb[0].mxu0 %v1055
        %v4918 = vpop.f32.mrb[0].mxu0
        %v4919 = vadd.f32 %v4878, %v4918
        %v4920 = vpop.f32.mrb[0].mxu0
        %v4921 = vadd.f32 %v4880, %v4920
        %v4922 = vpop.f32.mrb[0].mxu0
        %v4923 = vpop.f32.mrb[0].mxu0
        %4924 = vdwg.mxu0
        %4925 = vmatprep.subr.bf16.mxu0 %v3500
        %4926 = vmatpush1.bf16.msra.mxu0 %v3499
        %4927 = vmatprep.subr.bf16.mxu0 %v3502
        %4928 = vmatpush1.bf16.msra.mxu0 %v3501
        %4929 = vmatprep.subr.bf16.mxu0 %v3504
        %4930 = vmatpush1.bf16.msra.mxu0 %v3503
        %4931 = vmatprep.subr.bf16.mxu0 %v3506
        %4932 = vmatpush1.bf16.msra.mxu0 %v3505
        %4933 = vmatprep.subr.bf16.mxu0 %v3508
        %4934 = vmatpush1.bf16.msra.mxu0 %v3507
        %4935 = vmatprep.subr.bf16.mxu0 %v3510
        %4936 = vmatpush1.bf16.msra.mxu0 %v3509
        %4937 = vmatprep.subr.bf16.mxu0 %v3512
        %4938 = vmatpush1.bf16.msra.mxu0 %v3511
        %4939 = vmatprep.subr.bf16.mxu0 %v3514
        %4940 = vmatpush1.bf16.msra.mxu0 %v3513
        %4941 = vmatprep.subr.bf16.mxu0 %v3516
        %4942 = vmatpush1.bf16.msra.mxu0 %v3515
        %4943 = vmatprep.subr.bf16.mxu0 %v3518
        %4944 = vmatpush1.bf16.msra.mxu0 %v3517
        %4945 = vmatprep.subr.bf16.mxu0 %v3520
        %4946 = vmatpush1.bf16.msra.mxu0 %v3519
        %4947 = vmatprep.subr.bf16.mxu0 %v3522
        %4948 = vmatpush1.bf16.msra.mxu0 %v3521
        %4949 = vmatprep.subr.bf16.mxu0 %v3524
        %4950 = vmatpush1.bf16.msra.mxu0 %v3523
        %4951 = vmatprep.subr.bf16.mxu0 %v3526
        %4952 = vmatpush1.bf16.msra.mxu0 %v3525
        %4953 = vmatprep.subr.bf16.mxu0 %v3528
        %4954 = vmatpush1.bf16.msra.mxu0 %v3527
        %4955 = vmatprep.subr.bf16.mxu0 %v3530
        %4956 = vmatpush1.bf16.msra.mxu0 %v3529
        %4957 = vmatprep.mubr.bf16.mxu0 %v1054
        %4958 = vmatmul.mubr.bf16.gmra.mrb[0].mxu0 %v1040
        %v4959 = vpop.f32.mrb[0].mxu0
        %v4960 = vadd.f32 %v4919, %v4959
        %v4961 = vpop.f32.mrb[0].mxu0
        %v4962 = vadd.f32 %v4921, %v4961
        %v4963 = vpop.f32.mrb[0].mxu0
        %v4964 = vpop.f32.mrb[0].mxu0
        %4965 = vdwg.mxu0
        %4966 = vmatprep.subr.bf16.mxu0 %v3532
        %4967 = vmatpush1.bf16.msra.mxu0 %v3531
        %4968 = vmatprep.subr.bf16.mxu0 %v3534
        %4969 = vmatpush1.bf16.msra.mxu0 %v3533
        %4970 = vmatprep.subr.bf16.mxu0 %v3536
        %4971 = vmatpush1.bf16.msra.mxu0 %v3535
        %4972 = vmatprep.subr.bf16.mxu0 %v3538
        %4973 = vmatpush1.bf16.msra.mxu0 %v3537
        %4974 = vmatprep.subr.bf16.mxu0 %v3540
        %4975 = vmatpush1.bf16.msra.mxu0 %v3539
        %4976 = vmatprep.subr.bf16.mxu0 %v3542
        %4977 = vmatpush1.bf16.msra.mxu0 %v3541
        %4978 = vmatprep.subr.bf16.mxu0 %v3544
        %4979 = vmatpush1.bf16.msra.mxu0 %v3543
        %4980 = vmatprep.subr.bf16.mxu0 %v3546
        %4981 = vmatpush1.bf16.msra.mxu0 %v3545
        %4982 = vmatprep.subr.bf16.mxu0 %v3548
        %4983 = vmatpush1.bf16.msra.mxu0 %v3547
        %4984 = vmatprep.subr.bf16.mxu0 %v3550
        %4985 = vmatpush1.bf16.msra.mxu0 %v3549
        %4986 = vmatprep.subr.bf16.mxu0 %v3552
        %4987 = vmatpush1.bf16.msra.mxu0 %v3551
        %4988 = vmatprep.subr.bf16.mxu0 %v3554
        %4989 = vmatpush1.bf16.msra.mxu0 %v3553
        %4990 = vmatprep.subr.bf16.mxu0 %v3556
        %4991 = vmatpush1.bf16.msra.mxu0 %v3555
        %4992 = vmatprep.subr.bf16.mxu0 %v3558
        %4993 = vmatpush1.bf16.msra.mxu0 %v3557
        %4994 = vmatprep.subr.bf16.mxu0 %v3560
        %4995 = vmatpush1.bf16.msra.mxu0 %v3559
        %4996 = vmatprep.subr.bf16.mxu0 %v3562
        %4997 = vmatpush1.bf16.msra.mxu0 %v3561
        %4998 = vmatprep.mubr.bf16.mxu0 %v1058
        %4999 = vmatmul.mubr.bf16.gmra.mrb[0].mxu0 %v1056
        %v5000 = vpop.f32.mrb[0].mxu0
        %v5001 = vadd.f32 %v4960, %v5000
        %v5002 = vpop.f32.mrb[0].mxu0
        %v5003 = vadd.f32 %v4962, %v5002
        %v5004 = vpop.f32.mrb[0].mxu0
        %v5005 = vpop.f32.mrb[0].mxu0
        %5006 = vdwg.mxu0
        %5007 = vmatprep.subr.bf16.mxu0 %v3564
        %5008 = vmatpush1.bf16.msra.mxu0 %v3563
        %5009 = vmatprep.subr.bf16.mxu0 %v3566
        %5010 = vmatpush1.bf16.msra.mxu0 %v3565
        %5011 = vmatprep.subr.bf16.mxu0 %v3568
        %5012 = vmatpush1.bf16.msra.mxu0 %v3567
        %5013 = vmatprep.subr.bf16.mxu0 %v3570
        %5014 = vmatpush1.bf16.msra.mxu0 %v3569
        %5015 = vmatprep.subr.bf16.mxu0 %v3572
        %5016 = vmatpush1.bf16.msra.mxu0 %v3571
        %5017 = vmatprep.subr.bf16.mxu0 %v3574
        %5018 = vmatpush1.bf16.msra.mxu0 %v3573
        %5019 = vmatprep.subr.bf16.mxu0 %v3576
        %5020 = vmatpush1.bf16.msra.mxu0 %v3575
        %5021 = vmatprep.subr.bf16.mxu0 %v3578
        %5022 = vmatpush1.bf16.msra.mxu0 %v3577
        %5023 = vmatprep.subr.bf16.mxu0 %v3580
        %5024 = vmatpush1.bf16.msra.mxu0 %v3579
        %5025 = vmatprep.subr.bf16.mxu0 %v3582
        %5026 = vmatpush1.bf16.msra.mxu0 %v3581
        %5027 = vmatprep.subr.bf16.mxu0 %v3584
        %5028 = vmatpush1.bf16.msra.mxu0 %v3583
        %5029 = vmatprep.subr.bf16.mxu0 %v3586
        %5030 = vmatpush1.bf16.msra.mxu0 %v3585
        %5031 = vmatprep.subr.bf16.mxu0 %v3588
        %5032 = vmatpush1.bf16.msra.mxu0 %v3587
        %5033 = vmatprep.subr.bf16.mxu0 %v3590
        %5034 = vmatpush1.bf16.msra.mxu0 %v3589
        %5035 = vmatprep.subr.bf16.mxu0 %v3592
        %5036 = vmatpush1.bf16.msra.mxu0 %v3591
        %5037 = vmatprep.subr.bf16.mxu0 %v3594
        %5038 = vmatpush1.bf16.msra.mxu0 %v3593
        %5039 = vmatprep.mubr.bf16.mxu0 %v1096
        %5040 = vmatmul.mubr.bf16.gmra.mrb[0].mxu0 %v1082
        %v5041 = vpop.f32.mrb[0].mxu0
        %v5042 = vadd.f32 %v5001, %v5041
        %v5043 = vpop.f32.mrb[0].mxu0
        %v5044 = vadd.f32 %v5003, %v5043
        %v5045 = vpop.f32.mrb[0].mxu0
        %v5046 = vpop.f32.mrb[0].mxu0
        %5047 = vdwg.mxu0
        %5048 = vmatprep.subr.bf16.mxu0 %v3596
        %5049 = vmatpush1.bf16.msra.mxu0 %v3595
        %5050 = vmatprep.subr.bf16.mxu0 %v3598
        %5051 = vmatpush1.bf16.msra.mxu0 %v3597
        %5052 = vmatprep.subr.bf16.mxu0 %v3600
        %5053 = vmatpush1.bf16.msra.mxu0 %v3599
        %5054 = vmatprep.subr.bf16.mxu0 %v3602
        %5055 = vmatpush1.bf16.msra.mxu0 %v3601
        %5056 = vmatprep.subr.bf16.mxu0 %v3604
        %5057 = vmatpush1.bf16.msra.mxu0 %v3603
        %5058 = vmatprep.subr.bf16.mxu0 %v3606
        %5059 = vmatpush1.bf16.msra.mxu0 %v3605
        %5060 = vmatprep.subr.bf16.mxu0 %v3608
        %5061 = vmatpush1.bf16.msra.mxu0 %v3607
        %5062 = vmatprep.subr.bf16.mxu0 %v3610
        %5063 = vmatpush1.bf16.msra.mxu0 %v3609
        %5064 = vmatprep.subr.bf16.mxu0 %v3612
        %5065 = vmatpush1.bf16.msra.mxu0 %v3611
        %5066 = vmatprep.subr.bf16.mxu0 %v3614
        %5067 = vmatpush1.bf16.msra.mxu0 %v3613
        %5068 = vmatprep.subr.bf16.mxu0 %v3616
        %5069 = vmatpush1.bf16.msra.mxu0 %v3615
        %5070 = vmatprep.subr.bf16.mxu0 %v3618
        %5071 = vmatpush1.bf16.msra.mxu0 %v3617
        %5072 = vmatprep.subr.bf16.mxu0 %v3620
        %5073 = vmatpush1.bf16.msra.mxu0 %v3619
        %5074 = vmatprep.subr.bf16.mxu0 %v3622
        %5075 = vmatpush1.bf16.msra.mxu0 %v3621
        %5076 = vmatprep.subr.bf16.mxu0 %v3624
        %5077 = vmatpush1.bf16.msra.mxu0 %v3623
        %5078 = vmatprep.subr.bf16.mxu0 %v3626
        %5079 = vmatpush1.bf16.msra.mxu0 %v3625
        %5080 = vmatprep.mubr.bf16.mxu0 %v1106
        %5081 = vmatmul.mubr.bf16.gmra.mrb[0].mxu0 %v1104
        %v5082 = vpop.f32.mrb[0].mxu0
        %v5083 = vadd.f32 %v5042, %v5082
        %v5084 = vpop.f32.mrb[0].mxu0
        %v5085 = vadd.f32 %v5044, %v5084
        %v5086 = vpop.f32.mrb[0].mxu0
        %v5087 = vpop.f32.mrb[0].mxu0
        %5088 = vdwg.mxu0
        %5089 = vmatprep.subr.bf16.mxu0 %v3628
        %5090 = vmatpush1.bf16.msra.mxu0 %v3627
        %5091 = vmatprep.subr.bf16.mxu0 %v3630
        %5092 = vmatpush1.bf16.msra.mxu0 %v3629
        %5093 = vmatprep.subr.bf16.mxu0 %v3632
        %5094 = vmatpush1.bf16.msra.mxu0 %v3631
        %5095 = vmatprep.subr.bf16.mxu0 %v3634
        %5096 = vmatpush1.bf16.msra.mxu0 %v3633
        %5097 = vmatprep.subr.bf16.mxu0 %v3636
        %5098 = vmatpush1.bf16.msra.mxu0 %v3635
        %5099 = vmatprep.subr.bf16.mxu0 %v3638
        %5100 = vmatpush1.bf16.msra.mxu0 %v3637
        %5101 = vmatprep.subr.bf16.mxu0 %v3640
        %5102 = vmatpush1.bf16.msra.mxu0 %v3639
        %5103 = vmatprep.subr.bf16.mxu0 %v3642
        %5104 = vmatpush1.bf16.msra.mxu0 %v3641
        %5105 = vmatprep.subr.bf16.mxu0 %v3644
        %5106 = vmatpush1.bf16.msra.mxu0 %v3643
        %5107 = vmatprep.subr.bf16.mxu0 %v3646
        %5108 = vmatpush1.bf16.msra.mxu0 %v3645
        %5109 = vmatprep.subr.bf16.mxu0 %v3648
        %5110 = vmatpush1.bf16.msra.mxu0 %v3647
        %5111 = vmatprep.subr.bf16.mxu0 %v3650
        %5112 = vmatpush1.bf16.msra.mxu0 %v3649
        %5113 = vmatprep.subr.bf16.mxu0 %v3652
        %5114 = vmatpush1.bf16.msra.mxu0 %v3651
        %5115 = vmatprep.subr.bf16.mxu0 %v3654
        %5116 = vmatpush1.bf16.msra.mxu0 %v3653
        %5117 = vmatprep.subr.bf16.mxu0 %v3656
        %5118 = vmatpush1.bf16.msra.mxu0 %v3655
        %5119 = vmatprep.subr.bf16.mxu0 %v3658
        %5120 = vmatpush1.bf16.msra.mxu0 %v3657
        %5121 = vmatprep.mubr.bf16.mxu0 %v1103
        %5122 = vmatmul.mubr.bf16.gmra.mrb[0].mxu0 %v1089
        %v5123 = vpop.f32.mrb[0].mxu0
        %v5124 = vadd.f32 %v5083, %v5123
        %v5125 = vpop.f32.mrb[0].mxu0
        %v5126 = vadd.f32 %v5085, %v5125
        %v5127 = vpop.f32.mrb[0].mxu0
        %v5128 = vpop.f32.mrb[0].mxu0
        %5129 = vdwg.mxu0
        %5130 = vmatprep.subr.bf16.mxu0 %v3660
        %5131 = vmatpush1.bf16.msra.mxu0 %v3659
        %5132 = vmatprep.subr.bf16.mxu0 %v3662
        %5133 = vmatpush1.bf16.msra.mxu0 %v3661
        %5134 = vmatprep.subr.bf16.mxu0 %v3664
        %5135 = vmatpush1.bf16.msra.mxu0 %v3663
        %5136 = vmatprep.subr.bf16.mxu0 %v3666
        %5137 = vmatpush1.bf16.msra.mxu0 %v3665
        %5138 = vmatprep.subr.bf16.mxu0 %v3668
        %5139 = vmatpush1.bf16.msra.mxu0 %v3667
        %5140 = vmatprep.subr.bf16.mxu0 %v3670
        %5141 = vmatpush1.bf16.msra.mxu0 %v3669
        %5142 = vmatprep.subr.bf16.mxu0 %v3672
        %5143 = vmatpush1.bf16.msra.mxu0 %v3671
        %5144 = vmatprep.subr.bf16.mxu0 %v3674
        %5145 = vmatpush1.bf16.msra.mxu0 %v3673
        %5146 = vmatprep.subr.bf16.mxu0 %v3676
        %5147 = vmatpush1.bf16.msra.mxu0 %v3675
        %5148 = vmatprep.subr.bf16.mxu0 %v3678
        %5149 = vmatpush1.bf16.msra.mxu0 %v3677
        %5150 = vmatprep.subr.bf16.mxu0 %v3680
        %5151 = vmatpush1.bf16.msra.mxu0 %v3679
        %5152 = vmatprep.subr.bf16.mxu0 %v3682
        %5153 = vmatpush1.bf16.msra.mxu0 %v3681
        %5154 = vmatprep.subr.bf16.mxu0 %v3684
        %5155 = vmatpush1.bf16.msra.mxu0 %v3683
        %5156 = vmatprep.subr.bf16.mxu0 %v3686
        %5157 = vmatpush1.bf16.msra.mxu0 %v3685
        %5158 = vmatprep.subr.bf16.mxu0 %v3688
        %5159 = vmatpush1.bf16.msra.mxu0 %v3687
        %5160 = vmatprep.subr.bf16.mxu0 %v3690
        %5161 = vmatpush1.bf16.msra.mxu0 %v3689
        %5162 = vmatprep.mubr.bf16.mxu0 %v1107
        %5163 = vmatmul.mubr.bf16.gmra.mrb[0].mxu0 %v1105
        %v5164 = vpop.f32.mrb[0].mxu0
        %v5165 = vadd.f32 %v5124, %v5164
        %v5166 = vpop.f32.mrb[0].mxu0
        %v5167 = vadd.f32 %v5126, %v5166
        %v5168 = vpop.f32.mrb[0].mxu0
        %v5169 = vpop.f32.mrb[0].mxu0
        %5170 = vdwg.mxu0
        %5171 = vmatprep.subr.bf16.mxu0 %v3692
        %5172 = vmatpush1.bf16.msra.mxu0 %v3691
        %5173 = vmatprep.subr.bf16.mxu0 %v3694
        %5174 = vmatpush1.bf16.msra.mxu0 %v3693
        %5175 = vmatprep.subr.bf16.mxu0 %v3696
        %5176 = vmatpush1.bf16.msra.mxu0 %v3695
        %5177 = vmatprep.subr.bf16.mxu0 %v3698
        %5178 = vmatpush1.bf16.msra.mxu0 %v3697
        %5179 = vmatprep.subr.bf16.mxu0 %v3700
        %5180 = vmatpush1.bf16.msra.mxu0 %v3699
        %5181 = vmatprep.subr.bf16.mxu0 %v3702
        %5182 = vmatpush1.bf16.msra.mxu0 %v3701
        %5183 = vmatprep.subr.bf16.mxu0 %v3704
        %5184 = vmatpush1.bf16.msra.mxu0 %v3703
        %5185 = vmatprep.subr.bf16.mxu0 %v3706
        %5186 = vmatpush1.bf16.msra.mxu0 %v3705
        %5187 = vmatprep.subr.bf16.mxu0 %v3708
        %5188 = vmatpush1.bf16.msra.mxu0 %v3707
        %5189 = vmatprep.subr.bf16.mxu0 %v3710
        %5190 = vmatpush1.bf16.msra.mxu0 %v3709
        %5191 = vmatprep.subr.bf16.mxu0 %v3712
        %5192 = vmatpush1.bf16.msra.mxu0 %v3711
        %5193 = vmatprep.subr.bf16.mxu0 %v3714
        %5194 = vmatpush1.bf16.msra.mxu0 %v3713
        %5195 = vmatprep.subr.bf16.mxu0 %v3716
        %5196 = vmatpush1.bf16.msra.mxu0 %v3715
        %5197 = vmatprep.subr.bf16.mxu0 %v3718
        %5198 = vmatpush1.bf16.msra.mxu0 %v3717
        %5199 = vmatprep.subr.bf16.mxu0 %v3720
        %5200 = vmatpush1.bf16.msra.mxu0 %v3719
        %5201 = vmatprep.subr.bf16.mxu0 %v3722
        %5202 = vmatpush1.bf16.msra.mxu0 %v3721
        %5203 = vmatprep.mubr.bf16.mxu0 %v1145
        %5204 = vmatmul.mubr.bf16.gmra.mrb[0].mxu0 %v1131
        %v5205 = vpop.f32.mrb[0].mxu0
        %v5206 = vadd.f32 %v5165, %v5205
        %v5207 = vpop.f32.mrb[0].mxu0
        %v5208 = vadd.f32 %v5167, %v5207
        %v5209 = vpop.f32.mrb[0].mxu0
        %v5210 = vpop.f32.mrb[0].mxu0
        %5211 = vdwg.mxu0
        %5212 = vmatprep.subr.bf16.mxu0 %v3724
        %5213 = vmatpush1.bf16.msra.mxu0 %v3723
        %5214 = vmatprep.subr.bf16.mxu0 %v3726
        %5215 = vmatpush1.bf16.msra.mxu0 %v3725
        %5216 = vmatprep.subr.bf16.mxu0 %v3728
        %5217 = vmatpush1.bf16.msra.mxu0 %v3727
        %5218 = vmatprep.subr.bf16.mxu0 %v3730
        %5219 = vmatpush1.bf16.msra.mxu0 %v3729
        %5220 = vmatprep.subr.bf16.mxu0 %v3732
        %5221 = vmatpush1.bf16.msra.mxu0 %v3731
        %5222 = vmatprep.subr.bf16.mxu0 %v3734
        %5223 = vmatpush1.bf16.msra.mxu0 %v3733
        %5224 = vmatprep.subr.bf16.mxu0 %v3736
        %5225 = vmatpush1.bf16.msra.mxu0 %v3735
        %5226 = vmatprep.subr.bf16.mxu0 %v3738
        %5227 = vmatpush1.bf16.msra.mxu0 %v3737
        %5228 = vmatprep.subr.bf16.mxu0 %v3740
        %5229 = vmatpush1.bf16.msra.mxu0 %v3739
        %5230 = vmatprep.subr.bf16.mxu0 %v3742
        %5231 = vmatpush1.bf16.msra.mxu0 %v3741
        %5232 = vmatprep.subr.bf16.mxu0 %v3744
        %5233 = vmatpush1.bf16.msra.mxu0 %v3743
        %5234 = vmatprep.subr.bf16.mxu0 %v3746
        %5235 = vmatpush1.bf16.msra.mxu0 %v3745
        %5236 = vmatprep.subr.bf16.mxu0 %v3748
        %5237 = vmatpush1.bf16.msra.mxu0 %v3747
        %5238 = vmatprep.subr.bf16.mxu0 %v3750
        %5239 = vmatpush1.bf16.msra.mxu0 %v3749
        %5240 = vmatprep.subr.bf16.mxu0 %v3752
        %5241 = vmatpush1.bf16.msra.mxu0 %v3751
        %5242 = vmatprep.subr.bf16.mxu0 %v3754
        %5243 = vmatpush1.bf16.msra.mxu0 %v3753
        %5244 = vmatprep.mubr.bf16.mxu0 %v1155
        %5245 = vmatmul.mubr.bf16.gmra.mrb[0].mxu0 %v1153
        %v5246 = vpop.f32.mrb[0].mxu0
        %v5247 = vadd.f32 %v5206, %v5246
        %v5248 = vpop.f32.mrb[0].mxu0
        %v5249 = vadd.f32 %v5208, %v5248
        %v5250 = vpop.f32.mrb[0].mxu0
        %v5251 = vpop.f32.mrb[0].mxu0
        %5252 = vdwg.mxu0
        %5253 = vmatprep.subr.bf16.mxu0 %v3756
        %5254 = vmatpush1.bf16.msra.mxu0 %v3755
        %5255 = vmatprep.subr.bf16.mxu0 %v3758
        %5256 = vmatpush1.bf16.msra.mxu0 %v3757
        %5257 = vmatprep.subr.bf16.mxu0 %v3760
        %5258 = vmatpush1.bf16.msra.mxu0 %v3759
        %5259 = vmatprep.subr.bf16.mxu0 %v3762
        %5260 = vmatpush1.bf16.msra.mxu0 %v3761
        %5261 = vmatprep.subr.bf16.mxu0 %v3764
        %5262 = vmatpush1.bf16.msra.mxu0 %v3763
        %5263 = vmatprep.subr.bf16.mxu0 %v3766
        %5264 = vmatpush1.bf16.msra.mxu0 %v3765
        %5265 = vmatprep.subr.bf16.mxu0 %v3768
        %5266 = vmatpush1.bf16.msra.mxu0 %v3767
        %5267 = vmatprep.subr.bf16.mxu0 %v3770
        %5268 = vmatpush1.bf16.msra.mxu0 %v3769
        %5269 = vmatprep.subr.bf16.mxu0 %v3772
        %5270 = vmatpush1.bf16.msra.mxu0 %v3771
        %5271 = vmatprep.subr.bf16.mxu0 %v3774
        %5272 = vmatpush1.bf16.msra.mxu0 %v3773
        %5273 = vmatprep.subr.bf16.mxu0 %v3776
        %5274 = vmatpush1.bf16.msra.mxu0 %v3775
        %5275 = vmatprep.subr.bf16.mxu0 %v3778
        %5276 = vmatpush1.bf16.msra.mxu0 %v3777
        %5277 = vmatprep.subr.bf16.mxu0 %v3780
        %5278 = vmatpush1.bf16.msra.mxu0 %v3779
        %5279 = vmatprep.subr.bf16.mxu0 %v3782
        %5280 = vmatpush1.bf16.msra.mxu0 %v3781
        %5281 = vmatprep.subr.bf16.mxu0 %v3784
        %5282 = vmatpush1.bf16.msra.mxu0 %v3783
        %5283 = vmatprep.subr.bf16.mxu0 %v3786
        %5284 = vmatpush1.bf16.msra.mxu0 %v3785
        %5285 = vmatprep.mubr.bf16.mxu0 %v1152
        %5286 = vmatmul.mubr.bf16.gmra.mrb[0].mxu0 %v1138
        %v5287 = vpop.f32.mrb[0].mxu0
        %v5288 = vadd.f32 %v5247, %v5287
        %v5289 = vpop.f32.mrb[0].mxu0
        %v5290 = vadd.f32 %v5249, %v5289
        %v5291 = vpop.f32.mrb[0].mxu0
        %v5292 = vpop.f32.mrb[0].mxu0
        %5293 = vdwg.mxu0
        %5294 = vmatprep.subr.bf16.mxu0 %v3788
        %5295 = vmatpush1.bf16.msra.mxu0 %v3787
        %5296 = vmatprep.subr.bf16.mxu0 %v3790
        %5297 = vmatpush1.bf16.msra.mxu0 %v3789
        %5298 = vmatprep.subr.bf16.mxu0 %v3792
        %5299 = vmatpush1.bf16.msra.mxu0 %v3791
        %5300 = vmatprep.subr.bf16.mxu0 %v3794
        %5301 = vmatpush1.bf16.msra.mxu0 %v3793
        %5302 = vmatprep.subr.bf16.mxu0 %v3796
        %5303 = vmatpush1.bf16.msra.mxu0 %v3795
        %5304 = vmatprep.subr.bf16.mxu0 %v3798
        %5305 = vmatpush1.bf16.msra.mxu0 %v3797
        %5306 = vmatprep.subr.bf16.mxu0 %v3800
        %5307 = vmatpush1.bf16.msra.mxu0 %v3799
        %5308 = vmatprep.subr.bf16.mxu0 %v3802
        %5309 = vmatpush1.bf16.msra.mxu0 %v3801
        %5310 = vmatprep.subr.bf16.mxu0 %v3804
        %5311 = vmatpush1.bf16.msra.mxu0 %v3803
        %5312 = vmatprep.subr.bf16.mxu0 %v3806
        %5313 = vmatpush1.bf16.msra.mxu0 %v3805
        %5314 = vmatprep.subr.bf16.mxu0 %v3808
        %5315 = vmatpush1.bf16.msra.mxu0 %v3807
        %5316 = vmatprep.subr.bf16.mxu0 %v3810
        %5317 = vmatpush1.bf16.msra.mxu0 %v3809
        %5318 = vmatprep.subr.bf16.mxu0 %v3812
        %5319 = vmatpush1.bf16.msra.mxu0 %v3811
        %5320 = vmatprep.subr.bf16.mxu0 %v3814
        %5321 = vmatpush1.bf16.msra.mxu0 %v3813
        %5322 = vmatprep.subr.bf16.mxu0 %v3816
        %5323 = vmatpush1.bf16.msra.mxu0 %v3815
        %5324 = vmatprep.subr.bf16.mxu0 %v3818
        %5325 = vmatpush1.bf16.msra.mxu0 %v3817
        %5326 = vmatprep.mubr.bf16.mxu0 %v1156
        %5327 = vmatmul.mubr.bf16.gmra.mrb[0].mxu0 %v1154
        %v5328 = vpop.f32.mrb[0].mxu0
        %v5329 = vadd.f32 %v5288, %v5328
        %v5330 = vpop.f32.mrb[0].mxu0
        %v5331 = vadd.f32 %v5290, %v5330
        %v5332 = vpop.f32.mrb[0].mxu0
        %v5333 = vpop.f32.mrb[0].mxu0
        %5334 = vdwg.mxu0
        %5335 = vmatprep.subr.bf16.mxu0 %v3820
        %5336 = vmatpush1.bf16.msra.mxu0 %v3819
        %5337 = vmatprep.subr.bf16.mxu0 %v3822
        %5338 = vmatpush1.bf16.msra.mxu0 %v3821
        %5339 = vmatprep.subr.bf16.mxu0 %v3824
        %5340 = vmatpush1.bf16.msra.mxu0 %v3823
        %5341 = vmatprep.subr.bf16.mxu0 %v3826
        %5342 = vmatpush1.bf16.msra.mxu0 %v3825
        %5343 = vmatprep.subr.bf16.mxu0 %v3828
        %5344 = vmatpush1.bf16.msra.mxu0 %v3827
        %5345 = vmatprep.subr.bf16.mxu0 %v3830
        %5346 = vmatpush1.bf16.msra.mxu0 %v3829
        %5347 = vmatprep.subr.bf16.mxu0 %v3832
        %5348 = vmatpush1.bf16.msra.mxu0 %v3831
        %5349 = vmatprep.subr.bf16.mxu0 %v3834
        %5350 = vmatpush1.bf16.msra.mxu0 %v3833
        %5351 = vmatprep.subr.bf16.mxu0 %v3836
        %5352 = vmatpush1.bf16.msra.mxu0 %v3835
        %5353 = vmatprep.subr.bf16.mxu0 %v3838
        %5354 = vmatpush1.bf16.msra.mxu0 %v3837
        %5355 = vmatprep.subr.bf16.mxu0 %v3840
        %5356 = vmatpush1.bf16.msra.mxu0 %v3839
        %5357 = vmatprep.subr.bf16.mxu0 %v3842
        %5358 = vmatpush1.bf16.msra.mxu0 %v3841
        %5359 = vmatprep.subr.bf16.mxu0 %v3844
        %5360 = vmatpush1.bf16.msra.mxu0 %v3843
        %5361 = vmatprep.subr.bf16.mxu0 %v3846
        %5362 = vmatpush1.bf16.msra.mxu0 %v3845
        %5363 = vmatprep.subr.bf16.mxu0 %v3848
        %5364 = vmatpush1.bf16.msra.mxu0 %v3847
        %5365 = vmatprep.subr.bf16.mxu0 %v3850
        %5366 = vmatpush1.bf16.msra.mxu0 %v3849
        %5367 = vmatprep.mubr.bf16.mxu0 %v1194
        %5368 = vmatmul.mubr.bf16.gmra.mrb[0].mxu0 %v1180
        %v5369 = vpop.f32.mrb[0].mxu0
        %v5370 = vadd.f32 %v5329, %v5369
        %v5371 = vpop.f32.mrb[0].mxu0
        %v5372 = vadd.f32 %v5331, %v5371
        %v5373 = vpop.f32.mrb[0].mxu0
        %v5374 = vpop.f32.mrb[0].mxu0
        %5375 = vdwg.mxu0
        %5376 = vmatprep.subr.bf16.mxu0 %v3852
        %5377 = vmatpush1.bf16.msra.mxu0 %v3851
        %5378 = vmatprep.subr.bf16.mxu0 %v3854
        %5379 = vmatpush1.bf16.msra.mxu0 %v3853
        %5380 = vmatprep.subr.bf16.mxu0 %v3856
        %5381 = vmatpush1.bf16.msra.mxu0 %v3855
        %5382 = vmatprep.subr.bf16.mxu0 %v3858
        %5383 = vmatpush1.bf16.msra.mxu0 %v3857
        %5384 = vmatprep.subr.bf16.mxu0 %v3860
        %5385 = vmatpush1.bf16.msra.mxu0 %v3859
        %5386 = vmatprep.subr.bf16.mxu0 %v3862
        %5387 = vmatpush1.bf16.msra.mxu0 %v3861
        %5388 = vmatprep.subr.bf16.mxu0 %v3864
        %5389 = vmatpush1.bf16.msra.mxu0 %v3863
        %5390 = vmatprep.subr.bf16.mxu0 %v3866
        %5391 = vmatpush1.bf16.msra.mxu0 %v3865
        %5392 = vmatprep.subr.bf16.mxu0 %v3868
        %5393 = vmatpush1.bf16.msra.mxu0 %v3867
        %5394 = vmatprep.subr.bf16.mxu0 %v3870
        %5395 = vmatpush1.bf16.msra.mxu0 %v3869
        %5396 = vmatprep.subr.bf16.mxu0 %v3872
        %5397 = vmatpush1.bf16.msra.mxu0 %v3871
        %5398 = vmatprep.subr.bf16.mxu0 %v3874
        %5399 = vmatpush1.bf16.msra.mxu0 %v3873
        %5400 = vmatprep.subr.bf16.mxu0 %v3876
        %5401 = vmatpush1.bf16.msra.mxu0 %v3875
        %5402 = vmatprep.subr.bf16.mxu0 %v3878
        %5403 = vmatpush1.bf16.msra.mxu0 %v3877
        %5404 = vmatprep.subr.bf16.mxu0 %v3880
        %5405 = vmatpush1.bf16.msra.mxu0 %v3879
        %5406 = vmatprep.subr.bf16.mxu0 %v3882
        %5407 = vmatpush1.bf16.msra.mxu0 %v3881
        %5408 = vmatprep.mubr.bf16.mxu0 %v1204
        %5409 = vmatmul.mubr.bf16.gmra.mrb[0].mxu0 %v1202
        %v5410 = vpop.f32.mrb[0].mxu0
        %v5411 = vadd.f32 %v5370, %v5410
        %v5412 = vpop.f32.mrb[0].mxu0
        %v5413 = vadd.f32 %v5372, %v5412
        %v5414 = vpop.f32.mrb[0].mxu0
        %v5415 = vpop.f32.mrb[0].mxu0
        %5416 = vdwg.mxu0
        %5417 = vmatprep.subr.bf16.mxu0 %v3884
        %5418 = vmatpush1.bf16.msra.mxu0 %v3883
        %5419 = vmatprep.subr.bf16.mxu0 %v3886
        %5420 = vmatpush1.bf16.msra.mxu0 %v3885
        %5421 = vmatprep.subr.bf16.mxu0 %v3888
        %5422 = vmatpush1.bf16.msra.mxu0 %v3887
        %5423 = vmatprep.subr.bf16.mxu0 %v3890
        %5424 = vmatpush1.bf16.msra.mxu0 %v3889
        %5425 = vmatprep.subr.bf16.mxu0 %v3892
        %5426 = vmatpush1.bf16.msra.mxu0 %v3891
        %5427 = vmatprep.subr.bf16.mxu0 %v3894
        %5428 = vmatpush1.bf16.msra.mxu0 %v3893
        %5429 = vmatprep.subr.bf16.mxu0 %v3896
        %5430 = vmatpush1.bf16.msra.mxu0 %v3895
        %5431 = vmatprep.subr.bf16.mxu0 %v3898
        %5432 = vmatpush1.bf16.msra.mxu0 %v3897
        %5433 = vmatprep.subr.bf16.mxu0 %v3900
        %5434 = vmatpush1.bf16.msra.mxu0 %v3899
        %5435 = vmatprep.subr.bf16.mxu0 %v3902
        %5436 = vmatpush1.bf16.msra.mxu0 %v3901
        %5437 = vmatprep.subr.bf16.mxu0 %v3904
        %5438 = vmatpush1.bf16.msra.mxu0 %v3903
        %5439 = vmatprep.subr.bf16.mxu0 %v3906
        %5440 = vmatpush1.bf16.msra.mxu0 %v3905
        %5441 = vmatprep.subr.bf16.mxu0 %v3908
        %5442 = vmatpush1.bf16.msra.mxu0 %v3907
        %5443 = vmatprep.subr.bf16.mxu0 %v3910
        %5444 = vmatpush1.bf16.msra.mxu0 %v3909
        %5445 = vmatprep.subr.bf16.mxu0 %v3912
        %5446 = vmatpush1.bf16.msra.mxu0 %v3911
        %5447 = vmatprep.subr.bf16.mxu0 %v3914
        %5448 = vmatpush1.bf16.msra.mxu0 %v3913
        %5449 = vmatprep.mubr.bf16.mxu0 %v1201
        %5450 = vmatmul.mubr.bf16.gmra.mrb[0].mxu0 %v1187
        %v5451 = vpop.f32.mrb[0].mxu0
        %v5452 = vadd.f32 %v5411, %v5451
        %v5453 = vpop.f32.mrb[0].mxu0
        %v5454 = vadd.f32 %v5413, %v5453
        %v5455 = vpop.f32.mrb[0].mxu0
        %v5456 = vpop.f32.mrb[0].mxu0
        %5457 = vdwg.mxu0
        %5458 = vmatprep.subr.bf16.mxu0 %v3916
        %5459 = vmatpush1.bf16.msra.mxu0 %v3915
        %5460 = vmatprep.subr.bf16.mxu0 %v3918
        %5461 = vmatpush1.bf16.msra.mxu0 %v3917
        %5462 = vmatprep.subr.bf16.mxu0 %v3920
        %5463 = vmatpush1.bf16.msra.mxu0 %v3919
        %5464 = vmatprep.subr.bf16.mxu0 %v3922
        %5465 = vmatpush1.bf16.msra.mxu0 %v3921
        %5466 = vmatprep.subr.bf16.mxu0 %v3924
        %5467 = vmatpush1.bf16.msra.mxu0 %v3923
        %5468 = vmatprep.subr.bf16.mxu0 %v3926
        %5469 = vmatpush1.bf16.msra.mxu0 %v3925
        %5470 = vmatprep.subr.bf16.mxu0 %v3928
        %5471 = vmatpush1.bf16.msra.mxu0 %v3927
        %5472 = vmatprep.subr.bf16.mxu0 %v3930
        %5473 = vmatpush1.bf16.msra.mxu0 %v3929
        %5474 = vmatprep.subr.bf16.mxu0 %v3932
        %5475 = vmatpush1.bf16.msra.mxu0 %v3931
        %5476 = vmatprep.subr.bf16.mxu0 %v3934
        %5477 = vmatpush1.bf16.msra.mxu0 %v3933
        %5478 = vmatprep.subr.bf16.mxu0 %v3936
        %5479 = vmatpush1.bf16.msra.mxu0 %v3935
        %5480 = vmatprep.subr.bf16.mxu0 %v3938
        %5481 = vmatpush1.bf16.msra.mxu0 %v3937
        %5482 = vmatprep.subr.bf16.mxu0 %v3940
        %5483 = vmatpush1.bf16.msra.mxu0 %v3939
        %5484 = vmatprep.subr.bf16.mxu0 %v3942
        %5485 = vmatpush1.bf16.msra.mxu0 %v3941
        %5486 = vmatprep.subr.bf16.mxu0 %v3944
        %5487 = vmatpush1.bf16.msra.mxu0 %v3943
        %5488 = vmatprep.subr.bf16.mxu0 %v3946
        %5489 = vmatpush1.bf16.msra.mxu0 %v3945
        %5490 = vmatprep.mubr.bf16.mxu0 %v1205
        %5491 = vmatmul.mubr.bf16.gmra.mrb[0].mxu0 %v1203
        %v5492 = vpop.f32.mrb[0].mxu0
        %v5493 = vadd.f32 %v5452, %v5492
        %v5494 = vpop.f32.mrb[0].mxu0
        %v5495 = vadd.f32 %v5454, %v5494
        %v5496 = vpop.f32.mrb[0].mxu0
        %v5497 = vpop.f32.mrb[0].mxu0
        %5498 = vdwg.mxu0
        %5499 = vmatprep.subr.bf16.mxu0 %v3948
        %5500 = vmatpush1.bf16.msra.mxu0 %v3947
        %5501 = vmatprep.subr.bf16.mxu0 %v3950
        %5502 = vmatpush1.bf16.msra.mxu0 %v3949
        %5503 = vmatprep.subr.bf16.mxu0 %v3952
        %5504 = vmatpush1.bf16.msra.mxu0 %v3951
        %5505 = vmatprep.subr.bf16.mxu0 %v3954
        %5506 = vmatpush1.bf16.msra.mxu0 %v3953
        %5507 = vmatprep.subr.bf16.mxu0 %v3956
        %5508 = vmatpush1.bf16.msra.mxu0 %v3955
        %5509 = vmatprep.subr.bf16.mxu0 %v3958
        %5510 = vmatpush1.bf16.msra.mxu0 %v3957
        %5511 = vmatprep.subr.bf16.mxu0 %v3960
        %5512 = vmatpush1.bf16.msra.mxu0 %v3959
        %5513 = vmatprep.subr.bf16.mxu0 %v3962
        %5514 = vmatpush1.bf16.msra.mxu0 %v3961
        %5515 = vmatprep.subr.bf16.mxu0 %v3964
        %5516 = vmatpush1.bf16.msra.mxu0 %v3963
        %5517 = vmatprep.subr.bf16.mxu0 %v3966
        %5518 = vmatpush1.bf16.msra.mxu0 %v3965
        %5519 = vmatprep.subr.bf16.mxu0 %v3968
        %5520 = vmatpush1.bf16.msra.mxu0 %v3967
        %5521 = vmatprep.subr.bf16.mxu0 %v3970
        %5522 = vmatpush1.bf16.msra.mxu0 %v3969
        %5523 = vmatprep.subr.bf16.mxu0 %v3972
        %5524 = vmatpush1.bf16.msra.mxu0 %v3971
        %5525 = vmatprep.subr.bf16.mxu0 %v3974
        %5526 = vmatpush1.bf16.msra.mxu0 %v3973
        %5527 = vmatprep.subr.bf16.mxu0 %v3976
        %5528 = vmatpush1.bf16.msra.mxu0 %v3975
        %5529 = vmatprep.subr.bf16.mxu0 %v3978
        %5530 = vmatpush1.bf16.msra.mxu0 %v3977
        %5531 = vmatprep.mubr.bf16.mxu0 %v1243
        %5532 = vmatmul.mubr.bf16.gmra.mrb[0].mxu0 %v1229
        %v5533 = vpop.f32.mrb[0].mxu0
        %v5534 = vadd.f32 %v5493, %v5533
        %v5535 = vpop.f32.mrb[0].mxu0
        %v5536 = vadd.f32 %v5495, %v5535
        %v5537 = vpop.f32.mrb[0].mxu0
        %v5538 = vpop.f32.mrb[0].mxu0
        %5539 = vdwg.mxu0
        %5540 = vmatprep.subr.bf16.mxu0 %v3980
        %5541 = vmatpush1.bf16.msra.mxu0 %v3979
        %5542 = vmatprep.subr.bf16.mxu0 %v3982
        %5543 = vmatpush1.bf16.msra.mxu0 %v3981
        %5544 = vmatprep.subr.bf16.mxu0 %v3984
        %5545 = vmatpush1.bf16.msra.mxu0 %v3983
        %5546 = vmatprep.subr.bf16.mxu0 %v3986
        %5547 = vmatpush1.bf16.msra.mxu0 %v3985
        %5548 = vmatprep.subr.bf16.mxu0 %v3988
        %5549 = vmatpush1.bf16.msra.mxu0 %v3987
        %5550 = vmatprep.subr.bf16.mxu0 %v3990
        %5551 = vmatpush1.bf16.msra.mxu0 %v3989
        %5552 = vmatprep.subr.bf16.mxu0 %v3992
        %5553 = vmatpush1.bf16.msra.mxu0 %v3991
        %5554 = vmatprep.subr.bf16.mxu0 %v3994
        %5555 = vmatpush1.bf16.msra.mxu0 %v3993
        %5556 = vmatprep.subr.bf16.mxu0 %v3996
        %5557 = vmatpush1.bf16.msra.mxu0 %v3995
        %5558 = vmatprep.subr.bf16.mxu0 %v3998
        %5559 = vmatpush1.bf16.msra.mxu0 %v3997
        %5560 = vmatprep.subr.bf16.mxu0 %v4000
        %5561 = vmatpush1.bf16.msra.mxu0 %v3999
        %5562 = vmatprep.subr.bf16.mxu0 %v4002
        %5563 = vmatpush1.bf16.msra.mxu0 %v4001
        %5564 = vmatprep.subr.bf16.mxu0 %v4004
        %5565 = vmatpush1.bf16.msra.mxu0 %v4003
        %5566 = vmatprep.subr.bf16.mxu0 %v4006
        %5567 = vmatpush1.bf16.msra.mxu0 %v4005
        %5568 = vmatprep.subr.bf16.mxu0 %v4008
        %5569 = vmatpush1.bf16.msra.mxu0 %v4007
        %5570 = vmatprep.subr.bf16.mxu0 %v4010
        %5571 = vmatpush1.bf16.msra.mxu0 %v4009
        %5572 = vmatprep.mubr.bf16.mxu0 %v1253
        %5573 = vmatmul.mubr.bf16.gmra.mrb[0].mxu0 %v1251
        %v5574 = vpop.f32.mrb[0].mxu0
        %v5575 = vadd.f32 %v5534, %v5574
        %v5576 = vpop.f32.mrb[0].mxu0
        %v5577 = vadd.f32 %v5536, %v5576
        %v5578 = vpop.f32.mrb[0].mxu0
        %v5579 = vpop.f32.mrb[0].mxu0
        %5580 = vdwg.mxu0
        %5581 = vmatprep.subr.bf16.mxu0 %v4012
        %5582 = vmatpush1.bf16.msra.mxu0 %v4011
        %5583 = vmatprep.subr.bf16.mxu0 %v4014
        %5584 = vmatpush1.bf16.msra.mxu0 %v4013
        %5585 = vmatprep.subr.bf16.mxu0 %v4016
        %5586 = vmatpush1.bf16.msra.mxu0 %v4015
        %5587 = vmatprep.subr.bf16.mxu0 %v4018
        %5588 = vmatpush1.bf16.msra.mxu0 %v4017
        %5589 = vmatprep.subr.bf16.mxu0 %v4020
        %5590 = vmatpush1.bf16.msra.mxu0 %v4019
        %5591 = vmatprep.subr.bf16.mxu0 %v4022
        %5592 = vmatpush1.bf16.msra.mxu0 %v4021
        %5593 = vmatprep.subr.bf16.mxu0 %v4024
        %5594 = vmatpush1.bf16.msra.mxu0 %v4023
        %5595 = vmatprep.subr.bf16.mxu0 %v4026
        %5596 = vmatpush1.bf16.msra.mxu0 %v4025
        %5597 = vmatprep.subr.bf16.mxu0 %v4028
        %5598 = vmatpush1.bf16.msra.mxu0 %v4027
        %5599 = vmatprep.subr.bf16.mxu0 %v4030
        %5600 = vmatpush1.bf16.msra.mxu0 %v4029
        %5601 = vmatprep.subr.bf16.mxu0 %v4032
        %5602 = vmatpush1.bf16.msra.mxu0 %v4031
        %5603 = vmatprep.subr.bf16.mxu0 %v4034
        %5604 = vmatpush1.bf16.msra.mxu0 %v4033
        %5605 = vmatprep.subr.bf16.mxu0 %v4036
        %5606 = vmatpush1.bf16.msra.mxu0 %v4035
        %5607 = vmatprep.subr.bf16.mxu0 %v4038
        %5608 = vmatpush1.bf16.msra.mxu0 %v4037
        %5609 = vmatprep.subr.bf16.mxu0 %v4040
        %5610 = vmatpush1.bf16.msra.mxu0 %v4039
        %5611 = vmatprep.subr.bf16.mxu0 %v4042
        %5612 = vmatpush1.bf16.msra.mxu0 %v4041
        %5613 = vmatprep.mubr.bf16.mxu0 %v1250
        %5614 = vmatmul.mubr.bf16.gmra.mrb[0].mxu0 %v1236
        %v5615 = vpop.f32.mrb[0].mxu0
        %v5616 = vadd.f32 %v5575, %v5615
        %v5617 = vpop.f32.mrb[0].mxu0
        %v5618 = vadd.f32 %v5577, %v5617
        %v5619 = vpop.f32.mrb[0].mxu0
        %v5620 = vpop.f32.mrb[0].mxu0
        %5621 = vdwg.mxu0
        %5622 = vmatprep.subr.bf16.mxu0 %v4044
        %5623 = vmatpush1.bf16.msra.mxu0 %v4043
        %5624 = vmatprep.subr.bf16.mxu0 %v4046
        %5625 = vmatpush1.bf16.msra.mxu0 %v4045
        %5626 = vmatprep.subr.bf16.mxu0 %v4048
        %5627 = vmatpush1.bf16.msra.mxu0 %v4047
        %5628 = vmatprep.subr.bf16.mxu0 %v4050
        %5629 = vmatpush1.bf16.msra.mxu0 %v4049
        %5630 = vmatprep.subr.bf16.mxu0 %v4052
        %5631 = vmatpush1.bf16.msra.mxu0 %v4051
        %5632 = vmatprep.subr.bf16.mxu0 %v4054
        %5633 = vmatpush1.bf16.msra.mxu0 %v4053
        %5634 = vmatprep.subr.bf16.mxu0 %v4056
        %5635 = vmatpush1.bf16.msra.mxu0 %v4055
        %5636 = vmatprep.subr.bf16.mxu0 %v4058
        %5637 = vmatpush1.bf16.msra.mxu0 %v4057
        %5638 = vmatprep.subr.bf16.mxu0 %v4060
        %5639 = vmatpush1.bf16.msra.mxu0 %v4059
        %5640 = vmatprep.subr.bf16.mxu0 %v4062
        %5641 = vmatpush1.bf16.msra.mxu0 %v4061
        %5642 = vmatprep.subr.bf16.mxu0 %v4064
        %5643 = vmatpush1.bf16.msra.mxu0 %v4063
        %5644 = vmatprep.subr.bf16.mxu0 %v4066
        %5645 = vmatpush1.bf16.msra.mxu0 %v4065
        %5646 = vmatprep.subr.bf16.mxu0 %v4068
        %5647 = vmatpush1.bf16.msra.mxu0 %v4067
        %5648 = vmatprep.subr.bf16.mxu0 %v4070
        %5649 = vmatpush1.bf16.msra.mxu0 %v4069
        %5650 = vmatprep.subr.bf16.mxu0 %v4072
        %5651 = vmatpush1.bf16.msra.mxu0 %v4071
        %5652 = vmatprep.subr.bf16.mxu0 %v4074
        %5653 = vmatpush1.bf16.msra.mxu0 %v4073
        %5654 = vmatprep.mubr.bf16.mxu0 %v1254
        %5655 = vmatmul.mubr.bf16.gmra.mrb[0].mxu0 %v1252
        %v5656 = vpop.f32.mrb[0].mxu0
        %v5657 = vadd.f32 %v5616, %v5656
        %v5658 = vpop.f32.mrb[0].mxu0
        %v5659 = vadd.f32 %v5618, %v5658
        %v5660 = vpop.f32.mrb[0].mxu0
        %v5661 = vpop.f32.mrb[0].mxu0
        %5662 = vdwg.mxu0
        %5663 = vmatprep.subr.bf16.mxu0 %v4076
        %5664 = vmatpush1.bf16.msra.mxu0 %v4075
        %5665 = vmatprep.subr.bf16.mxu0 %v4078
        %5666 = vmatpush1.bf16.msra.mxu0 %v4077
        %5667 = vmatprep.subr.bf16.mxu0 %v4080
        %5668 = vmatpush1.bf16.msra.mxu0 %v4079
        %5669 = vmatprep.subr.bf16.mxu0 %v4082
        %5670 = vmatpush1.bf16.msra.mxu0 %v4081
        %5671 = vmatprep.subr.bf16.mxu0 %v4084
        %5672 = vmatpush1.bf16.msra.mxu0 %v4083
        %5673 = vmatprep.subr.bf16.mxu0 %v4086
        %5674 = vmatpush1.bf16.msra.mxu0 %v4085
        %5675 = vmatprep.subr.bf16.mxu0 %v4088
        %5676 = vmatpush1.bf16.msra.mxu0 %v4087
        %5677 = vmatprep.subr.bf16.mxu0 %v4090
        %5678 = vmatpush1.bf16.msra.mxu0 %v4089
        %5679 = vmatprep.subr.bf16.mxu0 %v4092
        %5680 = vmatpush1.bf16.msra.mxu0 %v4091
        %5681 = vmatprep.subr.bf16.mxu0 %v4094
        %5682 = vmatpush1.bf16.msra.mxu0 %v4093
        %5683 = vmatprep.subr.bf16.mxu0 %v4096
        %5684 = vmatpush1.bf16.msra.mxu0 %v4095
        %5685 = vmatprep.subr.bf16.mxu0 %v4098
        %5686 = vmatpush1.bf16.msra.mxu0 %v4097
        %5687 = vmatprep.subr.bf16.mxu0 %v4100
        %5688 = vmatpush1.bf16.msra.mxu0 %v4099
        %5689 = vmatprep.subr.bf16.mxu0 %v4102
        %5690 = vmatpush1.bf16.msra.mxu0 %v4101
        %5691 = vmatprep.subr.bf16.mxu0 %v4104
        %5692 = vmatpush1.bf16.msra.mxu0 %v4103
        %5693 = vmatprep.subr.bf16.mxu0 %v4106
        %5694 = vmatpush1.bf16.msra.mxu0 %v4105
        %5695 = vmatprep.mubr.bf16.mxu0 %v1276
        %5696 = vmatmul.mubr.bf16.gmra.mrb[0].mxu0 %v1269
        %v5697 = vpop.f32.mrb[0].mxu0
        %v5698 = vadd.f32 %v5657, %v5697
        %v5699 = vpop.f32.mrb[0].mxu0
        %v5700 = vadd.f32 %v5659, %v5699
        %v5701 = vpop.f32.mrb[0].mxu0
        %v5702 = vpop.f32.mrb[0].mxu0
        %5703 = vdwg.mxu0
        %5704 = vmatprep.subr.bf16.mxu0 %v4108
        %5705 = vmatpush1.bf16.msra.mxu0 %v4107
        %5706 = vmatprep.subr.bf16.mxu0 %v4110
        %5707 = vmatpush1.bf16.msra.mxu0 %v4109
        %5708 = vmatprep.subr.bf16.mxu0 %v4112
        %5709 = vmatpush1.bf16.msra.mxu0 %v4111
        %5710 = vmatprep.subr.bf16.mxu0 %v4114
        %5711 = vmatpush1.bf16.msra.mxu0 %v4113
        %5712 = vmatprep.subr.bf16.mxu0 %v4116
        %5713 = vmatpush1.bf16.msra.mxu0 %v4115
        %5714 = vmatprep.subr.bf16.mxu0 %v4118
        %5715 = vmatpush1.bf16.msra.mxu0 %v4117
        %5716 = vmatprep.subr.bf16.mxu0 %v4120
        %5717 = vmatpush1.bf16.msra.mxu0 %v4119
        %5718 = vmatprep.subr.bf16.mxu0 %v4122
        %5719 = vmatpush1.bf16.msra.mxu0 %v4121
        %5720 = vmatprep.subr.bf16.mxu0 %v4124
        %5721 = vmatpush1.bf16.msra.mxu0 %v4123
        %5722 = vmatprep.subr.bf16.mxu0 %v4126
        %5723 = vmatpush1.bf16.msra.mxu0 %v4125
        %5724 = vmatprep.subr.bf16.mxu0 %v4128
        %5725 = vmatpush1.bf16.msra.mxu0 %v4127
        %5726 = vmatprep.subr.bf16.mxu0 %v4130
        %5727 = vmatpush1.bf16.msra.mxu0 %v4129
        %5728 = vmatprep.subr.bf16.mxu0 %v4132
        %5729 = vmatpush1.bf16.msra.mxu0 %v4131
        %5730 = vmatprep.subr.bf16.mxu0 %v4134
        %5731 = vmatpush1.bf16.msra.mxu0 %v4133
        %5732 = vmatprep.subr.bf16.mxu0 %v4136
        %5733 = vmatpush1.bf16.msra.mxu0 %v4135
        %5734 = vmatprep.subr.bf16.mxu0 %v4138
        %5735 = vmatpush1.bf16.msra.mxu0 %v4137
        %5736 = vmatprep.mubr.bf16.mxu0 %v1278
        %5737 = vmatmul.mubr.bf16.gmra.mrb[0].mxu0 %v1277
        %v5738 = vpop.f32.mrb[0].mxu0
        %v5739 = vadd.f32 %v5698, %v5738
        %v5740 = vpop.f32.mrb[0].mxu0
        %v5741 = vadd.f32 %v5700, %v5740
        %v5742 = vpop.f32.mrb[0].mxu0
        %v5743 = vpop.f32.mrb[0].mxu0
        %5744 = vdwg.mxu0
        %v5747 = vcombine.low %v5739, %v5741
        %v5749 = vunpack.c.l.s4 1983009808
        %v5750 = vunpack.c.0.s8 %v5749
        %v5751 = vlaneseq
        %v5752 = vshrl.u32 %v5751, 7
        %v5753 = vsub.s32 %v5750, %v5752
        %v5754 = vrot.slane %v5747, %v5753
        %v5756 = vadd.f32 %v293, %v5754
        %5757 = vst [vmem:[%s267] sm:$0xf] %v5756
        %s5758 = smul.u32 2, %s24
        %p5759 = scmp.lt.s32.totalorder %s5758, 3
        %s5760 = scalar_select %p5759, %s5758, 3
        %s5761 = smul.addr %s5760, 2
        %s5762 = scalar_lea.vmem %s3, %s5761
        // Predicated region
        $region45: #{conv1d_model_forward.3} parent=31 // pred_check
          %p5763 = pneg %p130
        $region46: #{conv1d_model_forward.3} parent=31 // pred_check_branch
          %5765 = sbr.rel (%p5763) target = $region48
        $region47: #{conv1d_model_forward.3} parent=31 // pred_region
          %s5766 = smul.u32 2, %s24
        $region48: #{conv1d_model_forward.3} parent=31 // pred_fallthru
          _
      $region32: #{conv1d_model_forward.3} parent=5 // pred_fallthru
        _
      %p5767 = scmp.le.s32.totalorder 2, %s15
      // Predicated region
      $region49: #{conv1d_model_forward.3} parent=5 // pred_check
        %p5768 = pneg %p5767
      $region50: #{conv1d_model_forward.3} parent=5 // pred_check_branch
        %5770 = sbr.rel (%p5768) target = $region52
      $region51: #{conv1d_model_forward.3} parent=5 // pred_region
        %s5771 = ssub.s32 %s15, 2
        // Predicated region
        $region53: #{conv1d_model_forward.3} parent=51 // pred_check
          %p5772 = pneg %p136
        $region54: #{conv1d_model_forward.3} parent=51 // pred_check_branch
          %5774 = sbr.rel (%p5772) target = $region56
        $region55: #{conv1d_model_forward.3} parent=51 // pred_region
          %s5775 = smul.u32 2, %s26
          %p5776 = scmp.lt.s32.totalorder %s5775, 3
          %s5777 = scalar_select %p5776, %s5775, 3
          %s5778 = smul.addr %s5777, 2
          %s5779 = scalar_lea.vmem %s3, %s5778
        $region56: #{conv1d_model_forward.3} parent=51 // pred_fallthru
          _
      $region52: #{conv1d_model_forward.3} parent=5 // pred_fallthru
        _
    $region6: #{conv1d_model_forward.3} parent=1 // loop_footer
      %s19 = sadd.s32 1, %s15
    $region7: #{conv1d_model_forward.3} parent=1 // loop_footer_branch
      %14 = sbr.rel target = $region3
    $region8: #{conv1d_model_forward.3} parent=1 // loop_exit
      _
    %5780 = vsyncpa [#allocation3], 1
    %s5781 = scalar_lea.sflag [#allocation3], 1
    %5782 = vsyncpa %s5781, 1
    %5783 = vsyncpa [#allocation5], 1
    %s5784 = scalar_lea.sflag [#allocation5], 1
    %5785 = vsyncpa %s5784, 1

</llo_original>
